<compile_context>
chip_gen: v5e
topology: v5e:2x2
jax: 0.10.0
libtpu: 0.0.40
codegen_flags: <defaults>
</compile_context>

<pallas_src>
import functools

import numpy as np
import jax
import jax.numpy as jnp
from jax import lax
from jax.experimental import pallas as pl
from jax.experimental.pallas import tpu as pltpu


# ----------------------------------------------------------------------------
# Parameter / constant-buffer setup (pure JAX "glue": depends only on params,
# never on the input x, exactly like the registered buffers in the nn.Module).
# ----------------------------------------------------------------------------
def _soft_unit_step(t):
    safe = jnp.where(t > 0.0, t, 1.0)
    return jnp.where(t > 0.0, jnp.exp(-1.0 / safe), 0.0)


def _soft_one_hot_linspace_smooth_finite(d, start, end, number):
    # e3nn soft_one_hot_linspace(basis='smooth_finite', endpoint=True)
    values = jnp.linspace(start, end, number)
    step = values[1] - values[0]
    diff = (d[..., None] - values) / step
    return 1.14136 * jnp.exp(2.0) * _soft_unit_step(diff + 1.0) * _soft_unit_step(1.0 - diff)


def build_params(size, steps, c_in, c_out, tp_weight, w_sc):
    """Builds (unfolded conv kernel, scaled Linear weight) for the reference, plus the
    folded, flattened (C_out, S^3*C_in) bf16 matmul weight used by the Pallas kernel."""
    crop = size // 2
    r = np.linspace(-1.0, 1.0, size)
    xs = r * steps[0] / min(steps); xs = xs[np.abs(xs) <= 1.0]
    ys = r * steps[1] / min(steps); ys = ys[np.abs(ys) <= 1.0]
    zs = r * steps[2] / min(steps); zs = zs[np.abs(zs) <= 1.0]
    if not (size % 2 == 1 and len(xs) == len(ys) == len(zs) == size):
        # TODO(synk): anisotropic `steps` clip the lattice to a smaller / non-cubic kernel;
        # the original module's sc-crop + conv3d shapes only line up for the cubic odd-size
        # case, so refuse instead of silently indexing out of bounds.
        raise NotImplementedError("only cubic, odd-size kernels (uniform steps) are supported")

    lattice = np.stack(np.meshgrid(xs, ys, zs, indexing="ij"), axis=-1)      # (S,S,S,3)
    d = jnp.asarray(np.linalg.norm(lattice, axis=-1), jnp.float32)           # (S,S,S)

    emb = _soft_one_hot_linspace_smooth_finite(d, 0.0, 1.0, size)            # (S,S,S,num_rbfs)
    # spherical harmonics of "0e" with 'component' normalization == 1
    sh = jnp.ones(d.shape + (1,), jnp.float32)                               # (S,S,S,1)

    # weight = emb @ self.weight ; kernel = tp.right(sh, weight)
    w = jnp.einsum("xyzr,rw->xyzw", emb, tp_weight)                          # (S,S,S, Cin*Cout)
    w = w.reshape(size, size, size, c_in, c_out)
    alpha = 1.0 / np.sqrt(c_in * 1)                                          # e3nn path normalization
    kernel_xyzio = (alpha * sh[..., :, None] * w).astype(jnp.float32)        # (S,S,S,Cin,Cout)

    w_sc_scaled = (w_sc / np.sqrt(c_in)).astype(jnp.float32)                 # e3nn Linear normalization

    # Constant-fold the skip connection (applied to the centre/cropped voxels) into the
    # centre tap of the conv kernel, then flatten to (C_out, S^3*C_in), columns in
    # row-major (dx, dy, dz, c_in) order to match the in-kernel im2col packing.
    folded = kernel_xyzio.at[crop, crop, crop].add(w_sc_scaled)
    k_t = folded.reshape(size * size * size * c_in, c_out).T                 # (Cout, S^3*Cin)
    return kernel_xyzio, w_sc_scaled, k_t.astype(jnp.bfloat16), crop


# ----------------------------------------------------------------------------
# Pallas kernel: im2col + single MXU contraction, lane-dense (C_out, p) output.
# ----------------------------------------------------------------------------
def _conv_kernel(x_ref, k_ref, o_ref, xs_ref, *, size, ox, oy, oz):
    # x_ref : (X, Y, Z, C_in)        channels-last input volume (batch squeezed)
    # k_ref : (C_out, S^3*C_in)      bf16, skip-connection folded into the centre tap
    # o_ref : (C_out, ox*oy*oz)      lane-dense output (p = ox*oy*oz, multiple of 128)
    # xs_ref: (ox*oy*oz, S^3*C_in)   f32 VMEM scratch holding the im2col matrix
    c_in = x_ref.shape[-1]
    p = ox * oy * oz

    # im2col: pack every shifted tap into one (p, K) matrix, K = S^3*C_in.
    # Each tap is a layout-preserving (ox,oy,oz,C_in)->(p,C_in) reshape written to a
    # static lane-slice of the scratch.
    for dx in range(size):
        for dy in range(size):
            for dz in range(size):
                tap = (dx * size + dy) * size + dz
                xs_ref[:, tap * c_in:(tap + 1) * c_in] = (
                    x_ref[dx:dx + ox, dy:dy + oy, dz:dz + oz, :].reshape(p, c_in))

    # One MXU contraction with K = S^3*C_in instead of 27 K=C_in dots.
    # (C_out, K) x (p, K)^T -> (C_out, p): bf16 operands, f32 accumulation, and the
    # result is already channel-major so the store is a full, unmasked lane-dense write.
    xs = xs_ref[...].astype(jnp.bfloat16)
    acc = lax.dot_general(k_ref[...], xs,
                          dimension_numbers=(((1,), (1,)), ((), ())),
                          preferred_element_type=jnp.float32)                # (C_out, p)
    o_ref[...] = acc.astype(o_ref.dtype)


def convolution_forward(x_nc, k_t, crop, size):
    """x_nc: (B, C_in, X, Y, Z) float32 -> (B, C_out, X-2c, Y-2c, Z-2c)."""
    B, c_in, X, Y, Z = x_nc.shape
    c_out, K = k_t.shape
    ox, oy, oz = X - 2 * crop, Y - 2 * crop, Z - 2 * crop
    p = ox * oy * oz

    # channels-last so every im2col tap is a cheap (p, C_in) slice+reshape in-kernel.
    x_cl = jnp.transpose(x_nc, (0, 2, 3, 4, 1))                              # (B, X, Y, Z, C_in)

    kern = functools.partial(_conv_kernel, size=size, ox=ox, oy=oy, oz=oz)
    out = pl.pallas_call(
        kern,
        out_shape=jax.ShapeDtypeStruct((B, c_out, p), x_nc.dtype),
        grid_spec=pltpu.PrefetchScalarGridSpec(
            num_scalar_prefetch=0,
            grid=(B,),   # parallel over batch -> shards across v7x's two TensorCores
            in_specs=[
                pl.BlockSpec((None, X, Y, Z, c_in), lambda b: (b, 0, 0, 0, 0)),
                # constant block index -> weight stays resident in VMEM, no per-step re-DMA
                pl.BlockSpec((c_out, K), lambda b: (0, 0)),
            ],
            out_specs=pl.BlockSpec((None, c_out, p), lambda b: (b, 0, 0)),
            scratch_shapes=[pltpu.VMEM((p, K), jnp.float32)],
        ),
        compiler_params=pltpu.CompilerParams(dimension_semantics=("parallel",)),
    )(x_cl, k_t)

    # output is already channel-major: only a reshape (no transpose / extra HBM pass).
    # TODO(synk): production-size volumes need spatial (X) tiling with a 2*crop halo so the
    # per-step block fits v7x's smaller VMEM; the demo volume fits whole per batch element.
    return out.reshape(B, c_out, ox, oy, oz)


# ----------------------------------------------------------------------------
# Pure-JAX reference (unfolded skip connection + conv, HIGHEST precision).
# ----------------------------------------------------------------------------
def reference_forward(x_nc, kernel_xyzio, w_sc_scaled, crop):
    hp = jax.lax.Precision.HIGHEST
    x_cl = jnp.transpose(x_nc, (0, 2, 3, 4, 1)).astype(jnp.float32)
    S = kernel_xyzio.shape[0]
    B, X, Y, Z, _ = x_cl.shape
    ox, oy, oz = X - 2 * crop, Y - 2 * crop, Z - 2 * crop
    sc = jnp.einsum("bxyzi,io->bxyzo",
                    x_cl[:, crop:crop + ox, crop:crop + oy, crop:crop + oz, :],
                    w_sc_scaled, precision=hp)
    conv = jnp.zeros_like(sc)
    for dx in range(S):
        for dy in range(S):
            for dz in range(S):
                conv = conv + jnp.einsum(
                    "bxyzi,io->bxyzo",
                    x_cl[:, dx:dx + ox, dy:dy + oy, dz:dz + oz, :],
                    kernel_xyzio[dx, dy, dz], precision=hp)
    return jnp.transpose(sc + conv, (0, 4, 1, 2, 3))


if __name__ == "__main__":
    B, C_IN, C_OUT = 2, 4, 8
    SIZE = 3                      # conv kernel size (= num_rbfs), crop = 1
    STEPS = (1, 1, 1)
    X = Y = Z = 10                # output spatial = 8 -> p = 512 (lane-dense)

    key = jax.random.PRNGKey(0)
    kx, ksc, ktp = jax.random.split(key, 3)

    x = jax.random.normal(kx, (B, C_IN, X, Y, Z), jnp.float32)

    # Deterministic synthetic parameters (shapes per the module's __init__):
    w_sc = jax.random.normal(ksc, (C_IN, C_OUT), jnp.float32)      # e3nn Linear weight ~ N(0,1)
    weight_numel = C_IN * 1 * C_OUT                                # single 0e x 0e -> 0e path
    std = np.sqrt(2.0 / weight_numel)                              # kaiming_normal_(fan_in, relu)
    tp_weight = std * jax.random.normal(ktp, (SIZE, weight_numel), jnp.float32)

    kernel_xyzio, w_sc_scaled, k_t, crop = build_params(
        SIZE, STEPS, C_IN, C_OUT, tp_weight, w_sc)

    out = convolution_forward(x, k_t, crop, SIZE)
    out = jax.block_until_ready(out)

    ref = reference_forward(x, kernel_xyzio, w_sc_scaled, crop)
    assert out.shape == (B, C_OUT, X - 2 * crop, Y - 2 * crop, Z - 2 * crop), out.shape
    # bf16 MXU operands vs f32-HIGHEST reference -> loose tolerance.
    assert np.allclose(np.asarray(out), np.asarray(ref), rtol=5e-2, atol=5e-2)

    # TODO(synk): general (l>0) irreps for Linear / spherical_harmonics /
    # FullyConnectedTensorProduct are not reimplemented; this instance uses scalar
    # irreps for which the collapse above is exact.
    print("KERNEL_OK")
</pallas_src>

<mosaic_0001>
module attributes {stable_mosaic.version = 11 : i64} {
  func.func @_conv_kernel(%arg0: i32, %arg1: memref<1x10x10x10x4xf32, #tpu.memory_space<vmem>>, %arg2: memref<8x108xbf16, #tpu.memory_space<vmem>>, %arg3: memref<1x8x512xf32, #tpu.memory_space<vmem>>, %arg4: memref<512x108xf32, #tpu.memory_space<vmem>>) attributes {dimension_semantics = [#tpu.dimension_semantics<parallel>], iteration_bounds = array<i64: 2>, scalar_prefetch = 0 : i64, scratch_operands = 1 : i64, tpu.core_type = #tpu.core_type<tc>, window_params = [{transform_indices = @transform_0, window_bounds = array<i64: 1, 10, 10, 10, 4>}, {pipeline_mode = #tpu.pipeline_mode<synchronous>, transform_indices = @transform_1, window_bounds = array<i64: 8, 108>}, {transform_indices = @transform_2, window_bounds = array<i64: 1, 8, 512>}]} {
    %c0 = arith.constant 0 : index
    %c0_0 = arith.constant 0 : index
    %c0_1 = arith.constant 0 : index
    %c0_2 = arith.constant 0 : index
    %c0_3 = arith.constant 0 : index
    %0 = vector.load %arg1[%c0, %c0_0, %c0_1, %c0_2, %c0_3] : memref<1x10x10x10x4xf32, #tpu.memory_space<vmem>>, vector<1x8x8x8x4xf32>
    %1 = vector.shape_cast %0 : vector<1x8x8x8x4xf32> to vector<8x8x8x4xf32>
    %2 = vector.shape_cast %1 : vector<8x8x8x4xf32> to vector<512x4xf32>
    %c0_4 = arith.constant 0 : index
    %c0_5 = arith.constant 0 : index
    %3 = vector.load %arg4[%c0_4, %c0_5] : memref<512x108xf32, #tpu.memory_space<vmem>>, vector<512x4xf32>
    tpu.vector_store %arg4[%c0_4, %c0_5], %2 {strides = array<i32>} : memref<512x108xf32, #tpu.memory_space<vmem>>, vector<512x4xf32>,
    %c0_6 = arith.constant 0 : index
    %c0_7 = arith.constant 0 : index
    %c0_8 = arith.constant 0 : index
    %c1 = arith.constant 1 : index
    %c0_9 = arith.constant 0 : index
    %4 = vector.load %arg1[%c0_6, %c0_7, %c0_8, %c1, %c0_9] : memref<1x10x10x10x4xf32, #tpu.memory_space<vmem>>, vector<1x8x8x8x4xf32>
    %5 = vector.shape_cast %4 : vector<1x8x8x8x4xf32> to vector<8x8x8x4xf32>
    %6 = vector.shape_cast %5 : vector<8x8x8x4xf32> to vector<512x4xf32>
    %c0_10 = arith.constant 0 : index
    %c4 = arith.constant 4 : index
    %7 = vector.load %arg4[%c0_10, %c4] : memref<512x108xf32, #tpu.memory_space<vmem>>, vector<512x4xf32>
    tpu.vector_store %arg4[%c0_10, %c4], %6 {strides = array<i32>} : memref<512x108xf32, #tpu.memory_space<vmem>>, vector<512x4xf32>,
    %c0_11 = arith.constant 0 : index
    %c0_12 = arith.constant 0 : index
    %c0_13 = arith.constant 0 : index
    %c2 = arith.constant 2 : index
    %c0_14 = arith.constant 0 : index
    %8 = vector.load %arg1[%c0_11, %c0_12, %c0_13, %c2, %c0_14] : memref<1x10x10x10x4xf32, #tpu.memory_space<vmem>>, vector<1x8x8x8x4xf32>
    %9 = vector.shape_cast %8 : vector<1x8x8x8x4xf32> to vector<8x8x8x4xf32>
    %10 = vector.shape_cast %9 : vector<8x8x8x4xf32> to vector<512x4xf32>
    %c0_15 = arith.constant 0 : index
    %c8 = arith.constant 8 : index
    %11 = vector.load %arg4[%c0_15, %c8] : memref<512x108xf32, #tpu.memory_space<vmem>>, vector<512x4xf32>
    tpu.vector_store %arg4[%c0_15, %c8], %10 {strides = array<i32>} : memref<512x108xf32, #tpu.memory_space<vmem>>, vector<512x4xf32>,
    %c0_16 = arith.constant 0 : index
    %c0_17 = arith.constant 0 : index
    %c1_18 = arith.constant 1 : index
    %c0_19 = arith.constant 0 : index
    %c0_20 = arith.constant 0 : index
    %12 = vector.load %arg1[%c0_16, %c0_17, %c1_18, %c0_19, %c0_20] : memref<1x10x10x10x4xf32, #tpu.memory_space<vmem>>, vector<1x8x8x8x4xf32>
    %13 = vector.shape_cast %12 : vector<1x8x8x8x4xf32> to vector<8x8x8x4xf32>
    %14 = vector.shape_cast %13 : vector<8x8x8x4xf32> to vector<512x4xf32>
    %c0_21 = arith.constant 0 : index
    %c12 = arith.constant 12 : index
    %15 = vector.load %arg4[%c0_21, %c12] : memref<512x108xf32, #tpu.memory_space<vmem>>, vector<512x4xf32>
    tpu.vector_store %arg4[%c0_21, %c12], %14 {strides = array<i32>} : memref<512x108xf32, #tpu.memory_space<vmem>>, vector<512x4xf32>,
    %c0_22 = arith.constant 0 : index
    %c0_23 = arith.constant 0 : index
    %c1_24 = arith.constant 1 : index
    %c1_25 = arith.constant 1 : index
    %c0_26 = arith.constant 0 : index
    %16 = vector.load %arg1[%c0_22, %c0_23, %c1_24, %c1_25, %c0_26] : memref<1x10x10x10x4xf32, #tpu.memory_space<vmem>>, vector<1x8x8x8x4xf32>
    %17 = vector.shape_cast %16 : vector<1x8x8x8x4xf32> to vector<8x8x8x4xf32>
    %18 = vector.shape_cast %17 : vector<8x8x8x4xf32> to vector<512x4xf32>
    %c0_27 = arith.constant 0 : index
    %c16 = arith.constant 16 : index
    %19 = vector.load %arg4[%c0_27, %c16] : memref<512x108xf32, #tpu.memory_space<vmem>>, vector<512x4xf32>
    tpu.vector_store %arg4[%c0_27, %c16], %18 {strides = array<i32>} : memref<512x108xf32, #tpu.memory_space<vmem>>, vector<512x4xf32>,
    %c0_28 = arith.constant 0 : index
    %c0_29 = arith.constant 0 : index
    %c1_30 = arith.constant 1 : index
    %c2_31 = arith.constant 2 : index
    %c0_32 = arith.constant 0 : index
    %20 = vector.load %arg1[%c0_28, %c0_29, %c1_30, %c2_31, %c0_32] : memref<1x10x10x10x4xf32, #tpu.memory_space<vmem>>, vector<1x8x8x8x4xf32>
    %21 = vector.shape_cast %20 : vector<1x8x8x8x4xf32> to vector<8x8x8x4xf32>
    %22 = vector.shape_cast %21 : vector<8x8x8x4xf32> to vector<512x4xf32>
    %c0_33 = arith.constant 0 : index
    %c20 = arith.constant 20 : index
    %23 = vector.load %arg4[%c0_33, %c20] : memref<512x108xf32, #tpu.memory_space<vmem>>, vector<512x4xf32>
    tpu.vector_store %arg4[%c0_33, %c20], %22 {strides = array<i32>} : memref<512x108xf32, #tpu.memory_space<vmem>>, vector<512x4xf32>,
    %c0_34 = arith.constant 0 : index
    %c0_35 = arith.constant 0 : index
    %c2_36 = arith.constant 2 : index
    %c0_37 = arith.constant 0 : index
    %c0_38 = arith.constant 0 : index
    %24 = vector.load %arg1[%c0_34, %c0_35, %c2_36, %c0_37, %c0_38] : memref<1x10x10x10x4xf32, #tpu.memory_space<vmem>>, vector<1x8x8x8x4xf32>
    %25 = vector.shape_cast %24 : vector<1x8x8x8x4xf32> to vector<8x8x8x4xf32>
    %26 = vector.shape_cast %25 : vector<8x8x8x4xf32> to vector<512x4xf32>
    %c0_39 = arith.constant 0 : index
    %c24 = arith.constant 24 : index
    %27 = vector.load %arg4[%c0_39, %c24] : memref<512x108xf32, #tpu.memory_space<vmem>>, vector<512x4xf32>
    tpu.vector_store %arg4[%c0_39, %c24], %26 {strides = array<i32>} : memref<512x108xf32, #tpu.memory_space<vmem>>, vector<512x4xf32>,
    %c0_40 = arith.constant 0 : index
    %c0_41 = arith.constant 0 : index
    %c2_42 = arith.constant 2 : index
    %c1_43 = arith.constant 1 : index
    %c0_44 = arith.constant 0 : index
    %28 = vector.load %arg1[%c0_40, %c0_41, %c2_42, %c1_43, %c0_44] : memref<1x10x10x10x4xf32, #tpu.memory_space<vmem>>, vector<1x8x8x8x4xf32>
    %29 = vector.shape_cast %28 : vector<1x8x8x8x4xf32> to vector<8x8x8x4xf32>
    %30 = vector.shape_cast %29 : vector<8x8x8x4xf32> to vector<512x4xf32>
    %c0_45 = arith.constant 0 : index
    %c28 = arith.constant 28 : index
    %31 = vector.load %arg4[%c0_45, %c28] : memref<512x108xf32, #tpu.memory_space<vmem>>, vector<512x4xf32>
    tpu.vector_store %arg4[%c0_45, %c28], %30 {strides = array<i32>} : memref<512x108xf32, #tpu.memory_space<vmem>>, vector<512x4xf32>,
    %c0_46 = arith.constant 0 : index
    %c0_47 = arith.constant 0 : index
    %c2_48 = arith.constant 2 : index
    %c2_49 = arith.constant 2 : index
    %c0_50 = arith.constant 0 : index
    %32 = vector.load %arg1[%c0_46, %c0_47, %c2_48, %c2_49, %c0_50] : memref<1x10x10x10x4xf32, #tpu.memory_space<vmem>>, vector<1x8x8x8x4xf32>
    %33 = vector.shape_cast %32 : vector<1x8x8x8x4xf32> to vector<8x8x8x4xf32>
    %34 = vector.shape_cast %33 : vector<8x8x8x4xf32> to vector<512x4xf32>
    %c0_51 = arith.constant 0 : index
    %c32 = arith.constant 32 : index
    %35 = vector.load %arg4[%c0_51, %c32] : memref<512x108xf32, #tpu.memory_space<vmem>>, vector<512x4xf32>
    tpu.vector_store %arg4[%c0_51, %c32], %34 {strides = array<i32>} : memref<512x108xf32, #tpu.memory_space<vmem>>, vector<512x4xf32>,
    %c0_52 = arith.constant 0 : index
    %c1_53 = arith.constant 1 : index
    %c0_54 = arith.constant 0 : index
    %c0_55 = arith.constant 0 : index
    %c0_56 = arith.constant 0 : index
    %36 = vector.load %arg1[%c0_52, %c1_53, %c0_54, %c0_55, %c0_56] : memref<1x10x10x10x4xf32, #tpu.memory_space<vmem>>, vector<1x8x8x8x4xf32>
    %37 = vector.shape_cast %36 : vector<1x8x8x8x4xf32> to vector<8x8x8x4xf32>
    %38 = vector.shape_cast %37 : vector<8x8x8x4xf32> to vector<512x4xf32>
    %c0_57 = arith.constant 0 : index
    %c36 = arith.constant 36 : index
    %39 = vector.load %arg4[%c0_57, %c36] : memref<512x108xf32, #tpu.memory_space<vmem>>, vector<512x4xf32>
    tpu.vector_store %arg4[%c0_57, %c36], %38 {strides = array<i32>} : memref<512x108xf32, #tpu.memory_space<vmem>>, vector<512x4xf32>,
    %c0_58 = arith.constant 0 : index
    %c1_59 = arith.constant 1 : index
    %c0_60 = arith.constant 0 : index
    %c1_61 = arith.constant 1 : index
    %c0_62 = arith.constant 0 : index
    %40 = vector.load %arg1[%c0_58, %c1_59, %c0_60, %c1_61, %c0_62] : memref<1x10x10x10x4xf32, #tpu.memory_space<vmem>>, vector<1x8x8x8x4xf32>
    %41 = vector.shape_cast %40 : vector<1x8x8x8x4xf32> to vector<8x8x8x4xf32>
    %42 = vector.shape_cast %41 : vector<8x8x8x4xf32> to vector<512x4xf32>
    %c0_63 = arith.constant 0 : index
    %c40 = arith.constant 40 : index
    %43 = vector.load %arg4[%c0_63, %c40] : memref<512x108xf32, #tpu.memory_space<vmem>>, vector<512x4xf32>
    tpu.vector_store %arg4[%c0_63, %c40], %42 {strides = array<i32>} : memref<512x108xf32, #tpu.memory_space<vmem>>, vector<512x4xf32>,
    %c0_64 = arith.constant 0 : index
    %c1_65 = arith.constant 1 : index
    %c0_66 = arith.constant 0 : index
    %c2_67 = arith.constant 2 : index
    %c0_68 = arith.constant 0 : index
    %44 = vector.load %arg1[%c0_64, %c1_65, %c0_66, %c2_67, %c0_68] : memref<1x10x10x10x4xf32, #tpu.memory_space<vmem>>, vector<1x8x8x8x4xf32>
    %45 = vector.shape_cast %44 : vector<1x8x8x8x4xf32> to vector<8x8x8x4xf32>
    %46 = vector.shape_cast %45 : vector<8x8x8x4xf32> to vector<512x4xf32>
    %c0_69 = arith.constant 0 : index
    %c44 = arith.constant 44 : index
    %47 = vector.load %arg4[%c0_69, %c44] : memref<512x108xf32, #tpu.memory_space<vmem>>, vector<512x4xf32>
    tpu.vector_store %arg4[%c0_69, %c44], %46 {strides = array<i32>} : memref<512x108xf32, #tpu.memory_space<vmem>>, vector<512x4xf32>,
    %c0_70 = arith.constant 0 : index
    %c1_71 = arith.constant 1 : index
    %c1_72 = arith.constant 1 : index
    %c0_73 = arith.constant 0 : index
    %c0_74 = arith.constant 0 : index
    %48 = vector.load %arg1[%c0_70, %c1_71, %c1_72, %c0_73, %c0_74] : memref<1x10x10x10x4xf32, #tpu.memory_space<vmem>>, vector<1x8x8x8x4xf32>
    %49 = vector.shape_cast %48 : vector<1x8x8x8x4xf32> to vector<8x8x8x4xf32>
    %50 = vector.shape_cast %49 : vector<8x8x8x4xf32> to vector<512x4xf32>
    %c0_75 = arith.constant 0 : index
    %c48 = arith.constant 48 : index
    %51 = vector.load %arg4[%c0_75, %c48] : memref<512x108xf32, #tpu.memory_space<vmem>>, vector<512x4xf32>
    tpu.vector_store %arg4[%c0_75, %c48], %50 {strides = array<i32>} : memref<512x108xf32, #tpu.memory_space<vmem>>, vector<512x4xf32>,
    %c0_76 = arith.constant 0 : index
    %c1_77 = arith.constant 1 : index
    %c1_78 = arith.constant 1 : index
    %c1_79 = arith.constant 1 : index
    %c0_80 = arith.constant 0 : index
    %52 = vector.load %arg1[%c0_76, %c1_77, %c1_78, %c1_79, %c0_80] : memref<1x10x10x10x4xf32, #tpu.memory_space<vmem>>, vector<1x8x8x8x4xf32>
    %53 = vector.shape_cast %52 : vector<1x8x8x8x4xf32> to vector<8x8x8x4xf32>
    %54 = vector.shape_cast %53 : vector<8x8x8x4xf32> to vector<512x4xf32>
    %c0_81 = arith.constant 0 : index
    %c52 = arith.constant 52 : index
    %55 = vector.load %arg4[%c0_81, %c52] : memref<512x108xf32, #tpu.memory_space<vmem>>, vector<512x4xf32>
    tpu.vector_store %arg4[%c0_81, %c52], %54 {strides = array<i32>} : memref<512x108xf32, #tpu.memory_space<vmem>>, vector<512x4xf32>,
    %c0_82 = arith.constant 0 : index
    %c1_83 = arith.constant 1 : index
    %c1_84 = arith.constant 1 : index
    %c2_85 = arith.constant 2 : index
    %c0_86 = arith.constant 0 : index
    %56 = vector.load %arg1[%c0_82, %c1_83, %c1_84, %c2_85, %c0_86] : memref<1x10x10x10x4xf32, #tpu.memory_space<vmem>>, vector<1x8x8x8x4xf32>
    %57 = vector.shape_cast %56 : vector<1x8x8x8x4xf32> to vector<8x8x8x4xf32>
    %58 = vector.shape_cast %57 : vector<8x8x8x4xf32> to vector<512x4xf32>
    %c0_87 = arith.constant 0 : index
    %c56 = arith.constant 56 : index
    %59 = vector.load %arg4[%c0_87, %c56] : memref<512x108xf32, #tpu.memory_space<vmem>>, vector<512x4xf32>
    tpu.vector_store %arg4[%c0_87, %c56], %58 {strides = array<i32>} : memref<512x108xf32, #tpu.memory_space<vmem>>, vector<512x4xf32>,
    %c0_88 = arith.constant 0 : index
    %c1_89 = arith.constant 1 : index
    %c2_90 = arith.constant 2 : index
    %c0_91 = arith.constant 0 : index
    %c0_92 = arith.constant 0 : index
    %60 = vector.load %arg1[%c0_88, %c1_89, %c2_90, %c0_91, %c0_92] : memref<1x10x10x10x4xf32, #tpu.memory_space<vmem>>, vector<1x8x8x8x4xf32>
    %61 = vector.shape_cast %60 : vector<1x8x8x8x4xf32> to vector<8x8x8x4xf32>
    %62 = vector.shape_cast %61 : vector<8x8x8x4xf32> to vector<512x4xf32>
    %c0_93 = arith.constant 0 : index
    %c60 = arith.constant 60 : index
    %63 = vector.load %arg4[%c0_93, %c60] : memref<512x108xf32, #tpu.memory_space<vmem>>, vector<512x4xf32>
    tpu.vector_store %arg4[%c0_93, %c60], %62 {strides = array<i32>} : memref<512x108xf32, #tpu.memory_space<vmem>>, vector<512x4xf32>,
    %c0_94 = arith.constant 0 : index
    %c1_95 = arith.constant 1 : index
    %c2_96 = arith.constant 2 : index
    %c1_97 = arith.constant 1 : index
    %c0_98 = arith.constant 0 : index
    %64 = vector.load %arg1[%c0_94, %c1_95, %c2_96, %c1_97, %c0_98] : memref<1x10x10x10x4xf32, #tpu.memory_space<vmem>>, vector<1x8x8x8x4xf32>
    %65 = vector.shape_cast %64 : vector<1x8x8x8x4xf32> to vector<8x8x8x4xf32>
    %66 = vector.shape_cast %65 : vector<8x8x8x4xf32> to vector<512x4xf32>
    %c0_99 = arith.constant 0 : index
    %c64 = arith.constant 64 : index
    %67 = vector.load %arg4[%c0_99, %c64] : memref<512x108xf32, #tpu.memory_space<vmem>>, vector<512x4xf32>
    tpu.vector_store %arg4[%c0_99, %c64], %66 {strides = array<i32>} : memref<512x108xf32, #tpu.memory_space<vmem>>, vector<512x4xf32>,
    %c0_100 = arith.constant 0 : index
    %c1_101 = arith.constant 1 : index
    %c2_102 = arith.constant 2 : index
    %c2_103 = arith.constant 2 : index
    %c0_104 = arith.constant 0 : index
    %68 = vector.load %arg1[%c0_100, %c1_101, %c2_102, %c2_103, %c0_104] : memref<1x10x10x10x4xf32, #tpu.memory_space<vmem>>, vector<1x8x8x8x4xf32>
    %69 = vector.shape_cast %68 : vector<1x8x8x8x4xf32> to vector<8x8x8x4xf32>
    %70 = vector.shape_cast %69 : vector<8x8x8x4xf32> to vector<512x4xf32>
    %c0_105 = arith.constant 0 : index
    %c68 = arith.constant 68 : index
    %71 = vector.load %arg4[%c0_105, %c68] : memref<512x108xf32, #tpu.memory_space<vmem>>, vector<512x4xf32>
    tpu.vector_store %arg4[%c0_105, %c68], %70 {strides = array<i32>} : memref<512x108xf32, #tpu.memory_space<vmem>>, vector<512x4xf32>,
    %c0_106 = arith.constant 0 : index
    %c2_107 = arith.constant 2 : index
    %c0_108 = arith.constant 0 : index
    %c0_109 = arith.constant 0 : index
    %c0_110 = arith.constant 0 : index
    %72 = vector.load %arg1[%c0_106, %c2_107, %c0_108, %c0_109, %c0_110] : memref<1x10x10x10x4xf32, #tpu.memory_space<vmem>>, vector<1x8x8x8x4xf32>
    %73 = vector.shape_cast %72 : vector<1x8x8x8x4xf32> to vector<8x8x8x4xf32>
    %74 = vector.shape_cast %73 : vector<8x8x8x4xf32> to vector<512x4xf32>
    %c0_111 = arith.constant 0 : index
    %c72 = arith.constant 72 : index
    %75 = vector.load %arg4[%c0_111, %c72] : memref<512x108xf32, #tpu.memory_space<vmem>>, vector<512x4xf32>
    tpu.vector_store %arg4[%c0_111, %c72], %74 {strides = array<i32>} : memref<512x108xf32, #tpu.memory_space<vmem>>, vector<512x4xf32>,
    %c0_112 = arith.constant 0 : index
    %c2_113 = arith.constant 2 : index
    %c0_114 = arith.constant 0 : index
    %c1_115 = arith.constant 1 : index
    %c0_116 = arith.constant 0 : index
    %76 = vector.load %arg1[%c0_112, %c2_113, %c0_114, %c1_115, %c0_116] : memref<1x10x10x10x4xf32, #tpu.memory_space<vmem>>, vector<1x8x8x8x4xf32>
    %77 = vector.shape_cast %76 : vector<1x8x8x8x4xf32> to vector<8x8x8x4xf32>
    %78 = vector.shape_cast %77 : vector<8x8x8x4xf32> to vector<512x4xf32>
    %c0_117 = arith.constant 0 : index
    %c76 = arith.constant 76 : index
    %79 = vector.load %arg4[%c0_117, %c76] : memref<512x108xf32, #tpu.memory_space<vmem>>, vector<512x4xf32>
    tpu.vector_store %arg4[%c0_117, %c76], %78 {strides = array<i32>} : memref<512x108xf32, #tpu.memory_space<vmem>>, vector<512x4xf32>,
    %c0_118 = arith.constant 0 : index
    %c2_119 = arith.constant 2 : index
    %c0_120 = arith.constant 0 : index
    %c2_121 = arith.constant 2 : index
    %c0_122 = arith.constant 0 : index
    %80 = vector.load %arg1[%c0_118, %c2_119, %c0_120, %c2_121, %c0_122] : memref<1x10x10x10x4xf32, #tpu.memory_space<vmem>>, vector<1x8x8x8x4xf32>
    %81 = vector.shape_cast %80 : vector<1x8x8x8x4xf32> to vector<8x8x8x4xf32>
    %82 = vector.shape_cast %81 : vector<8x8x8x4xf32> to vector<512x4xf32>
    %c0_123 = arith.constant 0 : index
    %c80 = arith.constant 80 : index
    %83 = vector.load %arg4[%c0_123, %c80] : memref<512x108xf32, #tpu.memory_space<vmem>>, vector<512x4xf32>
    tpu.vector_store %arg4[%c0_123, %c80], %82 {strides = array<i32>} : memref<512x108xf32, #tpu.memory_space<vmem>>, vector<512x4xf32>,
    %c0_124 = arith.constant 0 : index
    %c2_125 = arith.constant 2 : index
    %c1_126 = arith.constant 1 : index
    %c0_127 = arith.constant 0 : index
    %c0_128 = arith.constant 0 : index
    %84 = vector.load %arg1[%c0_124, %c2_125, %c1_126, %c0_127, %c0_128] : memref<1x10x10x10x4xf32, #tpu.memory_space<vmem>>, vector<1x8x8x8x4xf32>
    %85 = vector.shape_cast %84 : vector<1x8x8x8x4xf32> to vector<8x8x8x4xf32>
    %86 = vector.shape_cast %85 : vector<8x8x8x4xf32> to vector<512x4xf32>
    %c0_129 = arith.constant 0 : index
    %c84 = arith.constant 84 : index
    %87 = vector.load %arg4[%c0_129, %c84] : memref<512x108xf32, #tpu.memory_space<vmem>>, vector<512x4xf32>
    tpu.vector_store %arg4[%c0_129, %c84], %86 {strides = array<i32>} : memref<512x108xf32, #tpu.memory_space<vmem>>, vector<512x4xf32>,
    %c0_130 = arith.constant 0 : index
    %c2_131 = arith.constant 2 : index
    %c1_132 = arith.constant 1 : index
    %c1_133 = arith.constant 1 : index
    %c0_134 = arith.constant 0 : index
    %88 = vector.load %arg1[%c0_130, %c2_131, %c1_132, %c1_133, %c0_134] : memref<1x10x10x10x4xf32, #tpu.memory_space<vmem>>, vector<1x8x8x8x4xf32>
    %89 = vector.shape_cast %88 : vector<1x8x8x8x4xf32> to vector<8x8x8x4xf32>
    %90 = vector.shape_cast %89 : vector<8x8x8x4xf32> to vector<512x4xf32>
    %c0_135 = arith.constant 0 : index
    %c88 = arith.constant 88 : index
    %91 = vector.load %arg4[%c0_135, %c88] : memref<512x108xf32, #tpu.memory_space<vmem>>, vector<512x4xf32>
    tpu.vector_store %arg4[%c0_135, %c88], %90 {strides = array<i32>} : memref<512x108xf32, #tpu.memory_space<vmem>>, vector<512x4xf32>,
    %c0_136 = arith.constant 0 : index
    %c2_137 = arith.constant 2 : index
    %c1_138 = arith.constant 1 : index
    %c2_139 = arith.constant 2 : index
    %c0_140 = arith.constant 0 : index
    %92 = vector.load %arg1[%c0_136, %c2_137, %c1_138, %c2_139, %c0_140] : memref<1x10x10x10x4xf32, #tpu.memory_space<vmem>>, vector<1x8x8x8x4xf32>
    %93 = vector.shape_cast %92 : vector<1x8x8x8x4xf32> to vector<8x8x8x4xf32>
    %94 = vector.shape_cast %93 : vector<8x8x8x4xf32> to vector<512x4xf32>
    %c0_141 = arith.constant 0 : index
    %c92 = arith.constant 92 : index
    %95 = vector.load %arg4[%c0_141, %c92] : memref<512x108xf32, #tpu.memory_space<vmem>>, vector<512x4xf32>
    tpu.vector_store %arg4[%c0_141, %c92], %94 {strides = array<i32>} : memref<512x108xf32, #tpu.memory_space<vmem>>, vector<512x4xf32>,
    %c0_142 = arith.constant 0 : index
    %c2_143 = arith.constant 2 : index
    %c2_144 = arith.constant 2 : index
    %c0_145 = arith.constant 0 : index
    %c0_146 = arith.constant 0 : index
    %96 = vector.load %arg1[%c0_142, %c2_143, %c2_144, %c0_145, %c0_146] : memref<1x10x10x10x4xf32, #tpu.memory_space<vmem>>, vector<1x8x8x8x4xf32>
    %97 = vector.shape_cast %96 : vector<1x8x8x8x4xf32> to vector<8x8x8x4xf32>
    %98 = vector.shape_cast %97 : vector<8x8x8x4xf32> to vector<512x4xf32>
    %c0_147 = arith.constant 0 : index
    %c96 = arith.constant 96 : index
    %99 = vector.load %arg4[%c0_147, %c96] : memref<512x108xf32, #tpu.memory_space<vmem>>, vector<512x4xf32>
    tpu.vector_store %arg4[%c0_147, %c96], %98 {strides = array<i32>} : memref<512x108xf32, #tpu.memory_space<vmem>>, vector<512x4xf32>,
    %c0_148 = arith.constant 0 : index
    %c2_149 = arith.constant 2 : index
    %c2_150 = arith.constant 2 : index
    %c1_151 = arith.constant 1 : index
    %c0_152 = arith.constant 0 : index
    %100 = vector.load %arg1[%c0_148, %c2_149, %c2_150, %c1_151, %c0_152] : memref<1x10x10x10x4xf32, #tpu.memory_space<vmem>>, vector<1x8x8x8x4xf32>
    %101 = vector.shape_cast %100 : vector<1x8x8x8x4xf32> to vector<8x8x8x4xf32>
    %102 = vector.shape_cast %101 : vector<8x8x8x4xf32> to vector<512x4xf32>
    %c0_153 = arith.constant 0 : index
    %c100 = arith.constant 100 : index
    %103 = vector.load %arg4[%c0_153, %c100] : memref<512x108xf32, #tpu.memory_space<vmem>>, vector<512x4xf32>
    tpu.vector_store %arg4[%c0_153, %c100], %102 {strides = array<i32>} : memref<512x108xf32, #tpu.memory_space<vmem>>, vector<512x4xf32>,
    %c0_154 = arith.constant 0 : index
    %c2_155 = arith.constant 2 : index
    %c2_156 = arith.constant 2 : index
    %c2_157 = arith.constant 2 : index
    %c0_158 = arith.constant 0 : index
    %104 = vector.load %arg1[%c0_154, %c2_155, %c2_156, %c2_157, %c0_158] : memref<1x10x10x10x4xf32, #tpu.memory_space<vmem>>, vector<1x8x8x8x4xf32>
    %105 = vector.shape_cast %104 : vector<1x8x8x8x4xf32> to vector<8x8x8x4xf32>
    %106 = vector.shape_cast %105 : vector<8x8x8x4xf32> to vector<512x4xf32>
    %c0_159 = arith.constant 0 : index
    %c104 = arith.constant 104 : index
    %107 = vector.load %arg4[%c0_159, %c104] : memref<512x108xf32, #tpu.memory_space<vmem>>, vector<512x4xf32>
    tpu.vector_store %arg4[%c0_159, %c104], %106 {strides = array<i32>} : memref<512x108xf32, #tpu.memory_space<vmem>>, vector<512x4xf32>,
    %c0_160 = arith.constant 0 : index
    %c0_161 = arith.constant 0 : index
    %108 = vector.load %arg4[%c0_160, %c0_161] : memref<512x108xf32, #tpu.memory_space<vmem>>, vector<512x108xf32>
    %109 = arith.truncf %108 : vector<512x108xf32> to vector<512x108xbf16>
    %c0_162 = arith.constant 0 : index
    %c0_163 = arith.constant 0 : index
    %110 = vector.load %arg2[%c0_162, %c0_163] : memref<8x108xbf16, #tpu.memory_space<vmem>>, vector<8x108xbf16>
    %cst = arith.constant dense<0.000000e+00> : vector<8x512xf32>
    %111 = tpu.matmul %110, %109, %cst {dimension_numbers = #tpu.dot_dimension_numbers<[1], [1], [0], [0], [0, 0, 1, 0], [], []>} : vector<8x108xbf16>, vector<512x108xbf16>, vector<8x512xf32> -> vector<8x512xf32>
    %c0_164 = arith.constant 0 : index
    %c0_165 = arith.constant 0 : index
    %c0_166 = arith.constant 0 : index
    %112 = vector.load %arg3[%c0_164, %c0_165, %c0_166] : memref<1x8x512xf32, #tpu.memory_space<vmem>>, vector<1x8x512xf32>
    %113 = vector.shape_cast %112 : vector<1x8x512xf32> to vector<8x512xf32>
    %114 = vector.shape_cast %111 : vector<8x512xf32> to vector<1x8x512xf32>
    tpu.vector_store %arg3[%c0_164, %c0_165, %c0_166], %114 {strides = array<i32>} : memref<1x8x512xf32, #tpu.memory_space<vmem>>, vector<1x8x512xf32>,
    return
  }
  func.func @transform_0(%arg0: i32) -> (i32, i32, i32, i32, i32) {
    %c0_i32 = arith.constant 0 : i32
    %c0_i32_0 = arith.constant 0 : i32
    %c0_i32_1 = arith.constant 0 : i32
    %c0_i32_2 = arith.constant 0 : i32
    %c0_i32_3 = arith.constant 0 : i32
    return %arg0, %c0_i32, %c0_i32_0, %c0_i32_1, %c0_i32_2 : i32, i32, i32, i32, i32
  }
  func.func @transform_1(%arg0: i32) -> (i32, i32) {
    %c0_i32 = arith.constant 0 : i32
    %c0_i32_0 = arith.constant 0 : i32
    %c0_i32_1 = arith.constant 0 : i32
    return %c0_i32, %c0_i32_0 : i32, i32
  }
  func.func @transform_2(%arg0: i32) -> (i32, i32, i32) {
    %c0_i32 = arith.constant 0 : i32
    %c0_i32_0 = arith.constant 0 : i32
    %c0_i32_1 = arith.constant 0 : i32
    return %arg0, %c0_i32, %c0_i32_0 : i32, i32, i32
  }
}

</mosaic_0001>

<llo_original>
// kernel: tpu_custom_call.1
$region0: #{tpu_custom_call.1}
  #allocation0 [shape = 'u32[]', space=smem, size = 0x4, offset = 0x4, fixed_abs, tag = 'smem constant byte address 0x4 - core index']
  #allocation1 [shape = 'u32[72,128]{1,0:T(1,128)}', space=vmem, size = 0x9000, scoped, tag = 'internal scratch']
  #allocation2 [shape = 'f32[512,108]{1,0:T(8,128)}', space=vmem, size = 0x40000, scoped, tag = 'scratch operand']
  %s0 = inlined_call_operand.vmem [shape: f32[2,10,10,10,4], index: 0, kind: input, shape index: {}]
  %s1 = inlined_call_operand.vmem [shape: bf16[8,108], index: 1, kind: input, shape index: {}]
  %s2 = inlined_call_operand.hbm [shape: f32[2,8,512], index: 2, kind: output, shape index: {}]
  %s3 = sld [smem:[#allocation0]]
  $region41: #{tpu_custom_call.1} parent=0
    _
  %s5 = ssub.s32 1, %s3
  %s6 = scalar_select 0, %s5, %s3
  $region1: #{tpu_custom_call.1} parent=0
    #allocation3 [shape = 'u8[32768]{0}', space=vmem, size = 0x8000, scoped, tag = 'output window, operand 0']
    #allocation4 [shape = 's32[2]{0}', space=sflag, size = 0x8, scoped, tag = 'scoped memory for tpu_custom_call.1']
    %7 = vsyncpa [#allocation4], 0
    %s8 = scalar_lea.sflag [#allocation4], 1
    %9 = vsyncpa %s8, 0
    loop: start=0, step=1, limit=4
    $region2: #{tpu_custom_call.1} parent=1 // loop_pre_header
      _
    $region3: #{tpu_custom_call.1} parent=1 // loop_header
      %s11 = sphi 0, %s15
      %p12 = scmp.ge.s32.totalorder %s11, 4
      %s21 = sphi 0, %s23
      %s24 = sphi 0, %s21
      %s25 = sphi 0, %s24
      %s41 = sphi 0, %s25
      %s45 = sphi 0, %s45
      %s47 = sphi 0, %s45
      %s48 = sphi 0, %s47
      %s62 = sphi 0, %s48
      %s68 = sphi 0, %s70
      %s71 = sphi 0, %s68
      %s72 = sphi 0, %s71
      %s88 = sphi 0, %s72
    $region4: #{tpu_custom_call.1} parent=1 // loop_header_branch
      %14 = sbr.rel (%p12) target = $region8
    $region5: #{tpu_custom_call.1} parent=1 // loop_body
      %s16 = ssub.s32 %s11, 1
      %s17 = ssub.s32 %s11, 2
      %s18 = sadd.s32 %s11, 1
      %s19 = ssub.s32 %s11, %s18
      %p20 = scmp.eq.s32.totalorder %s19, 0
      %s22 = sadd.s32 %s21, 1
      %s23 = scalar_select %p20, %s21, %s22
      %p26 = pneg %p20
      %p27 = scmp.eq.s32.totalorder %s11, 1
      %p28 = por %p26, %p27
      %p29 = scmp.ne.s32.totalorder %s21, %s24
      %p30 = scmp.eq.s32.totalorder %s11, 0
      %p31 = por %p29, %p30
      %p32 = scmp.ne.s32.totalorder %s21, %s24
      %p33 = scmp.eq.s32.totalorder %s16, 1
      %p34 = por %p32, %p33
      %p35 = scmp.ne.s32.totalorder %s24, %s25
      %p36 = scmp.eq.s32.totalorder %s16, 0
      %p37 = por %p35, %p36
      %p38 = scmp.ne.s32.totalorder %s24, %s25
      %p39 = scmp.eq.s32.totalorder %s17, 1
      %p40 = por %p38, %p39
      %p42 = scmp.ne.s32.totalorder %s25, %s41
      %p43 = scmp.eq.s32.totalorder %s17, 0
      %p44 = por %p42, %p43
      %s46 = sadd.s32 %s45, 1
      %p49 = scmp.eq.s32.totalorder %s11, 1
      %p50 = scmp.ne.s32.totalorder %s45, %s47
      %p51 = scmp.eq.s32.totalorder %s11, 0
      %p52 = por %p50, %p51
      %p53 = scmp.ne.s32.totalorder %s45, %s47
      %p54 = scmp.eq.s32.totalorder %s16, 1
      %p55 = por %p53, %p54
      %p56 = scmp.ne.s32.totalorder %s47, %s48
      %p57 = scmp.eq.s32.totalorder %s16, 0
      %p58 = por %p56, %p57
      %p59 = scmp.ne.s32.totalorder %s47, %s48
      %p60 = scmp.eq.s32.totalorder %s17, 1
      %p61 = por %p59, %p60
      %p63 = scmp.ne.s32.totalorder %s48, %s62
      %p64 = scmp.eq.s32.totalorder %s17, 0
      %p65 = por %p63, %p64
      %s66 = ssub.s32 %s11, %s18
      %p67 = scmp.eq.s32.totalorder %s66, 0
      %s69 = sadd.s32 %s68, 1
      %s70 = scalar_select %p67, %s68, %s69
      %p73 = pneg %p67
      %p74 = scmp.eq.s32.totalorder %s11, 1
      %p75 = por %p73, %p74
      %p76 = scmp.ne.s32.totalorder %s68, %s71
      %p77 = scmp.eq.s32.totalorder %s11, 0
      %p78 = por %p76, %p77
      %p79 = scmp.ne.s32.totalorder %s68, %s71
      %p80 = scmp.eq.s32.totalorder %s16, 1
      %p81 = por %p79, %p80
      %p82 = scmp.ne.s32.totalorder %s71, %s72
      %p83 = scmp.eq.s32.totalorder %s16, 0
      %p84 = por %p82, %p83
      %p85 = scmp.ne.s32.totalorder %s71, %s72
      %p86 = scmp.eq.s32.totalorder %s17, 1
      %p87 = por %p85, %p86
      %p89 = scmp.ne.s32.totalorder %s72, %s88
      %p90 = scmp.eq.s32.totalorder %s17, 0
      %p91 = por %p89, %p90
      %p92 = scmp.le.s32.totalorder 1, %s11
      %p93 = scmp.lt.s32.totalorder %s11, 3
      %p94 = pnand %p92, %p93
      %p95 = pneg %p94
      // Predicated region
      $region9: #{tpu_custom_call.1} parent=5 // pred_check
        _
      $region10: #{tpu_custom_call.1} parent=5 // pred_check_branch
        %97 = sbr.rel (%p94) target = $region12
      $region11: #{tpu_custom_call.1} parent=5 // pred_region
        %s98 = ssub.s32 %s11, 1
        // Predicated region
        $region13: #{tpu_custom_call.1} parent=11 // pred_check
          %p99 = pneg %p58
        $region14: #{tpu_custom_call.1} parent=11 // pred_check_branch
          %101 = sbr.rel (%p99) target = $region16
        $region15: #{tpu_custom_call.1} parent=11 // pred_region
          _
        $region16: #{tpu_custom_call.1} parent=11 // pred_fallthru
          _
      $region12: #{tpu_custom_call.1} parent=5 // pred_fallthru
        _
      %p102 = scmp.lt.s32.totalorder %s11, 2
      // Predicated region
      $region17: #{tpu_custom_call.1} parent=5 // pred_check
        %p103 = pneg %p102
      $region18: #{tpu_custom_call.1} parent=5 // pred_check_branch
        %105 = sbr.rel (%p103) target = $region20
      $region19: #{tpu_custom_call.1} parent=5 // pred_region
        // Predicated region
        $region21: #{tpu_custom_call.1} parent=19 // pred_check
          %p106 = pneg %p31
        $region22: #{tpu_custom_call.1} parent=19 // pred_check_branch
          %108 = sbr.rel (%p106) target = $region24
        $region23: #{tpu_custom_call.1} parent=19 // pred_region
          %p109 = scmp.lt.s32.totalorder %s11, 1
          %s110 = scalar_select %p109, %s11, 1
          %s111 = smul.addr %s110, 200
          %s112 = smul.addr %s111, 8
          %s113 = scalar_lea.vmem %s0, %s112
        $region24: #{tpu_custom_call.1} parent=19 // pred_fallthru
          _
      $region20: #{tpu_custom_call.1} parent=5 // pred_fallthru
        _
      %p114 = scmp.le.s32.totalorder 1, %s11
      %p115 = scmp.lt.s32.totalorder %s11, 3
      %p116 = pnand %p114, %p115
      %p117 = pneg %p116
      // Predicated region
      $region25: #{tpu_custom_call.1} parent=5 // pred_check
        _
      $region26: #{tpu_custom_call.1} parent=5 // pred_check_branch
        %119 = sbr.rel (%p116) target = $region28
      $region27: #{tpu_custom_call.1} parent=5 // pred_region
        %s120 = ssub.s32 %s11, 1
        %p121 = scmp.lt.s32.totalorder %s16, 1
        %s122 = scalar_select %p121, %s16, 1
        %s123 = smul.addr %s122, 200
        %s124 = smul.addr %s123, 8
        %s125 = scalar_lea.vmem %s0, %s124
        %p126 = pneg %p37
        %p127 = pneg %p34
        %p128 = pneg %p58
        %p129 = pneg %p55
        %p130 = pneg %p84
        %p131 = pneg %p81
        %s132 = sand.u32 %s71, 1
        %s133 = scalar_lea.sflag [#allocation4], %s132
        %s134 = sand.u32 %s71, 1
        %s135 = smul.addr %s134, 32
        %s136 = scalar_lea.vmem [#allocation3], %s135
        %p137 = scmp.lt.s32.totalorder %s16, 1
        %s138 = scalar_select %p137, %s16, 1
        %s139 = smul.addr %s138, 200
        %s140 = smul.addr %s139, 8
        %s141 = scalar_lea.vmem %s0, %s140
        %v142 = vld [vmem:[%s141] sm:$0xff]
        %v143 = vld [vmem:[%s141 + $0x10] sm:$0xff]
        %v144 = vld [vmem:[%s141 + $0x20] sm:$0xff]
        %v145 = vld [vmem:[%s141 + $0x30] sm:$0xff]
        %v146 = vld [vmem:[%s141 + $0x40] sm:$0xff]
        %v147 = vld [vmem:[%s141 + $0x50] sm:$0xff]
        %v148 = vld [vmem:[%s141 + $0x60] sm:$0xff]
        %v149 = vld [vmem:[%s141 + $0x70] sm:$0xff]
        %v150 = vld [vmem:[%s141 + $0xa0] sm:$0xff]
        %v151 = vld [vmem:[%s141 + $0xb0] sm:$0xff]
        %v152 = vld [vmem:[%s141 + $0xc0] sm:$0xff]
        %v153 = vld [vmem:[%s141 + $0xd0] sm:$0xff]
        %v154 = vld [vmem:[%s141 + $0xe0] sm:$0xff]
        %v155 = vld [vmem:[%s141 + $0xf0] sm:$0xff]
        %v156 = vld [vmem:[%s141 + $0x100] sm:$0xff]
        %v157 = vld [vmem:[%s141 + $0x110] sm:$0xff]
        %v158 = vld [vmem:[%s141 + $0x140] sm:$0xff]
        %v159 = vld [vmem:[%s141 + $0x150] sm:$0xff]
        %v160 = vld [vmem:[%s141 + $0x160] sm:$0xff]
        %v161 = vld [vmem:[%s141 + $0x170] sm:$0xff]
        %v162 = vld [vmem:[%s141 + $0x180] sm:$0xff]
        %v163 = vld [vmem:[%s141 + $0x190] sm:$0xff]
        %v164 = vld [vmem:[%s141 + $0x1a0] sm:$0xff]
        %v165 = vld [vmem:[%s141 + $0x1b0] sm:$0xff]
        %v166 = vld [vmem:[%s141 + $0x1e0] sm:$0xff]
        %v167 = vld [vmem:[%s141 + $0x1f0] sm:$0xff]
        %v168 = vld [vmem:[%s141 + $0x200] sm:$0xff]
        %v169 = vld [vmem:[%s141 + $0x210] sm:$0xff]
        %v170 = vld [vmem:[%s141 + $0x220] sm:$0xff]
        %v171 = vld [vmem:[%s141 + $0x230] sm:$0xff]
        %v172 = vld [vmem:[%s141 + $0x240] sm:$0xff]
        %v173 = vld [vmem:[%s141 + $0x250] sm:$0xff]
        %v174 = vld [vmem:[%s141 + $0x280] sm:$0xff]
        %v175 = vld [vmem:[%s141 + $0x290] sm:$0xff]
        %v176 = vld [vmem:[%s141 + $0x2a0] sm:$0xff]
        %v177 = vld [vmem:[%s141 + $0x2b0] sm:$0xff]
        %v178 = vld [vmem:[%s141 + $0x2c0] sm:$0xff]
        %v179 = vld [vmem:[%s141 + $0x2d0] sm:$0xff]
        %v180 = vld [vmem:[%s141 + $0x2e0] sm:$0xff]
        %v181 = vld [vmem:[%s141 + $0x2f0] sm:$0xff]
        %v182 = vld [vmem:[%s141 + $0x320] sm:$0xff]
        %v183 = vld [vmem:[%s141 + $0x330] sm:$0xff]
        %v184 = vld [vmem:[%s141 + $0x340] sm:$0xff]
        %v185 = vld [vmem:[%s141 + $0x350] sm:$0xff]
        %v186 = vld [vmem:[%s141 + $0x360] sm:$0xff]
        %v187 = vld [vmem:[%s141 + $0x370] sm:$0xff]
        %v188 = vld [vmem:[%s141 + $0x380] sm:$0xff]
        %v189 = vld [vmem:[%s141 + $0x390] sm:$0xff]
        %v190 = vld [vmem:[%s141 + $0x3c0] sm:$0xff]
        %v191 = vld [vmem:[%s141 + $0x3d0] sm:$0xff]
        %v192 = vld [vmem:[%s141 + $0x3e0] sm:$0xff]
        %v193 = vld [vmem:[%s141 + $0x3f0] sm:$0xff]
        %v194 = vld [vmem:[%s141 + $0x400] sm:$0xff]
        %v195 = vld [vmem:[%s141 + $0x410] sm:$0xff]
        %v196 = vld [vmem:[%s141 + $0x420] sm:$0xff]
        %v197 = vld [vmem:[%s141 + $0x430] sm:$0xff]
        %v198 = vld [vmem:[%s141 + $0x460] sm:$0xff]
        %v199 = vld [vmem:[%s141 + $0x470] sm:$0xff]
        %v200 = vld [vmem:[%s141 + $0x480] sm:$0xff]
        %v201 = vld [vmem:[%s141 + $0x490] sm:$0xff]
        %v202 = vld [vmem:[%s141 + $0x4a0] sm:$0xff]
        %v203 = vld [vmem:[%s141 + $0x4b0] sm:$0xff]
        %v204 = vld [vmem:[%s141 + $0x4c0] sm:$0xff]
        %v205 = vld [vmem:[%s141 + $0x4d0] sm:$0xff]
        %vm206 = vcmask 31744
        %207 = vst.msk [vmem:[#allocation2] sm:$0xff] %vm206, %v142
        %208 = vst.msk [vmem:[#allocation2 + $0x8] sm:$0xff] %vm206, %v143
        %209 = vst.msk [vmem:[#allocation2 + $0x10] sm:$0xff] %vm206, %v144
        %210 = vst.msk [vmem:[#allocation2 + $0x18] sm:$0xff] %vm206, %v145
        %211 = vst.msk [vmem:[#allocation2 + $0x20] sm:$0xff] %vm206, %v146
        %212 = vst.msk [vmem:[#allocation2 + $0x28] sm:$0xff] %vm206, %v147
        %213 = vst.msk [vmem:[#allocation2 + $0x30] sm:$0xff] %vm206, %v148
        %214 = vst.msk [vmem:[#allocation2 + $0x38] sm:$0xff] %vm206, %v149
        %215 = vst.msk [vmem:[#allocation2 + $0x40] sm:$0xff] %vm206, %v150
        %216 = vst.msk [vmem:[#allocation2 + $0x48] sm:$0xff] %vm206, %v151
        %217 = vst.msk [vmem:[#allocation2 + $0x50] sm:$0xff] %vm206, %v152
        %218 = vst.msk [vmem:[#allocation2 + $0x58] sm:$0xff] %vm206, %v153
        %219 = vst.msk [vmem:[#allocation2 + $0x60] sm:$0xff] %vm206, %v154
        %220 = vst.msk [vmem:[#allocation2 + $0x68] sm:$0xff] %vm206, %v155
        %221 = vst.msk [vmem:[#allocation2 + $0x70] sm:$0xff] %vm206, %v156
        %222 = vst.msk [vmem:[#allocation2 + $0x78] sm:$0xff] %vm206, %v157
        %223 = vst.msk [vmem:[#allocation2 + $0x80] sm:$0xff] %vm206, %v158
        %224 = vst.msk [vmem:[#allocation2 + $0x88] sm:$0xff] %vm206, %v159
        %225 = vst.msk [vmem:[#allocation2 + $0x90] sm:$0xff] %vm206, %v160
        %226 = vst.msk [vmem:[#allocation2 + $0x98] sm:$0xff] %vm206, %v161
        %227 = vst.msk [vmem:[#allocation2 + $0xa0] sm:$0xff] %vm206, %v162
        %228 = vst.msk [vmem:[#allocation2 + $0xa8] sm:$0xff] %vm206, %v163
        %229 = vst.msk [vmem:[#allocation2 + $0xb0] sm:$0xff] %vm206, %v164
        %230 = vst.msk [vmem:[#allocation2 + $0xb8] sm:$0xff] %vm206, %v165
        %231 = vst.msk [vmem:[#allocation2 + $0xc0] sm:$0xff] %vm206, %v166
        %232 = vst.msk [vmem:[#allocation2 + $0xc8] sm:$0xff] %vm206, %v167
        %233 = vst.msk [vmem:[#allocation2 + $0xd0] sm:$0xff] %vm206, %v168
        %234 = vst.msk [vmem:[#allocation2 + $0xd8] sm:$0xff] %vm206, %v169
        %235 = vst.msk [vmem:[#allocation2 + $0xe0] sm:$0xff] %vm206, %v170
        %236 = vst.msk [vmem:[#allocation2 + $0xe8] sm:$0xff] %vm206, %v171
        %237 = vst.msk [vmem:[#allocation2 + $0xf0] sm:$0xff] %vm206, %v172
        %238 = vst.msk [vmem:[#allocation2 + $0xf8] sm:$0xff] %vm206, %v173
        %239 = vst.msk [vmem:[#allocation2 + $0x100] sm:$0xff] %vm206, %v174
        %240 = vst.msk [vmem:[#allocation2 + $0x108] sm:$0xff] %vm206, %v175
        %241 = vst.msk [vmem:[#allocation2 + $0x110] sm:$0xff] %vm206, %v176
        %242 = vst.msk [vmem:[#allocation2 + $0x118] sm:$0xff] %vm206, %v177
        %243 = vst.msk [vmem:[#allocation2 + $0x120] sm:$0xff] %vm206, %v178
        %244 = vst.msk [vmem:[#allocation2 + $0x128] sm:$0xff] %vm206, %v179
        %245 = vst.msk [vmem:[#allocation2 + $0x130] sm:$0xff] %vm206, %v180
        %246 = vst.msk [vmem:[#allocation2 + $0x138] sm:$0xff] %vm206, %v181
        %247 = vst.msk [vmem:[#allocation2 + $0x140] sm:$0xff] %vm206, %v182
        %248 = vst.msk [vmem:[#allocation2 + $0x148] sm:$0xff] %vm206, %v183
        %249 = vst.msk [vmem:[#allocation2 + $0x150] sm:$0xff] %vm206, %v184
        %250 = vst.msk [vmem:[#allocation2 + $0x158] sm:$0xff] %vm206, %v185
        %251 = vst.msk [vmem:[#allocation2 + $0x160] sm:$0xff] %vm206, %v186
        %252 = vst.msk [vmem:[#allocation2 + $0x168] sm:$0xff] %vm206, %v187
        %253 = vst.msk [vmem:[#allocation2 + $0x170] sm:$0xff] %vm206, %v188
        %254 = vst.msk [vmem:[#allocation2 + $0x178] sm:$0xff] %vm206, %v189
        %255 = vst.msk [vmem:[#allocation2 + $0x180] sm:$0xff] %vm206, %v190
        %256 = vst.msk [vmem:[#allocation2 + $0x188] sm:$0xff] %vm206, %v191
        %257 = vst.msk [vmem:[#allocation2 + $0x190] sm:$0xff] %vm206, %v192
        %258 = vst.msk [vmem:[#allocation2 + $0x198] sm:$0xff] %vm206, %v193
        %259 = vst.msk [vmem:[#allocation2 + $0x1a0] sm:$0xff] %vm206, %v194
        %260 = vst.msk [vmem:[#allocation2 + $0x1a8] sm:$0xff] %vm206, %v195
        %261 = vst.msk [vmem:[#allocation2 + $0x1b0] sm:$0xff] %vm206, %v196
        %262 = vst.msk [vmem:[#allocation2 + $0x1b8] sm:$0xff] %vm206, %v197
        %263 = vst.msk [vmem:[#allocation2 + $0x1c0] sm:$0xff] %vm206, %v198
        %264 = vst.msk [vmem:[#allocation2 + $0x1c8] sm:$0xff] %vm206, %v199
        %265 = vst.msk [vmem:[#allocation2 + $0x1d0] sm:$0xff] %vm206, %v200
        %266 = vst.msk [vmem:[#allocation2 + $0x1d8] sm:$0xff] %vm206, %v201
        %267 = vst.msk [vmem:[#allocation2 + $0x1e0] sm:$0xff] %vm206, %v202
        %268 = vst.msk [vmem:[#allocation2 + $0x1e8] sm:$0xff] %vm206, %v203
        %269 = vst.msk [vmem:[#allocation2 + $0x1f0] sm:$0xff] %vm206, %v204
        %270 = vst.msk [vmem:[#allocation2 + $0x1f8] sm:$0xff] %vm206, %v205
        %v271 = vld [vmem:[%s141 + $0x1] sm:$0xff]
        %v272 = vld [vmem:[%s141 + $0x11] sm:$0xff]
        %v273 = vld [vmem:[%s141 + $0x21] sm:$0xff]
        %v274 = vld [vmem:[%s141 + $0x31] sm:$0xff]
        %v275 = vld [vmem:[%s141 + $0x41] sm:$0xff]
        %v276 = vld [vmem:[%s141 + $0x51] sm:$0xff]
        %v277 = vld [vmem:[%s141 + $0x61] sm:$0xff]
        %v278 = vld [vmem:[%s141 + $0x71] sm:$0xff]
        %v279 = vld [vmem:[%s141 + $0xa1] sm:$0xff]
        %v280 = vld [vmem:[%s141 + $0xb1] sm:$0xff]
        %v281 = vld [vmem:[%s141 + $0xc1] sm:$0xff]
        %v282 = vld [vmem:[%s141 + $0xd1] sm:$0xff]
        %v283 = vld [vmem:[%s141 + $0xe1] sm:$0xff]
        %v284 = vld [vmem:[%s141 + $0xf1] sm:$0xff]
        %v285 = vld [vmem:[%s141 + $0x101] sm:$0xff]
        %v286 = vld [vmem:[%s141 + $0x111] sm:$0xff]
        %v287 = vld [vmem:[%s141 + $0x141] sm:$0xff]
        %v288 = vld [vmem:[%s141 + $0x151] sm:$0xff]
        %v289 = vld [vmem:[%s141 + $0x161] sm:$0xff]
        %v290 = vld [vmem:[%s141 + $0x171] sm:$0xff]
        %v291 = vld [vmem:[%s141 + $0x181] sm:$0xff]
        %v292 = vld [vmem:[%s141 + $0x191] sm:$0xff]
        %v293 = vld [vmem:[%s141 + $0x1a1] sm:$0xff]
        %v294 = vld [vmem:[%s141 + $0x1b1] sm:$0xff]
        %v295 = vld [vmem:[%s141 + $0x1e1] sm:$0xff]
        %v296 = vld [vmem:[%s141 + $0x1f1] sm:$0xff]
        %v297 = vld [vmem:[%s141 + $0x201] sm:$0xff]
        %v298 = vld [vmem:[%s141 + $0x211] sm:$0xff]
        %v299 = vld [vmem:[%s141 + $0x221] sm:$0xff]
        %v300 = vld [vmem:[%s141 + $0x231] sm:$0xff]
        %v301 = vld [vmem:[%s141 + $0x241] sm:$0xff]
        %v302 = vld [vmem:[%s141 + $0x251] sm:$0xff]
        %v303 = vld [vmem:[%s141 + $0x281] sm:$0xff]
        %v304 = vld [vmem:[%s141 + $0x291] sm:$0xff]
        %v305 = vld [vmem:[%s141 + $0x2a1] sm:$0xff]
        %v306 = vld [vmem:[%s141 + $0x2b1] sm:$0xff]
        %v307 = vld [vmem:[%s141 + $0x2c1] sm:$0xff]
        %v308 = vld [vmem:[%s141 + $0x2d1] sm:$0xff]
        %v309 = vld [vmem:[%s141 + $0x2e1] sm:$0xff]
        %v310 = vld [vmem:[%s141 + $0x2f1] sm:$0xff]
        %v311 = vld [vmem:[%s141 + $0x321] sm:$0xff]
        %v312 = vld [vmem:[%s141 + $0x331] sm:$0xff]
        %v313 = vld [vmem:[%s141 + $0x341] sm:$0xff]
        %v314 = vld [vmem:[%s141 + $0x351] sm:$0xff]
        %v315 = vld [vmem:[%s141 + $0x361] sm:$0xff]
        %v316 = vld [vmem:[%s141 + $0x371] sm:$0xff]
        %v317 = vld [vmem:[%s141 + $0x381] sm:$0xff]
        %v318 = vld [vmem:[%s141 + $0x391] sm:$0xff]
        %v319 = vld [vmem:[%s141 + $0x3c1] sm:$0xff]
        %v320 = vld [vmem:[%s141 + $0x3d1] sm:$0xff]
        %v321 = vld [vmem:[%s141 + $0x3e1] sm:$0xff]
        %v322 = vld [vmem:[%s141 + $0x3f1] sm:$0xff]
        %v323 = vld [vmem:[%s141 + $0x401] sm:$0xff]
        %v324 = vld [vmem:[%s141 + $0x411] sm:$0xff]
        %v325 = vld [vmem:[%s141 + $0x421] sm:$0xff]
        %v326 = vld [vmem:[%s141 + $0x431] sm:$0xff]
        %v327 = vld [vmem:[%s141 + $0x461] sm:$0xff]
        %v328 = vld [vmem:[%s141 + $0x471] sm:$0xff]
        %v329 = vld [vmem:[%s141 + $0x481] sm:$0xff]
        %v330 = vld [vmem:[%s141 + $0x491] sm:$0xff]
        %v331 = vld [vmem:[%s141 + $0x4a1] sm:$0xff]
        %v332 = vld [vmem:[%s141 + $0x4b1] sm:$0xff]
        %v333 = vld [vmem:[%s141 + $0x4c1] sm:$0xff]
        %v334 = vld [vmem:[%s141 + $0x4d1] sm:$0xff]
        %399 = vrot.lane.b32.xlu0 %v271, 4
        %v400 = vpop.permute.xlu0 %399
        %401 = vrot.lane.b32.xlu0 %v272, 4
        %v402 = vpop.permute.xlu0 %401
        %403 = vrot.lane.b32.xlu0 %v273, 4
        %v404 = vpop.permute.xlu0 %403
        %405 = vrot.lane.b32.xlu0 %v274, 4
        %v406 = vpop.permute.xlu0 %405
        %407 = vrot.lane.b32.xlu0 %v275, 4
        %v408 = vpop.permute.xlu0 %407
        %409 = vrot.lane.b32.xlu0 %v276, 4
        %v410 = vpop.permute.xlu0 %409
        %411 = vrot.lane.b32.xlu0 %v277, 4
        %v412 = vpop.permute.xlu0 %411
        %413 = vrot.lane.b32.xlu0 %v278, 4
        %v414 = vpop.permute.xlu0 %413
        %415 = vrot.lane.b32.xlu0 %v279, 4
        %v416 = vpop.permute.xlu0 %415
        %417 = vrot.lane.b32.xlu0 %v280, 4
        %v418 = vpop.permute.xlu0 %417
        %419 = vrot.lane.b32.xlu0 %v281, 4
        %v420 = vpop.permute.xlu0 %419
        %421 = vrot.lane.b32.xlu0 %v282, 4
        %v422 = vpop.permute.xlu0 %421
        %423 = vrot.lane.b32.xlu0 %v283, 4
        %v424 = vpop.permute.xlu0 %423
        %425 = vrot.lane.b32.xlu0 %v284, 4
        %v426 = vpop.permute.xlu0 %425
        %427 = vrot.lane.b32.xlu0 %v285, 4
        %v428 = vpop.permute.xlu0 %427
        %429 = vrot.lane.b32.xlu0 %v286, 4
        %v430 = vpop.permute.xlu0 %429
        %431 = vrot.lane.b32.xlu0 %v287, 4
        %v432 = vpop.permute.xlu0 %431
        %433 = vrot.lane.b32.xlu0 %v288, 4
        %v434 = vpop.permute.xlu0 %433
        %435 = vrot.lane.b32.xlu0 %v289, 4
        %v436 = vpop.permute.xlu0 %435
        %437 = vrot.lane.b32.xlu0 %v290, 4
        %v438 = vpop.permute.xlu0 %437
        %439 = vrot.lane.b32.xlu0 %v291, 4
        %v440 = vpop.permute.xlu0 %439
        %441 = vrot.lane.b32.xlu0 %v292, 4
        %v442 = vpop.permute.xlu0 %441
        %443 = vrot.lane.b32.xlu0 %v293, 4
        %v444 = vpop.permute.xlu0 %443
        %445 = vrot.lane.b32.xlu0 %v294, 4
        %v446 = vpop.permute.xlu0 %445
        %447 = vrot.lane.b32.xlu0 %v295, 4
        %v448 = vpop.permute.xlu0 %447
        %449 = vrot.lane.b32.xlu0 %v296, 4
        %v450 = vpop.permute.xlu0 %449
        %451 = vrot.lane.b32.xlu0 %v297, 4
        %v452 = vpop.permute.xlu0 %451
        %453 = vrot.lane.b32.xlu0 %v298, 4
        %v454 = vpop.permute.xlu0 %453
        %455 = vrot.lane.b32.xlu0 %v299, 4
        %v456 = vpop.permute.xlu0 %455
        %457 = vrot.lane.b32.xlu0 %v300, 4
        %v458 = vpop.permute.xlu0 %457
        %459 = vrot.lane.b32.xlu0 %v301, 4
        %v460 = vpop.permute.xlu0 %459
        %461 = vrot.lane.b32.xlu0 %v302, 4
        %v462 = vpop.permute.xlu0 %461
        %463 = vrot.lane.b32.xlu0 %v303, 4
        %v464 = vpop.permute.xlu0 %463
        %465 = vrot.lane.b32.xlu0 %v304, 4
        %v466 = vpop.permute.xlu0 %465
        %467 = vrot.lane.b32.xlu0 %v305, 4
        %v468 = vpop.permute.xlu0 %467
        %469 = vrot.lane.b32.xlu0 %v306, 4
        %v470 = vpop.permute.xlu0 %469
        %471 = vrot.lane.b32.xlu0 %v307, 4
        %v472 = vpop.permute.xlu0 %471
        %473 = vrot.lane.b32.xlu0 %v308, 4
        %v474 = vpop.permute.xlu0 %473
        %475 = vrot.lane.b32.xlu0 %v309, 4
        %v476 = vpop.permute.xlu0 %475
        %477 = vrot.lane.b32.xlu0 %v310, 4
        %v478 = vpop.permute.xlu0 %477
        %479 = vrot.lane.b32.xlu0 %v311, 4
        %v480 = vpop.permute.xlu0 %479
        %481 = vrot.lane.b32.xlu0 %v312, 4
        %v482 = vpop.permute.xlu0 %481
        %483 = vrot.lane.b32.xlu0 %v313, 4
        %v484 = vpop.permute.xlu0 %483
        %485 = vrot.lane.b32.xlu0 %v314, 4
        %v486 = vpop.permute.xlu0 %485
        %487 = vrot.lane.b32.xlu0 %v315, 4
        %v488 = vpop.permute.xlu0 %487
        %489 = vrot.lane.b32.xlu0 %v316, 4
        %v490 = vpop.permute.xlu0 %489
        %491 = vrot.lane.b32.xlu0 %v317, 4
        %v492 = vpop.permute.xlu0 %491
        %493 = vrot.lane.b32.xlu0 %v318, 4
        %v494 = vpop.permute.xlu0 %493
        %495 = vrot.lane.b32.xlu0 %v319, 4
        %v496 = vpop.permute.xlu0 %495
        %497 = vrot.lane.b32.xlu0 %v320, 4
        %v498 = vpop.permute.xlu0 %497
        %499 = vrot.lane.b32.xlu0 %v321, 4
        %v500 = vpop.permute.xlu0 %499
        %501 = vrot.lane.b32.xlu0 %v322, 4
        %v502 = vpop.permute.xlu0 %501
        %503 = vrot.lane.b32.xlu0 %v323, 4
        %v504 = vpop.permute.xlu0 %503
        %505 = vrot.lane.b32.xlu0 %v324, 4
        %v506 = vpop.permute.xlu0 %505
        %507 = vrot.lane.b32.xlu0 %v325, 4
        %v508 = vpop.permute.xlu0 %507
        %509 = vrot.lane.b32.xlu0 %v326, 4
        %v510 = vpop.permute.xlu0 %509
        %511 = vrot.lane.b32.xlu0 %v327, 4
        %v512 = vpop.permute.xlu0 %511
        %513 = vrot.lane.b32.xlu0 %v328, 4
        %v514 = vpop.permute.xlu0 %513
        %515 = vrot.lane.b32.xlu0 %v329, 4
        %v516 = vpop.permute.xlu0 %515
        %517 = vrot.lane.b32.xlu0 %v330, 4
        %v518 = vpop.permute.xlu0 %517
        %519 = vrot.lane.b32.xlu0 %v331, 4
        %v520 = vpop.permute.xlu0 %519
        %521 = vrot.lane.b32.xlu0 %v332, 4
        %v522 = vpop.permute.xlu0 %521
        %523 = vrot.lane.b32.xlu0 %v333, 4
        %v524 = vpop.permute.xlu0 %523
        %525 = vrot.lane.b32.xlu0 %v334, 4
        %v526 = vpop.permute.xlu0 %525
        %vm591 = vcmask 64544
        %592 = vst.msk [vmem:[#allocation2] sm:$0xff] %vm591, %v400
        %593 = vst.msk [vmem:[#allocation2 + $0x8] sm:$0xff] %vm591, %v402
        %594 = vst.msk [vmem:[#allocation2 + $0x10] sm:$0xff] %vm591, %v404
        %595 = vst.msk [vmem:[#allocation2 + $0x18] sm:$0xff] %vm591, %v406
        %596 = vst.msk [vmem:[#allocation2 + $0x20] sm:$0xff] %vm591, %v408
        %597 = vst.msk [vmem:[#allocation2 + $0x28] sm:$0xff] %vm591, %v410
        %598 = vst.msk [vmem:[#allocation2 + $0x30] sm:$0xff] %vm591, %v412
        %599 = vst.msk [vmem:[#allocation2 + $0x38] sm:$0xff] %vm591, %v414
        %600 = vst.msk [vmem:[#allocation2 + $0x40] sm:$0xff] %vm591, %v416
        %601 = vst.msk [vmem:[#allocation2 + $0x48] sm:$0xff] %vm591, %v418
        %602 = vst.msk [vmem:[#allocation2 + $0x50] sm:$0xff] %vm591, %v420
        %603 = vst.msk [vmem:[#allocation2 + $0x58] sm:$0xff] %vm591, %v422
        %604 = vst.msk [vmem:[#allocation2 + $0x60] sm:$0xff] %vm591, %v424
        %605 = vst.msk [vmem:[#allocation2 + $0x68] sm:$0xff] %vm591, %v426
        %606 = vst.msk [vmem:[#allocation2 + $0x70] sm:$0xff] %vm591, %v428
        %607 = vst.msk [vmem:[#allocation2 + $0x78] sm:$0xff] %vm591, %v430
        %608 = vst.msk [vmem:[#allocation2 + $0x80] sm:$0xff] %vm591, %v432
        %609 = vst.msk [vmem:[#allocation2 + $0x88] sm:$0xff] %vm591, %v434
        %610 = vst.msk [vmem:[#allocation2 + $0x90] sm:$0xff] %vm591, %v436
        %611 = vst.msk [vmem:[#allocation2 + $0x98] sm:$0xff] %vm591, %v438
        %612 = vst.msk [vmem:[#allocation2 + $0xa0] sm:$0xff] %vm591, %v440
        %613 = vst.msk [vmem:[#allocation2 + $0xa8] sm:$0xff] %vm591, %v442
        %614 = vst.msk [vmem:[#allocation2 + $0xb0] sm:$0xff] %vm591, %v444
        %615 = vst.msk [vmem:[#allocation2 + $0xb8] sm:$0xff] %vm591, %v446
        %616 = vst.msk [vmem:[#allocation2 + $0xc0] sm:$0xff] %vm591, %v448
        %617 = vst.msk [vmem:[#allocation2 + $0xc8] sm:$0xff] %vm591, %v450
        %618 = vst.msk [vmem:[#allocation2 + $0xd0] sm:$0xff] %vm591, %v452
        %619 = vst.msk [vmem:[#allocation2 + $0xd8] sm:$0xff] %vm591, %v454
        %620 = vst.msk [vmem:[#allocation2 + $0xe0] sm:$0xff] %vm591, %v456
        %621 = vst.msk [vmem:[#allocation2 + $0xe8] sm:$0xff] %vm591, %v458
        %622 = vst.msk [vmem:[#allocation2 + $0xf0] sm:$0xff] %vm591, %v460
        %623 = vst.msk [vmem:[#allocation2 + $0xf8] sm:$0xff] %vm591, %v462
        %624 = vst.msk [vmem:[#allocation2 + $0x100] sm:$0xff] %vm591, %v464
        %625 = vst.msk [vmem:[#allocation2 + $0x108] sm:$0xff] %vm591, %v466
        %626 = vst.msk [vmem:[#allocation2 + $0x110] sm:$0xff] %vm591, %v468
        %627 = vst.msk [vmem:[#allocation2 + $0x118] sm:$0xff] %vm591, %v470
        %628 = vst.msk [vmem:[#allocation2 + $0x120] sm:$0xff] %vm591, %v472
        %629 = vst.msk [vmem:[#allocation2 + $0x128] sm:$0xff] %vm591, %v474
        %630 = vst.msk [vmem:[#allocation2 + $0x130] sm:$0xff] %vm591, %v476
        %631 = vst.msk [vmem:[#allocation2 + $0x138] sm:$0xff] %vm591, %v478
        %632 = vst.msk [vmem:[#allocation2 + $0x140] sm:$0xff] %vm591, %v480
        %633 = vst.msk [vmem:[#allocation2 + $0x148] sm:$0xff] %vm591, %v482
        %634 = vst.msk [vmem:[#allocation2 + $0x150] sm:$0xff] %vm591, %v484
        %635 = vst.msk [vmem:[#allocation2 + $0x158] sm:$0xff] %vm591, %v486
        %636 = vst.msk [vmem:[#allocation2 + $0x160] sm:$0xff] %vm591, %v488
        %637 = vst.msk [vmem:[#allocation2 + $0x168] sm:$0xff] %vm591, %v490
        %638 = vst.msk [vmem:[#allocation2 + $0x170] sm:$0xff] %vm591, %v492
        %639 = vst.msk [vmem:[#allocation2 + $0x178] sm:$0xff] %vm591, %v494
        %640 = vst.msk [vmem:[#allocation2 + $0x180] sm:$0xff] %vm591, %v496
        %641 = vst.msk [vmem:[#allocation2 + $0x188] sm:$0xff] %vm591, %v498
        %642 = vst.msk [vmem:[#allocation2 + $0x190] sm:$0xff] %vm591, %v500
        %643 = vst.msk [vmem:[#allocation2 + $0x198] sm:$0xff] %vm591, %v502
        %644 = vst.msk [vmem:[#allocation2 + $0x1a0] sm:$0xff] %vm591, %v504
        %645 = vst.msk [vmem:[#allocation2 + $0x1a8] sm:$0xff] %vm591, %v506
        %646 = vst.msk [vmem:[#allocation2 + $0x1b0] sm:$0xff] %vm591, %v508
        %647 = vst.msk [vmem:[#allocation2 + $0x1b8] sm:$0xff] %vm591, %v510
        %648 = vst.msk [vmem:[#allocation2 + $0x1c0] sm:$0xff] %vm591, %v512
        %649 = vst.msk [vmem:[#allocation2 + $0x1c8] sm:$0xff] %vm591, %v514
        %650 = vst.msk [vmem:[#allocation2 + $0x1d0] sm:$0xff] %vm591, %v516
        %651 = vst.msk [vmem:[#allocation2 + $0x1d8] sm:$0xff] %vm591, %v518
        %652 = vst.msk [vmem:[#allocation2 + $0x1e0] sm:$0xff] %vm591, %v520
        %653 = vst.msk [vmem:[#allocation2 + $0x1e8] sm:$0xff] %vm591, %v522
        %654 = vst.msk [vmem:[#allocation2 + $0x1f0] sm:$0xff] %vm591, %v524
        %655 = vst.msk [vmem:[#allocation2 + $0x1f8] sm:$0xff] %vm591, %v526
        %v656 = vld [vmem:[%s141 + $0x2] sm:$0xff]
        %v657 = vld [vmem:[%s141 + $0x12] sm:$0xff]
        %v658 = vld [vmem:[%s141 + $0x22] sm:$0xff]
        %v659 = vld [vmem:[%s141 + $0x32] sm:$0xff]
        %v660 = vld [vmem:[%s141 + $0x42] sm:$0xff]
        %v661 = vld [vmem:[%s141 + $0x52] sm:$0xff]
        %v662 = vld [vmem:[%s141 + $0x62] sm:$0xff]
        %v663 = vld [vmem:[%s141 + $0x72] sm:$0xff]
        %v664 = vld [vmem:[%s141 + $0xa2] sm:$0xff]
        %v665 = vld [vmem:[%s141 + $0xb2] sm:$0xff]
        %v666 = vld [vmem:[%s141 + $0xc2] sm:$0xff]
        %v667 = vld [vmem:[%s141 + $0xd2] sm:$0xff]
        %v668 = vld [vmem:[%s141 + $0xe2] sm:$0xff]
        %v669 = vld [vmem:[%s141 + $0xf2] sm:$0xff]
        %v670 = vld [vmem:[%s141 + $0x102] sm:$0xff]
        %v671 = vld [vmem:[%s141 + $0x112] sm:$0xff]
        %v672 = vld [vmem:[%s141 + $0x142] sm:$0xff]
        %v673 = vld [vmem:[%s141 + $0x152] sm:$0xff]
        %v674 = vld [vmem:[%s141 + $0x162] sm:$0xff]
        %v675 = vld [vmem:[%s141 + $0x172] sm:$0xff]
        %v676 = vld [vmem:[%s141 + $0x182] sm:$0xff]
        %v677 = vld [vmem:[%s141 + $0x192] sm:$0xff]
        %v678 = vld [vmem:[%s141 + $0x1a2] sm:$0xff]
        %v679 = vld [vmem:[%s141 + $0x1b2] sm:$0xff]
        %v680 = vld [vmem:[%s141 + $0x1e2] sm:$0xff]
        %v681 = vld [vmem:[%s141 + $0x1f2] sm:$0xff]
        %v682 = vld [vmem:[%s141 + $0x202] sm:$0xff]
        %v683 = vld [vmem:[%s141 + $0x212] sm:$0xff]
        %v684 = vld [vmem:[%s141 + $0x222] sm:$0xff]
        %v685 = vld [vmem:[%s141 + $0x232] sm:$0xff]
        %v686 = vld [vmem:[%s141 + $0x242] sm:$0xff]
        %v687 = vld [vmem:[%s141 + $0x252] sm:$0xff]
        %v688 = vld [vmem:[%s141 + $0x282] sm:$0xff]
        %v689 = vld [vmem:[%s141 + $0x292] sm:$0xff]
        %v690 = vld [vmem:[%s141 + $0x2a2] sm:$0xff]
        %v691 = vld [vmem:[%s141 + $0x2b2] sm:$0xff]
        %v692 = vld [vmem:[%s141 + $0x2c2] sm:$0xff]
        %v693 = vld [vmem:[%s141 + $0x2d2] sm:$0xff]
        %v694 = vld [vmem:[%s141 + $0x2e2] sm:$0xff]
        %v695 = vld [vmem:[%s141 + $0x2f2] sm:$0xff]
        %v696 = vld [vmem:[%s141 + $0x322] sm:$0xff]
        %v697 = vld [vmem:[%s141 + $0x332] sm:$0xff]
        %v698 = vld [vmem:[%s141 + $0x342] sm:$0xff]
        %v699 = vld [vmem:[%s141 + $0x352] sm:$0xff]
        %v700 = vld [vmem:[%s141 + $0x362] sm:$0xff]
        %v701 = vld [vmem:[%s141 + $0x372] sm:$0xff]
        %v702 = vld [vmem:[%s141 + $0x382] sm:$0xff]
        %v703 = vld [vmem:[%s141 + $0x392] sm:$0xff]
        %v704 = vld [vmem:[%s141 + $0x3c2] sm:$0xff]
        %v705 = vld [vmem:[%s141 + $0x3d2] sm:$0xff]
        %v706 = vld [vmem:[%s141 + $0x3e2] sm:$0xff]
        %v707 = vld [vmem:[%s141 + $0x3f2] sm:$0xff]
        %v708 = vld [vmem:[%s141 + $0x402] sm:$0xff]
        %v709 = vld [vmem:[%s141 + $0x412] sm:$0xff]
        %v710 = vld [vmem:[%s141 + $0x422] sm:$0xff]
        %v711 = vld [vmem:[%s141 + $0x432] sm:$0xff]
        %v712 = vld [vmem:[%s141 + $0x462] sm:$0xff]
        %v713 = vld [vmem:[%s141 + $0x472] sm:$0xff]
        %v714 = vld [vmem:[%s141 + $0x482] sm:$0xff]
        %v715 = vld [vmem:[%s141 + $0x492] sm:$0xff]
        %v716 = vld [vmem:[%s141 + $0x4a2] sm:$0xff]
        %v717 = vld [vmem:[%s141 + $0x4b2] sm:$0xff]
        %v718 = vld [vmem:[%s141 + $0x4c2] sm:$0xff]
        %v719 = vld [vmem:[%s141 + $0x4d2] sm:$0xff]
        %784 = vrot.lane.b32.xlu0 %v656, 8
        %v785 = vpop.permute.xlu0 %784
        %786 = vrot.lane.b32.xlu0 %v657, 8
        %v787 = vpop.permute.xlu0 %786
        %788 = vrot.lane.b32.xlu0 %v658, 8
        %v789 = vpop.permute.xlu0 %788
        %790 = vrot.lane.b32.xlu0 %v659, 8
        %v791 = vpop.permute.xlu0 %790
        %792 = vrot.lane.b32.xlu0 %v660, 8
        %v793 = vpop.permute.xlu0 %792
        %794 = vrot.lane.b32.xlu0 %v661, 8
        %v795 = vpop.permute.xlu0 %794
        %796 = vrot.lane.b32.xlu0 %v662, 8
        %v797 = vpop.permute.xlu0 %796
        %798 = vrot.lane.b32.xlu0 %v663, 8
        %v799 = vpop.permute.xlu0 %798
        %800 = vrot.lane.b32.xlu0 %v664, 8
        %v801 = vpop.permute.xlu0 %800
        %802 = vrot.lane.b32.xlu0 %v665, 8
        %v803 = vpop.permute.xlu0 %802
        %804 = vrot.lane.b32.xlu0 %v666, 8
        %v805 = vpop.permute.xlu0 %804
        %806 = vrot.lane.b32.xlu0 %v667, 8
        %v807 = vpop.permute.xlu0 %806
        %808 = vrot.lane.b32.xlu0 %v668, 8
        %v809 = vpop.permute.xlu0 %808
        %810 = vrot.lane.b32.xlu0 %v669, 8
        %v811 = vpop.permute.xlu0 %810
        %812 = vrot.lane.b32.xlu0 %v670, 8
        %v813 = vpop.permute.xlu0 %812
        %814 = vrot.lane.b32.xlu0 %v671, 8
        %v815 = vpop.permute.xlu0 %814
        %816 = vrot.lane.b32.xlu0 %v672, 8
        %v817 = vpop.permute.xlu0 %816
        %818 = vrot.lane.b32.xlu0 %v673, 8
        %v819 = vpop.permute.xlu0 %818
        %820 = vrot.lane.b32.xlu0 %v674, 8
        %v821 = vpop.permute.xlu0 %820
        %822 = vrot.lane.b32.xlu0 %v675, 8
        %v823 = vpop.permute.xlu0 %822
        %824 = vrot.lane.b32.xlu0 %v676, 8
        %v825 = vpop.permute.xlu0 %824
        %826 = vrot.lane.b32.xlu0 %v677, 8
        %v827 = vpop.permute.xlu0 %826
        %828 = vrot.lane.b32.xlu0 %v678, 8
        %v829 = vpop.permute.xlu0 %828
        %830 = vrot.lane.b32.xlu0 %v679, 8
        %v831 = vpop.permute.xlu0 %830
        %832 = vrot.lane.b32.xlu0 %v680, 8
        %v833 = vpop.permute.xlu0 %832
        %834 = vrot.lane.b32.xlu0 %v681, 8
        %v835 = vpop.permute.xlu0 %834
        %836 = vrot.lane.b32.xlu0 %v682, 8
        %v837 = vpop.permute.xlu0 %836
        %838 = vrot.lane.b32.xlu0 %v683, 8
        %v839 = vpop.permute.xlu0 %838
        %840 = vrot.lane.b32.xlu0 %v684, 8
        %v841 = vpop.permute.xlu0 %840
        %842 = vrot.lane.b32.xlu0 %v685, 8
        %v843 = vpop.permute.xlu0 %842
        %844 = vrot.lane.b32.xlu0 %v686, 8
        %v845 = vpop.permute.xlu0 %844
        %846 = vrot.lane.b32.xlu0 %v687, 8
        %v847 = vpop.permute.xlu0 %846
        %848 = vrot.lane.b32.xlu0 %v688, 8
        %v849 = vpop.permute.xlu0 %848
        %850 = vrot.lane.b32.xlu0 %v689, 8
        %v851 = vpop.permute.xlu0 %850
        %852 = vrot.lane.b32.xlu0 %v690, 8
        %v853 = vpop.permute.xlu0 %852
        %854 = vrot.lane.b32.xlu0 %v691, 8
        %v855 = vpop.permute.xlu0 %854
        %856 = vrot.lane.b32.xlu0 %v692, 8
        %v857 = vpop.permute.xlu0 %856
        %858 = vrot.lane.b32.xlu0 %v693, 8
        %v859 = vpop.permute.xlu0 %858
        %860 = vrot.lane.b32.xlu0 %v694, 8
        %v861 = vpop.permute.xlu0 %860
        %862 = vrot.lane.b32.xlu0 %v695, 8
        %v863 = vpop.permute.xlu0 %862
        %864 = vrot.lane.b32.xlu0 %v696, 8
        %v865 = vpop.permute.xlu0 %864
        %866 = vrot.lane.b32.xlu0 %v697, 8
        %v867 = vpop.permute.xlu0 %866
        %868 = vrot.lane.b32.xlu0 %v698, 8
        %v869 = vpop.permute.xlu0 %868
        %870 = vrot.lane.b32.xlu0 %v699, 8
        %v871 = vpop.permute.xlu0 %870
        %872 = vrot.lane.b32.xlu0 %v700, 8
        %v873 = vpop.permute.xlu0 %872
        %874 = vrot.lane.b32.xlu0 %v701, 8
        %v875 = vpop.permute.xlu0 %874
        %876 = vrot.lane.b32.xlu0 %v702, 8
        %v877 = vpop.permute.xlu0 %876
        %878 = vrot.lane.b32.xlu0 %v703, 8
        %v879 = vpop.permute.xlu0 %878
        %880 = vrot.lane.b32.xlu0 %v704, 8
        %v881 = vpop.permute.xlu0 %880
        %882 = vrot.lane.b32.xlu0 %v705, 8
        %v883 = vpop.permute.xlu0 %882
        %884 = vrot.lane.b32.xlu0 %v706, 8
        %v885 = vpop.permute.xlu0 %884
        %886 = vrot.lane.b32.xlu0 %v707, 8
        %v887 = vpop.permute.xlu0 %886
        %888 = vrot.lane.b32.xlu0 %v708, 8
        %v889 = vpop.permute.xlu0 %888
        %890 = vrot.lane.b32.xlu0 %v709, 8
        %v891 = vpop.permute.xlu0 %890
        %892 = vrot.lane.b32.xlu0 %v710, 8
        %v893 = vpop.permute.xlu0 %892
        %894 = vrot.lane.b32.xlu0 %v711, 8
        %v895 = vpop.permute.xlu0 %894
        %896 = vrot.lane.b32.xlu0 %v712, 8
        %v897 = vpop.permute.xlu0 %896
        %898 = vrot.lane.b32.xlu0 %v713, 8
        %v899 = vpop.permute.xlu0 %898
        %900 = vrot.lane.b32.xlu0 %v714, 8
        %v901 = vpop.permute.xlu0 %900
        %902 = vrot.lane.b32.xlu0 %v715, 8
        %v903 = vpop.permute.xlu0 %902
        %904 = vrot.lane.b32.xlu0 %v716, 8
        %v905 = vpop.permute.xlu0 %904
        %906 = vrot.lane.b32.xlu0 %v717, 8
        %v907 = vpop.permute.xlu0 %906
        %908 = vrot.lane.b32.xlu0 %v718, 8
        %v909 = vpop.permute.xlu0 %908
        %910 = vrot.lane.b32.xlu0 %v719, 8
        %v911 = vpop.permute.xlu0 %910
        %vm976 = vcmask 97344
        %977 = vst.msk [vmem:[#allocation2] sm:$0xff] %vm976, %v785
        %978 = vst.msk [vmem:[#allocation2 + $0x8] sm:$0xff] %vm976, %v787
        %979 = vst.msk [vmem:[#allocation2 + $0x10] sm:$0xff] %vm976, %v789
        %980 = vst.msk [vmem:[#allocation2 + $0x18] sm:$0xff] %vm976, %v791
        %981 = vst.msk [vmem:[#allocation2 + $0x20] sm:$0xff] %vm976, %v793
        %982 = vst.msk [vmem:[#allocation2 + $0x28] sm:$0xff] %vm976, %v795
        %983 = vst.msk [vmem:[#allocation2 + $0x30] sm:$0xff] %vm976, %v797
        %984 = vst.msk [vmem:[#allocation2 + $0x38] sm:$0xff] %vm976, %v799
        %985 = vst.msk [vmem:[#allocation2 + $0x40] sm:$0xff] %vm976, %v801
        %986 = vst.msk [vmem:[#allocation2 + $0x48] sm:$0xff] %vm976, %v803
        %987 = vst.msk [vmem:[#allocation2 + $0x50] sm:$0xff] %vm976, %v805
        %988 = vst.msk [vmem:[#allocation2 + $0x58] sm:$0xff] %vm976, %v807
        %989 = vst.msk [vmem:[#allocation2 + $0x60] sm:$0xff] %vm976, %v809
        %990 = vst.msk [vmem:[#allocation2 + $0x68] sm:$0xff] %vm976, %v811
        %991 = vst.msk [vmem:[#allocation2 + $0x70] sm:$0xff] %vm976, %v813
        %992 = vst.msk [vmem:[#allocation2 + $0x78] sm:$0xff] %vm976, %v815
        %993 = vst.msk [vmem:[#allocation2 + $0x80] sm:$0xff] %vm976, %v817
        %994 = vst.msk [vmem:[#allocation2 + $0x88] sm:$0xff] %vm976, %v819
        %995 = vst.msk [vmem:[#allocation2 + $0x90] sm:$0xff] %vm976, %v821
        %996 = vst.msk [vmem:[#allocation2 + $0x98] sm:$0xff] %vm976, %v823
        %997 = vst.msk [vmem:[#allocation2 + $0xa0] sm:$0xff] %vm976, %v825
        %998 = vst.msk [vmem:[#allocation2 + $0xa8] sm:$0xff] %vm976, %v827
        %999 = vst.msk [vmem:[#allocation2 + $0xb0] sm:$0xff] %vm976, %v829
        %1000 = vst.msk [vmem:[#allocation2 + $0xb8] sm:$0xff] %vm976, %v831
        %1001 = vst.msk [vmem:[#allocation2 + $0xc0] sm:$0xff] %vm976, %v833
        %1002 = vst.msk [vmem:[#allocation2 + $0xc8] sm:$0xff] %vm976, %v835
        %1003 = vst.msk [vmem:[#allocation2 + $0xd0] sm:$0xff] %vm976, %v837
        %1004 = vst.msk [vmem:[#allocation2 + $0xd8] sm:$0xff] %vm976, %v839
        %1005 = vst.msk [vmem:[#allocation2 + $0xe0] sm:$0xff] %vm976, %v841
        %1006 = vst.msk [vmem:[#allocation2 + $0xe8] sm:$0xff] %vm976, %v843
        %1007 = vst.msk [vmem:[#allocation2 + $0xf0] sm:$0xff] %vm976, %v845
        %1008 = vst.msk [vmem:[#allocation2 + $0xf8] sm:$0xff] %vm976, %v847
        %1009 = vst.msk [vmem:[#allocation2 + $0x100] sm:$0xff] %vm976, %v849
        %1010 = vst.msk [vmem:[#allocation2 + $0x108] sm:$0xff] %vm976, %v851
        %1011 = vst.msk [vmem:[#allocation2 + $0x110] sm:$0xff] %vm976, %v853
        %1012 = vst.msk [vmem:[#allocation2 + $0x118] sm:$0xff] %vm976, %v855
        %1013 = vst.msk [vmem:[#allocation2 + $0x120] sm:$0xff] %vm976, %v857
        %1014 = vst.msk [vmem:[#allocation2 + $0x128] sm:$0xff] %vm976, %v859
        %1015 = vst.msk [vmem:[#allocation2 + $0x130] sm:$0xff] %vm976, %v861
        %1016 = vst.msk [vmem:[#allocation2 + $0x138] sm:$0xff] %vm976, %v863
        %1017 = vst.msk [vmem:[#allocation2 + $0x140] sm:$0xff] %vm976, %v865
        %1018 = vst.msk [vmem:[#allocation2 + $0x148] sm:$0xff] %vm976, %v867
        %1019 = vst.msk [vmem:[#allocation2 + $0x150] sm:$0xff] %vm976, %v869
        %1020 = vst.msk [vmem:[#allocation2 + $0x158] sm:$0xff] %vm976, %v871
        %1021 = vst.msk [vmem:[#allocation2 + $0x160] sm:$0xff] %vm976, %v873
        %1022 = vst.msk [vmem:[#allocation2 + $0x168] sm:$0xff] %vm976, %v875
        %1023 = vst.msk [vmem:[#allocation2 + $0x170] sm:$0xff] %vm976, %v877
        %1024 = vst.msk [vmem:[#allocation2 + $0x178] sm:$0xff] %vm976, %v879
        %1025 = vst.msk [vmem:[#allocation2 + $0x180] sm:$0xff] %vm976, %v881
        %1026 = vst.msk [vmem:[#allocation2 + $0x188] sm:$0xff] %vm976, %v883
        %1027 = vst.msk [vmem:[#allocation2 + $0x190] sm:$0xff] %vm976, %v885
        %1028 = vst.msk [vmem:[#allocation2 + $0x198] sm:$0xff] %vm976, %v887
        %1029 = vst.msk [vmem:[#allocation2 + $0x1a0] sm:$0xff] %vm976, %v889
        %1030 = vst.msk [vmem:[#allocation2 + $0x1a8] sm:$0xff] %vm976, %v891
        %1031 = vst.msk [vmem:[#allocation2 + $0x1b0] sm:$0xff] %vm976, %v893
        %1032 = vst.msk [vmem:[#allocation2 + $0x1b8] sm:$0xff] %vm976, %v895
        %1033 = vst.msk [vmem:[#allocation2 + $0x1c0] sm:$0xff] %vm976, %v897
        %1034 = vst.msk [vmem:[#allocation2 + $0x1c8] sm:$0xff] %vm976, %v899
        %1035 = vst.msk [vmem:[#allocation2 + $0x1d0] sm:$0xff] %vm976, %v901
        %1036 = vst.msk [vmem:[#allocation2 + $0x1d8] sm:$0xff] %vm976, %v903
        %1037 = vst.msk [vmem:[#allocation2 + $0x1e0] sm:$0xff] %vm976, %v905
        %1038 = vst.msk [vmem:[#allocation2 + $0x1e8] sm:$0xff] %vm976, %v907
        %1039 = vst.msk [vmem:[#allocation2 + $0x1f0] sm:$0xff] %vm976, %v909
        %1040 = vst.msk [vmem:[#allocation2 + $0x1f8] sm:$0xff] %vm976, %v911
        %s1041 = scalar_lea.vmem %s141, 16
        %v1042 = vld [vmem:[%s1041] sm:$0xff]
        %v1043 = vld [vmem:[%s1041 + $0x10] sm:$0xff]
        %v1044 = vld [vmem:[%s1041 + $0x20] sm:$0xff]
        %v1045 = vld [vmem:[%s1041 + $0x30] sm:$0xff]
        %v1046 = vld [vmem:[%s1041 + $0x40] sm:$0xff]
        %v1047 = vld [vmem:[%s1041 + $0x50] sm:$0xff]
        %v1048 = vld [vmem:[%s1041 + $0x60] sm:$0xff]
        %v1049 = vld [vmem:[%s1041 + $0x70] sm:$0xff]
        %v1050 = vld [vmem:[%s1041 + $0xa0] sm:$0xff]
        %v1051 = vld [vmem:[%s1041 + $0xb0] sm:$0xff]
        %v1052 = vld [vmem:[%s1041 + $0xc0] sm:$0xff]
        %v1053 = vld [vmem:[%s1041 + $0xd0] sm:$0xff]
        %v1054 = vld [vmem:[%s1041 + $0xe0] sm:$0xff]
        %v1055 = vld [vmem:[%s1041 + $0xf0] sm:$0xff]
        %v1056 = vld [vmem:[%s1041 + $0x100] sm:$0xff]
        %v1057 = vld [vmem:[%s1041 + $0x110] sm:$0xff]
        %v1058 = vld [vmem:[%s1041 + $0x140] sm:$0xff]
        %v1059 = vld [vmem:[%s1041 + $0x150] sm:$0xff]
        %v1060 = vld [vmem:[%s1041 + $0x160] sm:$0xff]
        %v1061 = vld [vmem:[%s1041 + $0x170] sm:$0xff]
        %v1062 = vld [vmem:[%s1041 + $0x180] sm:$0xff]
        %v1063 = vld [vmem:[%s1041 + $0x190] sm:$0xff]
        %v1064 = vld [vmem:[%s1041 + $0x1a0] sm:$0xff]
        %v1065 = vld [vmem:[%s1041 + $0x1b0] sm:$0xff]
        %v1066 = vld [vmem:[%s1041 + $0x1e0] sm:$0xff]
        %v1067 = vld [vmem:[%s1041 + $0x1f0] sm:$0xff]
        %v1068 = vld [vmem:[%s1041 + $0x200] sm:$0xff]
        %v1069 = vld [vmem:[%s1041 + $0x210] sm:$0xff]
        %v1070 = vld [vmem:[%s1041 + $0x220] sm:$0xff]
        %v1071 = vld [vmem:[%s1041 + $0x230] sm:$0xff]
        %v1072 = vld [vmem:[%s1041 + $0x240] sm:$0xff]
        %v1073 = vld [vmem:[%s1041 + $0x250] sm:$0xff]
        %v1074 = vld [vmem:[%s1041 + $0x280] sm:$0xff]
        %v1075 = vld [vmem:[%s1041 + $0x290] sm:$0xff]
        %v1076 = vld [vmem:[%s1041 + $0x2a0] sm:$0xff]
        %v1077 = vld [vmem:[%s1041 + $0x2b0] sm:$0xff]
        %v1078 = vld [vmem:[%s1041 + $0x2c0] sm:$0xff]
        %v1079 = vld [vmem:[%s1041 + $0x2d0] sm:$0xff]
        %v1080 = vld [vmem:[%s1041 + $0x2e0] sm:$0xff]
        %v1081 = vld [vmem:[%s1041 + $0x2f0] sm:$0xff]
        %v1082 = vld [vmem:[%s1041 + $0x320] sm:$0xff]
        %v1083 = vld [vmem:[%s1041 + $0x330] sm:$0xff]
        %v1084 = vld [vmem:[%s1041 + $0x340] sm:$0xff]
        %v1085 = vld [vmem:[%s1041 + $0x350] sm:$0xff]
        %v1086 = vld [vmem:[%s1041 + $0x360] sm:$0xff]
        %v1087 = vld [vmem:[%s1041 + $0x370] sm:$0xff]
        %v1088 = vld [vmem:[%s1041 + $0x380] sm:$0xff]
        %v1089 = vld [vmem:[%s1041 + $0x390] sm:$0xff]
        %v1090 = vld [vmem:[%s1041 + $0x3c0] sm:$0xff]
        %v1091 = vld [vmem:[%s1041 + $0x3d0] sm:$0xff]
        %v1092 = vld [vmem:[%s1041 + $0x3e0] sm:$0xff]
        %v1093 = vld [vmem:[%s1041 + $0x3f0] sm:$0xff]
        %v1094 = vld [vmem:[%s1041 + $0x400] sm:$0xff]
        %v1095 = vld [vmem:[%s1041 + $0x410] sm:$0xff]
        %v1096 = vld [vmem:[%s1041 + $0x420] sm:$0xff]
        %v1097 = vld [vmem:[%s1041 + $0x430] sm:$0xff]
        %v1098 = vld [vmem:[%s1041 + $0x460] sm:$0xff]
        %v1099 = vld [vmem:[%s1041 + $0x470] sm:$0xff]
        %v1100 = vld [vmem:[%s1041 + $0x480] sm:$0xff]
        %v1101 = vld [vmem:[%s1041 + $0x490] sm:$0xff]
        %v1102 = vld [vmem:[%s1041 + $0x4a0] sm:$0xff]
        %v1103 = vld [vmem:[%s1041 + $0x4b0] sm:$0xff]
        %v1104 = vld [vmem:[%s1041 + $0x4c0] sm:$0xff]
        %v1105 = vld [vmem:[%s1041 + $0x4d0] sm:$0xff]
        %1170 = vrot.lane.b32.xlu0 %v1042, 12
        %v1171 = vpop.permute.xlu0 %1170
        %1172 = vrot.lane.b32.xlu0 %v1043, 12
        %v1173 = vpop.permute.xlu0 %1172
        %1174 = vrot.lane.b32.xlu0 %v1044, 12
        %v1175 = vpop.permute.xlu0 %1174
        %1176 = vrot.lane.b32.xlu0 %v1045, 12
        %v1177 = vpop.permute.xlu0 %1176
        %1178 = vrot.lane.b32.xlu0 %v1046, 12
        %v1179 = vpop.permute.xlu0 %1178
        %1180 = vrot.lane.b32.xlu0 %v1047, 12
        %v1181 = vpop.permute.xlu0 %1180
        %1182 = vrot.lane.b32.xlu0 %v1048, 12
        %v1183 = vpop.permute.xlu0 %1182
        %1184 = vrot.lane.b32.xlu0 %v1049, 12
        %v1185 = vpop.permute.xlu0 %1184
        %1186 = vrot.lane.b32.xlu0 %v1050, 12
        %v1187 = vpop.permute.xlu0 %1186
        %1188 = vrot.lane.b32.xlu0 %v1051, 12
        %v1189 = vpop.permute.xlu0 %1188
        %1190 = vrot.lane.b32.xlu0 %v1052, 12
        %v1191 = vpop.permute.xlu0 %1190
        %1192 = vrot.lane.b32.xlu0 %v1053, 12
        %v1193 = vpop.permute.xlu0 %1192
        %1194 = vrot.lane.b32.xlu0 %v1054, 12
        %v1195 = vpop.permute.xlu0 %1194
        %1196 = vrot.lane.b32.xlu0 %v1055, 12
        %v1197 = vpop.permute.xlu0 %1196
        %1198 = vrot.lane.b32.xlu0 %v1056, 12
        %v1199 = vpop.permute.xlu0 %1198
        %1200 = vrot.lane.b32.xlu0 %v1057, 12
        %v1201 = vpop.permute.xlu0 %1200
        %1202 = vrot.lane.b32.xlu0 %v1058, 12
        %v1203 = vpop.permute.xlu0 %1202
        %1204 = vrot.lane.b32.xlu0 %v1059, 12
        %v1205 = vpop.permute.xlu0 %1204
        %1206 = vrot.lane.b32.xlu0 %v1060, 12
        %v1207 = vpop.permute.xlu0 %1206
        %1208 = vrot.lane.b32.xlu0 %v1061, 12
        %v1209 = vpop.permute.xlu0 %1208
        %1210 = vrot.lane.b32.xlu0 %v1062, 12
        %v1211 = vpop.permute.xlu0 %1210
        %1212 = vrot.lane.b32.xlu0 %v1063, 12
        %v1213 = vpop.permute.xlu0 %1212
        %1214 = vrot.lane.b32.xlu0 %v1064, 12
        %v1215 = vpop.permute.xlu0 %1214
        %1216 = vrot.lane.b32.xlu0 %v1065, 12
        %v1217 = vpop.permute.xlu0 %1216
        %1218 = vrot.lane.b32.xlu0 %v1066, 12
        %v1219 = vpop.permute.xlu0 %1218
        %1220 = vrot.lane.b32.xlu0 %v1067, 12
        %v1221 = vpop.permute.xlu0 %1220
        %1222 = vrot.lane.b32.xlu0 %v1068, 12
        %v1223 = vpop.permute.xlu0 %1222
        %1224 = vrot.lane.b32.xlu0 %v1069, 12
        %v1225 = vpop.permute.xlu0 %1224
        %1226 = vrot.lane.b32.xlu0 %v1070, 12
        %v1227 = vpop.permute.xlu0 %1226
        %1228 = vrot.lane.b32.xlu0 %v1071, 12
        %v1229 = vpop.permute.xlu0 %1228
        %1230 = vrot.lane.b32.xlu0 %v1072, 12
        %v1231 = vpop.permute.xlu0 %1230
        %1232 = vrot.lane.b32.xlu0 %v1073, 12
        %v1233 = vpop.permute.xlu0 %1232
        %1234 = vrot.lane.b32.xlu0 %v1074, 12
        %v1235 = vpop.permute.xlu0 %1234
        %1236 = vrot.lane.b32.xlu0 %v1075, 12
        %v1237 = vpop.permute.xlu0 %1236
        %1238 = vrot.lane.b32.xlu0 %v1076, 12
        %v1239 = vpop.permute.xlu0 %1238
        %1240 = vrot.lane.b32.xlu0 %v1077, 12
        %v1241 = vpop.permute.xlu0 %1240
        %1242 = vrot.lane.b32.xlu0 %v1078, 12
        %v1243 = vpop.permute.xlu0 %1242
        %1244 = vrot.lane.b32.xlu0 %v1079, 12
        %v1245 = vpop.permute.xlu0 %1244
        %1246 = vrot.lane.b32.xlu0 %v1080, 12
        %v1247 = vpop.permute.xlu0 %1246
        %1248 = vrot.lane.b32.xlu0 %v1081, 12
        %v1249 = vpop.permute.xlu0 %1248
        %1250 = vrot.lane.b32.xlu0 %v1082, 12
        %v1251 = vpop.permute.xlu0 %1250
        %1252 = vrot.lane.b32.xlu0 %v1083, 12
        %v1253 = vpop.permute.xlu0 %1252
        %1254 = vrot.lane.b32.xlu0 %v1084, 12
        %v1255 = vpop.permute.xlu0 %1254
        %1256 = vrot.lane.b32.xlu0 %v1085, 12
        %v1257 = vpop.permute.xlu0 %1256
        %1258 = vrot.lane.b32.xlu0 %v1086, 12
        %v1259 = vpop.permute.xlu0 %1258
        %1260 = vrot.lane.b32.xlu0 %v1087, 12
        %v1261 = vpop.permute.xlu0 %1260
        %1262 = vrot.lane.b32.xlu0 %v1088, 12
        %v1263 = vpop.permute.xlu0 %1262
        %1264 = vrot.lane.b32.xlu0 %v1089, 12
        %v1265 = vpop.permute.xlu0 %1264
        %1266 = vrot.lane.b32.xlu0 %v1090, 12
        %v1267 = vpop.permute.xlu0 %1266
        %1268 = vrot.lane.b32.xlu0 %v1091, 12
        %v1269 = vpop.permute.xlu0 %1268
        %1270 = vrot.lane.b32.xlu0 %v1092, 12
        %v1271 = vpop.permute.xlu0 %1270
        %1272 = vrot.lane.b32.xlu0 %v1093, 12
        %v1273 = vpop.permute.xlu0 %1272
        %1274 = vrot.lane.b32.xlu0 %v1094, 12
        %v1275 = vpop.permute.xlu0 %1274
        %1276 = vrot.lane.b32.xlu0 %v1095, 12
        %v1277 = vpop.permute.xlu0 %1276
        %1278 = vrot.lane.b32.xlu0 %v1096, 12
        %v1279 = vpop.permute.xlu0 %1278
        %1280 = vrot.lane.b32.xlu0 %v1097, 12
        %v1281 = vpop.permute.xlu0 %1280
        %1282 = vrot.lane.b32.xlu0 %v1098, 12
        %v1283 = vpop.permute.xlu0 %1282
        %1284 = vrot.lane.b32.xlu0 %v1099, 12
        %v1285 = vpop.permute.xlu0 %1284
        %1286 = vrot.lane.b32.xlu0 %v1100, 12
        %v1287 = vpop.permute.xlu0 %1286
        %1288 = vrot.lane.b32.xlu0 %v1101, 12
        %v1289 = vpop.permute.xlu0 %1288
        %1290 = vrot.lane.b32.xlu0 %v1102, 12
        %v1291 = vpop.permute.xlu0 %1290
        %1292 = vrot.lane.b32.xlu0 %v1103, 12
        %v1293 = vpop.permute.xlu0 %1292
        %1294 = vrot.lane.b32.xlu0 %v1104, 12
        %v1295 = vpop.permute.xlu0 %1294
        %1296 = vrot.lane.b32.xlu0 %v1105, 12
        %v1297 = vpop.permute.xlu0 %1296
        %vm1362 = vcmask 130144
        %1363 = vst.msk [vmem:[#allocation2] sm:$0xff] %vm1362, %v1171
        %1364 = vst.msk [vmem:[#allocation2 + $0x8] sm:$0xff] %vm1362, %v1173
        %1365 = vst.msk [vmem:[#allocation2 + $0x10] sm:$0xff] %vm1362, %v1175
        %1366 = vst.msk [vmem:[#allocation2 + $0x18] sm:$0xff] %vm1362, %v1177
        %1367 = vst.msk [vmem:[#allocation2 + $0x20] sm:$0xff] %vm1362, %v1179
        %1368 = vst.msk [vmem:[#allocation2 + $0x28] sm:$0xff] %vm1362, %v1181
        %1369 = vst.msk [vmem:[#allocation2 + $0x30] sm:$0xff] %vm1362, %v1183
        %1370 = vst.msk [vmem:[#allocation2 + $0x38] sm:$0xff] %vm1362, %v1185
        %1371 = vst.msk [vmem:[#allocation2 + $0x40] sm:$0xff] %vm1362, %v1187
        %1372 = vst.msk [vmem:[#allocation2 + $0x48] sm:$0xff] %vm1362, %v1189
        %1373 = vst.msk [vmem:[#allocation2 + $0x50] sm:$0xff] %vm1362, %v1191
        %1374 = vst.msk [vmem:[#allocation2 + $0x58] sm:$0xff] %vm1362, %v1193
        %1375 = vst.msk [vmem:[#allocation2 + $0x60] sm:$0xff] %vm1362, %v1195
        %1376 = vst.msk [vmem:[#allocation2 + $0x68] sm:$0xff] %vm1362, %v1197
        %1377 = vst.msk [vmem:[#allocation2 + $0x70] sm:$0xff] %vm1362, %v1199
        %1378 = vst.msk [vmem:[#allocation2 + $0x78] sm:$0xff] %vm1362, %v1201
        %1379 = vst.msk [vmem:[#allocation2 + $0x80] sm:$0xff] %vm1362, %v1203
        %1380 = vst.msk [vmem:[#allocation2 + $0x88] sm:$0xff] %vm1362, %v1205
        %1381 = vst.msk [vmem:[#allocation2 + $0x90] sm:$0xff] %vm1362, %v1207
        %1382 = vst.msk [vmem:[#allocation2 + $0x98] sm:$0xff] %vm1362, %v1209
        %1383 = vst.msk [vmem:[#allocation2 + $0xa0] sm:$0xff] %vm1362, %v1211
        %1384 = vst.msk [vmem:[#allocation2 + $0xa8] sm:$0xff] %vm1362, %v1213
        %1385 = vst.msk [vmem:[#allocation2 + $0xb0] sm:$0xff] %vm1362, %v1215
        %1386 = vst.msk [vmem:[#allocation2 + $0xb8] sm:$0xff] %vm1362, %v1217
        %1387 = vst.msk [vmem:[#allocation2 + $0xc0] sm:$0xff] %vm1362, %v1219
        %1388 = vst.msk [vmem:[#allocation2 + $0xc8] sm:$0xff] %vm1362, %v1221
        %1389 = vst.msk [vmem:[#allocation2 + $0xd0] sm:$0xff] %vm1362, %v1223
        %1390 = vst.msk [vmem:[#allocation2 + $0xd8] sm:$0xff] %vm1362, %v1225
        %1391 = vst.msk [vmem:[#allocation2 + $0xe0] sm:$0xff] %vm1362, %v1227
        %1392 = vst.msk [vmem:[#allocation2 + $0xe8] sm:$0xff] %vm1362, %v1229
        %1393 = vst.msk [vmem:[#allocation2 + $0xf0] sm:$0xff] %vm1362, %v1231
        %1394 = vst.msk [vmem:[#allocation2 + $0xf8] sm:$0xff] %vm1362, %v1233
        %1395 = vst.msk [vmem:[#allocation2 + $0x100] sm:$0xff] %vm1362, %v1235
        %1396 = vst.msk [vmem:[#allocation2 + $0x108] sm:$0xff] %vm1362, %v1237
        %1397 = vst.msk [vmem:[#allocation2 + $0x110] sm:$0xff] %vm1362, %v1239
        %1398 = vst.msk [vmem:[#allocation2 + $0x118] sm:$0xff] %vm1362, %v1241
        %1399 = vst.msk [vmem:[#allocation2 + $0x120] sm:$0xff] %vm1362, %v1243
        %1400 = vst.msk [vmem:[#allocation2 + $0x128] sm:$0xff] %vm1362, %v1245
        %1401 = vst.msk [vmem:[#allocation2 + $0x130] sm:$0xff] %vm1362, %v1247
        %1402 = vst.msk [vmem:[#allocation2 + $0x138] sm:$0xff] %vm1362, %v1249
        %1403 = vst.msk [vmem:[#allocation2 + $0x140] sm:$0xff] %vm1362, %v1251
        %1404 = vst.msk [vmem:[#allocation2 + $0x148] sm:$0xff] %vm1362, %v1253
        %1405 = vst.msk [vmem:[#allocation2 + $0x150] sm:$0xff] %vm1362, %v1255
        %1406 = vst.msk [vmem:[#allocation2 + $0x158] sm:$0xff] %vm1362, %v1257
        %1407 = vst.msk [vmem:[#allocation2 + $0x160] sm:$0xff] %vm1362, %v1259
        %1408 = vst.msk [vmem:[#allocation2 + $0x168] sm:$0xff] %vm1362, %v1261
        %1409 = vst.msk [vmem:[#allocation2 + $0x170] sm:$0xff] %vm1362, %v1263
        %1410 = vst.msk [vmem:[#allocation2 + $0x178] sm:$0xff] %vm1362, %v1265
        %1411 = vst.msk [vmem:[#allocation2 + $0x180] sm:$0xff] %vm1362, %v1267
        %1412 = vst.msk [vmem:[#allocation2 + $0x188] sm:$0xff] %vm1362, %v1269
        %1413 = vst.msk [vmem:[#allocation2 + $0x190] sm:$0xff] %vm1362, %v1271
        %1414 = vst.msk [vmem:[#allocation2 + $0x198] sm:$0xff] %vm1362, %v1273
        %1415 = vst.msk [vmem:[#allocation2 + $0x1a0] sm:$0xff] %vm1362, %v1275
        %1416 = vst.msk [vmem:[#allocation2 + $0x1a8] sm:$0xff] %vm1362, %v1277
        %1417 = vst.msk [vmem:[#allocation2 + $0x1b0] sm:$0xff] %vm1362, %v1279
        %1418 = vst.msk [vmem:[#allocation2 + $0x1b8] sm:$0xff] %vm1362, %v1281
        %1419 = vst.msk [vmem:[#allocation2 + $0x1c0] sm:$0xff] %vm1362, %v1283
        %1420 = vst.msk [vmem:[#allocation2 + $0x1c8] sm:$0xff] %vm1362, %v1285
        %1421 = vst.msk [vmem:[#allocation2 + $0x1d0] sm:$0xff] %vm1362, %v1287
        %1422 = vst.msk [vmem:[#allocation2 + $0x1d8] sm:$0xff] %vm1362, %v1289
        %1423 = vst.msk [vmem:[#allocation2 + $0x1e0] sm:$0xff] %vm1362, %v1291
        %1424 = vst.msk [vmem:[#allocation2 + $0x1e8] sm:$0xff] %vm1362, %v1293
        %1425 = vst.msk [vmem:[#allocation2 + $0x1f0] sm:$0xff] %vm1362, %v1295
        %1426 = vst.msk [vmem:[#allocation2 + $0x1f8] sm:$0xff] %vm1362, %v1297
        %v1427 = vld [vmem:[%s1041 + $0x1] sm:$0xff]
        %v1428 = vld [vmem:[%s1041 + $0x11] sm:$0xff]
        %v1429 = vld [vmem:[%s1041 + $0x21] sm:$0xff]
        %v1430 = vld [vmem:[%s1041 + $0x31] sm:$0xff]
        %v1431 = vld [vmem:[%s1041 + $0x41] sm:$0xff]
        %v1432 = vld [vmem:[%s1041 + $0x51] sm:$0xff]
        %v1433 = vld [vmem:[%s1041 + $0x61] sm:$0xff]
        %v1434 = vld [vmem:[%s1041 + $0x71] sm:$0xff]
        %v1435 = vld [vmem:[%s1041 + $0xa1] sm:$0xff]
        %v1436 = vld [vmem:[%s1041 + $0xb1] sm:$0xff]
        %v1437 = vld [vmem:[%s1041 + $0xc1] sm:$0xff]
        %v1438 = vld [vmem:[%s1041 + $0xd1] sm:$0xff]
        %v1439 = vld [vmem:[%s1041 + $0xe1] sm:$0xff]
        %v1440 = vld [vmem:[%s1041 + $0xf1] sm:$0xff]
        %v1441 = vld [vmem:[%s1041 + $0x101] sm:$0xff]
        %v1442 = vld [vmem:[%s1041 + $0x111] sm:$0xff]
        %v1443 = vld [vmem:[%s1041 + $0x141] sm:$0xff]
        %v1444 = vld [vmem:[%s1041 + $0x151] sm:$0xff]
        %v1445 = vld [vmem:[%s1041 + $0x161] sm:$0xff]
        %v1446 = vld [vmem:[%s1041 + $0x171] sm:$0xff]
        %v1447 = vld [vmem:[%s1041 + $0x181] sm:$0xff]
        %v1448 = vld [vmem:[%s1041 + $0x191] sm:$0xff]
        %v1449 = vld [vmem:[%s1041 + $0x1a1] sm:$0xff]
        %v1450 = vld [vmem:[%s1041 + $0x1b1] sm:$0xff]
        %v1451 = vld [vmem:[%s1041 + $0x1e1] sm:$0xff]
        %v1452 = vld [vmem:[%s1041 + $0x1f1] sm:$0xff]
        %v1453 = vld [vmem:[%s1041 + $0x201] sm:$0xff]
        %v1454 = vld [vmem:[%s1041 + $0x211] sm:$0xff]
        %v1455 = vld [vmem:[%s1041 + $0x221] sm:$0xff]
        %v1456 = vld [vmem:[%s1041 + $0x231] sm:$0xff]
        %v1457 = vld [vmem:[%s1041 + $0x241] sm:$0xff]
        %v1458 = vld [vmem:[%s1041 + $0x251] sm:$0xff]
        %v1459 = vld [vmem:[%s1041 + $0x281] sm:$0xff]
        %v1460 = vld [vmem:[%s1041 + $0x291] sm:$0xff]
        %v1461 = vld [vmem:[%s1041 + $0x2a1] sm:$0xff]
        %v1462 = vld [vmem:[%s1041 + $0x2b1] sm:$0xff]
        %v1463 = vld [vmem:[%s1041 + $0x2c1] sm:$0xff]
        %v1464 = vld [vmem:[%s1041 + $0x2d1] sm:$0xff]
        %v1465 = vld [vmem:[%s1041 + $0x2e1] sm:$0xff]
        %v1466 = vld [vmem:[%s1041 + $0x2f1] sm:$0xff]
        %v1467 = vld [vmem:[%s1041 + $0x321] sm:$0xff]
        %v1468 = vld [vmem:[%s1041 + $0x331] sm:$0xff]
        %v1469 = vld [vmem:[%s1041 + $0x341] sm:$0xff]
        %v1470 = vld [vmem:[%s1041 + $0x351] sm:$0xff]
        %v1471 = vld [vmem:[%s1041 + $0x361] sm:$0xff]
        %v1472 = vld [vmem:[%s1041 + $0x371] sm:$0xff]
        %v1473 = vld [vmem:[%s1041 + $0x381] sm:$0xff]
        %v1474 = vld [vmem:[%s1041 + $0x391] sm:$0xff]
        %v1475 = vld [vmem:[%s1041 + $0x3c1] sm:$0xff]
        %v1476 = vld [vmem:[%s1041 + $0x3d1] sm:$0xff]
        %v1477 = vld [vmem:[%s1041 + $0x3e1] sm:$0xff]
        %v1478 = vld [vmem:[%s1041 + $0x3f1] sm:$0xff]
        %v1479 = vld [vmem:[%s1041 + $0x401] sm:$0xff]
        %v1480 = vld [vmem:[%s1041 + $0x411] sm:$0xff]
        %v1481 = vld [vmem:[%s1041 + $0x421] sm:$0xff]
        %v1482 = vld [vmem:[%s1041 + $0x431] sm:$0xff]
        %v1483 = vld [vmem:[%s1041 + $0x461] sm:$0xff]
        %v1484 = vld [vmem:[%s1041 + $0x471] sm:$0xff]
        %v1485 = vld [vmem:[%s1041 + $0x481] sm:$0xff]
        %v1486 = vld [vmem:[%s1041 + $0x491] sm:$0xff]
        %v1487 = vld [vmem:[%s1041 + $0x4a1] sm:$0xff]
        %v1488 = vld [vmem:[%s1041 + $0x4b1] sm:$0xff]
        %v1489 = vld [vmem:[%s1041 + $0x4c1] sm:$0xff]
        %v1490 = vld [vmem:[%s1041 + $0x4d1] sm:$0xff]
        %1555 = vrot.lane.b32.xlu0 %v1427, 16
        %v1556 = vpop.permute.xlu0 %1555
        %1557 = vrot.lane.b32.xlu0 %v1428, 16
        %v1558 = vpop.permute.xlu0 %1557
        %1559 = vrot.lane.b32.xlu0 %v1429, 16
        %v1560 = vpop.permute.xlu0 %1559
        %1561 = vrot.lane.b32.xlu0 %v1430, 16
        %v1562 = vpop.permute.xlu0 %1561
        %1563 = vrot.lane.b32.xlu0 %v1431, 16
        %v1564 = vpop.permute.xlu0 %1563
        %1565 = vrot.lane.b32.xlu0 %v1432, 16
        %v1566 = vpop.permute.xlu0 %1565
        %1567 = vrot.lane.b32.xlu0 %v1433, 16
        %v1568 = vpop.permute.xlu0 %1567
        %1569 = vrot.lane.b32.xlu0 %v1434, 16
        %v1570 = vpop.permute.xlu0 %1569
        %1571 = vrot.lane.b32.xlu0 %v1435, 16
        %v1572 = vpop.permute.xlu0 %1571
        %1573 = vrot.lane.b32.xlu0 %v1436, 16
        %v1574 = vpop.permute.xlu0 %1573
        %1575 = vrot.lane.b32.xlu0 %v1437, 16
        %v1576 = vpop.permute.xlu0 %1575
        %1577 = vrot.lane.b32.xlu0 %v1438, 16
        %v1578 = vpop.permute.xlu0 %1577
        %1579 = vrot.lane.b32.xlu0 %v1439, 16
        %v1580 = vpop.permute.xlu0 %1579
        %1581 = vrot.lane.b32.xlu0 %v1440, 16
        %v1582 = vpop.permute.xlu0 %1581
        %1583 = vrot.lane.b32.xlu0 %v1441, 16
        %v1584 = vpop.permute.xlu0 %1583
        %1585 = vrot.lane.b32.xlu0 %v1442, 16
        %v1586 = vpop.permute.xlu0 %1585
        %1587 = vrot.lane.b32.xlu0 %v1443, 16
        %v1588 = vpop.permute.xlu0 %1587
        %1589 = vrot.lane.b32.xlu0 %v1444, 16
        %v1590 = vpop.permute.xlu0 %1589
        %1591 = vrot.lane.b32.xlu0 %v1445, 16
        %v1592 = vpop.permute.xlu0 %1591
        %1593 = vrot.lane.b32.xlu0 %v1446, 16
        %v1594 = vpop.permute.xlu0 %1593
        %1595 = vrot.lane.b32.xlu0 %v1447, 16
        %v1596 = vpop.permute.xlu0 %1595
        %1597 = vrot.lane.b32.xlu0 %v1448, 16
        %v1598 = vpop.permute.xlu0 %1597
        %1599 = vrot.lane.b32.xlu0 %v1449, 16
        %v1600 = vpop.permute.xlu0 %1599
        %1601 = vrot.lane.b32.xlu0 %v1450, 16
        %v1602 = vpop.permute.xlu0 %1601
        %1603 = vrot.lane.b32.xlu0 %v1451, 16
        %v1604 = vpop.permute.xlu0 %1603
        %1605 = vrot.lane.b32.xlu0 %v1452, 16
        %v1606 = vpop.permute.xlu0 %1605
        %1607 = vrot.lane.b32.xlu0 %v1453, 16
        %v1608 = vpop.permute.xlu0 %1607
        %1609 = vrot.lane.b32.xlu0 %v1454, 16
        %v1610 = vpop.permute.xlu0 %1609
        %1611 = vrot.lane.b32.xlu0 %v1455, 16
        %v1612 = vpop.permute.xlu0 %1611
        %1613 = vrot.lane.b32.xlu0 %v1456, 16
        %v1614 = vpop.permute.xlu0 %1613
        %1615 = vrot.lane.b32.xlu0 %v1457, 16
        %v1616 = vpop.permute.xlu0 %1615
        %1617 = vrot.lane.b32.xlu0 %v1458, 16
        %v1618 = vpop.permute.xlu0 %1617
        %1619 = vrot.lane.b32.xlu0 %v1459, 16
        %v1620 = vpop.permute.xlu0 %1619
        %1621 = vrot.lane.b32.xlu0 %v1460, 16
        %v1622 = vpop.permute.xlu0 %1621
        %1623 = vrot.lane.b32.xlu0 %v1461, 16
        %v1624 = vpop.permute.xlu0 %1623
        %1625 = vrot.lane.b32.xlu0 %v1462, 16
        %v1626 = vpop.permute.xlu0 %1625
        %1627 = vrot.lane.b32.xlu0 %v1463, 16
        %v1628 = vpop.permute.xlu0 %1627
        %1629 = vrot.lane.b32.xlu0 %v1464, 16
        %v1630 = vpop.permute.xlu0 %1629
        %1631 = vrot.lane.b32.xlu0 %v1465, 16
        %v1632 = vpop.permute.xlu0 %1631
        %1633 = vrot.lane.b32.xlu0 %v1466, 16
        %v1634 = vpop.permute.xlu0 %1633
        %1635 = vrot.lane.b32.xlu0 %v1467, 16
        %v1636 = vpop.permute.xlu0 %1635
        %1637 = vrot.lane.b32.xlu0 %v1468, 16
        %v1638 = vpop.permute.xlu0 %1637
        %1639 = vrot.lane.b32.xlu0 %v1469, 16
        %v1640 = vpop.permute.xlu0 %1639
        %1641 = vrot.lane.b32.xlu0 %v1470, 16
        %v1642 = vpop.permute.xlu0 %1641
        %1643 = vrot.lane.b32.xlu0 %v1471, 16
        %v1644 = vpop.permute.xlu0 %1643
        %1645 = vrot.lane.b32.xlu0 %v1472, 16
        %v1646 = vpop.permute.xlu0 %1645
        %1647 = vrot.lane.b32.xlu0 %v1473, 16
        %v1648 = vpop.permute.xlu0 %1647
        %1649 = vrot.lane.b32.xlu0 %v1474, 16
        %v1650 = vpop.permute.xlu0 %1649
        %1651 = vrot.lane.b32.xlu0 %v1475, 16
        %v1652 = vpop.permute.xlu0 %1651
        %1653 = vrot.lane.b32.xlu0 %v1476, 16
        %v1654 = vpop.permute.xlu0 %1653
        %1655 = vrot.lane.b32.xlu0 %v1477, 16
        %v1656 = vpop.permute.xlu0 %1655
        %1657 = vrot.lane.b32.xlu0 %v1478, 16
        %v1658 = vpop.permute.xlu0 %1657
        %1659 = vrot.lane.b32.xlu0 %v1479, 16
        %v1660 = vpop.permute.xlu0 %1659
        %1661 = vrot.lane.b32.xlu0 %v1480, 16
        %v1662 = vpop.permute.xlu0 %1661
        %1663 = vrot.lane.b32.xlu0 %v1481, 16
        %v1664 = vpop.permute.xlu0 %1663
        %1665 = vrot.lane.b32.xlu0 %v1482, 16
        %v1666 = vpop.permute.xlu0 %1665
        %1667 = vrot.lane.b32.xlu0 %v1483, 16
        %v1668 = vpop.permute.xlu0 %1667
        %1669 = vrot.lane.b32.xlu0 %v1484, 16
        %v1670 = vpop.permute.xlu0 %1669
        %1671 = vrot.lane.b32.xlu0 %v1485, 16
        %v1672 = vpop.permute.xlu0 %1671
        %1673 = vrot.lane.b32.xlu0 %v1486, 16
        %v1674 = vpop.permute.xlu0 %1673
        %1675 = vrot.lane.b32.xlu0 %v1487, 16
        %v1676 = vpop.permute.xlu0 %1675
        %1677 = vrot.lane.b32.xlu0 %v1488, 16
        %v1678 = vpop.permute.xlu0 %1677
        %1679 = vrot.lane.b32.xlu0 %v1489, 16
        %v1680 = vpop.permute.xlu0 %1679
        %1681 = vrot.lane.b32.xlu0 %v1490, 16
        %v1682 = vpop.permute.xlu0 %1681
        %vm1747 = vcmask 162944
        %1748 = vst.msk [vmem:[#allocation2] sm:$0xff] %vm1747, %v1556
        %1749 = vst.msk [vmem:[#allocation2 + $0x8] sm:$0xff] %vm1747, %v1558
        %1750 = vst.msk [vmem:[#allocation2 + $0x10] sm:$0xff] %vm1747, %v1560
        %1751 = vst.msk [vmem:[#allocation2 + $0x18] sm:$0xff] %vm1747, %v1562
        %1752 = vst.msk [vmem:[#allocation2 + $0x20] sm:$0xff] %vm1747, %v1564
        %1753 = vst.msk [vmem:[#allocation2 + $0x28] sm:$0xff] %vm1747, %v1566
        %1754 = vst.msk [vmem:[#allocation2 + $0x30] sm:$0xff] %vm1747, %v1568
        %1755 = vst.msk [vmem:[#allocation2 + $0x38] sm:$0xff] %vm1747, %v1570
        %1756 = vst.msk [vmem:[#allocation2 + $0x40] sm:$0xff] %vm1747, %v1572
        %1757 = vst.msk [vmem:[#allocation2 + $0x48] sm:$0xff] %vm1747, %v1574
        %1758 = vst.msk [vmem:[#allocation2 + $0x50] sm:$0xff] %vm1747, %v1576
        %1759 = vst.msk [vmem:[#allocation2 + $0x58] sm:$0xff] %vm1747, %v1578
        %1760 = vst.msk [vmem:[#allocation2 + $0x60] sm:$0xff] %vm1747, %v1580
        %1761 = vst.msk [vmem:[#allocation2 + $0x68] sm:$0xff] %vm1747, %v1582
        %1762 = vst.msk [vmem:[#allocation2 + $0x70] sm:$0xff] %vm1747, %v1584
        %1763 = vst.msk [vmem:[#allocation2 + $0x78] sm:$0xff] %vm1747, %v1586
        %1764 = vst.msk [vmem:[#allocation2 + $0x80] sm:$0xff] %vm1747, %v1588
        %1765 = vst.msk [vmem:[#allocation2 + $0x88] sm:$0xff] %vm1747, %v1590
        %1766 = vst.msk [vmem:[#allocation2 + $0x90] sm:$0xff] %vm1747, %v1592
        %1767 = vst.msk [vmem:[#allocation2 + $0x98] sm:$0xff] %vm1747, %v1594
        %1768 = vst.msk [vmem:[#allocation2 + $0xa0] sm:$0xff] %vm1747, %v1596
        %1769 = vst.msk [vmem:[#allocation2 + $0xa8] sm:$0xff] %vm1747, %v1598
        %1770 = vst.msk [vmem:[#allocation2 + $0xb0] sm:$0xff] %vm1747, %v1600
        %1771 = vst.msk [vmem:[#allocation2 + $0xb8] sm:$0xff] %vm1747, %v1602
        %1772 = vst.msk [vmem:[#allocation2 + $0xc0] sm:$0xff] %vm1747, %v1604
        %1773 = vst.msk [vmem:[#allocation2 + $0xc8] sm:$0xff] %vm1747, %v1606
        %1774 = vst.msk [vmem:[#allocation2 + $0xd0] sm:$0xff] %vm1747, %v1608
        %1775 = vst.msk [vmem:[#allocation2 + $0xd8] sm:$0xff] %vm1747, %v1610
        %1776 = vst.msk [vmem:[#allocation2 + $0xe0] sm:$0xff] %vm1747, %v1612
        %1777 = vst.msk [vmem:[#allocation2 + $0xe8] sm:$0xff] %vm1747, %v1614
        %1778 = vst.msk [vmem:[#allocation2 + $0xf0] sm:$0xff] %vm1747, %v1616
        %1779 = vst.msk [vmem:[#allocation2 + $0xf8] sm:$0xff] %vm1747, %v1618
        %1780 = vst.msk [vmem:[#allocation2 + $0x100] sm:$0xff] %vm1747, %v1620
        %1781 = vst.msk [vmem:[#allocation2 + $0x108] sm:$0xff] %vm1747, %v1622
        %1782 = vst.msk [vmem:[#allocation2 + $0x110] sm:$0xff] %vm1747, %v1624
        %1783 = vst.msk [vmem:[#allocation2 + $0x118] sm:$0xff] %vm1747, %v1626
        %1784 = vst.msk [vmem:[#allocation2 + $0x120] sm:$0xff] %vm1747, %v1628
        %1785 = vst.msk [vmem:[#allocation2 + $0x128] sm:$0xff] %vm1747, %v1630
        %1786 = vst.msk [vmem:[#allocation2 + $0x130] sm:$0xff] %vm1747, %v1632
        %1787 = vst.msk [vmem:[#allocation2 + $0x138] sm:$0xff] %vm1747, %v1634
        %1788 = vst.msk [vmem:[#allocation2 + $0x140] sm:$0xff] %vm1747, %v1636
        %1789 = vst.msk [vmem:[#allocation2 + $0x148] sm:$0xff] %vm1747, %v1638
        %1790 = vst.msk [vmem:[#allocation2 + $0x150] sm:$0xff] %vm1747, %v1640
        %1791 = vst.msk [vmem:[#allocation2 + $0x158] sm:$0xff] %vm1747, %v1642
        %1792 = vst.msk [vmem:[#allocation2 + $0x160] sm:$0xff] %vm1747, %v1644
        %1793 = vst.msk [vmem:[#allocation2 + $0x168] sm:$0xff] %vm1747, %v1646
        %1794 = vst.msk [vmem:[#allocation2 + $0x170] sm:$0xff] %vm1747, %v1648
        %1795 = vst.msk [vmem:[#allocation2 + $0x178] sm:$0xff] %vm1747, %v1650
        %1796 = vst.msk [vmem:[#allocation2 + $0x180] sm:$0xff] %vm1747, %v1652
        %1797 = vst.msk [vmem:[#allocation2 + $0x188] sm:$0xff] %vm1747, %v1654
        %1798 = vst.msk [vmem:[#allocation2 + $0x190] sm:$0xff] %vm1747, %v1656
        %1799 = vst.msk [vmem:[#allocation2 + $0x198] sm:$0xff] %vm1747, %v1658
        %1800 = vst.msk [vmem:[#allocation2 + $0x1a0] sm:$0xff] %vm1747, %v1660
        %1801 = vst.msk [vmem:[#allocation2 + $0x1a8] sm:$0xff] %vm1747, %v1662
        %1802 = vst.msk [vmem:[#allocation2 + $0x1b0] sm:$0xff] %vm1747, %v1664
        %1803 = vst.msk [vmem:[#allocation2 + $0x1b8] sm:$0xff] %vm1747, %v1666
        %1804 = vst.msk [vmem:[#allocation2 + $0x1c0] sm:$0xff] %vm1747, %v1668
        %1805 = vst.msk [vmem:[#allocation2 + $0x1c8] sm:$0xff] %vm1747, %v1670
        %1806 = vst.msk [vmem:[#allocation2 + $0x1d0] sm:$0xff] %vm1747, %v1672
        %1807 = vst.msk [vmem:[#allocation2 + $0x1d8] sm:$0xff] %vm1747, %v1674
        %1808 = vst.msk [vmem:[#allocation2 + $0x1e0] sm:$0xff] %vm1747, %v1676
        %1809 = vst.msk [vmem:[#allocation2 + $0x1e8] sm:$0xff] %vm1747, %v1678
        %1810 = vst.msk [vmem:[#allocation2 + $0x1f0] sm:$0xff] %vm1747, %v1680
        %1811 = vst.msk [vmem:[#allocation2 + $0x1f8] sm:$0xff] %vm1747, %v1682
        %v1812 = vld [vmem:[%s1041 + $0x2] sm:$0xff]
        %v1813 = vld [vmem:[%s1041 + $0x12] sm:$0xff]
        %v1814 = vld [vmem:[%s1041 + $0x22] sm:$0xff]
        %v1815 = vld [vmem:[%s1041 + $0x32] sm:$0xff]
        %v1816 = vld [vmem:[%s1041 + $0x42] sm:$0xff]
        %v1817 = vld [vmem:[%s1041 + $0x52] sm:$0xff]
        %v1818 = vld [vmem:[%s1041 + $0x62] sm:$0xff]
        %v1819 = vld [vmem:[%s1041 + $0x72] sm:$0xff]
        %v1820 = vld [vmem:[%s1041 + $0xa2] sm:$0xff]
        %v1821 = vld [vmem:[%s1041 + $0xb2] sm:$0xff]
        %v1822 = vld [vmem:[%s1041 + $0xc2] sm:$0xff]
        %v1823 = vld [vmem:[%s1041 + $0xd2] sm:$0xff]
        %v1824 = vld [vmem:[%s1041 + $0xe2] sm:$0xff]
        %v1825 = vld [vmem:[%s1041 + $0xf2] sm:$0xff]
        %v1826 = vld [vmem:[%s1041 + $0x102] sm:$0xff]
        %v1827 = vld [vmem:[%s1041 + $0x112] sm:$0xff]
        %v1828 = vld [vmem:[%s1041 + $0x142] sm:$0xff]
        %v1829 = vld [vmem:[%s1041 + $0x152] sm:$0xff]
        %v1830 = vld [vmem:[%s1041 + $0x162] sm:$0xff]
        %v1831 = vld [vmem:[%s1041 + $0x172] sm:$0xff]
        %v1832 = vld [vmem:[%s1041 + $0x182] sm:$0xff]
        %v1833 = vld [vmem:[%s1041 + $0x192] sm:$0xff]
        %v1834 = vld [vmem:[%s1041 + $0x1a2] sm:$0xff]
        %v1835 = vld [vmem:[%s1041 + $0x1b2] sm:$0xff]
        %v1836 = vld [vmem:[%s1041 + $0x1e2] sm:$0xff]
        %v1837 = vld [vmem:[%s1041 + $0x1f2] sm:$0xff]
        %v1838 = vld [vmem:[%s1041 + $0x202] sm:$0xff]
        %v1839 = vld [vmem:[%s1041 + $0x212] sm:$0xff]
        %v1840 = vld [vmem:[%s1041 + $0x222] sm:$0xff]
        %v1841 = vld [vmem:[%s1041 + $0x232] sm:$0xff]
        %v1842 = vld [vmem:[%s1041 + $0x242] sm:$0xff]
        %v1843 = vld [vmem:[%s1041 + $0x252] sm:$0xff]
        %v1844 = vld [vmem:[%s1041 + $0x282] sm:$0xff]
        %v1845 = vld [vmem:[%s1041 + $0x292] sm:$0xff]
        %v1846 = vld [vmem:[%s1041 + $0x2a2] sm:$0xff]
        %v1847 = vld [vmem:[%s1041 + $0x2b2] sm:$0xff]
        %v1848 = vld [vmem:[%s1041 + $0x2c2] sm:$0xff]
        %v1849 = vld [vmem:[%s1041 + $0x2d2] sm:$0xff]
        %v1850 = vld [vmem:[%s1041 + $0x2e2] sm:$0xff]
        %v1851 = vld [vmem:[%s1041 + $0x2f2] sm:$0xff]
        %v1852 = vld [vmem:[%s1041 + $0x322] sm:$0xff]
        %v1853 = vld [vmem:[%s1041 + $0x332] sm:$0xff]
        %v1854 = vld [vmem:[%s1041 + $0x342] sm:$0xff]
        %v1855 = vld [vmem:[%s1041 + $0x352] sm:$0xff]
        %v1856 = vld [vmem:[%s1041 + $0x362] sm:$0xff]
        %v1857 = vld [vmem:[%s1041 + $0x372] sm:$0xff]
        %v1858 = vld [vmem:[%s1041 + $0x382] sm:$0xff]
        %v1859 = vld [vmem:[%s1041 + $0x392] sm:$0xff]
        %v1860 = vld [vmem:[%s1041 + $0x3c2] sm:$0xff]
        %v1861 = vld [vmem:[%s1041 + $0x3d2] sm:$0xff]
        %v1862 = vld [vmem:[%s1041 + $0x3e2] sm:$0xff]
        %v1863 = vld [vmem:[%s1041 + $0x3f2] sm:$0xff]
        %v1864 = vld [vmem:[%s1041 + $0x402] sm:$0xff]
        %v1865 = vld [vmem:[%s1041 + $0x412] sm:$0xff]
        %v1866 = vld [vmem:[%s1041 + $0x422] sm:$0xff]
        %v1867 = vld [vmem:[%s1041 + $0x432] sm:$0xff]
        %v1868 = vld [vmem:[%s1041 + $0x462] sm:$0xff]
        %v1869 = vld [vmem:[%s1041 + $0x472] sm:$0xff]
        %v1870 = vld [vmem:[%s1041 + $0x482] sm:$0xff]
        %v1871 = vld [vmem:[%s1041 + $0x492] sm:$0xff]
        %v1872 = vld [vmem:[%s1041 + $0x4a2] sm:$0xff]
        %v1873 = vld [vmem:[%s1041 + $0x4b2] sm:$0xff]
        %v1874 = vld [vmem:[%s1041 + $0x4c2] sm:$0xff]
        %v1875 = vld [vmem:[%s1041 + $0x4d2] sm:$0xff]
        %1940 = vrot.lane.b32.xlu0 %v1812, 20
        %v1941 = vpop.permute.xlu0 %1940
        %1942 = vrot.lane.b32.xlu0 %v1813, 20
        %v1943 = vpop.permute.xlu0 %1942
        %1944 = vrot.lane.b32.xlu0 %v1814, 20
        %v1945 = vpop.permute.xlu0 %1944
        %1946 = vrot.lane.b32.xlu0 %v1815, 20
        %v1947 = vpop.permute.xlu0 %1946
        %1948 = vrot.lane.b32.xlu0 %v1816, 20
        %v1949 = vpop.permute.xlu0 %1948
        %1950 = vrot.lane.b32.xlu0 %v1817, 20
        %v1951 = vpop.permute.xlu0 %1950
        %1952 = vrot.lane.b32.xlu0 %v1818, 20
        %v1953 = vpop.permute.xlu0 %1952
        %1954 = vrot.lane.b32.xlu0 %v1819, 20
        %v1955 = vpop.permute.xlu0 %1954
        %1956 = vrot.lane.b32.xlu0 %v1820, 20
        %v1957 = vpop.permute.xlu0 %1956
        %1958 = vrot.lane.b32.xlu0 %v1821, 20
        %v1959 = vpop.permute.xlu0 %1958
        %1960 = vrot.lane.b32.xlu0 %v1822, 20
        %v1961 = vpop.permute.xlu0 %1960
        %1962 = vrot.lane.b32.xlu0 %v1823, 20
        %v1963 = vpop.permute.xlu0 %1962
        %1964 = vrot.lane.b32.xlu0 %v1824, 20
        %v1965 = vpop.permute.xlu0 %1964
        %1966 = vrot.lane.b32.xlu0 %v1825, 20
        %v1967 = vpop.permute.xlu0 %1966
        %1968 = vrot.lane.b32.xlu0 %v1826, 20
        %v1969 = vpop.permute.xlu0 %1968
        %1970 = vrot.lane.b32.xlu0 %v1827, 20
        %v1971 = vpop.permute.xlu0 %1970
        %1972 = vrot.lane.b32.xlu0 %v1828, 20
        %v1973 = vpop.permute.xlu0 %1972
        %1974 = vrot.lane.b32.xlu0 %v1829, 20
        %v1975 = vpop.permute.xlu0 %1974
        %1976 = vrot.lane.b32.xlu0 %v1830, 20
        %v1977 = vpop.permute.xlu0 %1976
        %1978 = vrot.lane.b32.xlu0 %v1831, 20
        %v1979 = vpop.permute.xlu0 %1978
        %1980 = vrot.lane.b32.xlu0 %v1832, 20
        %v1981 = vpop.permute.xlu0 %1980
        %1982 = vrot.lane.b32.xlu0 %v1833, 20
        %v1983 = vpop.permute.xlu0 %1982
        %1984 = vrot.lane.b32.xlu0 %v1834, 20
        %v1985 = vpop.permute.xlu0 %1984
        %1986 = vrot.lane.b32.xlu0 %v1835, 20
        %v1987 = vpop.permute.xlu0 %1986
        %1988 = vrot.lane.b32.xlu0 %v1836, 20
        %v1989 = vpop.permute.xlu0 %1988
        %1990 = vrot.lane.b32.xlu0 %v1837, 20
        %v1991 = vpop.permute.xlu0 %1990
        %1992 = vrot.lane.b32.xlu0 %v1838, 20
        %v1993 = vpop.permute.xlu0 %1992
        %1994 = vrot.lane.b32.xlu0 %v1839, 20
        %v1995 = vpop.permute.xlu0 %1994
        %1996 = vrot.lane.b32.xlu0 %v1840, 20
        %v1997 = vpop.permute.xlu0 %1996
        %1998 = vrot.lane.b32.xlu0 %v1841, 20
        %v1999 = vpop.permute.xlu0 %1998
        %2000 = vrot.lane.b32.xlu0 %v1842, 20
        %v2001 = vpop.permute.xlu0 %2000
        %2002 = vrot.lane.b32.xlu0 %v1843, 20
        %v2003 = vpop.permute.xlu0 %2002
        %2004 = vrot.lane.b32.xlu0 %v1844, 20
        %v2005 = vpop.permute.xlu0 %2004
        %2006 = vrot.lane.b32.xlu0 %v1845, 20
        %v2007 = vpop.permute.xlu0 %2006
        %2008 = vrot.lane.b32.xlu0 %v1846, 20
        %v2009 = vpop.permute.xlu0 %2008
        %2010 = vrot.lane.b32.xlu0 %v1847, 20
        %v2011 = vpop.permute.xlu0 %2010
        %2012 = vrot.lane.b32.xlu0 %v1848, 20
        %v2013 = vpop.permute.xlu0 %2012
        %2014 = vrot.lane.b32.xlu0 %v1849, 20
        %v2015 = vpop.permute.xlu0 %2014
        %2016 = vrot.lane.b32.xlu0 %v1850, 20
        %v2017 = vpop.permute.xlu0 %2016
        %2018 = vrot.lane.b32.xlu0 %v1851, 20
        %v2019 = vpop.permute.xlu0 %2018
        %2020 = vrot.lane.b32.xlu0 %v1852, 20
        %v2021 = vpop.permute.xlu0 %2020
        %2022 = vrot.lane.b32.xlu0 %v1853, 20
        %v2023 = vpop.permute.xlu0 %2022
        %2024 = vrot.lane.b32.xlu0 %v1854, 20
        %v2025 = vpop.permute.xlu0 %2024
        %2026 = vrot.lane.b32.xlu0 %v1855, 20
        %v2027 = vpop.permute.xlu0 %2026
        %2028 = vrot.lane.b32.xlu0 %v1856, 20
        %v2029 = vpop.permute.xlu0 %2028
        %2030 = vrot.lane.b32.xlu0 %v1857, 20
        %v2031 = vpop.permute.xlu0 %2030
        %2032 = vrot.lane.b32.xlu0 %v1858, 20
        %v2033 = vpop.permute.xlu0 %2032
        %2034 = vrot.lane.b32.xlu0 %v1859, 20
        %v2035 = vpop.permute.xlu0 %2034
        %2036 = vrot.lane.b32.xlu0 %v1860, 20
        %v2037 = vpop.permute.xlu0 %2036
        %2038 = vrot.lane.b32.xlu0 %v1861, 20
        %v2039 = vpop.permute.xlu0 %2038
        %2040 = vrot.lane.b32.xlu0 %v1862, 20
        %v2041 = vpop.permute.xlu0 %2040
        %2042 = vrot.lane.b32.xlu0 %v1863, 20
        %v2043 = vpop.permute.xlu0 %2042
        %2044 = vrot.lane.b32.xlu0 %v1864, 20
        %v2045 = vpop.permute.xlu0 %2044
        %2046 = vrot.lane.b32.xlu0 %v1865, 20
        %v2047 = vpop.permute.xlu0 %2046
        %2048 = vrot.lane.b32.xlu0 %v1866, 20
        %v2049 = vpop.permute.xlu0 %2048
        %2050 = vrot.lane.b32.xlu0 %v1867, 20
        %v2051 = vpop.permute.xlu0 %2050
        %2052 = vrot.lane.b32.xlu0 %v1868, 20
        %v2053 = vpop.permute.xlu0 %2052
        %2054 = vrot.lane.b32.xlu0 %v1869, 20
        %v2055 = vpop.permute.xlu0 %2054
        %2056 = vrot.lane.b32.xlu0 %v1870, 20
        %v2057 = vpop.permute.xlu0 %2056
        %2058 = vrot.lane.b32.xlu0 %v1871, 20
        %v2059 = vpop.permute.xlu0 %2058
        %2060 = vrot.lane.b32.xlu0 %v1872, 20
        %v2061 = vpop.permute.xlu0 %2060
        %2062 = vrot.lane.b32.xlu0 %v1873, 20
        %v2063 = vpop.permute.xlu0 %2062
        %2064 = vrot.lane.b32.xlu0 %v1874, 20
        %v2065 = vpop.permute.xlu0 %2064
        %2066 = vrot.lane.b32.xlu0 %v1875, 20
        %v2067 = vpop.permute.xlu0 %2066
        %vm2132 = vcmask 195744
        %2133 = vst.msk [vmem:[#allocation2] sm:$0xff] %vm2132, %v1941
        %2134 = vst.msk [vmem:[#allocation2 + $0x8] sm:$0xff] %vm2132, %v1943
        %2135 = vst.msk [vmem:[#allocation2 + $0x10] sm:$0xff] %vm2132, %v1945
        %2136 = vst.msk [vmem:[#allocation2 + $0x18] sm:$0xff] %vm2132, %v1947
        %2137 = vst.msk [vmem:[#allocation2 + $0x20] sm:$0xff] %vm2132, %v1949
        %2138 = vst.msk [vmem:[#allocation2 + $0x28] sm:$0xff] %vm2132, %v1951
        %2139 = vst.msk [vmem:[#allocation2 + $0x30] sm:$0xff] %vm2132, %v1953
        %2140 = vst.msk [vmem:[#allocation2 + $0x38] sm:$0xff] %vm2132, %v1955
        %2141 = vst.msk [vmem:[#allocation2 + $0x40] sm:$0xff] %vm2132, %v1957
        %2142 = vst.msk [vmem:[#allocation2 + $0x48] sm:$0xff] %vm2132, %v1959
        %2143 = vst.msk [vmem:[#allocation2 + $0x50] sm:$0xff] %vm2132, %v1961
        %2144 = vst.msk [vmem:[#allocation2 + $0x58] sm:$0xff] %vm2132, %v1963
        %2145 = vst.msk [vmem:[#allocation2 + $0x60] sm:$0xff] %vm2132, %v1965
        %2146 = vst.msk [vmem:[#allocation2 + $0x68] sm:$0xff] %vm2132, %v1967
        %2147 = vst.msk [vmem:[#allocation2 + $0x70] sm:$0xff] %vm2132, %v1969
        %2148 = vst.msk [vmem:[#allocation2 + $0x78] sm:$0xff] %vm2132, %v1971
        %2149 = vst.msk [vmem:[#allocation2 + $0x80] sm:$0xff] %vm2132, %v1973
        %2150 = vst.msk [vmem:[#allocation2 + $0x88] sm:$0xff] %vm2132, %v1975
        %2151 = vst.msk [vmem:[#allocation2 + $0x90] sm:$0xff] %vm2132, %v1977
        %2152 = vst.msk [vmem:[#allocation2 + $0x98] sm:$0xff] %vm2132, %v1979
        %2153 = vst.msk [vmem:[#allocation2 + $0xa0] sm:$0xff] %vm2132, %v1981
        %2154 = vst.msk [vmem:[#allocation2 + $0xa8] sm:$0xff] %vm2132, %v1983
        %2155 = vst.msk [vmem:[#allocation2 + $0xb0] sm:$0xff] %vm2132, %v1985
        %2156 = vst.msk [vmem:[#allocation2 + $0xb8] sm:$0xff] %vm2132, %v1987
        %2157 = vst.msk [vmem:[#allocation2 + $0xc0] sm:$0xff] %vm2132, %v1989
        %2158 = vst.msk [vmem:[#allocation2 + $0xc8] sm:$0xff] %vm2132, %v1991
        %2159 = vst.msk [vmem:[#allocation2 + $0xd0] sm:$0xff] %vm2132, %v1993
        %2160 = vst.msk [vmem:[#allocation2 + $0xd8] sm:$0xff] %vm2132, %v1995
        %2161 = vst.msk [vmem:[#allocation2 + $0xe0] sm:$0xff] %vm2132, %v1997
        %2162 = vst.msk [vmem:[#allocation2 + $0xe8] sm:$0xff] %vm2132, %v1999
        %2163 = vst.msk [vmem:[#allocation2 + $0xf0] sm:$0xff] %vm2132, %v2001
        %2164 = vst.msk [vmem:[#allocation2 + $0xf8] sm:$0xff] %vm2132, %v2003
        %2165 = vst.msk [vmem:[#allocation2 + $0x100] sm:$0xff] %vm2132, %v2005
        %2166 = vst.msk [vmem:[#allocation2 + $0x108] sm:$0xff] %vm2132, %v2007
        %2167 = vst.msk [vmem:[#allocation2 + $0x110] sm:$0xff] %vm2132, %v2009
        %2168 = vst.msk [vmem:[#allocation2 + $0x118] sm:$0xff] %vm2132, %v2011
        %2169 = vst.msk [vmem:[#allocation2 + $0x120] sm:$0xff] %vm2132, %v2013
        %2170 = vst.msk [vmem:[#allocation2 + $0x128] sm:$0xff] %vm2132, %v2015
        %2171 = vst.msk [vmem:[#allocation2 + $0x130] sm:$0xff] %vm2132, %v2017
        %2172 = vst.msk [vmem:[#allocation2 + $0x138] sm:$0xff] %vm2132, %v2019
        %2173 = vst.msk [vmem:[#allocation2 + $0x140] sm:$0xff] %vm2132, %v2021
        %2174 = vst.msk [vmem:[#allocation2 + $0x148] sm:$0xff] %vm2132, %v2023
        %2175 = vst.msk [vmem:[#allocation2 + $0x150] sm:$0xff] %vm2132, %v2025
        %2176 = vst.msk [vmem:[#allocation2 + $0x158] sm:$0xff] %vm2132, %v2027
        %2177 = vst.msk [vmem:[#allocation2 + $0x160] sm:$0xff] %vm2132, %v2029
        %2178 = vst.msk [vmem:[#allocation2 + $0x168] sm:$0xff] %vm2132, %v2031
        %2179 = vst.msk [vmem:[#allocation2 + $0x170] sm:$0xff] %vm2132, %v2033
        %2180 = vst.msk [vmem:[#allocation2 + $0x178] sm:$0xff] %vm2132, %v2035
        %2181 = vst.msk [vmem:[#allocation2 + $0x180] sm:$0xff] %vm2132, %v2037
        %2182 = vst.msk [vmem:[#allocation2 + $0x188] sm:$0xff] %vm2132, %v2039
        %2183 = vst.msk [vmem:[#allocation2 + $0x190] sm:$0xff] %vm2132, %v2041
        %2184 = vst.msk [vmem:[#allocation2 + $0x198] sm:$0xff] %vm2132, %v2043
        %2185 = vst.msk [vmem:[#allocation2 + $0x1a0] sm:$0xff] %vm2132, %v2045
        %2186 = vst.msk [vmem:[#allocation2 + $0x1a8] sm:$0xff] %vm2132, %v2047
        %2187 = vst.msk [vmem:[#allocation2 + $0x1b0] sm:$0xff] %vm2132, %v2049
        %2188 = vst.msk [vmem:[#allocation2 + $0x1b8] sm:$0xff] %vm2132, %v2051
        %2189 = vst.msk [vmem:[#allocation2 + $0x1c0] sm:$0xff] %vm2132, %v2053
        %2190 = vst.msk [vmem:[#allocation2 + $0x1c8] sm:$0xff] %vm2132, %v2055
        %2191 = vst.msk [vmem:[#allocation2 + $0x1d0] sm:$0xff] %vm2132, %v2057
        %2192 = vst.msk [vmem:[#allocation2 + $0x1d8] sm:$0xff] %vm2132, %v2059
        %2193 = vst.msk [vmem:[#allocation2 + $0x1e0] sm:$0xff] %vm2132, %v2061
        %2194 = vst.msk [vmem:[#allocation2 + $0x1e8] sm:$0xff] %vm2132, %v2063
        %2195 = vst.msk [vmem:[#allocation2 + $0x1f0] sm:$0xff] %vm2132, %v2065
        %2196 = vst.msk [vmem:[#allocation2 + $0x1f8] sm:$0xff] %vm2132, %v2067
        %s2197 = scalar_lea.vmem %s141, 32
        %v2198 = vld [vmem:[%s2197] sm:$0xff]
        %v2199 = vld [vmem:[%s2197 + $0x10] sm:$0xff]
        %v2200 = vld [vmem:[%s2197 + $0x20] sm:$0xff]
        %v2201 = vld [vmem:[%s2197 + $0x30] sm:$0xff]
        %v2202 = vld [vmem:[%s2197 + $0x40] sm:$0xff]
        %v2203 = vld [vmem:[%s2197 + $0x50] sm:$0xff]
        %v2204 = vld [vmem:[%s2197 + $0x60] sm:$0xff]
        %v2205 = vld [vmem:[%s2197 + $0x70] sm:$0xff]
        %v2206 = vld [vmem:[%s2197 + $0xa0] sm:$0xff]
        %v2207 = vld [vmem:[%s2197 + $0xb0] sm:$0xff]
        %v2208 = vld [vmem:[%s2197 + $0xc0] sm:$0xff]
        %v2209 = vld [vmem:[%s2197 + $0xd0] sm:$0xff]
        %v2210 = vld [vmem:[%s2197 + $0xe0] sm:$0xff]
        %v2211 = vld [vmem:[%s2197 + $0xf0] sm:$0xff]
        %v2212 = vld [vmem:[%s2197 + $0x100] sm:$0xff]
        %v2213 = vld [vmem:[%s2197 + $0x110] sm:$0xff]
        %v2214 = vld [vmem:[%s2197 + $0x140] sm:$0xff]
        %v2215 = vld [vmem:[%s2197 + $0x150] sm:$0xff]
        %v2216 = vld [vmem:[%s2197 + $0x160] sm:$0xff]
        %v2217 = vld [vmem:[%s2197 + $0x170] sm:$0xff]
        %v2218 = vld [vmem:[%s2197 + $0x180] sm:$0xff]
        %v2219 = vld [vmem:[%s2197 + $0x190] sm:$0xff]
        %v2220 = vld [vmem:[%s2197 + $0x1a0] sm:$0xff]
        %v2221 = vld [vmem:[%s2197 + $0x1b0] sm:$0xff]
        %v2222 = vld [vmem:[%s2197 + $0x1e0] sm:$0xff]
        %v2223 = vld [vmem:[%s2197 + $0x1f0] sm:$0xff]
        %v2224 = vld [vmem:[%s2197 + $0x200] sm:$0xff]
        %v2225 = vld [vmem:[%s2197 + $0x210] sm:$0xff]
        %v2226 = vld [vmem:[%s2197 + $0x220] sm:$0xff]
        %v2227 = vld [vmem:[%s2197 + $0x230] sm:$0xff]
        %v2228 = vld [vmem:[%s2197 + $0x240] sm:$0xff]
        %v2229 = vld [vmem:[%s2197 + $0x250] sm:$0xff]
        %v2230 = vld [vmem:[%s2197 + $0x280] sm:$0xff]
        %v2231 = vld [vmem:[%s2197 + $0x290] sm:$0xff]
        %v2232 = vld [vmem:[%s2197 + $0x2a0] sm:$0xff]
        %v2233 = vld [vmem:[%s2197 + $0x2b0] sm:$0xff]
        %v2234 = vld [vmem:[%s2197 + $0x2c0] sm:$0xff]
        %v2235 = vld [vmem:[%s2197 + $0x2d0] sm:$0xff]
        %v2236 = vld [vmem:[%s2197 + $0x2e0] sm:$0xff]
        %v2237 = vld [vmem:[%s2197 + $0x2f0] sm:$0xff]
        %v2238 = vld [vmem:[%s2197 + $0x320] sm:$0xff]
        %v2239 = vld [vmem:[%s2197 + $0x330] sm:$0xff]
        %v2240 = vld [vmem:[%s2197 + $0x340] sm:$0xff]
        %v2241 = vld [vmem:[%s2197 + $0x350] sm:$0xff]
        %v2242 = vld [vmem:[%s2197 + $0x360] sm:$0xff]
        %v2243 = vld [vmem:[%s2197 + $0x370] sm:$0xff]
        %v2244 = vld [vmem:[%s2197 + $0x380] sm:$0xff]
        %v2245 = vld [vmem:[%s2197 + $0x390] sm:$0xff]
        %v2246 = vld [vmem:[%s2197 + $0x3c0] sm:$0xff]
        %v2247 = vld [vmem:[%s2197 + $0x3d0] sm:$0xff]
        %v2248 = vld [vmem:[%s2197 + $0x3e0] sm:$0xff]
        %v2249 = vld [vmem:[%s2197 + $0x3f0] sm:$0xff]
        %v2250 = vld [vmem:[%s2197 + $0x400] sm:$0xff]
        %v2251 = vld [vmem:[%s2197 + $0x410] sm:$0xff]
        %v2252 = vld [vmem:[%s2197 + $0x420] sm:$0xff]
        %v2253 = vld [vmem:[%s2197 + $0x430] sm:$0xff]
        %v2254 = vld [vmem:[%s2197 + $0x460] sm:$0xff]
        %v2255 = vld [vmem:[%s2197 + $0x470] sm:$0xff]
        %v2256 = vld [vmem:[%s2197 + $0x480] sm:$0xff]
        %v2257 = vld [vmem:[%s2197 + $0x490] sm:$0xff]
        %v2258 = vld [vmem:[%s2197 + $0x4a0] sm:$0xff]
        %v2259 = vld [vmem:[%s2197 + $0x4b0] sm:$0xff]
        %v2260 = vld [vmem:[%s2197 + $0x4c0] sm:$0xff]
        %v2261 = vld [vmem:[%s2197 + $0x4d0] sm:$0xff]
        %2326 = vrot.lane.b32.xlu0 %v2198, 24
        %v2327 = vpop.permute.xlu0 %2326
        %2328 = vrot.lane.b32.xlu0 %v2199, 24
        %v2329 = vpop.permute.xlu0 %2328
        %2330 = vrot.lane.b32.xlu0 %v2200, 24
        %v2331 = vpop.permute.xlu0 %2330
        %2332 = vrot.lane.b32.xlu0 %v2201, 24
        %v2333 = vpop.permute.xlu0 %2332
        %2334 = vrot.lane.b32.xlu0 %v2202, 24
        %v2335 = vpop.permute.xlu0 %2334
        %2336 = vrot.lane.b32.xlu0 %v2203, 24
        %v2337 = vpop.permute.xlu0 %2336
        %2338 = vrot.lane.b32.xlu0 %v2204, 24
        %v2339 = vpop.permute.xlu0 %2338
        %2340 = vrot.lane.b32.xlu0 %v2205, 24
        %v2341 = vpop.permute.xlu0 %2340
        %2342 = vrot.lane.b32.xlu0 %v2206, 24
        %v2343 = vpop.permute.xlu0 %2342
        %2344 = vrot.lane.b32.xlu0 %v2207, 24
        %v2345 = vpop.permute.xlu0 %2344
        %2346 = vrot.lane.b32.xlu0 %v2208, 24
        %v2347 = vpop.permute.xlu0 %2346
        %2348 = vrot.lane.b32.xlu0 %v2209, 24
        %v2349 = vpop.permute.xlu0 %2348
        %2350 = vrot.lane.b32.xlu0 %v2210, 24
        %v2351 = vpop.permute.xlu0 %2350
        %2352 = vrot.lane.b32.xlu0 %v2211, 24
        %v2353 = vpop.permute.xlu0 %2352
        %2354 = vrot.lane.b32.xlu0 %v2212, 24
        %v2355 = vpop.permute.xlu0 %2354
        %2356 = vrot.lane.b32.xlu0 %v2213, 24
        %v2357 = vpop.permute.xlu0 %2356
        %2358 = vrot.lane.b32.xlu0 %v2214, 24
        %v2359 = vpop.permute.xlu0 %2358
        %2360 = vrot.lane.b32.xlu0 %v2215, 24
        %v2361 = vpop.permute.xlu0 %2360
        %2362 = vrot.lane.b32.xlu0 %v2216, 24
        %v2363 = vpop.permute.xlu0 %2362
        %2364 = vrot.lane.b32.xlu0 %v2217, 24
        %v2365 = vpop.permute.xlu0 %2364
        %2366 = vrot.lane.b32.xlu0 %v2218, 24
        %v2367 = vpop.permute.xlu0 %2366
        %2368 = vrot.lane.b32.xlu0 %v2219, 24
        %v2369 = vpop.permute.xlu0 %2368
        %2370 = vrot.lane.b32.xlu0 %v2220, 24
        %v2371 = vpop.permute.xlu0 %2370
        %2372 = vrot.lane.b32.xlu0 %v2221, 24
        %v2373 = vpop.permute.xlu0 %2372
        %2374 = vrot.lane.b32.xlu0 %v2222, 24
        %v2375 = vpop.permute.xlu0 %2374
        %2376 = vrot.lane.b32.xlu0 %v2223, 24
        %v2377 = vpop.permute.xlu0 %2376
        %2378 = vrot.lane.b32.xlu0 %v2224, 24
        %v2379 = vpop.permute.xlu0 %2378
        %2380 = vrot.lane.b32.xlu0 %v2225, 24
        %v2381 = vpop.permute.xlu0 %2380
        %2382 = vrot.lane.b32.xlu0 %v2226, 24
        %v2383 = vpop.permute.xlu0 %2382
        %2384 = vrot.lane.b32.xlu0 %v2227, 24
        %v2385 = vpop.permute.xlu0 %2384
        %2386 = vrot.lane.b32.xlu0 %v2228, 24
        %v2387 = vpop.permute.xlu0 %2386
        %2388 = vrot.lane.b32.xlu0 %v2229, 24
        %v2389 = vpop.permute.xlu0 %2388
        %2390 = vrot.lane.b32.xlu0 %v2230, 24
        %v2391 = vpop.permute.xlu0 %2390
        %2392 = vrot.lane.b32.xlu0 %v2231, 24
        %v2393 = vpop.permute.xlu0 %2392
        %2394 = vrot.lane.b32.xlu0 %v2232, 24
        %v2395 = vpop.permute.xlu0 %2394
        %2396 = vrot.lane.b32.xlu0 %v2233, 24
        %v2397 = vpop.permute.xlu0 %2396
        %2398 = vrot.lane.b32.xlu0 %v2234, 24
        %v2399 = vpop.permute.xlu0 %2398
        %2400 = vrot.lane.b32.xlu0 %v2235, 24
        %v2401 = vpop.permute.xlu0 %2400
        %2402 = vrot.lane.b32.xlu0 %v2236, 24
        %v2403 = vpop.permute.xlu0 %2402
        %2404 = vrot.lane.b32.xlu0 %v2237, 24
        %v2405 = vpop.permute.xlu0 %2404
        %2406 = vrot.lane.b32.xlu0 %v2238, 24
        %v2407 = vpop.permute.xlu0 %2406
        %2408 = vrot.lane.b32.xlu0 %v2239, 24
        %v2409 = vpop.permute.xlu0 %2408
        %2410 = vrot.lane.b32.xlu0 %v2240, 24
        %v2411 = vpop.permute.xlu0 %2410
        %2412 = vrot.lane.b32.xlu0 %v2241, 24
        %v2413 = vpop.permute.xlu0 %2412
        %2414 = vrot.lane.b32.xlu0 %v2242, 24
        %v2415 = vpop.permute.xlu0 %2414
        %2416 = vrot.lane.b32.xlu0 %v2243, 24
        %v2417 = vpop.permute.xlu0 %2416
        %2418 = vrot.lane.b32.xlu0 %v2244, 24
        %v2419 = vpop.permute.xlu0 %2418
        %2420 = vrot.lane.b32.xlu0 %v2245, 24
        %v2421 = vpop.permute.xlu0 %2420
        %2422 = vrot.lane.b32.xlu0 %v2246, 24
        %v2423 = vpop.permute.xlu0 %2422
        %2424 = vrot.lane.b32.xlu0 %v2247, 24
        %v2425 = vpop.permute.xlu0 %2424
        %2426 = vrot.lane.b32.xlu0 %v2248, 24
        %v2427 = vpop.permute.xlu0 %2426
        %2428 = vrot.lane.b32.xlu0 %v2249, 24
        %v2429 = vpop.permute.xlu0 %2428
        %2430 = vrot.lane.b32.xlu0 %v2250, 24
        %v2431 = vpop.permute.xlu0 %2430
        %2432 = vrot.lane.b32.xlu0 %v2251, 24
        %v2433 = vpop.permute.xlu0 %2432
        %2434 = vrot.lane.b32.xlu0 %v2252, 24
        %v2435 = vpop.permute.xlu0 %2434
        %2436 = vrot.lane.b32.xlu0 %v2253, 24
        %v2437 = vpop.permute.xlu0 %2436
        %2438 = vrot.lane.b32.xlu0 %v2254, 24
        %v2439 = vpop.permute.xlu0 %2438
        %2440 = vrot.lane.b32.xlu0 %v2255, 24
        %v2441 = vpop.permute.xlu0 %2440
        %2442 = vrot.lane.b32.xlu0 %v2256, 24
        %v2443 = vpop.permute.xlu0 %2442
        %2444 = vrot.lane.b32.xlu0 %v2257, 24
        %v2445 = vpop.permute.xlu0 %2444
        %2446 = vrot.lane.b32.xlu0 %v2258, 24
        %v2447 = vpop.permute.xlu0 %2446
        %2448 = vrot.lane.b32.xlu0 %v2259, 24
        %v2449 = vpop.permute.xlu0 %2448
        %2450 = vrot.lane.b32.xlu0 %v2260, 24
        %v2451 = vpop.permute.xlu0 %2450
        %2452 = vrot.lane.b32.xlu0 %v2261, 24
        %v2453 = vpop.permute.xlu0 %2452
        %vm2518 = vcmask 228544
        %2519 = vst.msk [vmem:[#allocation2] sm:$0xff] %vm2518, %v2327
        %2520 = vst.msk [vmem:[#allocation2 + $0x8] sm:$0xff] %vm2518, %v2329
        %2521 = vst.msk [vmem:[#allocation2 + $0x10] sm:$0xff] %vm2518, %v2331
        %2522 = vst.msk [vmem:[#allocation2 + $0x18] sm:$0xff] %vm2518, %v2333
        %2523 = vst.msk [vmem:[#allocation2 + $0x20] sm:$0xff] %vm2518, %v2335
        %2524 = vst.msk [vmem:[#allocation2 + $0x28] sm:$0xff] %vm2518, %v2337
        %2525 = vst.msk [vmem:[#allocation2 + $0x30] sm:$0xff] %vm2518, %v2339
        %2526 = vst.msk [vmem:[#allocation2 + $0x38] sm:$0xff] %vm2518, %v2341
        %2527 = vst.msk [vmem:[#allocation2 + $0x40] sm:$0xff] %vm2518, %v2343
        %2528 = vst.msk [vmem:[#allocation2 + $0x48] sm:$0xff] %vm2518, %v2345
        %2529 = vst.msk [vmem:[#allocation2 + $0x50] sm:$0xff] %vm2518, %v2347
        %2530 = vst.msk [vmem:[#allocation2 + $0x58] sm:$0xff] %vm2518, %v2349
        %2531 = vst.msk [vmem:[#allocation2 + $0x60] sm:$0xff] %vm2518, %v2351
        %2532 = vst.msk [vmem:[#allocation2 + $0x68] sm:$0xff] %vm2518, %v2353
        %2533 = vst.msk [vmem:[#allocation2 + $0x70] sm:$0xff] %vm2518, %v2355
        %2534 = vst.msk [vmem:[#allocation2 + $0x78] sm:$0xff] %vm2518, %v2357
        %2535 = vst.msk [vmem:[#allocation2 + $0x80] sm:$0xff] %vm2518, %v2359
        %2536 = vst.msk [vmem:[#allocation2 + $0x88] sm:$0xff] %vm2518, %v2361
        %2537 = vst.msk [vmem:[#allocation2 + $0x90] sm:$0xff] %vm2518, %v2363
        %2538 = vst.msk [vmem:[#allocation2 + $0x98] sm:$0xff] %vm2518, %v2365
        %2539 = vst.msk [vmem:[#allocation2 + $0xa0] sm:$0xff] %vm2518, %v2367
        %2540 = vst.msk [vmem:[#allocation2 + $0xa8] sm:$0xff] %vm2518, %v2369
        %2541 = vst.msk [vmem:[#allocation2 + $0xb0] sm:$0xff] %vm2518, %v2371
        %2542 = vst.msk [vmem:[#allocation2 + $0xb8] sm:$0xff] %vm2518, %v2373
        %2543 = vst.msk [vmem:[#allocation2 + $0xc0] sm:$0xff] %vm2518, %v2375
        %2544 = vst.msk [vmem:[#allocation2 + $0xc8] sm:$0xff] %vm2518, %v2377
        %2545 = vst.msk [vmem:[#allocation2 + $0xd0] sm:$0xff] %vm2518, %v2379
        %2546 = vst.msk [vmem:[#allocation2 + $0xd8] sm:$0xff] %vm2518, %v2381
        %2547 = vst.msk [vmem:[#allocation2 + $0xe0] sm:$0xff] %vm2518, %v2383
        %2548 = vst.msk [vmem:[#allocation2 + $0xe8] sm:$0xff] %vm2518, %v2385
        %2549 = vst.msk [vmem:[#allocation2 + $0xf0] sm:$0xff] %vm2518, %v2387
        %2550 = vst.msk [vmem:[#allocation2 + $0xf8] sm:$0xff] %vm2518, %v2389
        %2551 = vst.msk [vmem:[#allocation2 + $0x100] sm:$0xff] %vm2518, %v2391
        %2552 = vst.msk [vmem:[#allocation2 + $0x108] sm:$0xff] %vm2518, %v2393
        %2553 = vst.msk [vmem:[#allocation2 + $0x110] sm:$0xff] %vm2518, %v2395
        %2554 = vst.msk [vmem:[#allocation2 + $0x118] sm:$0xff] %vm2518, %v2397
        %2555 = vst.msk [vmem:[#allocation2 + $0x120] sm:$0xff] %vm2518, %v2399
        %2556 = vst.msk [vmem:[#allocation2 + $0x128] sm:$0xff] %vm2518, %v2401
        %2557 = vst.msk [vmem:[#allocation2 + $0x130] sm:$0xff] %vm2518, %v2403
        %2558 = vst.msk [vmem:[#allocation2 + $0x138] sm:$0xff] %vm2518, %v2405
        %2559 = vst.msk [vmem:[#allocation2 + $0x140] sm:$0xff] %vm2518, %v2407
        %2560 = vst.msk [vmem:[#allocation2 + $0x148] sm:$0xff] %vm2518, %v2409
        %2561 = vst.msk [vmem:[#allocation2 + $0x150] sm:$0xff] %vm2518, %v2411
        %2562 = vst.msk [vmem:[#allocation2 + $0x158] sm:$0xff] %vm2518, %v2413
        %2563 = vst.msk [vmem:[#allocation2 + $0x160] sm:$0xff] %vm2518, %v2415
        %2564 = vst.msk [vmem:[#allocation2 + $0x168] sm:$0xff] %vm2518, %v2417
        %2565 = vst.msk [vmem:[#allocation2 + $0x170] sm:$0xff] %vm2518, %v2419
        %2566 = vst.msk [vmem:[#allocation2 + $0x178] sm:$0xff] %vm2518, %v2421
        %2567 = vst.msk [vmem:[#allocation2 + $0x180] sm:$0xff] %vm2518, %v2423
        %2568 = vst.msk [vmem:[#allocation2 + $0x188] sm:$0xff] %vm2518, %v2425
        %2569 = vst.msk [vmem:[#allocation2 + $0x190] sm:$0xff] %vm2518, %v2427
        %2570 = vst.msk [vmem:[#allocation2 + $0x198] sm:$0xff] %vm2518, %v2429
        %2571 = vst.msk [vmem:[#allocation2 + $0x1a0] sm:$0xff] %vm2518, %v2431
        %2572 = vst.msk [vmem:[#allocation2 + $0x1a8] sm:$0xff] %vm2518, %v2433
        %2573 = vst.msk [vmem:[#allocation2 + $0x1b0] sm:$0xff] %vm2518, %v2435
        %2574 = vst.msk [vmem:[#allocation2 + $0x1b8] sm:$0xff] %vm2518, %v2437
        %2575 = vst.msk [vmem:[#allocation2 + $0x1c0] sm:$0xff] %vm2518, %v2439
        %2576 = vst.msk [vmem:[#allocation2 + $0x1c8] sm:$0xff] %vm2518, %v2441
        %2577 = vst.msk [vmem:[#allocation2 + $0x1d0] sm:$0xff] %vm2518, %v2443
        %2578 = vst.msk [vmem:[#allocation2 + $0x1d8] sm:$0xff] %vm2518, %v2445
        %2579 = vst.msk [vmem:[#allocation2 + $0x1e0] sm:$0xff] %vm2518, %v2447
        %2580 = vst.msk [vmem:[#allocation2 + $0x1e8] sm:$0xff] %vm2518, %v2449
        %2581 = vst.msk [vmem:[#allocation2 + $0x1f0] sm:$0xff] %vm2518, %v2451
        %2582 = vst.msk [vmem:[#allocation2 + $0x1f8] sm:$0xff] %vm2518, %v2453
        %v2583 = vld [vmem:[%s2197 + $0x1] sm:$0xff]
        %v2584 = vld [vmem:[%s2197 + $0x11] sm:$0xff]
        %v2585 = vld [vmem:[%s2197 + $0x21] sm:$0xff]
        %v2586 = vld [vmem:[%s2197 + $0x31] sm:$0xff]
        %v2587 = vld [vmem:[%s2197 + $0x41] sm:$0xff]
        %v2588 = vld [vmem:[%s2197 + $0x51] sm:$0xff]
        %v2589 = vld [vmem:[%s2197 + $0x61] sm:$0xff]
        %v2590 = vld [vmem:[%s2197 + $0x71] sm:$0xff]
        %v2591 = vld [vmem:[%s2197 + $0xa1] sm:$0xff]
        %v2592 = vld [vmem:[%s2197 + $0xb1] sm:$0xff]
        %v2593 = vld [vmem:[%s2197 + $0xc1] sm:$0xff]
        %v2594 = vld [vmem:[%s2197 + $0xd1] sm:$0xff]
        %v2595 = vld [vmem:[%s2197 + $0xe1] sm:$0xff]
        %v2596 = vld [vmem:[%s2197 + $0xf1] sm:$0xff]
        %v2597 = vld [vmem:[%s2197 + $0x101] sm:$0xff]
        %v2598 = vld [vmem:[%s2197 + $0x111] sm:$0xff]
        %v2599 = vld [vmem:[%s2197 + $0x141] sm:$0xff]
        %v2600 = vld [vmem:[%s2197 + $0x151] sm:$0xff]
        %v2601 = vld [vmem:[%s2197 + $0x161] sm:$0xff]
        %v2602 = vld [vmem:[%s2197 + $0x171] sm:$0xff]
        %v2603 = vld [vmem:[%s2197 + $0x181] sm:$0xff]
        %v2604 = vld [vmem:[%s2197 + $0x191] sm:$0xff]
        %v2605 = vld [vmem:[%s2197 + $0x1a1] sm:$0xff]
        %v2606 = vld [vmem:[%s2197 + $0x1b1] sm:$0xff]
        %v2607 = vld [vmem:[%s2197 + $0x1e1] sm:$0xff]
        %v2608 = vld [vmem:[%s2197 + $0x1f1] sm:$0xff]
        %v2609 = vld [vmem:[%s2197 + $0x201] sm:$0xff]
        %v2610 = vld [vmem:[%s2197 + $0x211] sm:$0xff]
        %v2611 = vld [vmem:[%s2197 + $0x221] sm:$0xff]
        %v2612 = vld [vmem:[%s2197 + $0x231] sm:$0xff]
        %v2613 = vld [vmem:[%s2197 + $0x241] sm:$0xff]
        %v2614 = vld [vmem:[%s2197 + $0x251] sm:$0xff]
        %v2615 = vld [vmem:[%s2197 + $0x281] sm:$0xff]
        %v2616 = vld [vmem:[%s2197 + $0x291] sm:$0xff]
        %v2617 = vld [vmem:[%s2197 + $0x2a1] sm:$0xff]
        %v2618 = vld [vmem:[%s2197 + $0x2b1] sm:$0xff]
        %v2619 = vld [vmem:[%s2197 + $0x2c1] sm:$0xff]
        %v2620 = vld [vmem:[%s2197 + $0x2d1] sm:$0xff]
        %v2621 = vld [vmem:[%s2197 + $0x2e1] sm:$0xff]
        %v2622 = vld [vmem:[%s2197 + $0x2f1] sm:$0xff]
        %v2623 = vld [vmem:[%s2197 + $0x321] sm:$0xff]
        %v2624 = vld [vmem:[%s2197 + $0x331] sm:$0xff]
        %v2625 = vld [vmem:[%s2197 + $0x341] sm:$0xff]
        %v2626 = vld [vmem:[%s2197 + $0x351] sm:$0xff]
        %v2627 = vld [vmem:[%s2197 + $0x361] sm:$0xff]
        %v2628 = vld [vmem:[%s2197 + $0x371] sm:$0xff]
        %v2629 = vld [vmem:[%s2197 + $0x381] sm:$0xff]
        %v2630 = vld [vmem:[%s2197 + $0x391] sm:$0xff]
        %v2631 = vld [vmem:[%s2197 + $0x3c1] sm:$0xff]
        %v2632 = vld [vmem:[%s2197 + $0x3d1] sm:$0xff]
        %v2633 = vld [vmem:[%s2197 + $0x3e1] sm:$0xff]
        %v2634 = vld [vmem:[%s2197 + $0x3f1] sm:$0xff]
        %v2635 = vld [vmem:[%s2197 + $0x401] sm:$0xff]
        %v2636 = vld [vmem:[%s2197 + $0x411] sm:$0xff]
        %v2637 = vld [vmem:[%s2197 + $0x421] sm:$0xff]
        %v2638 = vld [vmem:[%s2197 + $0x431] sm:$0xff]
        %v2639 = vld [vmem:[%s2197 + $0x461] sm:$0xff]
        %v2640 = vld [vmem:[%s2197 + $0x471] sm:$0xff]
        %v2641 = vld [vmem:[%s2197 + $0x481] sm:$0xff]
        %v2642 = vld [vmem:[%s2197 + $0x491] sm:$0xff]
        %v2643 = vld [vmem:[%s2197 + $0x4a1] sm:$0xff]
        %v2644 = vld [vmem:[%s2197 + $0x4b1] sm:$0xff]
        %v2645 = vld [vmem:[%s2197 + $0x4c1] sm:$0xff]
        %v2646 = vld [vmem:[%s2197 + $0x4d1] sm:$0xff]
        %2711 = vrot.lane.b32.xlu0 %v2583, 28
        %v2712 = vpop.permute.xlu0 %2711
        %2713 = vrot.lane.b32.xlu0 %v2584, 28
        %v2714 = vpop.permute.xlu0 %2713
        %2715 = vrot.lane.b32.xlu0 %v2585, 28
        %v2716 = vpop.permute.xlu0 %2715
        %2717 = vrot.lane.b32.xlu0 %v2586, 28
        %v2718 = vpop.permute.xlu0 %2717
        %2719 = vrot.lane.b32.xlu0 %v2587, 28
        %v2720 = vpop.permute.xlu0 %2719
        %2721 = vrot.lane.b32.xlu0 %v2588, 28
        %v2722 = vpop.permute.xlu0 %2721
        %2723 = vrot.lane.b32.xlu0 %v2589, 28
        %v2724 = vpop.permute.xlu0 %2723
        %2725 = vrot.lane.b32.xlu0 %v2590, 28
        %v2726 = vpop.permute.xlu0 %2725
        %2727 = vrot.lane.b32.xlu0 %v2591, 28
        %v2728 = vpop.permute.xlu0 %2727
        %2729 = vrot.lane.b32.xlu0 %v2592, 28
        %v2730 = vpop.permute.xlu0 %2729
        %2731 = vrot.lane.b32.xlu0 %v2593, 28
        %v2732 = vpop.permute.xlu0 %2731
        %2733 = vrot.lane.b32.xlu0 %v2594, 28
        %v2734 = vpop.permute.xlu0 %2733
        %2735 = vrot.lane.b32.xlu0 %v2595, 28
        %v2736 = vpop.permute.xlu0 %2735
        %2737 = vrot.lane.b32.xlu0 %v2596, 28
        %v2738 = vpop.permute.xlu0 %2737
        %2739 = vrot.lane.b32.xlu0 %v2597, 28
        %v2740 = vpop.permute.xlu0 %2739
        %2741 = vrot.lane.b32.xlu0 %v2598, 28
        %v2742 = vpop.permute.xlu0 %2741
        %2743 = vrot.lane.b32.xlu0 %v2599, 28
        %v2744 = vpop.permute.xlu0 %2743
        %2745 = vrot.lane.b32.xlu0 %v2600, 28
        %v2746 = vpop.permute.xlu0 %2745
        %2747 = vrot.lane.b32.xlu0 %v2601, 28
        %v2748 = vpop.permute.xlu0 %2747
        %2749 = vrot.lane.b32.xlu0 %v2602, 28
        %v2750 = vpop.permute.xlu0 %2749
        %2751 = vrot.lane.b32.xlu0 %v2603, 28
        %v2752 = vpop.permute.xlu0 %2751
        %2753 = vrot.lane.b32.xlu0 %v2604, 28
        %v2754 = vpop.permute.xlu0 %2753
        %2755 = vrot.lane.b32.xlu0 %v2605, 28
        %v2756 = vpop.permute.xlu0 %2755
        %2757 = vrot.lane.b32.xlu0 %v2606, 28
        %v2758 = vpop.permute.xlu0 %2757
        %2759 = vrot.lane.b32.xlu0 %v2607, 28
        %v2760 = vpop.permute.xlu0 %2759
        %2761 = vrot.lane.b32.xlu0 %v2608, 28
        %v2762 = vpop.permute.xlu0 %2761
        %2763 = vrot.lane.b32.xlu0 %v2609, 28
        %v2764 = vpop.permute.xlu0 %2763
        %2765 = vrot.lane.b32.xlu0 %v2610, 28
        %v2766 = vpop.permute.xlu0 %2765
        %2767 = vrot.lane.b32.xlu0 %v2611, 28
        %v2768 = vpop.permute.xlu0 %2767
        %2769 = vrot.lane.b32.xlu0 %v2612, 28
        %v2770 = vpop.permute.xlu0 %2769
        %2771 = vrot.lane.b32.xlu0 %v2613, 28
        %v2772 = vpop.permute.xlu0 %2771
        %2773 = vrot.lane.b32.xlu0 %v2614, 28
        %v2774 = vpop.permute.xlu0 %2773
        %2775 = vrot.lane.b32.xlu0 %v2615, 28
        %v2776 = vpop.permute.xlu0 %2775
        %2777 = vrot.lane.b32.xlu0 %v2616, 28
        %v2778 = vpop.permute.xlu0 %2777
        %2779 = vrot.lane.b32.xlu0 %v2617, 28
        %v2780 = vpop.permute.xlu0 %2779
        %2781 = vrot.lane.b32.xlu0 %v2618, 28
        %v2782 = vpop.permute.xlu0 %2781
        %2783 = vrot.lane.b32.xlu0 %v2619, 28
        %v2784 = vpop.permute.xlu0 %2783
        %2785 = vrot.lane.b32.xlu0 %v2620, 28
        %v2786 = vpop.permute.xlu0 %2785
        %2787 = vrot.lane.b32.xlu0 %v2621, 28
        %v2788 = vpop.permute.xlu0 %2787
        %2789 = vrot.lane.b32.xlu0 %v2622, 28
        %v2790 = vpop.permute.xlu0 %2789
        %2791 = vrot.lane.b32.xlu0 %v2623, 28
        %v2792 = vpop.permute.xlu0 %2791
        %2793 = vrot.lane.b32.xlu0 %v2624, 28
        %v2794 = vpop.permute.xlu0 %2793
        %2795 = vrot.lane.b32.xlu0 %v2625, 28
        %v2796 = vpop.permute.xlu0 %2795
        %2797 = vrot.lane.b32.xlu0 %v2626, 28
        %v2798 = vpop.permute.xlu0 %2797
        %2799 = vrot.lane.b32.xlu0 %v2627, 28
        %v2800 = vpop.permute.xlu0 %2799
        %2801 = vrot.lane.b32.xlu0 %v2628, 28
        %v2802 = vpop.permute.xlu0 %2801
        %2803 = vrot.lane.b32.xlu0 %v2629, 28
        %v2804 = vpop.permute.xlu0 %2803
        %2805 = vrot.lane.b32.xlu0 %v2630, 28
        %v2806 = vpop.permute.xlu0 %2805
        %2807 = vrot.lane.b32.xlu0 %v2631, 28
        %v2808 = vpop.permute.xlu0 %2807
        %2809 = vrot.lane.b32.xlu0 %v2632, 28
        %v2810 = vpop.permute.xlu0 %2809
        %2811 = vrot.lane.b32.xlu0 %v2633, 28
        %v2812 = vpop.permute.xlu0 %2811
        %2813 = vrot.lane.b32.xlu0 %v2634, 28
        %v2814 = vpop.permute.xlu0 %2813
        %2815 = vrot.lane.b32.xlu0 %v2635, 28
        %v2816 = vpop.permute.xlu0 %2815
        %2817 = vrot.lane.b32.xlu0 %v2636, 28
        %v2818 = vpop.permute.xlu0 %2817
        %2819 = vrot.lane.b32.xlu0 %v2637, 28
        %v2820 = vpop.permute.xlu0 %2819
        %2821 = vrot.lane.b32.xlu0 %v2638, 28
        %v2822 = vpop.permute.xlu0 %2821
        %2823 = vrot.lane.b32.xlu0 %v2639, 28
        %v2824 = vpop.permute.xlu0 %2823
        %2825 = vrot.lane.b32.xlu0 %v2640, 28
        %v2826 = vpop.permute.xlu0 %2825
        %2827 = vrot.lane.b32.xlu0 %v2641, 28
        %v2828 = vpop.permute.xlu0 %2827
        %2829 = vrot.lane.b32.xlu0 %v2642, 28
        %v2830 = vpop.permute.xlu0 %2829
        %2831 = vrot.lane.b32.xlu0 %v2643, 28
        %v2832 = vpop.permute.xlu0 %2831
        %2833 = vrot.lane.b32.xlu0 %v2644, 28
        %v2834 = vpop.permute.xlu0 %2833
        %2835 = vrot.lane.b32.xlu0 %v2645, 28
        %v2836 = vpop.permute.xlu0 %2835
        %2837 = vrot.lane.b32.xlu0 %v2646, 28
        %v2838 = vpop.permute.xlu0 %2837
        %vm2903 = vcmask 261344
        %2904 = vst.msk [vmem:[#allocation2] sm:$0xff] %vm2903, %v2712
        %2905 = vst.msk [vmem:[#allocation2 + $0x8] sm:$0xff] %vm2903, %v2714
        %2906 = vst.msk [vmem:[#allocation2 + $0x10] sm:$0xff] %vm2903, %v2716
        %2907 = vst.msk [vmem:[#allocation2 + $0x18] sm:$0xff] %vm2903, %v2718
        %2908 = vst.msk [vmem:[#allocation2 + $0x20] sm:$0xff] %vm2903, %v2720
        %2909 = vst.msk [vmem:[#allocation2 + $0x28] sm:$0xff] %vm2903, %v2722
        %2910 = vst.msk [vmem:[#allocation2 + $0x30] sm:$0xff] %vm2903, %v2724
        %2911 = vst.msk [vmem:[#allocation2 + $0x38] sm:$0xff] %vm2903, %v2726
        %2912 = vst.msk [vmem:[#allocation2 + $0x40] sm:$0xff] %vm2903, %v2728
        %2913 = vst.msk [vmem:[#allocation2 + $0x48] sm:$0xff] %vm2903, %v2730
        %2914 = vst.msk [vmem:[#allocation2 + $0x50] sm:$0xff] %vm2903, %v2732
        %2915 = vst.msk [vmem:[#allocation2 + $0x58] sm:$0xff] %vm2903, %v2734
        %2916 = vst.msk [vmem:[#allocation2 + $0x60] sm:$0xff] %vm2903, %v2736
        %2917 = vst.msk [vmem:[#allocation2 + $0x68] sm:$0xff] %vm2903, %v2738
        %2918 = vst.msk [vmem:[#allocation2 + $0x70] sm:$0xff] %vm2903, %v2740
        %2919 = vst.msk [vmem:[#allocation2 + $0x78] sm:$0xff] %vm2903, %v2742
        %2920 = vst.msk [vmem:[#allocation2 + $0x80] sm:$0xff] %vm2903, %v2744
        %2921 = vst.msk [vmem:[#allocation2 + $0x88] sm:$0xff] %vm2903, %v2746
        %2922 = vst.msk [vmem:[#allocation2 + $0x90] sm:$0xff] %vm2903, %v2748
        %2923 = vst.msk [vmem:[#allocation2 + $0x98] sm:$0xff] %vm2903, %v2750
        %2924 = vst.msk [vmem:[#allocation2 + $0xa0] sm:$0xff] %vm2903, %v2752
        %2925 = vst.msk [vmem:[#allocation2 + $0xa8] sm:$0xff] %vm2903, %v2754
        %2926 = vst.msk [vmem:[#allocation2 + $0xb0] sm:$0xff] %vm2903, %v2756
        %2927 = vst.msk [vmem:[#allocation2 + $0xb8] sm:$0xff] %vm2903, %v2758
        %2928 = vst.msk [vmem:[#allocation2 + $0xc0] sm:$0xff] %vm2903, %v2760
        %2929 = vst.msk [vmem:[#allocation2 + $0xc8] sm:$0xff] %vm2903, %v2762
        %2930 = vst.msk [vmem:[#allocation2 + $0xd0] sm:$0xff] %vm2903, %v2764
        %2931 = vst.msk [vmem:[#allocation2 + $0xd8] sm:$0xff] %vm2903, %v2766
        %2932 = vst.msk [vmem:[#allocation2 + $0xe0] sm:$0xff] %vm2903, %v2768
        %2933 = vst.msk [vmem:[#allocation2 + $0xe8] sm:$0xff] %vm2903, %v2770
        %2934 = vst.msk [vmem:[#allocation2 + $0xf0] sm:$0xff] %vm2903, %v2772
        %2935 = vst.msk [vmem:[#allocation2 + $0xf8] sm:$0xff] %vm2903, %v2774
        %2936 = vst.msk [vmem:[#allocation2 + $0x100] sm:$0xff] %vm2903, %v2776
        %2937 = vst.msk [vmem:[#allocation2 + $0x108] sm:$0xff] %vm2903, %v2778
        %2938 = vst.msk [vmem:[#allocation2 + $0x110] sm:$0xff] %vm2903, %v2780
        %2939 = vst.msk [vmem:[#allocation2 + $0x118] sm:$0xff] %vm2903, %v2782
        %2940 = vst.msk [vmem:[#allocation2 + $0x120] sm:$0xff] %vm2903, %v2784
        %2941 = vst.msk [vmem:[#allocation2 + $0x128] sm:$0xff] %vm2903, %v2786
        %2942 = vst.msk [vmem:[#allocation2 + $0x130] sm:$0xff] %vm2903, %v2788
        %2943 = vst.msk [vmem:[#allocation2 + $0x138] sm:$0xff] %vm2903, %v2790
        %2944 = vst.msk [vmem:[#allocation2 + $0x140] sm:$0xff] %vm2903, %v2792
        %2945 = vst.msk [vmem:[#allocation2 + $0x148] sm:$0xff] %vm2903, %v2794
        %2946 = vst.msk [vmem:[#allocation2 + $0x150] sm:$0xff] %vm2903, %v2796
        %2947 = vst.msk [vmem:[#allocation2 + $0x158] sm:$0xff] %vm2903, %v2798
        %2948 = vst.msk [vmem:[#allocation2 + $0x160] sm:$0xff] %vm2903, %v2800
        %2949 = vst.msk [vmem:[#allocation2 + $0x168] sm:$0xff] %vm2903, %v2802
        %2950 = vst.msk [vmem:[#allocation2 + $0x170] sm:$0xff] %vm2903, %v2804
        %2951 = vst.msk [vmem:[#allocation2 + $0x178] sm:$0xff] %vm2903, %v2806
        %2952 = vst.msk [vmem:[#allocation2 + $0x180] sm:$0xff] %vm2903, %v2808
        %2953 = vst.msk [vmem:[#allocation2 + $0x188] sm:$0xff] %vm2903, %v2810
        %2954 = vst.msk [vmem:[#allocation2 + $0x190] sm:$0xff] %vm2903, %v2812
        %2955 = vst.msk [vmem:[#allocation2 + $0x198] sm:$0xff] %vm2903, %v2814
        %2956 = vst.msk [vmem:[#allocation2 + $0x1a0] sm:$0xff] %vm2903, %v2816
        %2957 = vst.msk [vmem:[#allocation2 + $0x1a8] sm:$0xff] %vm2903, %v2818
        %2958 = vst.msk [vmem:[#allocation2 + $0x1b0] sm:$0xff] %vm2903, %v2820
        %2959 = vst.msk [vmem:[#allocation2 + $0x1b8] sm:$0xff] %vm2903, %v2822
        %2960 = vst.msk [vmem:[#allocation2 + $0x1c0] sm:$0xff] %vm2903, %v2824
        %2961 = vst.msk [vmem:[#allocation2 + $0x1c8] sm:$0xff] %vm2903, %v2826
        %2962 = vst.msk [vmem:[#allocation2 + $0x1d0] sm:$0xff] %vm2903, %v2828
        %2963 = vst.msk [vmem:[#allocation2 + $0x1d8] sm:$0xff] %vm2903, %v2830
        %2964 = vst.msk [vmem:[#allocation2 + $0x1e0] sm:$0xff] %vm2903, %v2832
        %2965 = vst.msk [vmem:[#allocation2 + $0x1e8] sm:$0xff] %vm2903, %v2834
        %2966 = vst.msk [vmem:[#allocation2 + $0x1f0] sm:$0xff] %vm2903, %v2836
        %2967 = vst.msk [vmem:[#allocation2 + $0x1f8] sm:$0xff] %vm2903, %v2838
        %v2968 = vld [vmem:[%s2197 + $0x2] sm:$0xff]
        %v2969 = vld [vmem:[%s2197 + $0x12] sm:$0xff]
        %v2970 = vld [vmem:[%s2197 + $0x22] sm:$0xff]
        %v2971 = vld [vmem:[%s2197 + $0x32] sm:$0xff]
        %v2972 = vld [vmem:[%s2197 + $0x42] sm:$0xff]
        %v2973 = vld [vmem:[%s2197 + $0x52] sm:$0xff]
        %v2974 = vld [vmem:[%s2197 + $0x62] sm:$0xff]
        %v2975 = vld [vmem:[%s2197 + $0x72] sm:$0xff]
        %v2976 = vld [vmem:[%s2197 + $0xa2] sm:$0xff]
        %v2977 = vld [vmem:[%s2197 + $0xb2] sm:$0xff]
        %v2978 = vld [vmem:[%s2197 + $0xc2] sm:$0xff]
        %v2979 = vld [vmem:[%s2197 + $0xd2] sm:$0xff]
        %v2980 = vld [vmem:[%s2197 + $0xe2] sm:$0xff]
        %v2981 = vld [vmem:[%s2197 + $0xf2] sm:$0xff]
        %v2982 = vld [vmem:[%s2197 + $0x102] sm:$0xff]
        %v2983 = vld [vmem:[%s2197 + $0x112] sm:$0xff]
        %v2984 = vld [vmem:[%s2197 + $0x142] sm:$0xff]
        %v2985 = vld [vmem:[%s2197 + $0x152] sm:$0xff]
        %v2986 = vld [vmem:[%s2197 + $0x162] sm:$0xff]
        %v2987 = vld [vmem:[%s2197 + $0x172] sm:$0xff]
        %v2988 = vld [vmem:[%s2197 + $0x182] sm:$0xff]
        %v2989 = vld [vmem:[%s2197 + $0x192] sm:$0xff]
        %v2990 = vld [vmem:[%s2197 + $0x1a2] sm:$0xff]
        %v2991 = vld [vmem:[%s2197 + $0x1b2] sm:$0xff]
        %v2992 = vld [vmem:[%s2197 + $0x1e2] sm:$0xff]
        %v2993 = vld [vmem:[%s2197 + $0x1f2] sm:$0xff]
        %v2994 = vld [vmem:[%s2197 + $0x202] sm:$0xff]
        %v2995 = vld [vmem:[%s2197 + $0x212] sm:$0xff]
        %v2996 = vld [vmem:[%s2197 + $0x222] sm:$0xff]
        %v2997 = vld [vmem:[%s2197 + $0x232] sm:$0xff]
        %v2998 = vld [vmem:[%s2197 + $0x242] sm:$0xff]
        %v2999 = vld [vmem:[%s2197 + $0x252] sm:$0xff]
        %v3000 = vld [vmem:[%s2197 + $0x282] sm:$0xff]
        %v3001 = vld [vmem:[%s2197 + $0x292] sm:$0xff]
        %v3002 = vld [vmem:[%s2197 + $0x2a2] sm:$0xff]
        %v3003 = vld [vmem:[%s2197 + $0x2b2] sm:$0xff]
        %v3004 = vld [vmem:[%s2197 + $0x2c2] sm:$0xff]
        %v3005 = vld [vmem:[%s2197 + $0x2d2] sm:$0xff]
        %v3006 = vld [vmem:[%s2197 + $0x2e2] sm:$0xff]
        %v3007 = vld [vmem:[%s2197 + $0x2f2] sm:$0xff]
        %v3008 = vld [vmem:[%s2197 + $0x322] sm:$0xff]
        %v3009 = vld [vmem:[%s2197 + $0x332] sm:$0xff]
        %v3010 = vld [vmem:[%s2197 + $0x342] sm:$0xff]
        %v3011 = vld [vmem:[%s2197 + $0x352] sm:$0xff]
        %v3012 = vld [vmem:[%s2197 + $0x362] sm:$0xff]
        %v3013 = vld [vmem:[%s2197 + $0x372] sm:$0xff]
        %v3014 = vld [vmem:[%s2197 + $0x382] sm:$0xff]
        %v3015 = vld [vmem:[%s2197 + $0x392] sm:$0xff]
        %v3016 = vld [vmem:[%s2197 + $0x3c2] sm:$0xff]
        %v3017 = vld [vmem:[%s2197 + $0x3d2] sm:$0xff]
        %v3018 = vld [vmem:[%s2197 + $0x3e2] sm:$0xff]
        %v3019 = vld [vmem:[%s2197 + $0x3f2] sm:$0xff]
        %v3020 = vld [vmem:[%s2197 + $0x402] sm:$0xff]
        %v3021 = vld [vmem:[%s2197 + $0x412] sm:$0xff]
        %v3022 = vld [vmem:[%s2197 + $0x422] sm:$0xff]
        %v3023 = vld [vmem:[%s2197 + $0x432] sm:$0xff]
        %v3024 = vld [vmem:[%s2197 + $0x462] sm:$0xff]
        %v3025 = vld [vmem:[%s2197 + $0x472] sm:$0xff]
        %v3026 = vld [vmem:[%s2197 + $0x482] sm:$0xff]
        %v3027 = vld [vmem:[%s2197 + $0x492] sm:$0xff]
        %v3028 = vld [vmem:[%s2197 + $0x4a2] sm:$0xff]
        %v3029 = vld [vmem:[%s2197 + $0x4b2] sm:$0xff]
        %v3030 = vld [vmem:[%s2197 + $0x4c2] sm:$0xff]
        %v3031 = vld [vmem:[%s2197 + $0x4d2] sm:$0xff]
        %3096 = vrot.lane.b32.xlu0 %v2968, 32
        %v3097 = vpop.permute.xlu0 %3096
        %3098 = vrot.lane.b32.xlu0 %v2969, 32
        %v3099 = vpop.permute.xlu0 %3098
        %3100 = vrot.lane.b32.xlu0 %v2970, 32
        %v3101 = vpop.permute.xlu0 %3100
        %3102 = vrot.lane.b32.xlu0 %v2971, 32
        %v3103 = vpop.permute.xlu0 %3102
        %3104 = vrot.lane.b32.xlu0 %v2972, 32
        %v3105 = vpop.permute.xlu0 %3104
        %3106 = vrot.lane.b32.xlu0 %v2973, 32
        %v3107 = vpop.permute.xlu0 %3106
        %3108 = vrot.lane.b32.xlu0 %v2974, 32
        %v3109 = vpop.permute.xlu0 %3108
        %3110 = vrot.lane.b32.xlu0 %v2975, 32
        %v3111 = vpop.permute.xlu0 %3110
        %3112 = vrot.lane.b32.xlu0 %v2976, 32
        %v3113 = vpop.permute.xlu0 %3112
        %3114 = vrot.lane.b32.xlu0 %v2977, 32
        %v3115 = vpop.permute.xlu0 %3114
        %3116 = vrot.lane.b32.xlu0 %v2978, 32
        %v3117 = vpop.permute.xlu0 %3116
        %3118 = vrot.lane.b32.xlu0 %v2979, 32
        %v3119 = vpop.permute.xlu0 %3118
        %3120 = vrot.lane.b32.xlu0 %v2980, 32
        %v3121 = vpop.permute.xlu0 %3120
        %3122 = vrot.lane.b32.xlu0 %v2981, 32
        %v3123 = vpop.permute.xlu0 %3122
        %3124 = vrot.lane.b32.xlu0 %v2982, 32
        %v3125 = vpop.permute.xlu0 %3124
        %3126 = vrot.lane.b32.xlu0 %v2983, 32
        %v3127 = vpop.permute.xlu0 %3126
        %3128 = vrot.lane.b32.xlu0 %v2984, 32
        %v3129 = vpop.permute.xlu0 %3128
        %3130 = vrot.lane.b32.xlu0 %v2985, 32
        %v3131 = vpop.permute.xlu0 %3130
        %3132 = vrot.lane.b32.xlu0 %v2986, 32
        %v3133 = vpop.permute.xlu0 %3132
        %3134 = vrot.lane.b32.xlu0 %v2987, 32
        %v3135 = vpop.permute.xlu0 %3134
        %3136 = vrot.lane.b32.xlu0 %v2988, 32
        %v3137 = vpop.permute.xlu0 %3136
        %3138 = vrot.lane.b32.xlu0 %v2989, 32
        %v3139 = vpop.permute.xlu0 %3138
        %3140 = vrot.lane.b32.xlu0 %v2990, 32
        %v3141 = vpop.permute.xlu0 %3140
        %3142 = vrot.lane.b32.xlu0 %v2991, 32
        %v3143 = vpop.permute.xlu0 %3142
        %3144 = vrot.lane.b32.xlu0 %v2992, 32
        %v3145 = vpop.permute.xlu0 %3144
        %3146 = vrot.lane.b32.xlu0 %v2993, 32
        %v3147 = vpop.permute.xlu0 %3146
        %3148 = vrot.lane.b32.xlu0 %v2994, 32
        %v3149 = vpop.permute.xlu0 %3148
        %3150 = vrot.lane.b32.xlu0 %v2995, 32
        %v3151 = vpop.permute.xlu0 %3150
        %3152 = vrot.lane.b32.xlu0 %v2996, 32
        %v3153 = vpop.permute.xlu0 %3152
        %3154 = vrot.lane.b32.xlu0 %v2997, 32
        %v3155 = vpop.permute.xlu0 %3154
        %3156 = vrot.lane.b32.xlu0 %v2998, 32
        %v3157 = vpop.permute.xlu0 %3156
        %3158 = vrot.lane.b32.xlu0 %v2999, 32
        %v3159 = vpop.permute.xlu0 %3158
        %3160 = vrot.lane.b32.xlu0 %v3000, 32
        %v3161 = vpop.permute.xlu0 %3160
        %3162 = vrot.lane.b32.xlu0 %v3001, 32
        %v3163 = vpop.permute.xlu0 %3162
        %3164 = vrot.lane.b32.xlu0 %v3002, 32
        %v3165 = vpop.permute.xlu0 %3164
        %3166 = vrot.lane.b32.xlu0 %v3003, 32
        %v3167 = vpop.permute.xlu0 %3166
        %3168 = vrot.lane.b32.xlu0 %v3004, 32
        %v3169 = vpop.permute.xlu0 %3168
        %3170 = vrot.lane.b32.xlu0 %v3005, 32
        %v3171 = vpop.permute.xlu0 %3170
        %3172 = vrot.lane.b32.xlu0 %v3006, 32
        %v3173 = vpop.permute.xlu0 %3172
        %3174 = vrot.lane.b32.xlu0 %v3007, 32
        %v3175 = vpop.permute.xlu0 %3174
        %3176 = vrot.lane.b32.xlu0 %v3008, 32
        %v3177 = vpop.permute.xlu0 %3176
        %3178 = vrot.lane.b32.xlu0 %v3009, 32
        %v3179 = vpop.permute.xlu0 %3178
        %3180 = vrot.lane.b32.xlu0 %v3010, 32
        %v3181 = vpop.permute.xlu0 %3180
        %3182 = vrot.lane.b32.xlu0 %v3011, 32
        %v3183 = vpop.permute.xlu0 %3182
        %3184 = vrot.lane.b32.xlu0 %v3012, 32
        %v3185 = vpop.permute.xlu0 %3184
        %3186 = vrot.lane.b32.xlu0 %v3013, 32
        %v3187 = vpop.permute.xlu0 %3186
        %3188 = vrot.lane.b32.xlu0 %v3014, 32
        %v3189 = vpop.permute.xlu0 %3188
        %3190 = vrot.lane.b32.xlu0 %v3015, 32
        %v3191 = vpop.permute.xlu0 %3190
        %3192 = vrot.lane.b32.xlu0 %v3016, 32
        %v3193 = vpop.permute.xlu0 %3192
        %3194 = vrot.lane.b32.xlu0 %v3017, 32
        %v3195 = vpop.permute.xlu0 %3194
        %3196 = vrot.lane.b32.xlu0 %v3018, 32
        %v3197 = vpop.permute.xlu0 %3196
        %3198 = vrot.lane.b32.xlu0 %v3019, 32
        %v3199 = vpop.permute.xlu0 %3198
        %3200 = vrot.lane.b32.xlu0 %v3020, 32
        %v3201 = vpop.permute.xlu0 %3200
        %3202 = vrot.lane.b32.xlu0 %v3021, 32
        %v3203 = vpop.permute.xlu0 %3202
        %3204 = vrot.lane.b32.xlu0 %v3022, 32
        %v3205 = vpop.permute.xlu0 %3204
        %3206 = vrot.lane.b32.xlu0 %v3023, 32
        %v3207 = vpop.permute.xlu0 %3206
        %3208 = vrot.lane.b32.xlu0 %v3024, 32
        %v3209 = vpop.permute.xlu0 %3208
        %3210 = vrot.lane.b32.xlu0 %v3025, 32
        %v3211 = vpop.permute.xlu0 %3210
        %3212 = vrot.lane.b32.xlu0 %v3026, 32
        %v3213 = vpop.permute.xlu0 %3212
        %3214 = vrot.lane.b32.xlu0 %v3027, 32
        %v3215 = vpop.permute.xlu0 %3214
        %3216 = vrot.lane.b32.xlu0 %v3028, 32
        %v3217 = vpop.permute.xlu0 %3216
        %3218 = vrot.lane.b32.xlu0 %v3029, 32
        %v3219 = vpop.permute.xlu0 %3218
        %3220 = vrot.lane.b32.xlu0 %v3030, 32
        %v3221 = vpop.permute.xlu0 %3220
        %3222 = vrot.lane.b32.xlu0 %v3031, 32
        %v3223 = vpop.permute.xlu0 %3222
        %vm3288 = vcmask 294144
        %3289 = vst.msk [vmem:[#allocation2] sm:$0xff] %vm3288, %v3097
        %3290 = vst.msk [vmem:[#allocation2 + $0x8] sm:$0xff] %vm3288, %v3099
        %3291 = vst.msk [vmem:[#allocation2 + $0x10] sm:$0xff] %vm3288, %v3101
        %3292 = vst.msk [vmem:[#allocation2 + $0x18] sm:$0xff] %vm3288, %v3103
        %3293 = vst.msk [vmem:[#allocation2 + $0x20] sm:$0xff] %vm3288, %v3105
        %3294 = vst.msk [vmem:[#allocation2 + $0x28] sm:$0xff] %vm3288, %v3107
        %3295 = vst.msk [vmem:[#allocation2 + $0x30] sm:$0xff] %vm3288, %v3109
        %3296 = vst.msk [vmem:[#allocation2 + $0x38] sm:$0xff] %vm3288, %v3111
        %3297 = vst.msk [vmem:[#allocation2 + $0x40] sm:$0xff] %vm3288, %v3113
        %3298 = vst.msk [vmem:[#allocation2 + $0x48] sm:$0xff] %vm3288, %v3115
        %3299 = vst.msk [vmem:[#allocation2 + $0x50] sm:$0xff] %vm3288, %v3117
        %3300 = vst.msk [vmem:[#allocation2 + $0x58] sm:$0xff] %vm3288, %v3119
        %3301 = vst.msk [vmem:[#allocation2 + $0x60] sm:$0xff] %vm3288, %v3121
        %3302 = vst.msk [vmem:[#allocation2 + $0x68] sm:$0xff] %vm3288, %v3123
        %3303 = vst.msk [vmem:[#allocation2 + $0x70] sm:$0xff] %vm3288, %v3125
        %3304 = vst.msk [vmem:[#allocation2 + $0x78] sm:$0xff] %vm3288, %v3127
        %3305 = vst.msk [vmem:[#allocation2 + $0x80] sm:$0xff] %vm3288, %v3129
        %3306 = vst.msk [vmem:[#allocation2 + $0x88] sm:$0xff] %vm3288, %v3131
        %3307 = vst.msk [vmem:[#allocation2 + $0x90] sm:$0xff] %vm3288, %v3133
        %3308 = vst.msk [vmem:[#allocation2 + $0x98] sm:$0xff] %vm3288, %v3135
        %3309 = vst.msk [vmem:[#allocation2 + $0xa0] sm:$0xff] %vm3288, %v3137
        %3310 = vst.msk [vmem:[#allocation2 + $0xa8] sm:$0xff] %vm3288, %v3139
        %3311 = vst.msk [vmem:[#allocation2 + $0xb0] sm:$0xff] %vm3288, %v3141
        %3312 = vst.msk [vmem:[#allocation2 + $0xb8] sm:$0xff] %vm3288, %v3143
        %3313 = vst.msk [vmem:[#allocation2 + $0xc0] sm:$0xff] %vm3288, %v3145
        %3314 = vst.msk [vmem:[#allocation2 + $0xc8] sm:$0xff] %vm3288, %v3147
        %3315 = vst.msk [vmem:[#allocation2 + $0xd0] sm:$0xff] %vm3288, %v3149
        %3316 = vst.msk [vmem:[#allocation2 + $0xd8] sm:$0xff] %vm3288, %v3151
        %3317 = vst.msk [vmem:[#allocation2 + $0xe0] sm:$0xff] %vm3288, %v3153
        %3318 = vst.msk [vmem:[#allocation2 + $0xe8] sm:$0xff] %vm3288, %v3155
        %3319 = vst.msk [vmem:[#allocation2 + $0xf0] sm:$0xff] %vm3288, %v3157
        %3320 = vst.msk [vmem:[#allocation2 + $0xf8] sm:$0xff] %vm3288, %v3159
        %3321 = vst.msk [vmem:[#allocation2 + $0x100] sm:$0xff] %vm3288, %v3161
        %3322 = vst.msk [vmem:[#allocation2 + $0x108] sm:$0xff] %vm3288, %v3163
        %3323 = vst.msk [vmem:[#allocation2 + $0x110] sm:$0xff] %vm3288, %v3165
        %3324 = vst.msk [vmem:[#allocation2 + $0x118] sm:$0xff] %vm3288, %v3167
        %3325 = vst.msk [vmem:[#allocation2 + $0x120] sm:$0xff] %vm3288, %v3169
        %3326 = vst.msk [vmem:[#allocation2 + $0x128] sm:$0xff] %vm3288, %v3171
        %3327 = vst.msk [vmem:[#allocation2 + $0x130] sm:$0xff] %vm3288, %v3173
        %3328 = vst.msk [vmem:[#allocation2 + $0x138] sm:$0xff] %vm3288, %v3175
        %3329 = vst.msk [vmem:[#allocation2 + $0x140] sm:$0xff] %vm3288, %v3177
        %3330 = vst.msk [vmem:[#allocation2 + $0x148] sm:$0xff] %vm3288, %v3179
        %3331 = vst.msk [vmem:[#allocation2 + $0x150] sm:$0xff] %vm3288, %v3181
        %3332 = vst.msk [vmem:[#allocation2 + $0x158] sm:$0xff] %vm3288, %v3183
        %3333 = vst.msk [vmem:[#allocation2 + $0x160] sm:$0xff] %vm3288, %v3185
        %3334 = vst.msk [vmem:[#allocation2 + $0x168] sm:$0xff] %vm3288, %v3187
        %3335 = vst.msk [vmem:[#allocation2 + $0x170] sm:$0xff] %vm3288, %v3189
        %3336 = vst.msk [vmem:[#allocation2 + $0x178] sm:$0xff] %vm3288, %v3191
        %3337 = vst.msk [vmem:[#allocation2 + $0x180] sm:$0xff] %vm3288, %v3193
        %3338 = vst.msk [vmem:[#allocation2 + $0x188] sm:$0xff] %vm3288, %v3195
        %3339 = vst.msk [vmem:[#allocation2 + $0x190] sm:$0xff] %vm3288, %v3197
        %3340 = vst.msk [vmem:[#allocation2 + $0x198] sm:$0xff] %vm3288, %v3199
        %3341 = vst.msk [vmem:[#allocation2 + $0x1a0] sm:$0xff] %vm3288, %v3201
        %3342 = vst.msk [vmem:[#allocation2 + $0x1a8] sm:$0xff] %vm3288, %v3203
        %3343 = vst.msk [vmem:[#allocation2 + $0x1b0] sm:$0xff] %vm3288, %v3205
        %3344 = vst.msk [vmem:[#allocation2 + $0x1b8] sm:$0xff] %vm3288, %v3207
        %3345 = vst.msk [vmem:[#allocation2 + $0x1c0] sm:$0xff] %vm3288, %v3209
        %3346 = vst.msk [vmem:[#allocation2 + $0x1c8] sm:$0xff] %vm3288, %v3211
        %3347 = vst.msk [vmem:[#allocation2 + $0x1d0] sm:$0xff] %vm3288, %v3213
        %3348 = vst.msk [vmem:[#allocation2 + $0x1d8] sm:$0xff] %vm3288, %v3215
        %3349 = vst.msk [vmem:[#allocation2 + $0x1e0] sm:$0xff] %vm3288, %v3217
        %3350 = vst.msk [vmem:[#allocation2 + $0x1e8] sm:$0xff] %vm3288, %v3219
        %3351 = vst.msk [vmem:[#allocation2 + $0x1f0] sm:$0xff] %vm3288, %v3221
        %3352 = vst.msk [vmem:[#allocation2 + $0x1f8] sm:$0xff] %vm3288, %v3223
        %s3353 = scalar_lea.vmem %s141, 160
        %v3354 = vld [vmem:[%s3353] sm:$0xff]
        %v3355 = vld [vmem:[%s3353 + $0x10] sm:$0xff]
        %v3356 = vld [vmem:[%s3353 + $0x20] sm:$0xff]
        %v3357 = vld [vmem:[%s3353 + $0x30] sm:$0xff]
        %v3358 = vld [vmem:[%s3353 + $0x40] sm:$0xff]
        %v3359 = vld [vmem:[%s3353 + $0x50] sm:$0xff]
        %v3360 = vld [vmem:[%s3353 + $0x60] sm:$0xff]
        %v3361 = vld [vmem:[%s3353 + $0x70] sm:$0xff]
        %v3362 = vld [vmem:[%s3353 + $0xa0] sm:$0xff]
        %v3363 = vld [vmem:[%s3353 + $0xb0] sm:$0xff]
        %v3364 = vld [vmem:[%s3353 + $0xc0] sm:$0xff]
        %v3365 = vld [vmem:[%s3353 + $0xd0] sm:$0xff]
        %v3366 = vld [vmem:[%s3353 + $0xe0] sm:$0xff]
        %v3367 = vld [vmem:[%s3353 + $0xf0] sm:$0xff]
        %v3368 = vld [vmem:[%s3353 + $0x100] sm:$0xff]
        %v3369 = vld [vmem:[%s3353 + $0x110] sm:$0xff]
        %v3370 = vld [vmem:[%s3353 + $0x140] sm:$0xff]
        %v3371 = vld [vmem:[%s3353 + $0x150] sm:$0xff]
        %v3372 = vld [vmem:[%s3353 + $0x160] sm:$0xff]
        %v3373 = vld [vmem:[%s3353 + $0x170] sm:$0xff]
        %v3374 = vld [vmem:[%s3353 + $0x180] sm:$0xff]
        %v3375 = vld [vmem:[%s3353 + $0x190] sm:$0xff]
        %v3376 = vld [vmem:[%s3353 + $0x1a0] sm:$0xff]
        %v3377 = vld [vmem:[%s3353 + $0x1b0] sm:$0xff]
        %v3378 = vld [vmem:[%s3353 + $0x1e0] sm:$0xff]
        %v3379 = vld [vmem:[%s3353 + $0x1f0] sm:$0xff]
        %v3380 = vld [vmem:[%s3353 + $0x200] sm:$0xff]
        %v3381 = vld [vmem:[%s3353 + $0x210] sm:$0xff]
        %v3382 = vld [vmem:[%s3353 + $0x220] sm:$0xff]
        %v3383 = vld [vmem:[%s3353 + $0x230] sm:$0xff]
        %v3384 = vld [vmem:[%s3353 + $0x240] sm:$0xff]
        %v3385 = vld [vmem:[%s3353 + $0x250] sm:$0xff]
        %v3386 = vld [vmem:[%s3353 + $0x280] sm:$0xff]
        %v3387 = vld [vmem:[%s3353 + $0x290] sm:$0xff]
        %v3388 = vld [vmem:[%s3353 + $0x2a0] sm:$0xff]
        %v3389 = vld [vmem:[%s3353 + $0x2b0] sm:$0xff]
        %v3390 = vld [vmem:[%s3353 + $0x2c0] sm:$0xff]
        %v3391 = vld [vmem:[%s3353 + $0x2d0] sm:$0xff]
        %v3392 = vld [vmem:[%s3353 + $0x2e0] sm:$0xff]
        %v3393 = vld [vmem:[%s3353 + $0x2f0] sm:$0xff]
        %v3394 = vld [vmem:[%s3353 + $0x320] sm:$0xff]
        %v3395 = vld [vmem:[%s3353 + $0x330] sm:$0xff]
        %v3396 = vld [vmem:[%s3353 + $0x340] sm:$0xff]
        %v3397 = vld [vmem:[%s3353 + $0x350] sm:$0xff]
        %v3398 = vld [vmem:[%s3353 + $0x360] sm:$0xff]
        %v3399 = vld [vmem:[%s3353 + $0x370] sm:$0xff]
        %v3400 = vld [vmem:[%s3353 + $0x380] sm:$0xff]
        %v3401 = vld [vmem:[%s3353 + $0x390] sm:$0xff]
        %v3402 = vld [vmem:[%s3353 + $0x3c0] sm:$0xff]
        %v3403 = vld [vmem:[%s3353 + $0x3d0] sm:$0xff]
        %v3404 = vld [vmem:[%s3353 + $0x3e0] sm:$0xff]
        %v3405 = vld [vmem:[%s3353 + $0x3f0] sm:$0xff]
        %v3406 = vld [vmem:[%s3353 + $0x400] sm:$0xff]
        %v3407 = vld [vmem:[%s3353 + $0x410] sm:$0xff]
        %v3408 = vld [vmem:[%s3353 + $0x420] sm:$0xff]
        %v3409 = vld [vmem:[%s3353 + $0x430] sm:$0xff]
        %v3410 = vld [vmem:[%s3353 + $0x460] sm:$0xff]
        %v3411 = vld [vmem:[%s3353 + $0x470] sm:$0xff]
        %v3412 = vld [vmem:[%s3353 + $0x480] sm:$0xff]
        %v3413 = vld [vmem:[%s3353 + $0x490] sm:$0xff]
        %v3414 = vld [vmem:[%s3353 + $0x4a0] sm:$0xff]
        %v3415 = vld [vmem:[%s3353 + $0x4b0] sm:$0xff]
        %v3416 = vld [vmem:[%s3353 + $0x4c0] sm:$0xff]
        %v3417 = vld [vmem:[%s3353 + $0x4d0] sm:$0xff]
        %3482 = vrot.lane.b32.xlu0 %v3354, 36
        %v3483 = vpop.permute.xlu0 %3482
        %3484 = vrot.lane.b32.xlu0 %v3355, 36
        %v3485 = vpop.permute.xlu0 %3484
        %3486 = vrot.lane.b32.xlu0 %v3356, 36
        %v3487 = vpop.permute.xlu0 %3486
        %3488 = vrot.lane.b32.xlu0 %v3357, 36
        %v3489 = vpop.permute.xlu0 %3488
        %3490 = vrot.lane.b32.xlu0 %v3358, 36
        %v3491 = vpop.permute.xlu0 %3490
        %3492 = vrot.lane.b32.xlu0 %v3359, 36
        %v3493 = vpop.permute.xlu0 %3492
        %3494 = vrot.lane.b32.xlu0 %v3360, 36
        %v3495 = vpop.permute.xlu0 %3494
        %3496 = vrot.lane.b32.xlu0 %v3361, 36
        %v3497 = vpop.permute.xlu0 %3496
        %3498 = vrot.lane.b32.xlu0 %v3362, 36
        %v3499 = vpop.permute.xlu0 %3498
        %3500 = vrot.lane.b32.xlu0 %v3363, 36
        %v3501 = vpop.permute.xlu0 %3500
        %3502 = vrot.lane.b32.xlu0 %v3364, 36
        %v3503 = vpop.permute.xlu0 %3502
        %3504 = vrot.lane.b32.xlu0 %v3365, 36
        %v3505 = vpop.permute.xlu0 %3504
        %3506 = vrot.lane.b32.xlu0 %v3366, 36
        %v3507 = vpop.permute.xlu0 %3506
        %3508 = vrot.lane.b32.xlu0 %v3367, 36
        %v3509 = vpop.permute.xlu0 %3508
        %3510 = vrot.lane.b32.xlu0 %v3368, 36
        %v3511 = vpop.permute.xlu0 %3510
        %3512 = vrot.lane.b32.xlu0 %v3369, 36
        %v3513 = vpop.permute.xlu0 %3512
        %3514 = vrot.lane.b32.xlu0 %v3370, 36
        %v3515 = vpop.permute.xlu0 %3514
        %3516 = vrot.lane.b32.xlu0 %v3371, 36
        %v3517 = vpop.permute.xlu0 %3516
        %3518 = vrot.lane.b32.xlu0 %v3372, 36
        %v3519 = vpop.permute.xlu0 %3518
        %3520 = vrot.lane.b32.xlu0 %v3373, 36
        %v3521 = vpop.permute.xlu0 %3520
        %3522 = vrot.lane.b32.xlu0 %v3374, 36
        %v3523 = vpop.permute.xlu0 %3522
        %3524 = vrot.lane.b32.xlu0 %v3375, 36
        %v3525 = vpop.permute.xlu0 %3524
        %3526 = vrot.lane.b32.xlu0 %v3376, 36
        %v3527 = vpop.permute.xlu0 %3526
        %3528 = vrot.lane.b32.xlu0 %v3377, 36
        %v3529 = vpop.permute.xlu0 %3528
        %3530 = vrot.lane.b32.xlu0 %v3378, 36
        %v3531 = vpop.permute.xlu0 %3530
        %3532 = vrot.lane.b32.xlu0 %v3379, 36
        %v3533 = vpop.permute.xlu0 %3532
        %3534 = vrot.lane.b32.xlu0 %v3380, 36
        %v3535 = vpop.permute.xlu0 %3534
        %3536 = vrot.lane.b32.xlu0 %v3381, 36
        %v3537 = vpop.permute.xlu0 %3536
        %3538 = vrot.lane.b32.xlu0 %v3382, 36
        %v3539 = vpop.permute.xlu0 %3538
        %3540 = vrot.lane.b32.xlu0 %v3383, 36
        %v3541 = vpop.permute.xlu0 %3540
        %3542 = vrot.lane.b32.xlu0 %v3384, 36
        %v3543 = vpop.permute.xlu0 %3542
        %3544 = vrot.lane.b32.xlu0 %v3385, 36
        %v3545 = vpop.permute.xlu0 %3544
        %3546 = vrot.lane.b32.xlu0 %v3386, 36
        %v3547 = vpop.permute.xlu0 %3546
        %3548 = vrot.lane.b32.xlu0 %v3387, 36
        %v3549 = vpop.permute.xlu0 %3548
        %3550 = vrot.lane.b32.xlu0 %v3388, 36
        %v3551 = vpop.permute.xlu0 %3550
        %3552 = vrot.lane.b32.xlu0 %v3389, 36
        %v3553 = vpop.permute.xlu0 %3552
        %3554 = vrot.lane.b32.xlu0 %v3390, 36
        %v3555 = vpop.permute.xlu0 %3554
        %3556 = vrot.lane.b32.xlu0 %v3391, 36
        %v3557 = vpop.permute.xlu0 %3556
        %3558 = vrot.lane.b32.xlu0 %v3392, 36
        %v3559 = vpop.permute.xlu0 %3558
        %3560 = vrot.lane.b32.xlu0 %v3393, 36
        %v3561 = vpop.permute.xlu0 %3560
        %3562 = vrot.lane.b32.xlu0 %v3394, 36
        %v3563 = vpop.permute.xlu0 %3562
        %3564 = vrot.lane.b32.xlu0 %v3395, 36
        %v3565 = vpop.permute.xlu0 %3564
        %3566 = vrot.lane.b32.xlu0 %v3396, 36
        %v3567 = vpop.permute.xlu0 %3566
        %3568 = vrot.lane.b32.xlu0 %v3397, 36
        %v3569 = vpop.permute.xlu0 %3568
        %3570 = vrot.lane.b32.xlu0 %v3398, 36
        %v3571 = vpop.permute.xlu0 %3570
        %3572 = vrot.lane.b32.xlu0 %v3399, 36
        %v3573 = vpop.permute.xlu0 %3572
        %3574 = vrot.lane.b32.xlu0 %v3400, 36
        %v3575 = vpop.permute.xlu0 %3574
        %3576 = vrot.lane.b32.xlu0 %v3401, 36
        %v3577 = vpop.permute.xlu0 %3576
        %3578 = vrot.lane.b32.xlu0 %v3402, 36
        %v3579 = vpop.permute.xlu0 %3578
        %3580 = vrot.lane.b32.xlu0 %v3403, 36
        %v3581 = vpop.permute.xlu0 %3580
        %3582 = vrot.lane.b32.xlu0 %v3404, 36
        %v3583 = vpop.permute.xlu0 %3582
        %3584 = vrot.lane.b32.xlu0 %v3405, 36
        %v3585 = vpop.permute.xlu0 %3584
        %3586 = vrot.lane.b32.xlu0 %v3406, 36
        %v3587 = vpop.permute.xlu0 %3586
        %3588 = vrot.lane.b32.xlu0 %v3407, 36
        %v3589 = vpop.permute.xlu0 %3588
        %3590 = vrot.lane.b32.xlu0 %v3408, 36
        %v3591 = vpop.permute.xlu0 %3590
        %3592 = vrot.lane.b32.xlu0 %v3409, 36
        %v3593 = vpop.permute.xlu0 %3592
        %3594 = vrot.lane.b32.xlu0 %v3410, 36
        %v3595 = vpop.permute.xlu0 %3594
        %3596 = vrot.lane.b32.xlu0 %v3411, 36
        %v3597 = vpop.permute.xlu0 %3596
        %3598 = vrot.lane.b32.xlu0 %v3412, 36
        %v3599 = vpop.permute.xlu0 %3598
        %3600 = vrot.lane.b32.xlu0 %v3413, 36
        %v3601 = vpop.permute.xlu0 %3600
        %3602 = vrot.lane.b32.xlu0 %v3414, 36
        %v3603 = vpop.permute.xlu0 %3602
        %3604 = vrot.lane.b32.xlu0 %v3415, 36
        %v3605 = vpop.permute.xlu0 %3604
        %3606 = vrot.lane.b32.xlu0 %v3416, 36
        %v3607 = vpop.permute.xlu0 %3606
        %3608 = vrot.lane.b32.xlu0 %v3417, 36
        %v3609 = vpop.permute.xlu0 %3608
        %vm3674 = vcmask 326944
        %3675 = vst.msk [vmem:[#allocation2] sm:$0xff] %vm3674, %v3483
        %3676 = vst.msk [vmem:[#allocation2 + $0x8] sm:$0xff] %vm3674, %v3485
        %3677 = vst.msk [vmem:[#allocation2 + $0x10] sm:$0xff] %vm3674, %v3487
        %3678 = vst.msk [vmem:[#allocation2 + $0x18] sm:$0xff] %vm3674, %v3489
        %3679 = vst.msk [vmem:[#allocation2 + $0x20] sm:$0xff] %vm3674, %v3491
        %3680 = vst.msk [vmem:[#allocation2 + $0x28] sm:$0xff] %vm3674, %v3493
        %3681 = vst.msk [vmem:[#allocation2 + $0x30] sm:$0xff] %vm3674, %v3495
        %3682 = vst.msk [vmem:[#allocation2 + $0x38] sm:$0xff] %vm3674, %v3497
        %3683 = vst.msk [vmem:[#allocation2 + $0x40] sm:$0xff] %vm3674, %v3499
        %3684 = vst.msk [vmem:[#allocation2 + $0x48] sm:$0xff] %vm3674, %v3501
        %3685 = vst.msk [vmem:[#allocation2 + $0x50] sm:$0xff] %vm3674, %v3503
        %3686 = vst.msk [vmem:[#allocation2 + $0x58] sm:$0xff] %vm3674, %v3505
        %3687 = vst.msk [vmem:[#allocation2 + $0x60] sm:$0xff] %vm3674, %v3507
        %3688 = vst.msk [vmem:[#allocation2 + $0x68] sm:$0xff] %vm3674, %v3509
        %3689 = vst.msk [vmem:[#allocation2 + $0x70] sm:$0xff] %vm3674, %v3511
        %3690 = vst.msk [vmem:[#allocation2 + $0x78] sm:$0xff] %vm3674, %v3513
        %3691 = vst.msk [vmem:[#allocation2 + $0x80] sm:$0xff] %vm3674, %v3515
        %3692 = vst.msk [vmem:[#allocation2 + $0x88] sm:$0xff] %vm3674, %v3517
        %3693 = vst.msk [vmem:[#allocation2 + $0x90] sm:$0xff] %vm3674, %v3519
        %3694 = vst.msk [vmem:[#allocation2 + $0x98] sm:$0xff] %vm3674, %v3521
        %3695 = vst.msk [vmem:[#allocation2 + $0xa0] sm:$0xff] %vm3674, %v3523
        %3696 = vst.msk [vmem:[#allocation2 + $0xa8] sm:$0xff] %vm3674, %v3525
        %3697 = vst.msk [vmem:[#allocation2 + $0xb0] sm:$0xff] %vm3674, %v3527
        %3698 = vst.msk [vmem:[#allocation2 + $0xb8] sm:$0xff] %vm3674, %v3529
        %3699 = vst.msk [vmem:[#allocation2 + $0xc0] sm:$0xff] %vm3674, %v3531
        %3700 = vst.msk [vmem:[#allocation2 + $0xc8] sm:$0xff] %vm3674, %v3533
        %3701 = vst.msk [vmem:[#allocation2 + $0xd0] sm:$0xff] %vm3674, %v3535
        %3702 = vst.msk [vmem:[#allocation2 + $0xd8] sm:$0xff] %vm3674, %v3537
        %3703 = vst.msk [vmem:[#allocation2 + $0xe0] sm:$0xff] %vm3674, %v3539
        %3704 = vst.msk [vmem:[#allocation2 + $0xe8] sm:$0xff] %vm3674, %v3541
        %3705 = vst.msk [vmem:[#allocation2 + $0xf0] sm:$0xff] %vm3674, %v3543
        %3706 = vst.msk [vmem:[#allocation2 + $0xf8] sm:$0xff] %vm3674, %v3545
        %3707 = vst.msk [vmem:[#allocation2 + $0x100] sm:$0xff] %vm3674, %v3547
        %3708 = vst.msk [vmem:[#allocation2 + $0x108] sm:$0xff] %vm3674, %v3549
        %3709 = vst.msk [vmem:[#allocation2 + $0x110] sm:$0xff] %vm3674, %v3551
        %3710 = vst.msk [vmem:[#allocation2 + $0x118] sm:$0xff] %vm3674, %v3553
        %3711 = vst.msk [vmem:[#allocation2 + $0x120] sm:$0xff] %vm3674, %v3555
        %3712 = vst.msk [vmem:[#allocation2 + $0x128] sm:$0xff] %vm3674, %v3557
        %3713 = vst.msk [vmem:[#allocation2 + $0x130] sm:$0xff] %vm3674, %v3559
        %3714 = vst.msk [vmem:[#allocation2 + $0x138] sm:$0xff] %vm3674, %v3561
        %3715 = vst.msk [vmem:[#allocation2 + $0x140] sm:$0xff] %vm3674, %v3563
        %3716 = vst.msk [vmem:[#allocation2 + $0x148] sm:$0xff] %vm3674, %v3565
        %3717 = vst.msk [vmem:[#allocation2 + $0x150] sm:$0xff] %vm3674, %v3567
        %3718 = vst.msk [vmem:[#allocation2 + $0x158] sm:$0xff] %vm3674, %v3569
        %3719 = vst.msk [vmem:[#allocation2 + $0x160] sm:$0xff] %vm3674, %v3571
        %3720 = vst.msk [vmem:[#allocation2 + $0x168] sm:$0xff] %vm3674, %v3573
        %3721 = vst.msk [vmem:[#allocation2 + $0x170] sm:$0xff] %vm3674, %v3575
        %3722 = vst.msk [vmem:[#allocation2 + $0x178] sm:$0xff] %vm3674, %v3577
        %3723 = vst.msk [vmem:[#allocation2 + $0x180] sm:$0xff] %vm3674, %v3579
        %3724 = vst.msk [vmem:[#allocation2 + $0x188] sm:$0xff] %vm3674, %v3581
        %3725 = vst.msk [vmem:[#allocation2 + $0x190] sm:$0xff] %vm3674, %v3583
        %3726 = vst.msk [vmem:[#allocation2 + $0x198] sm:$0xff] %vm3674, %v3585
        %3727 = vst.msk [vmem:[#allocation2 + $0x1a0] sm:$0xff] %vm3674, %v3587
        %3728 = vst.msk [vmem:[#allocation2 + $0x1a8] sm:$0xff] %vm3674, %v3589
        %3729 = vst.msk [vmem:[#allocation2 + $0x1b0] sm:$0xff] %vm3674, %v3591
        %3730 = vst.msk [vmem:[#allocation2 + $0x1b8] sm:$0xff] %vm3674, %v3593
        %3731 = vst.msk [vmem:[#allocation2 + $0x1c0] sm:$0xff] %vm3674, %v3595
        %3732 = vst.msk [vmem:[#allocation2 + $0x1c8] sm:$0xff] %vm3674, %v3597
        %3733 = vst.msk [vmem:[#allocation2 + $0x1d0] sm:$0xff] %vm3674, %v3599
        %3734 = vst.msk [vmem:[#allocation2 + $0x1d8] sm:$0xff] %vm3674, %v3601
        %3735 = vst.msk [vmem:[#allocation2 + $0x1e0] sm:$0xff] %vm3674, %v3603
        %3736 = vst.msk [vmem:[#allocation2 + $0x1e8] sm:$0xff] %vm3674, %v3605
        %3737 = vst.msk [vmem:[#allocation2 + $0x1f0] sm:$0xff] %vm3674, %v3607
        %3738 = vst.msk [vmem:[#allocation2 + $0x1f8] sm:$0xff] %vm3674, %v3609
        %v3739 = vld [vmem:[%s3353 + $0x1] sm:$0xff]
        %v3740 = vld [vmem:[%s3353 + $0x11] sm:$0xff]
        %v3741 = vld [vmem:[%s3353 + $0x21] sm:$0xff]
        %v3742 = vld [vmem:[%s3353 + $0x31] sm:$0xff]
        %v3743 = vld [vmem:[%s3353 + $0x41] sm:$0xff]
        %v3744 = vld [vmem:[%s3353 + $0x51] sm:$0xff]
        %v3745 = vld [vmem:[%s3353 + $0x61] sm:$0xff]
        %v3746 = vld [vmem:[%s3353 + $0x71] sm:$0xff]
        %v3747 = vld [vmem:[%s3353 + $0xa1] sm:$0xff]
        %v3748 = vld [vmem:[%s3353 + $0xb1] sm:$0xff]
        %v3749 = vld [vmem:[%s3353 + $0xc1] sm:$0xff]
        %v3750 = vld [vmem:[%s3353 + $0xd1] sm:$0xff]
        %v3751 = vld [vmem:[%s3353 + $0xe1] sm:$0xff]
        %v3752 = vld [vmem:[%s3353 + $0xf1] sm:$0xff]
        %v3753 = vld [vmem:[%s3353 + $0x101] sm:$0xff]
        %v3754 = vld [vmem:[%s3353 + $0x111] sm:$0xff]
        %v3755 = vld [vmem:[%s3353 + $0x141] sm:$0xff]
        %v3756 = vld [vmem:[%s3353 + $0x151] sm:$0xff]
        %v3757 = vld [vmem:[%s3353 + $0x161] sm:$0xff]
        %v3758 = vld [vmem:[%s3353 + $0x171] sm:$0xff]
        %v3759 = vld [vmem:[%s3353 + $0x181] sm:$0xff]
        %v3760 = vld [vmem:[%s3353 + $0x191] sm:$0xff]
        %v3761 = vld [vmem:[%s3353 + $0x1a1] sm:$0xff]
        %v3762 = vld [vmem:[%s3353 + $0x1b1] sm:$0xff]
        %v3763 = vld [vmem:[%s3353 + $0x1e1] sm:$0xff]
        %v3764 = vld [vmem:[%s3353 + $0x1f1] sm:$0xff]
        %v3765 = vld [vmem:[%s3353 + $0x201] sm:$0xff]
        %v3766 = vld [vmem:[%s3353 + $0x211] sm:$0xff]
        %v3767 = vld [vmem:[%s3353 + $0x221] sm:$0xff]
        %v3768 = vld [vmem:[%s3353 + $0x231] sm:$0xff]
        %v3769 = vld [vmem:[%s3353 + $0x241] sm:$0xff]
        %v3770 = vld [vmem:[%s3353 + $0x251] sm:$0xff]
        %v3771 = vld [vmem:[%s3353 + $0x281] sm:$0xff]
        %v3772 = vld [vmem:[%s3353 + $0x291] sm:$0xff]
        %v3773 = vld [vmem:[%s3353 + $0x2a1] sm:$0xff]
        %v3774 = vld [vmem:[%s3353 + $0x2b1] sm:$0xff]
        %v3775 = vld [vmem:[%s3353 + $0x2c1] sm:$0xff]
        %v3776 = vld [vmem:[%s3353 + $0x2d1] sm:$0xff]
        %v3777 = vld [vmem:[%s3353 + $0x2e1] sm:$0xff]
        %v3778 = vld [vmem:[%s3353 + $0x2f1] sm:$0xff]
        %v3779 = vld [vmem:[%s3353 + $0x321] sm:$0xff]
        %v3780 = vld [vmem:[%s3353 + $0x331] sm:$0xff]
        %v3781 = vld [vmem:[%s3353 + $0x341] sm:$0xff]
        %v3782 = vld [vmem:[%s3353 + $0x351] sm:$0xff]
        %v3783 = vld [vmem:[%s3353 + $0x361] sm:$0xff]
        %v3784 = vld [vmem:[%s3353 + $0x371] sm:$0xff]
        %v3785 = vld [vmem:[%s3353 + $0x381] sm:$0xff]
        %v3786 = vld [vmem:[%s3353 + $0x391] sm:$0xff]
        %v3787 = vld [vmem:[%s3353 + $0x3c1] sm:$0xff]
        %v3788 = vld [vmem:[%s3353 + $0x3d1] sm:$0xff]
        %v3789 = vld [vmem:[%s3353 + $0x3e1] sm:$0xff]
        %v3790 = vld [vmem:[%s3353 + $0x3f1] sm:$0xff]
        %v3791 = vld [vmem:[%s3353 + $0x401] sm:$0xff]
        %v3792 = vld [vmem:[%s3353 + $0x411] sm:$0xff]
        %v3793 = vld [vmem:[%s3353 + $0x421] sm:$0xff]
        %v3794 = vld [vmem:[%s3353 + $0x431] sm:$0xff]
        %v3795 = vld [vmem:[%s3353 + $0x461] sm:$0xff]
        %v3796 = vld [vmem:[%s3353 + $0x471] sm:$0xff]
        %v3797 = vld [vmem:[%s3353 + $0x481] sm:$0xff]
        %v3798 = vld [vmem:[%s3353 + $0x491] sm:$0xff]
        %v3799 = vld [vmem:[%s3353 + $0x4a1] sm:$0xff]
        %v3800 = vld [vmem:[%s3353 + $0x4b1] sm:$0xff]
        %v3801 = vld [vmem:[%s3353 + $0x4c1] sm:$0xff]
        %v3802 = vld [vmem:[%s3353 + $0x4d1] sm:$0xff]
        %3867 = vrot.lane.b32.xlu0 %v3739, 40
        %v3868 = vpop.permute.xlu0 %3867
        %3869 = vrot.lane.b32.xlu0 %v3740, 40
        %v3870 = vpop.permute.xlu0 %3869
        %3871 = vrot.lane.b32.xlu0 %v3741, 40
        %v3872 = vpop.permute.xlu0 %3871
        %3873 = vrot.lane.b32.xlu0 %v3742, 40
        %v3874 = vpop.permute.xlu0 %3873
        %3875 = vrot.lane.b32.xlu0 %v3743, 40
        %v3876 = vpop.permute.xlu0 %3875
        %3877 = vrot.lane.b32.xlu0 %v3744, 40
        %v3878 = vpop.permute.xlu0 %3877
        %3879 = vrot.lane.b32.xlu0 %v3745, 40
        %v3880 = vpop.permute.xlu0 %3879
        %3881 = vrot.lane.b32.xlu0 %v3746, 40
        %v3882 = vpop.permute.xlu0 %3881
        %3883 = vrot.lane.b32.xlu0 %v3747, 40
        %v3884 = vpop.permute.xlu0 %3883
        %3885 = vrot.lane.b32.xlu0 %v3748, 40
        %v3886 = vpop.permute.xlu0 %3885
        %3887 = vrot.lane.b32.xlu0 %v3749, 40
        %v3888 = vpop.permute.xlu0 %3887
        %3889 = vrot.lane.b32.xlu0 %v3750, 40
        %v3890 = vpop.permute.xlu0 %3889
        %3891 = vrot.lane.b32.xlu0 %v3751, 40
        %v3892 = vpop.permute.xlu0 %3891
        %3893 = vrot.lane.b32.xlu0 %v3752, 40
        %v3894 = vpop.permute.xlu0 %3893
        %3895 = vrot.lane.b32.xlu0 %v3753, 40
        %v3896 = vpop.permute.xlu0 %3895
        %3897 = vrot.lane.b32.xlu0 %v3754, 40
        %v3898 = vpop.permute.xlu0 %3897
        %3899 = vrot.lane.b32.xlu0 %v3755, 40
        %v3900 = vpop.permute.xlu0 %3899
        %3901 = vrot.lane.b32.xlu0 %v3756, 40
        %v3902 = vpop.permute.xlu0 %3901
        %3903 = vrot.lane.b32.xlu0 %v3757, 40
        %v3904 = vpop.permute.xlu0 %3903
        %3905 = vrot.lane.b32.xlu0 %v3758, 40
        %v3906 = vpop.permute.xlu0 %3905
        %3907 = vrot.lane.b32.xlu0 %v3759, 40
        %v3908 = vpop.permute.xlu0 %3907
        %3909 = vrot.lane.b32.xlu0 %v3760, 40
        %v3910 = vpop.permute.xlu0 %3909
        %3911 = vrot.lane.b32.xlu0 %v3761, 40
        %v3912 = vpop.permute.xlu0 %3911
        %3913 = vrot.lane.b32.xlu0 %v3762, 40
        %v3914 = vpop.permute.xlu0 %3913
        %3915 = vrot.lane.b32.xlu0 %v3763, 40
        %v3916 = vpop.permute.xlu0 %3915
        %3917 = vrot.lane.b32.xlu0 %v3764, 40
        %v3918 = vpop.permute.xlu0 %3917
        %3919 = vrot.lane.b32.xlu0 %v3765, 40
        %v3920 = vpop.permute.xlu0 %3919
        %3921 = vrot.lane.b32.xlu0 %v3766, 40
        %v3922 = vpop.permute.xlu0 %3921
        %3923 = vrot.lane.b32.xlu0 %v3767, 40
        %v3924 = vpop.permute.xlu0 %3923
        %3925 = vrot.lane.b32.xlu0 %v3768, 40
        %v3926 = vpop.permute.xlu0 %3925
        %3927 = vrot.lane.b32.xlu0 %v3769, 40
        %v3928 = vpop.permute.xlu0 %3927
        %3929 = vrot.lane.b32.xlu0 %v3770, 40
        %v3930 = vpop.permute.xlu0 %3929
        %3931 = vrot.lane.b32.xlu0 %v3771, 40
        %v3932 = vpop.permute.xlu0 %3931
        %3933 = vrot.lane.b32.xlu0 %v3772, 40
        %v3934 = vpop.permute.xlu0 %3933
        %3935 = vrot.lane.b32.xlu0 %v3773, 40
        %v3936 = vpop.permute.xlu0 %3935
        %3937 = vrot.lane.b32.xlu0 %v3774, 40
        %v3938 = vpop.permute.xlu0 %3937
        %3939 = vrot.lane.b32.xlu0 %v3775, 40
        %v3940 = vpop.permute.xlu0 %3939
        %3941 = vrot.lane.b32.xlu0 %v3776, 40
        %v3942 = vpop.permute.xlu0 %3941
        %3943 = vrot.lane.b32.xlu0 %v3777, 40
        %v3944 = vpop.permute.xlu0 %3943
        %3945 = vrot.lane.b32.xlu0 %v3778, 40
        %v3946 = vpop.permute.xlu0 %3945
        %3947 = vrot.lane.b32.xlu0 %v3779, 40
        %v3948 = vpop.permute.xlu0 %3947
        %3949 = vrot.lane.b32.xlu0 %v3780, 40
        %v3950 = vpop.permute.xlu0 %3949
        %3951 = vrot.lane.b32.xlu0 %v3781, 40
        %v3952 = vpop.permute.xlu0 %3951
        %3953 = vrot.lane.b32.xlu0 %v3782, 40
        %v3954 = vpop.permute.xlu0 %3953
        %3955 = vrot.lane.b32.xlu0 %v3783, 40
        %v3956 = vpop.permute.xlu0 %3955
        %3957 = vrot.lane.b32.xlu0 %v3784, 40
        %v3958 = vpop.permute.xlu0 %3957
        %3959 = vrot.lane.b32.xlu0 %v3785, 40
        %v3960 = vpop.permute.xlu0 %3959
        %3961 = vrot.lane.b32.xlu0 %v3786, 40
        %v3962 = vpop.permute.xlu0 %3961
        %3963 = vrot.lane.b32.xlu0 %v3787, 40
        %v3964 = vpop.permute.xlu0 %3963
        %3965 = vrot.lane.b32.xlu0 %v3788, 40
        %v3966 = vpop.permute.xlu0 %3965
        %3967 = vrot.lane.b32.xlu0 %v3789, 40
        %v3968 = vpop.permute.xlu0 %3967
        %3969 = vrot.lane.b32.xlu0 %v3790, 40
        %v3970 = vpop.permute.xlu0 %3969
        %3971 = vrot.lane.b32.xlu0 %v3791, 40
        %v3972 = vpop.permute.xlu0 %3971
        %3973 = vrot.lane.b32.xlu0 %v3792, 40
        %v3974 = vpop.permute.xlu0 %3973
        %3975 = vrot.lane.b32.xlu0 %v3793, 40
        %v3976 = vpop.permute.xlu0 %3975
        %3977 = vrot.lane.b32.xlu0 %v3794, 40
        %v3978 = vpop.permute.xlu0 %3977
        %3979 = vrot.lane.b32.xlu0 %v3795, 40
        %v3980 = vpop.permute.xlu0 %3979
        %3981 = vrot.lane.b32.xlu0 %v3796, 40
        %v3982 = vpop.permute.xlu0 %3981
        %3983 = vrot.lane.b32.xlu0 %v3797, 40
        %v3984 = vpop.permute.xlu0 %3983
        %3985 = vrot.lane.b32.xlu0 %v3798, 40
        %v3986 = vpop.permute.xlu0 %3985
        %3987 = vrot.lane.b32.xlu0 %v3799, 40
        %v3988 = vpop.permute.xlu0 %3987
        %3989 = vrot.lane.b32.xlu0 %v3800, 40
        %v3990 = vpop.permute.xlu0 %3989
        %3991 = vrot.lane.b32.xlu0 %v3801, 40
        %v3992 = vpop.permute.xlu0 %3991
        %3993 = vrot.lane.b32.xlu0 %v3802, 40
        %v3994 = vpop.permute.xlu0 %3993
        %vm4059 = vcmask 359744
        %4060 = vst.msk [vmem:[#allocation2] sm:$0xff] %vm4059, %v3868
        %4061 = vst.msk [vmem:[#allocation2 + $0x8] sm:$0xff] %vm4059, %v3870
        %4062 = vst.msk [vmem:[#allocation2 + $0x10] sm:$0xff] %vm4059, %v3872
        %4063 = vst.msk [vmem:[#allocation2 + $0x18] sm:$0xff] %vm4059, %v3874
        %4064 = vst.msk [vmem:[#allocation2 + $0x20] sm:$0xff] %vm4059, %v3876
        %4065 = vst.msk [vmem:[#allocation2 + $0x28] sm:$0xff] %vm4059, %v3878
        %4066 = vst.msk [vmem:[#allocation2 + $0x30] sm:$0xff] %vm4059, %v3880
        %4067 = vst.msk [vmem:[#allocation2 + $0x38] sm:$0xff] %vm4059, %v3882
        %4068 = vst.msk [vmem:[#allocation2 + $0x40] sm:$0xff] %vm4059, %v3884
        %4069 = vst.msk [vmem:[#allocation2 + $0x48] sm:$0xff] %vm4059, %v3886
        %4070 = vst.msk [vmem:[#allocation2 + $0x50] sm:$0xff] %vm4059, %v3888
        %4071 = vst.msk [vmem:[#allocation2 + $0x58] sm:$0xff] %vm4059, %v3890
        %4072 = vst.msk [vmem:[#allocation2 + $0x60] sm:$0xff] %vm4059, %v3892
        %4073 = vst.msk [vmem:[#allocation2 + $0x68] sm:$0xff] %vm4059, %v3894
        %4074 = vst.msk [vmem:[#allocation2 + $0x70] sm:$0xff] %vm4059, %v3896
        %4075 = vst.msk [vmem:[#allocation2 + $0x78] sm:$0xff] %vm4059, %v3898
        %4076 = vst.msk [vmem:[#allocation2 + $0x80] sm:$0xff] %vm4059, %v3900
        %4077 = vst.msk [vmem:[#allocation2 + $0x88] sm:$0xff] %vm4059, %v3902
        %4078 = vst.msk [vmem:[#allocation2 + $0x90] sm:$0xff] %vm4059, %v3904
        %4079 = vst.msk [vmem:[#allocation2 + $0x98] sm:$0xff] %vm4059, %v3906
        %4080 = vst.msk [vmem:[#allocation2 + $0xa0] sm:$0xff] %vm4059, %v3908
        %4081 = vst.msk [vmem:[#allocation2 + $0xa8] sm:$0xff] %vm4059, %v3910
        %4082 = vst.msk [vmem:[#allocation2 + $0xb0] sm:$0xff] %vm4059, %v3912
        %4083 = vst.msk [vmem:[#allocation2 + $0xb8] sm:$0xff] %vm4059, %v3914
        %4084 = vst.msk [vmem:[#allocation2 + $0xc0] sm:$0xff] %vm4059, %v3916
        %4085 = vst.msk [vmem:[#allocation2 + $0xc8] sm:$0xff] %vm4059, %v3918
        %4086 = vst.msk [vmem:[#allocation2 + $0xd0] sm:$0xff] %vm4059, %v3920
        %4087 = vst.msk [vmem:[#allocation2 + $0xd8] sm:$0xff] %vm4059, %v3922
        %4088 = vst.msk [vmem:[#allocation2 + $0xe0] sm:$0xff] %vm4059, %v3924
        %4089 = vst.msk [vmem:[#allocation2 + $0xe8] sm:$0xff] %vm4059, %v3926
        %4090 = vst.msk [vmem:[#allocation2 + $0xf0] sm:$0xff] %vm4059, %v3928
        %4091 = vst.msk [vmem:[#allocation2 + $0xf8] sm:$0xff] %vm4059, %v3930
        %4092 = vst.msk [vmem:[#allocation2 + $0x100] sm:$0xff] %vm4059, %v3932
        %4093 = vst.msk [vmem:[#allocation2 + $0x108] sm:$0xff] %vm4059, %v3934
        %4094 = vst.msk [vmem:[#allocation2 + $0x110] sm:$0xff] %vm4059, %v3936
        %4095 = vst.msk [vmem:[#allocation2 + $0x118] sm:$0xff] %vm4059, %v3938
        %4096 = vst.msk [vmem:[#allocation2 + $0x120] sm:$0xff] %vm4059, %v3940
        %4097 = vst.msk [vmem:[#allocation2 + $0x128] sm:$0xff] %vm4059, %v3942
        %4098 = vst.msk [vmem:[#allocation2 + $0x130] sm:$0xff] %vm4059, %v3944
        %4099 = vst.msk [vmem:[#allocation2 + $0x138] sm:$0xff] %vm4059, %v3946
        %4100 = vst.msk [vmem:[#allocation2 + $0x140] sm:$0xff] %vm4059, %v3948
        %4101 = vst.msk [vmem:[#allocation2 + $0x148] sm:$0xff] %vm4059, %v3950
        %4102 = vst.msk [vmem:[#allocation2 + $0x150] sm:$0xff] %vm4059, %v3952
        %4103 = vst.msk [vmem:[#allocation2 + $0x158] sm:$0xff] %vm4059, %v3954
        %4104 = vst.msk [vmem:[#allocation2 + $0x160] sm:$0xff] %vm4059, %v3956
        %4105 = vst.msk [vmem:[#allocation2 + $0x168] sm:$0xff] %vm4059, %v3958
        %4106 = vst.msk [vmem:[#allocation2 + $0x170] sm:$0xff] %vm4059, %v3960
        %4107 = vst.msk [vmem:[#allocation2 + $0x178] sm:$0xff] %vm4059, %v3962
        %4108 = vst.msk [vmem:[#allocation2 + $0x180] sm:$0xff] %vm4059, %v3964
        %4109 = vst.msk [vmem:[#allocation2 + $0x188] sm:$0xff] %vm4059, %v3966
        %4110 = vst.msk [vmem:[#allocation2 + $0x190] sm:$0xff] %vm4059, %v3968
        %4111 = vst.msk [vmem:[#allocation2 + $0x198] sm:$0xff] %vm4059, %v3970
        %4112 = vst.msk [vmem:[#allocation2 + $0x1a0] sm:$0xff] %vm4059, %v3972
        %4113 = vst.msk [vmem:[#allocation2 + $0x1a8] sm:$0xff] %vm4059, %v3974
        %4114 = vst.msk [vmem:[#allocation2 + $0x1b0] sm:$0xff] %vm4059, %v3976
        %4115 = vst.msk [vmem:[#allocation2 + $0x1b8] sm:$0xff] %vm4059, %v3978
        %4116 = vst.msk [vmem:[#allocation2 + $0x1c0] sm:$0xff] %vm4059, %v3980
        %4117 = vst.msk [vmem:[#allocation2 + $0x1c8] sm:$0xff] %vm4059, %v3982
        %4118 = vst.msk [vmem:[#allocation2 + $0x1d0] sm:$0xff] %vm4059, %v3984
        %4119 = vst.msk [vmem:[#allocation2 + $0x1d8] sm:$0xff] %vm4059, %v3986
        %4120 = vst.msk [vmem:[#allocation2 + $0x1e0] sm:$0xff] %vm4059, %v3988
        %4121 = vst.msk [vmem:[#allocation2 + $0x1e8] sm:$0xff] %vm4059, %v3990
        %4122 = vst.msk [vmem:[#allocation2 + $0x1f0] sm:$0xff] %vm4059, %v3992
        %4123 = vst.msk [vmem:[#allocation2 + $0x1f8] sm:$0xff] %vm4059, %v3994
        %v4124 = vld [vmem:[%s3353 + $0x2] sm:$0xff]
        %v4125 = vld [vmem:[%s3353 + $0x12] sm:$0xff]
        %v4126 = vld [vmem:[%s3353 + $0x22] sm:$0xff]
        %v4127 = vld [vmem:[%s3353 + $0x32] sm:$0xff]
        %v4128 = vld [vmem:[%s3353 + $0x42] sm:$0xff]
        %v4129 = vld [vmem:[%s3353 + $0x52] sm:$0xff]
        %v4130 = vld [vmem:[%s3353 + $0x62] sm:$0xff]
        %v4131 = vld [vmem:[%s3353 + $0x72] sm:$0xff]
        %v4132 = vld [vmem:[%s3353 + $0xa2] sm:$0xff]
        %v4133 = vld [vmem:[%s3353 + $0xb2] sm:$0xff]
        %v4134 = vld [vmem:[%s3353 + $0xc2] sm:$0xff]
        %v4135 = vld [vmem:[%s3353 + $0xd2] sm:$0xff]
        %v4136 = vld [vmem:[%s3353 + $0xe2] sm:$0xff]
        %v4137 = vld [vmem:[%s3353 + $0xf2] sm:$0xff]
        %v4138 = vld [vmem:[%s3353 + $0x102] sm:$0xff]
        %v4139 = vld [vmem:[%s3353 + $0x112] sm:$0xff]
        %v4140 = vld [vmem:[%s3353 + $0x142] sm:$0xff]
        %v4141 = vld [vmem:[%s3353 + $0x152] sm:$0xff]
        %v4142 = vld [vmem:[%s3353 + $0x162] sm:$0xff]
        %v4143 = vld [vmem:[%s3353 + $0x172] sm:$0xff]
        %v4144 = vld [vmem:[%s3353 + $0x182] sm:$0xff]
        %v4145 = vld [vmem:[%s3353 + $0x192] sm:$0xff]
        %v4146 = vld [vmem:[%s3353 + $0x1a2] sm:$0xff]
        %v4147 = vld [vmem:[%s3353 + $0x1b2] sm:$0xff]
        %v4148 = vld [vmem:[%s3353 + $0x1e2] sm:$0xff]
        %v4149 = vld [vmem:[%s3353 + $0x1f2] sm:$0xff]
        %v4150 = vld [vmem:[%s3353 + $0x202] sm:$0xff]
        %v4151 = vld [vmem:[%s3353 + $0x212] sm:$0xff]
        %v4152 = vld [vmem:[%s3353 + $0x222] sm:$0xff]
        %v4153 = vld [vmem:[%s3353 + $0x232] sm:$0xff]
        %v4154 = vld [vmem:[%s3353 + $0x242] sm:$0xff]
        %v4155 = vld [vmem:[%s3353 + $0x252] sm:$0xff]
        %v4156 = vld [vmem:[%s3353 + $0x282] sm:$0xff]
        %v4157 = vld [vmem:[%s3353 + $0x292] sm:$0xff]
        %v4158 = vld [vmem:[%s3353 + $0x2a2] sm:$0xff]
        %v4159 = vld [vmem:[%s3353 + $0x2b2] sm:$0xff]
        %v4160 = vld [vmem:[%s3353 + $0x2c2] sm:$0xff]
        %v4161 = vld [vmem:[%s3353 + $0x2d2] sm:$0xff]
        %v4162 = vld [vmem:[%s3353 + $0x2e2] sm:$0xff]
        %v4163 = vld [vmem:[%s3353 + $0x2f2] sm:$0xff]
        %v4164 = vld [vmem:[%s3353 + $0x322] sm:$0xff]
        %v4165 = vld [vmem:[%s3353 + $0x332] sm:$0xff]
        %v4166 = vld [vmem:[%s3353 + $0x342] sm:$0xff]
        %v4167 = vld [vmem:[%s3353 + $0x352] sm:$0xff]
        %v4168 = vld [vmem:[%s3353 + $0x362] sm:$0xff]
        %v4169 = vld [vmem:[%s3353 + $0x372] sm:$0xff]
        %v4170 = vld [vmem:[%s3353 + $0x382] sm:$0xff]
        %v4171 = vld [vmem:[%s3353 + $0x392] sm:$0xff]
        %v4172 = vld [vmem:[%s3353 + $0x3c2] sm:$0xff]
        %v4173 = vld [vmem:[%s3353 + $0x3d2] sm:$0xff]
        %v4174 = vld [vmem:[%s3353 + $0x3e2] sm:$0xff]
        %v4175 = vld [vmem:[%s3353 + $0x3f2] sm:$0xff]
        %v4176 = vld [vmem:[%s3353 + $0x402] sm:$0xff]
        %v4177 = vld [vmem:[%s3353 + $0x412] sm:$0xff]
        %v4178 = vld [vmem:[%s3353 + $0x422] sm:$0xff]
        %v4179 = vld [vmem:[%s3353 + $0x432] sm:$0xff]
        %v4180 = vld [vmem:[%s3353 + $0x462] sm:$0xff]
        %v4181 = vld [vmem:[%s3353 + $0x472] sm:$0xff]
        %v4182 = vld [vmem:[%s3353 + $0x482] sm:$0xff]
        %v4183 = vld [vmem:[%s3353 + $0x492] sm:$0xff]
        %v4184 = vld [vmem:[%s3353 + $0x4a2] sm:$0xff]
        %v4185 = vld [vmem:[%s3353 + $0x4b2] sm:$0xff]
        %v4186 = vld [vmem:[%s3353 + $0x4c2] sm:$0xff]
        %v4187 = vld [vmem:[%s3353 + $0x4d2] sm:$0xff]
        %4252 = vrot.lane.b32.xlu0 %v4124, 44
        %v4253 = vpop.permute.xlu0 %4252
        %4254 = vrot.lane.b32.xlu0 %v4125, 44
        %v4255 = vpop.permute.xlu0 %4254
        %4256 = vrot.lane.b32.xlu0 %v4126, 44
        %v4257 = vpop.permute.xlu0 %4256
        %4258 = vrot.lane.b32.xlu0 %v4127, 44
        %v4259 = vpop.permute.xlu0 %4258
        %4260 = vrot.lane.b32.xlu0 %v4128, 44
        %v4261 = vpop.permute.xlu0 %4260
        %4262 = vrot.lane.b32.xlu0 %v4129, 44
        %v4263 = vpop.permute.xlu0 %4262
        %4264 = vrot.lane.b32.xlu0 %v4130, 44
        %v4265 = vpop.permute.xlu0 %4264
        %4266 = vrot.lane.b32.xlu0 %v4131, 44
        %v4267 = vpop.permute.xlu0 %4266
        %4268 = vrot.lane.b32.xlu0 %v4132, 44
        %v4269 = vpop.permute.xlu0 %4268
        %4270 = vrot.lane.b32.xlu0 %v4133, 44
        %v4271 = vpop.permute.xlu0 %4270
        %4272 = vrot.lane.b32.xlu0 %v4134, 44
        %v4273 = vpop.permute.xlu0 %4272
        %4274 = vrot.lane.b32.xlu0 %v4135, 44
        %v4275 = vpop.permute.xlu0 %4274
        %4276 = vrot.lane.b32.xlu0 %v4136, 44
        %v4277 = vpop.permute.xlu0 %4276
        %4278 = vrot.lane.b32.xlu0 %v4137, 44
        %v4279 = vpop.permute.xlu0 %4278
        %4280 = vrot.lane.b32.xlu0 %v4138, 44
        %v4281 = vpop.permute.xlu0 %4280
        %4282 = vrot.lane.b32.xlu0 %v4139, 44
        %v4283 = vpop.permute.xlu0 %4282
        %4284 = vrot.lane.b32.xlu0 %v4140, 44
        %v4285 = vpop.permute.xlu0 %4284
        %4286 = vrot.lane.b32.xlu0 %v4141, 44
        %v4287 = vpop.permute.xlu0 %4286
        %4288 = vrot.lane.b32.xlu0 %v4142, 44
        %v4289 = vpop.permute.xlu0 %4288
        %4290 = vrot.lane.b32.xlu0 %v4143, 44
        %v4291 = vpop.permute.xlu0 %4290
        %4292 = vrot.lane.b32.xlu0 %v4144, 44
        %v4293 = vpop.permute.xlu0 %4292
        %4294 = vrot.lane.b32.xlu0 %v4145, 44
        %v4295 = vpop.permute.xlu0 %4294
        %4296 = vrot.lane.b32.xlu0 %v4146, 44
        %v4297 = vpop.permute.xlu0 %4296
        %4298 = vrot.lane.b32.xlu0 %v4147, 44
        %v4299 = vpop.permute.xlu0 %4298
        %4300 = vrot.lane.b32.xlu0 %v4148, 44
        %v4301 = vpop.permute.xlu0 %4300
        %4302 = vrot.lane.b32.xlu0 %v4149, 44
        %v4303 = vpop.permute.xlu0 %4302
        %4304 = vrot.lane.b32.xlu0 %v4150, 44
        %v4305 = vpop.permute.xlu0 %4304
        %4306 = vrot.lane.b32.xlu0 %v4151, 44
        %v4307 = vpop.permute.xlu0 %4306
        %4308 = vrot.lane.b32.xlu0 %v4152, 44
        %v4309 = vpop.permute.xlu0 %4308
        %4310 = vrot.lane.b32.xlu0 %v4153, 44
        %v4311 = vpop.permute.xlu0 %4310
        %4312 = vrot.lane.b32.xlu0 %v4154, 44
        %v4313 = vpop.permute.xlu0 %4312
        %4314 = vrot.lane.b32.xlu0 %v4155, 44
        %v4315 = vpop.permute.xlu0 %4314
        %4316 = vrot.lane.b32.xlu0 %v4156, 44
        %v4317 = vpop.permute.xlu0 %4316
        %4318 = vrot.lane.b32.xlu0 %v4157, 44
        %v4319 = vpop.permute.xlu0 %4318
        %4320 = vrot.lane.b32.xlu0 %v4158, 44
        %v4321 = vpop.permute.xlu0 %4320
        %4322 = vrot.lane.b32.xlu0 %v4159, 44
        %v4323 = vpop.permute.xlu0 %4322
        %4324 = vrot.lane.b32.xlu0 %v4160, 44
        %v4325 = vpop.permute.xlu0 %4324
        %4326 = vrot.lane.b32.xlu0 %v4161, 44
        %v4327 = vpop.permute.xlu0 %4326
        %4328 = vrot.lane.b32.xlu0 %v4162, 44
        %v4329 = vpop.permute.xlu0 %4328
        %4330 = vrot.lane.b32.xlu0 %v4163, 44
        %v4331 = vpop.permute.xlu0 %4330
        %4332 = vrot.lane.b32.xlu0 %v4164, 44
        %v4333 = vpop.permute.xlu0 %4332
        %4334 = vrot.lane.b32.xlu0 %v4165, 44
        %v4335 = vpop.permute.xlu0 %4334
        %4336 = vrot.lane.b32.xlu0 %v4166, 44
        %v4337 = vpop.permute.xlu0 %4336
        %4338 = vrot.lane.b32.xlu0 %v4167, 44
        %v4339 = vpop.permute.xlu0 %4338
        %4340 = vrot.lane.b32.xlu0 %v4168, 44
        %v4341 = vpop.permute.xlu0 %4340
        %4342 = vrot.lane.b32.xlu0 %v4169, 44
        %v4343 = vpop.permute.xlu0 %4342
        %4344 = vrot.lane.b32.xlu0 %v4170, 44
        %v4345 = vpop.permute.xlu0 %4344
        %4346 = vrot.lane.b32.xlu0 %v4171, 44
        %v4347 = vpop.permute.xlu0 %4346
        %4348 = vrot.lane.b32.xlu0 %v4172, 44
        %v4349 = vpop.permute.xlu0 %4348
        %4350 = vrot.lane.b32.xlu0 %v4173, 44
        %v4351 = vpop.permute.xlu0 %4350
        %4352 = vrot.lane.b32.xlu0 %v4174, 44
        %v4353 = vpop.permute.xlu0 %4352
        %4354 = vrot.lane.b32.xlu0 %v4175, 44
        %v4355 = vpop.permute.xlu0 %4354
        %4356 = vrot.lane.b32.xlu0 %v4176, 44
        %v4357 = vpop.permute.xlu0 %4356
        %4358 = vrot.lane.b32.xlu0 %v4177, 44
        %v4359 = vpop.permute.xlu0 %4358
        %4360 = vrot.lane.b32.xlu0 %v4178, 44
        %v4361 = vpop.permute.xlu0 %4360
        %4362 = vrot.lane.b32.xlu0 %v4179, 44
        %v4363 = vpop.permute.xlu0 %4362
        %4364 = vrot.lane.b32.xlu0 %v4180, 44
        %v4365 = vpop.permute.xlu0 %4364
        %4366 = vrot.lane.b32.xlu0 %v4181, 44
        %v4367 = vpop.permute.xlu0 %4366
        %4368 = vrot.lane.b32.xlu0 %v4182, 44
        %v4369 = vpop.permute.xlu0 %4368
        %4370 = vrot.lane.b32.xlu0 %v4183, 44
        %v4371 = vpop.permute.xlu0 %4370
        %4372 = vrot.lane.b32.xlu0 %v4184, 44
        %v4373 = vpop.permute.xlu0 %4372
        %4374 = vrot.lane.b32.xlu0 %v4185, 44
        %v4375 = vpop.permute.xlu0 %4374
        %4376 = vrot.lane.b32.xlu0 %v4186, 44
        %v4377 = vpop.permute.xlu0 %4376
        %4378 = vrot.lane.b32.xlu0 %v4187, 44
        %v4379 = vpop.permute.xlu0 %4378
        %vm4444 = vcmask 392544
        %4445 = vst.msk [vmem:[#allocation2] sm:$0xff] %vm4444, %v4253
        %4446 = vst.msk [vmem:[#allocation2 + $0x8] sm:$0xff] %vm4444, %v4255
        %4447 = vst.msk [vmem:[#allocation2 + $0x10] sm:$0xff] %vm4444, %v4257
        %4448 = vst.msk [vmem:[#allocation2 + $0x18] sm:$0xff] %vm4444, %v4259
        %4449 = vst.msk [vmem:[#allocation2 + $0x20] sm:$0xff] %vm4444, %v4261
        %4450 = vst.msk [vmem:[#allocation2 + $0x28] sm:$0xff] %vm4444, %v4263
        %4451 = vst.msk [vmem:[#allocation2 + $0x30] sm:$0xff] %vm4444, %v4265
        %4452 = vst.msk [vmem:[#allocation2 + $0x38] sm:$0xff] %vm4444, %v4267
        %4453 = vst.msk [vmem:[#allocation2 + $0x40] sm:$0xff] %vm4444, %v4269
        %4454 = vst.msk [vmem:[#allocation2 + $0x48] sm:$0xff] %vm4444, %v4271
        %4455 = vst.msk [vmem:[#allocation2 + $0x50] sm:$0xff] %vm4444, %v4273
        %4456 = vst.msk [vmem:[#allocation2 + $0x58] sm:$0xff] %vm4444, %v4275
        %4457 = vst.msk [vmem:[#allocation2 + $0x60] sm:$0xff] %vm4444, %v4277
        %4458 = vst.msk [vmem:[#allocation2 + $0x68] sm:$0xff] %vm4444, %v4279
        %4459 = vst.msk [vmem:[#allocation2 + $0x70] sm:$0xff] %vm4444, %v4281
        %4460 = vst.msk [vmem:[#allocation2 + $0x78] sm:$0xff] %vm4444, %v4283
        %4461 = vst.msk [vmem:[#allocation2 + $0x80] sm:$0xff] %vm4444, %v4285
        %4462 = vst.msk [vmem:[#allocation2 + $0x88] sm:$0xff] %vm4444, %v4287
        %4463 = vst.msk [vmem:[#allocation2 + $0x90] sm:$0xff] %vm4444, %v4289
        %4464 = vst.msk [vmem:[#allocation2 + $0x98] sm:$0xff] %vm4444, %v4291
        %4465 = vst.msk [vmem:[#allocation2 + $0xa0] sm:$0xff] %vm4444, %v4293
        %4466 = vst.msk [vmem:[#allocation2 + $0xa8] sm:$0xff] %vm4444, %v4295
        %4467 = vst.msk [vmem:[#allocation2 + $0xb0] sm:$0xff] %vm4444, %v4297
        %4468 = vst.msk [vmem:[#allocation2 + $0xb8] sm:$0xff] %vm4444, %v4299
        %4469 = vst.msk [vmem:[#allocation2 + $0xc0] sm:$0xff] %vm4444, %v4301
        %4470 = vst.msk [vmem:[#allocation2 + $0xc8] sm:$0xff] %vm4444, %v4303
        %4471 = vst.msk [vmem:[#allocation2 + $0xd0] sm:$0xff] %vm4444, %v4305
        %4472 = vst.msk [vmem:[#allocation2 + $0xd8] sm:$0xff] %vm4444, %v4307
        %4473 = vst.msk [vmem:[#allocation2 + $0xe0] sm:$0xff] %vm4444, %v4309
        %4474 = vst.msk [vmem:[#allocation2 + $0xe8] sm:$0xff] %vm4444, %v4311
        %4475 = vst.msk [vmem:[#allocation2 + $0xf0] sm:$0xff] %vm4444, %v4313
        %4476 = vst.msk [vmem:[#allocation2 + $0xf8] sm:$0xff] %vm4444, %v4315
        %4477 = vst.msk [vmem:[#allocation2 + $0x100] sm:$0xff] %vm4444, %v4317
        %4478 = vst.msk [vmem:[#allocation2 + $0x108] sm:$0xff] %vm4444, %v4319
        %4479 = vst.msk [vmem:[#allocation2 + $0x110] sm:$0xff] %vm4444, %v4321
        %4480 = vst.msk [vmem:[#allocation2 + $0x118] sm:$0xff] %vm4444, %v4323
        %4481 = vst.msk [vmem:[#allocation2 + $0x120] sm:$0xff] %vm4444, %v4325
        %4482 = vst.msk [vmem:[#allocation2 + $0x128] sm:$0xff] %vm4444, %v4327
        %4483 = vst.msk [vmem:[#allocation2 + $0x130] sm:$0xff] %vm4444, %v4329
        %4484 = vst.msk [vmem:[#allocation2 + $0x138] sm:$0xff] %vm4444, %v4331
        %4485 = vst.msk [vmem:[#allocation2 + $0x140] sm:$0xff] %vm4444, %v4333
        %4486 = vst.msk [vmem:[#allocation2 + $0x148] sm:$0xff] %vm4444, %v4335
        %4487 = vst.msk [vmem:[#allocation2 + $0x150] sm:$0xff] %vm4444, %v4337
        %4488 = vst.msk [vmem:[#allocation2 + $0x158] sm:$0xff] %vm4444, %v4339
        %4489 = vst.msk [vmem:[#allocation2 + $0x160] sm:$0xff] %vm4444, %v4341
        %4490 = vst.msk [vmem:[#allocation2 + $0x168] sm:$0xff] %vm4444, %v4343
        %4491 = vst.msk [vmem:[#allocation2 + $0x170] sm:$0xff] %vm4444, %v4345
        %4492 = vst.msk [vmem:[#allocation2 + $0x178] sm:$0xff] %vm4444, %v4347
        %4493 = vst.msk [vmem:[#allocation2 + $0x180] sm:$0xff] %vm4444, %v4349
        %4494 = vst.msk [vmem:[#allocation2 + $0x188] sm:$0xff] %vm4444, %v4351
        %4495 = vst.msk [vmem:[#allocation2 + $0x190] sm:$0xff] %vm4444, %v4353
        %4496 = vst.msk [vmem:[#allocation2 + $0x198] sm:$0xff] %vm4444, %v4355
        %4497 = vst.msk [vmem:[#allocation2 + $0x1a0] sm:$0xff] %vm4444, %v4357
        %4498 = vst.msk [vmem:[#allocation2 + $0x1a8] sm:$0xff] %vm4444, %v4359
        %4499 = vst.msk [vmem:[#allocation2 + $0x1b0] sm:$0xff] %vm4444, %v4361
        %4500 = vst.msk [vmem:[#allocation2 + $0x1b8] sm:$0xff] %vm4444, %v4363
        %4501 = vst.msk [vmem:[#allocation2 + $0x1c0] sm:$0xff] %vm4444, %v4365
        %4502 = vst.msk [vmem:[#allocation2 + $0x1c8] sm:$0xff] %vm4444, %v4367
        %4503 = vst.msk [vmem:[#allocation2 + $0x1d0] sm:$0xff] %vm4444, %v4369
        %4504 = vst.msk [vmem:[#allocation2 + $0x1d8] sm:$0xff] %vm4444, %v4371
        %4505 = vst.msk [vmem:[#allocation2 + $0x1e0] sm:$0xff] %vm4444, %v4373
        %4506 = vst.msk [vmem:[#allocation2 + $0x1e8] sm:$0xff] %vm4444, %v4375
        %4507 = vst.msk [vmem:[#allocation2 + $0x1f0] sm:$0xff] %vm4444, %v4377
        %4508 = vst.msk [vmem:[#allocation2 + $0x1f8] sm:$0xff] %vm4444, %v4379
        %s4509 = scalar_lea.vmem %s141, 176
        %v4510 = vld [vmem:[%s4509] sm:$0xff]
        %v4511 = vld [vmem:[%s4509 + $0x10] sm:$0xff]
        %v4512 = vld [vmem:[%s4509 + $0x20] sm:$0xff]
        %v4513 = vld [vmem:[%s4509 + $0x30] sm:$0xff]
        %v4514 = vld [vmem:[%s4509 + $0x40] sm:$0xff]
        %v4515 = vld [vmem:[%s4509 + $0x50] sm:$0xff]
        %v4516 = vld [vmem:[%s4509 + $0x60] sm:$0xff]
        %v4517 = vld [vmem:[%s4509 + $0x70] sm:$0xff]
        %v4518 = vld [vmem:[%s4509 + $0xa0] sm:$0xff]
        %v4519 = vld [vmem:[%s4509 + $0xb0] sm:$0xff]
        %v4520 = vld [vmem:[%s4509 + $0xc0] sm:$0xff]
        %v4521 = vld [vmem:[%s4509 + $0xd0] sm:$0xff]
        %v4522 = vld [vmem:[%s4509 + $0xe0] sm:$0xff]
        %v4523 = vld [vmem:[%s4509 + $0xf0] sm:$0xff]
        %v4524 = vld [vmem:[%s4509 + $0x100] sm:$0xff]
        %v4525 = vld [vmem:[%s4509 + $0x110] sm:$0xff]
        %v4526 = vld [vmem:[%s4509 + $0x140] sm:$0xff]
        %v4527 = vld [vmem:[%s4509 + $0x150] sm:$0xff]
        %v4528 = vld [vmem:[%s4509 + $0x160] sm:$0xff]
        %v4529 = vld [vmem:[%s4509 + $0x170] sm:$0xff]
        %v4530 = vld [vmem:[%s4509 + $0x180] sm:$0xff]
        %v4531 = vld [vmem:[%s4509 + $0x190] sm:$0xff]
        %v4532 = vld [vmem:[%s4509 + $0x1a0] sm:$0xff]
        %v4533 = vld [vmem:[%s4509 + $0x1b0] sm:$0xff]
        %v4534 = vld [vmem:[%s4509 + $0x1e0] sm:$0xff]
        %v4535 = vld [vmem:[%s4509 + $0x1f0] sm:$0xff]
        %v4536 = vld [vmem:[%s4509 + $0x200] sm:$0xff]
        %v4537 = vld [vmem:[%s4509 + $0x210] sm:$0xff]
        %v4538 = vld [vmem:[%s4509 + $0x220] sm:$0xff]
        %v4539 = vld [vmem:[%s4509 + $0x230] sm:$0xff]
        %v4540 = vld [vmem:[%s4509 + $0x240] sm:$0xff]
        %v4541 = vld [vmem:[%s4509 + $0x250] sm:$0xff]
        %v4542 = vld [vmem:[%s4509 + $0x280] sm:$0xff]
        %v4543 = vld [vmem:[%s4509 + $0x290] sm:$0xff]
        %v4544 = vld [vmem:[%s4509 + $0x2a0] sm:$0xff]
        %v4545 = vld [vmem:[%s4509 + $0x2b0] sm:$0xff]
        %v4546 = vld [vmem:[%s4509 + $0x2c0] sm:$0xff]
        %v4547 = vld [vmem:[%s4509 + $0x2d0] sm:$0xff]
        %v4548 = vld [vmem:[%s4509 + $0x2e0] sm:$0xff]
        %v4549 = vld [vmem:[%s4509 + $0x2f0] sm:$0xff]
        %v4550 = vld [vmem:[%s4509 + $0x320] sm:$0xff]
        %v4551 = vld [vmem:[%s4509 + $0x330] sm:$0xff]
        %v4552 = vld [vmem:[%s4509 + $0x340] sm:$0xff]
        %v4553 = vld [vmem:[%s4509 + $0x350] sm:$0xff]
        %v4554 = vld [vmem:[%s4509 + $0x360] sm:$0xff]
        %v4555 = vld [vmem:[%s4509 + $0x370] sm:$0xff]
        %v4556 = vld [vmem:[%s4509 + $0x380] sm:$0xff]
        %v4557 = vld [vmem:[%s4509 + $0x390] sm:$0xff]
        %v4558 = vld [vmem:[%s4509 + $0x3c0] sm:$0xff]
        %v4559 = vld [vmem:[%s4509 + $0x3d0] sm:$0xff]
        %v4560 = vld [vmem:[%s4509 + $0x3e0] sm:$0xff]
        %v4561 = vld [vmem:[%s4509 + $0x3f0] sm:$0xff]
        %v4562 = vld [vmem:[%s4509 + $0x400] sm:$0xff]
        %v4563 = vld [vmem:[%s4509 + $0x410] sm:$0xff]
        %v4564 = vld [vmem:[%s4509 + $0x420] sm:$0xff]
        %v4565 = vld [vmem:[%s4509 + $0x430] sm:$0xff]
        %v4566 = vld [vmem:[%s4509 + $0x460] sm:$0xff]
        %v4567 = vld [vmem:[%s4509 + $0x470] sm:$0xff]
        %v4568 = vld [vmem:[%s4509 + $0x480] sm:$0xff]
        %v4569 = vld [vmem:[%s4509 + $0x490] sm:$0xff]
        %v4570 = vld [vmem:[%s4509 + $0x4a0] sm:$0xff]
        %v4571 = vld [vmem:[%s4509 + $0x4b0] sm:$0xff]
        %v4572 = vld [vmem:[%s4509 + $0x4c0] sm:$0xff]
        %v4573 = vld [vmem:[%s4509 + $0x4d0] sm:$0xff]
        %4638 = vrot.lane.b32.xlu0 %v4510, 48
        %v4639 = vpop.permute.xlu0 %4638
        %4640 = vrot.lane.b32.xlu0 %v4511, 48
        %v4641 = vpop.permute.xlu0 %4640
        %4642 = vrot.lane.b32.xlu0 %v4512, 48
        %v4643 = vpop.permute.xlu0 %4642
        %4644 = vrot.lane.b32.xlu0 %v4513, 48
        %v4645 = vpop.permute.xlu0 %4644
        %4646 = vrot.lane.b32.xlu0 %v4514, 48
        %v4647 = vpop.permute.xlu0 %4646
        %4648 = vrot.lane.b32.xlu0 %v4515, 48
        %v4649 = vpop.permute.xlu0 %4648
        %4650 = vrot.lane.b32.xlu0 %v4516, 48
        %v4651 = vpop.permute.xlu0 %4650
        %4652 = vrot.lane.b32.xlu0 %v4517, 48
        %v4653 = vpop.permute.xlu0 %4652
        %4654 = vrot.lane.b32.xlu0 %v4518, 48
        %v4655 = vpop.permute.xlu0 %4654
        %4656 = vrot.lane.b32.xlu0 %v4519, 48
        %v4657 = vpop.permute.xlu0 %4656
        %4658 = vrot.lane.b32.xlu0 %v4520, 48
        %v4659 = vpop.permute.xlu0 %4658
        %4660 = vrot.lane.b32.xlu0 %v4521, 48
        %v4661 = vpop.permute.xlu0 %4660
        %4662 = vrot.lane.b32.xlu0 %v4522, 48
        %v4663 = vpop.permute.xlu0 %4662
        %4664 = vrot.lane.b32.xlu0 %v4523, 48
        %v4665 = vpop.permute.xlu0 %4664
        %4666 = vrot.lane.b32.xlu0 %v4524, 48
        %v4667 = vpop.permute.xlu0 %4666
        %4668 = vrot.lane.b32.xlu0 %v4525, 48
        %v4669 = vpop.permute.xlu0 %4668
        %4670 = vrot.lane.b32.xlu0 %v4526, 48
        %v4671 = vpop.permute.xlu0 %4670
        %4672 = vrot.lane.b32.xlu0 %v4527, 48
        %v4673 = vpop.permute.xlu0 %4672
        %4674 = vrot.lane.b32.xlu0 %v4528, 48
        %v4675 = vpop.permute.xlu0 %4674
        %4676 = vrot.lane.b32.xlu0 %v4529, 48
        %v4677 = vpop.permute.xlu0 %4676
        %4678 = vrot.lane.b32.xlu0 %v4530, 48
        %v4679 = vpop.permute.xlu0 %4678
        %4680 = vrot.lane.b32.xlu0 %v4531, 48
        %v4681 = vpop.permute.xlu0 %4680
        %4682 = vrot.lane.b32.xlu0 %v4532, 48
        %v4683 = vpop.permute.xlu0 %4682
        %4684 = vrot.lane.b32.xlu0 %v4533, 48
        %v4685 = vpop.permute.xlu0 %4684
        %4686 = vrot.lane.b32.xlu0 %v4534, 48
        %v4687 = vpop.permute.xlu0 %4686
        %4688 = vrot.lane.b32.xlu0 %v4535, 48
        %v4689 = vpop.permute.xlu0 %4688
        %4690 = vrot.lane.b32.xlu0 %v4536, 48
        %v4691 = vpop.permute.xlu0 %4690
        %4692 = vrot.lane.b32.xlu0 %v4537, 48
        %v4693 = vpop.permute.xlu0 %4692
        %4694 = vrot.lane.b32.xlu0 %v4538, 48
        %v4695 = vpop.permute.xlu0 %4694
        %4696 = vrot.lane.b32.xlu0 %v4539, 48
        %v4697 = vpop.permute.xlu0 %4696
        %4698 = vrot.lane.b32.xlu0 %v4540, 48
        %v4699 = vpop.permute.xlu0 %4698
        %4700 = vrot.lane.b32.xlu0 %v4541, 48
        %v4701 = vpop.permute.xlu0 %4700
        %4702 = vrot.lane.b32.xlu0 %v4542, 48
        %v4703 = vpop.permute.xlu0 %4702
        %4704 = vrot.lane.b32.xlu0 %v4543, 48
        %v4705 = vpop.permute.xlu0 %4704
        %4706 = vrot.lane.b32.xlu0 %v4544, 48
        %v4707 = vpop.permute.xlu0 %4706
        %4708 = vrot.lane.b32.xlu0 %v4545, 48
        %v4709 = vpop.permute.xlu0 %4708
        %4710 = vrot.lane.b32.xlu0 %v4546, 48
        %v4711 = vpop.permute.xlu0 %4710
        %4712 = vrot.lane.b32.xlu0 %v4547, 48
        %v4713 = vpop.permute.xlu0 %4712
        %4714 = vrot.lane.b32.xlu0 %v4548, 48
        %v4715 = vpop.permute.xlu0 %4714
        %4716 = vrot.lane.b32.xlu0 %v4549, 48
        %v4717 = vpop.permute.xlu0 %4716
        %4718 = vrot.lane.b32.xlu0 %v4550, 48
        %v4719 = vpop.permute.xlu0 %4718
        %4720 = vrot.lane.b32.xlu0 %v4551, 48
        %v4721 = vpop.permute.xlu0 %4720
        %4722 = vrot.lane.b32.xlu0 %v4552, 48
        %v4723 = vpop.permute.xlu0 %4722
        %4724 = vrot.lane.b32.xlu0 %v4553, 48
        %v4725 = vpop.permute.xlu0 %4724
        %4726 = vrot.lane.b32.xlu0 %v4554, 48
        %v4727 = vpop.permute.xlu0 %4726
        %4728 = vrot.lane.b32.xlu0 %v4555, 48
        %v4729 = vpop.permute.xlu0 %4728
        %4730 = vrot.lane.b32.xlu0 %v4556, 48
        %v4731 = vpop.permute.xlu0 %4730
        %4732 = vrot.lane.b32.xlu0 %v4557, 48
        %v4733 = vpop.permute.xlu0 %4732
        %4734 = vrot.lane.b32.xlu0 %v4558, 48
        %v4735 = vpop.permute.xlu0 %4734
        %4736 = vrot.lane.b32.xlu0 %v4559, 48
        %v4737 = vpop.permute.xlu0 %4736
        %4738 = vrot.lane.b32.xlu0 %v4560, 48
        %v4739 = vpop.permute.xlu0 %4738
        %4740 = vrot.lane.b32.xlu0 %v4561, 48
        %v4741 = vpop.permute.xlu0 %4740
        %4742 = vrot.lane.b32.xlu0 %v4562, 48
        %v4743 = vpop.permute.xlu0 %4742
        %4744 = vrot.lane.b32.xlu0 %v4563, 48
        %v4745 = vpop.permute.xlu0 %4744
        %4746 = vrot.lane.b32.xlu0 %v4564, 48
        %v4747 = vpop.permute.xlu0 %4746
        %4748 = vrot.lane.b32.xlu0 %v4565, 48
        %v4749 = vpop.permute.xlu0 %4748
        %4750 = vrot.lane.b32.xlu0 %v4566, 48
        %v4751 = vpop.permute.xlu0 %4750
        %4752 = vrot.lane.b32.xlu0 %v4567, 48
        %v4753 = vpop.permute.xlu0 %4752
        %4754 = vrot.lane.b32.xlu0 %v4568, 48
        %v4755 = vpop.permute.xlu0 %4754
        %4756 = vrot.lane.b32.xlu0 %v4569, 48
        %v4757 = vpop.permute.xlu0 %4756
        %4758 = vrot.lane.b32.xlu0 %v4570, 48
        %v4759 = vpop.permute.xlu0 %4758
        %4760 = vrot.lane.b32.xlu0 %v4571, 48
        %v4761 = vpop.permute.xlu0 %4760
        %4762 = vrot.lane.b32.xlu0 %v4572, 48
        %v4763 = vpop.permute.xlu0 %4762
        %4764 = vrot.lane.b32.xlu0 %v4573, 48
        %v4765 = vpop.permute.xlu0 %4764
        %vm4830 = vcmask 425344
        %4831 = vst.msk [vmem:[#allocation2] sm:$0xff] %vm4830, %v4639
        %4832 = vst.msk [vmem:[#allocation2 + $0x8] sm:$0xff] %vm4830, %v4641
        %4833 = vst.msk [vmem:[#allocation2 + $0x10] sm:$0xff] %vm4830, %v4643
        %4834 = vst.msk [vmem:[#allocation2 + $0x18] sm:$0xff] %vm4830, %v4645
        %4835 = vst.msk [vmem:[#allocation2 + $0x20] sm:$0xff] %vm4830, %v4647
        %4836 = vst.msk [vmem:[#allocation2 + $0x28] sm:$0xff] %vm4830, %v4649
        %4837 = vst.msk [vmem:[#allocation2 + $0x30] sm:$0xff] %vm4830, %v4651
        %4838 = vst.msk [vmem:[#allocation2 + $0x38] sm:$0xff] %vm4830, %v4653
        %4839 = vst.msk [vmem:[#allocation2 + $0x40] sm:$0xff] %vm4830, %v4655
        %4840 = vst.msk [vmem:[#allocation2 + $0x48] sm:$0xff] %vm4830, %v4657
        %4841 = vst.msk [vmem:[#allocation2 + $0x50] sm:$0xff] %vm4830, %v4659
        %4842 = vst.msk [vmem:[#allocation2 + $0x58] sm:$0xff] %vm4830, %v4661
        %4843 = vst.msk [vmem:[#allocation2 + $0x60] sm:$0xff] %vm4830, %v4663
        %4844 = vst.msk [vmem:[#allocation2 + $0x68] sm:$0xff] %vm4830, %v4665
        %4845 = vst.msk [vmem:[#allocation2 + $0x70] sm:$0xff] %vm4830, %v4667
        %4846 = vst.msk [vmem:[#allocation2 + $0x78] sm:$0xff] %vm4830, %v4669
        %4847 = vst.msk [vmem:[#allocation2 + $0x80] sm:$0xff] %vm4830, %v4671
        %4848 = vst.msk [vmem:[#allocation2 + $0x88] sm:$0xff] %vm4830, %v4673
        %4849 = vst.msk [vmem:[#allocation2 + $0x90] sm:$0xff] %vm4830, %v4675
        %4850 = vst.msk [vmem:[#allocation2 + $0x98] sm:$0xff] %vm4830, %v4677
        %4851 = vst.msk [vmem:[#allocation2 + $0xa0] sm:$0xff] %vm4830, %v4679
        %4852 = vst.msk [vmem:[#allocation2 + $0xa8] sm:$0xff] %vm4830, %v4681
        %4853 = vst.msk [vmem:[#allocation2 + $0xb0] sm:$0xff] %vm4830, %v4683
        %4854 = vst.msk [vmem:[#allocation2 + $0xb8] sm:$0xff] %vm4830, %v4685
        %4855 = vst.msk [vmem:[#allocation2 + $0xc0] sm:$0xff] %vm4830, %v4687
        %4856 = vst.msk [vmem:[#allocation2 + $0xc8] sm:$0xff] %vm4830, %v4689
        %4857 = vst.msk [vmem:[#allocation2 + $0xd0] sm:$0xff] %vm4830, %v4691
        %4858 = vst.msk [vmem:[#allocation2 + $0xd8] sm:$0xff] %vm4830, %v4693
        %4859 = vst.msk [vmem:[#allocation2 + $0xe0] sm:$0xff] %vm4830, %v4695
        %4860 = vst.msk [vmem:[#allocation2 + $0xe8] sm:$0xff] %vm4830, %v4697
        %4861 = vst.msk [vmem:[#allocation2 + $0xf0] sm:$0xff] %vm4830, %v4699
        %4862 = vst.msk [vmem:[#allocation2 + $0xf8] sm:$0xff] %vm4830, %v4701
        %4863 = vst.msk [vmem:[#allocation2 + $0x100] sm:$0xff] %vm4830, %v4703
        %4864 = vst.msk [vmem:[#allocation2 + $0x108] sm:$0xff] %vm4830, %v4705
        %4865 = vst.msk [vmem:[#allocation2 + $0x110] sm:$0xff] %vm4830, %v4707
        %4866 = vst.msk [vmem:[#allocation2 + $0x118] sm:$0xff] %vm4830, %v4709
        %4867 = vst.msk [vmem:[#allocation2 + $0x120] sm:$0xff] %vm4830, %v4711
        %4868 = vst.msk [vmem:[#allocation2 + $0x128] sm:$0xff] %vm4830, %v4713
        %4869 = vst.msk [vmem:[#allocation2 + $0x130] sm:$0xff] %vm4830, %v4715
        %4870 = vst.msk [vmem:[#allocation2 + $0x138] sm:$0xff] %vm4830, %v4717
        %4871 = vst.msk [vmem:[#allocation2 + $0x140] sm:$0xff] %vm4830, %v4719
        %4872 = vst.msk [vmem:[#allocation2 + $0x148] sm:$0xff] %vm4830, %v4721
        %4873 = vst.msk [vmem:[#allocation2 + $0x150] sm:$0xff] %vm4830, %v4723
        %4874 = vst.msk [vmem:[#allocation2 + $0x158] sm:$0xff] %vm4830, %v4725
        %4875 = vst.msk [vmem:[#allocation2 + $0x160] sm:$0xff] %vm4830, %v4727
        %4876 = vst.msk [vmem:[#allocation2 + $0x168] sm:$0xff] %vm4830, %v4729
        %4877 = vst.msk [vmem:[#allocation2 + $0x170] sm:$0xff] %vm4830, %v4731
        %4878 = vst.msk [vmem:[#allocation2 + $0x178] sm:$0xff] %vm4830, %v4733
        %4879 = vst.msk [vmem:[#allocation2 + $0x180] sm:$0xff] %vm4830, %v4735
        %4880 = vst.msk [vmem:[#allocation2 + $0x188] sm:$0xff] %vm4830, %v4737
        %4881 = vst.msk [vmem:[#allocation2 + $0x190] sm:$0xff] %vm4830, %v4739
        %4882 = vst.msk [vmem:[#allocation2 + $0x198] sm:$0xff] %vm4830, %v4741
        %4883 = vst.msk [vmem:[#allocation2 + $0x1a0] sm:$0xff] %vm4830, %v4743
        %4884 = vst.msk [vmem:[#allocation2 + $0x1a8] sm:$0xff] %vm4830, %v4745
        %4885 = vst.msk [vmem:[#allocation2 + $0x1b0] sm:$0xff] %vm4830, %v4747
        %4886 = vst.msk [vmem:[#allocation2 + $0x1b8] sm:$0xff] %vm4830, %v4749
        %4887 = vst.msk [vmem:[#allocation2 + $0x1c0] sm:$0xff] %vm4830, %v4751
        %4888 = vst.msk [vmem:[#allocation2 + $0x1c8] sm:$0xff] %vm4830, %v4753
        %4889 = vst.msk [vmem:[#allocation2 + $0x1d0] sm:$0xff] %vm4830, %v4755
        %4890 = vst.msk [vmem:[#allocation2 + $0x1d8] sm:$0xff] %vm4830, %v4757
        %4891 = vst.msk [vmem:[#allocation2 + $0x1e0] sm:$0xff] %vm4830, %v4759
        %4892 = vst.msk [vmem:[#allocation2 + $0x1e8] sm:$0xff] %vm4830, %v4761
        %4893 = vst.msk [vmem:[#allocation2 + $0x1f0] sm:$0xff] %vm4830, %v4763
        %4894 = vst.msk [vmem:[#allocation2 + $0x1f8] sm:$0xff] %vm4830, %v4765
        %v4895 = vld [vmem:[%s4509 + $0x1] sm:$0xff]
        %v4896 = vld [vmem:[%s4509 + $0x11] sm:$0xff]
        %v4897 = vld [vmem:[%s4509 + $0x21] sm:$0xff]
        %v4898 = vld [vmem:[%s4509 + $0x31] sm:$0xff]
        %v4899 = vld [vmem:[%s4509 + $0x41] sm:$0xff]
        %v4900 = vld [vmem:[%s4509 + $0x51] sm:$0xff]
        %v4901 = vld [vmem:[%s4509 + $0x61] sm:$0xff]
        %v4902 = vld [vmem:[%s4509 + $0x71] sm:$0xff]
        %v4903 = vld [vmem:[%s4509 + $0xa1] sm:$0xff]
        %v4904 = vld [vmem:[%s4509 + $0xb1] sm:$0xff]
        %v4905 = vld [vmem:[%s4509 + $0xc1] sm:$0xff]
        %v4906 = vld [vmem:[%s4509 + $0xd1] sm:$0xff]
        %v4907 = vld [vmem:[%s4509 + $0xe1] sm:$0xff]
        %v4908 = vld [vmem:[%s4509 + $0xf1] sm:$0xff]
        %v4909 = vld [vmem:[%s4509 + $0x101] sm:$0xff]
        %v4910 = vld [vmem:[%s4509 + $0x111] sm:$0xff]
        %v4911 = vld [vmem:[%s4509 + $0x141] sm:$0xff]
        %v4912 = vld [vmem:[%s4509 + $0x151] sm:$0xff]
        %v4913 = vld [vmem:[%s4509 + $0x161] sm:$0xff]
        %v4914 = vld [vmem:[%s4509 + $0x171] sm:$0xff]
        %v4915 = vld [vmem:[%s4509 + $0x181] sm:$0xff]
        %v4916 = vld [vmem:[%s4509 + $0x191] sm:$0xff]
        %v4917 = vld [vmem:[%s4509 + $0x1a1] sm:$0xff]
        %v4918 = vld [vmem:[%s4509 + $0x1b1] sm:$0xff]
        %v4919 = vld [vmem:[%s4509 + $0x1e1] sm:$0xff]
        %v4920 = vld [vmem:[%s4509 + $0x1f1] sm:$0xff]
        %v4921 = vld [vmem:[%s4509 + $0x201] sm:$0xff]
        %v4922 = vld [vmem:[%s4509 + $0x211] sm:$0xff]
        %v4923 = vld [vmem:[%s4509 + $0x221] sm:$0xff]
        %v4924 = vld [vmem:[%s4509 + $0x231] sm:$0xff]
        %v4925 = vld [vmem:[%s4509 + $0x241] sm:$0xff]
        %v4926 = vld [vmem:[%s4509 + $0x251] sm:$0xff]
        %v4927 = vld [vmem:[%s4509 + $0x281] sm:$0xff]
        %v4928 = vld [vmem:[%s4509 + $0x291] sm:$0xff]
        %v4929 = vld [vmem:[%s4509 + $0x2a1] sm:$0xff]
        %v4930 = vld [vmem:[%s4509 + $0x2b1] sm:$0xff]
        %v4931 = vld [vmem:[%s4509 + $0x2c1] sm:$0xff]
        %v4932 = vld [vmem:[%s4509 + $0x2d1] sm:$0xff]
        %v4933 = vld [vmem:[%s4509 + $0x2e1] sm:$0xff]
        %v4934 = vld [vmem:[%s4509 + $0x2f1] sm:$0xff]
        %v4935 = vld [vmem:[%s4509 + $0x321] sm:$0xff]
        %v4936 = vld [vmem:[%s4509 + $0x331] sm:$0xff]
        %v4937 = vld [vmem:[%s4509 + $0x341] sm:$0xff]
        %v4938 = vld [vmem:[%s4509 + $0x351] sm:$0xff]
        %v4939 = vld [vmem:[%s4509 + $0x361] sm:$0xff]
        %v4940 = vld [vmem:[%s4509 + $0x371] sm:$0xff]
        %v4941 = vld [vmem:[%s4509 + $0x381] sm:$0xff]
        %v4942 = vld [vmem:[%s4509 + $0x391] sm:$0xff]
        %v4943 = vld [vmem:[%s4509 + $0x3c1] sm:$0xff]
        %v4944 = vld [vmem:[%s4509 + $0x3d1] sm:$0xff]
        %v4945 = vld [vmem:[%s4509 + $0x3e1] sm:$0xff]
        %v4946 = vld [vmem:[%s4509 + $0x3f1] sm:$0xff]
        %v4947 = vld [vmem:[%s4509 + $0x401] sm:$0xff]
        %v4948 = vld [vmem:[%s4509 + $0x411] sm:$0xff]
        %v4949 = vld [vmem:[%s4509 + $0x421] sm:$0xff]
        %v4950 = vld [vmem:[%s4509 + $0x431] sm:$0xff]
        %v4951 = vld [vmem:[%s4509 + $0x461] sm:$0xff]
        %v4952 = vld [vmem:[%s4509 + $0x471] sm:$0xff]
        %v4953 = vld [vmem:[%s4509 + $0x481] sm:$0xff]
        %v4954 = vld [vmem:[%s4509 + $0x491] sm:$0xff]
        %v4955 = vld [vmem:[%s4509 + $0x4a1] sm:$0xff]
        %v4956 = vld [vmem:[%s4509 + $0x4b1] sm:$0xff]
        %v4957 = vld [vmem:[%s4509 + $0x4c1] sm:$0xff]
        %v4958 = vld [vmem:[%s4509 + $0x4d1] sm:$0xff]
        %5023 = vrot.lane.b32.xlu0 %v4895, 52
        %v5024 = vpop.permute.xlu0 %5023
        %5025 = vrot.lane.b32.xlu0 %v4896, 52
        %v5026 = vpop.permute.xlu0 %5025
        %5027 = vrot.lane.b32.xlu0 %v4897, 52
        %v5028 = vpop.permute.xlu0 %5027
        %5029 = vrot.lane.b32.xlu0 %v4898, 52
        %v5030 = vpop.permute.xlu0 %5029
        %5031 = vrot.lane.b32.xlu0 %v4899, 52
        %v5032 = vpop.permute.xlu0 %5031
        %5033 = vrot.lane.b32.xlu0 %v4900, 52
        %v5034 = vpop.permute.xlu0 %5033
        %5035 = vrot.lane.b32.xlu0 %v4901, 52
        %v5036 = vpop.permute.xlu0 %5035
        %5037 = vrot.lane.b32.xlu0 %v4902, 52
        %v5038 = vpop.permute.xlu0 %5037
        %5039 = vrot.lane.b32.xlu0 %v4903, 52
        %v5040 = vpop.permute.xlu0 %5039
        %5041 = vrot.lane.b32.xlu0 %v4904, 52
        %v5042 = vpop.permute.xlu0 %5041
        %5043 = vrot.lane.b32.xlu0 %v4905, 52
        %v5044 = vpop.permute.xlu0 %5043
        %5045 = vrot.lane.b32.xlu0 %v4906, 52
        %v5046 = vpop.permute.xlu0 %5045
        %5047 = vrot.lane.b32.xlu0 %v4907, 52
        %v5048 = vpop.permute.xlu0 %5047
        %5049 = vrot.lane.b32.xlu0 %v4908, 52
        %v5050 = vpop.permute.xlu0 %5049
        %5051 = vrot.lane.b32.xlu0 %v4909, 52
        %v5052 = vpop.permute.xlu0 %5051
        %5053 = vrot.lane.b32.xlu0 %v4910, 52
        %v5054 = vpop.permute.xlu0 %5053
        %5055 = vrot.lane.b32.xlu0 %v4911, 52
        %v5056 = vpop.permute.xlu0 %5055
        %5057 = vrot.lane.b32.xlu0 %v4912, 52
        %v5058 = vpop.permute.xlu0 %5057
        %5059 = vrot.lane.b32.xlu0 %v4913, 52
        %v5060 = vpop.permute.xlu0 %5059
        %5061 = vrot.lane.b32.xlu0 %v4914, 52
        %v5062 = vpop.permute.xlu0 %5061
        %5063 = vrot.lane.b32.xlu0 %v4915, 52
        %v5064 = vpop.permute.xlu0 %5063
        %5065 = vrot.lane.b32.xlu0 %v4916, 52
        %v5066 = vpop.permute.xlu0 %5065
        %5067 = vrot.lane.b32.xlu0 %v4917, 52
        %v5068 = vpop.permute.xlu0 %5067
        %5069 = vrot.lane.b32.xlu0 %v4918, 52
        %v5070 = vpop.permute.xlu0 %5069
        %5071 = vrot.lane.b32.xlu0 %v4919, 52
        %v5072 = vpop.permute.xlu0 %5071
        %5073 = vrot.lane.b32.xlu0 %v4920, 52
        %v5074 = vpop.permute.xlu0 %5073
        %5075 = vrot.lane.b32.xlu0 %v4921, 52
        %v5076 = vpop.permute.xlu0 %5075
        %5077 = vrot.lane.b32.xlu0 %v4922, 52
        %v5078 = vpop.permute.xlu0 %5077
        %5079 = vrot.lane.b32.xlu0 %v4923, 52
        %v5080 = vpop.permute.xlu0 %5079
        %5081 = vrot.lane.b32.xlu0 %v4924, 52
        %v5082 = vpop.permute.xlu0 %5081
        %5083 = vrot.lane.b32.xlu0 %v4925, 52
        %v5084 = vpop.permute.xlu0 %5083
        %5085 = vrot.lane.b32.xlu0 %v4926, 52
        %v5086 = vpop.permute.xlu0 %5085
        %5087 = vrot.lane.b32.xlu0 %v4927, 52
        %v5088 = vpop.permute.xlu0 %5087
        %5089 = vrot.lane.b32.xlu0 %v4928, 52
        %v5090 = vpop.permute.xlu0 %5089
        %5091 = vrot.lane.b32.xlu0 %v4929, 52
        %v5092 = vpop.permute.xlu0 %5091
        %5093 = vrot.lane.b32.xlu0 %v4930, 52
        %v5094 = vpop.permute.xlu0 %5093
        %5095 = vrot.lane.b32.xlu0 %v4931, 52
        %v5096 = vpop.permute.xlu0 %5095
        %5097 = vrot.lane.b32.xlu0 %v4932, 52
        %v5098 = vpop.permute.xlu0 %5097
        %5099 = vrot.lane.b32.xlu0 %v4933, 52
        %v5100 = vpop.permute.xlu0 %5099
        %5101 = vrot.lane.b32.xlu0 %v4934, 52
        %v5102 = vpop.permute.xlu0 %5101
        %5103 = vrot.lane.b32.xlu0 %v4935, 52
        %v5104 = vpop.permute.xlu0 %5103
        %5105 = vrot.lane.b32.xlu0 %v4936, 52
        %v5106 = vpop.permute.xlu0 %5105
        %5107 = vrot.lane.b32.xlu0 %v4937, 52
        %v5108 = vpop.permute.xlu0 %5107
        %5109 = vrot.lane.b32.xlu0 %v4938, 52
        %v5110 = vpop.permute.xlu0 %5109
        %5111 = vrot.lane.b32.xlu0 %v4939, 52
        %v5112 = vpop.permute.xlu0 %5111
        %5113 = vrot.lane.b32.xlu0 %v4940, 52
        %v5114 = vpop.permute.xlu0 %5113
        %5115 = vrot.lane.b32.xlu0 %v4941, 52
        %v5116 = vpop.permute.xlu0 %5115
        %5117 = vrot.lane.b32.xlu0 %v4942, 52
        %v5118 = vpop.permute.xlu0 %5117
        %5119 = vrot.lane.b32.xlu0 %v4943, 52
        %v5120 = vpop.permute.xlu0 %5119
        %5121 = vrot.lane.b32.xlu0 %v4944, 52
        %v5122 = vpop.permute.xlu0 %5121
        %5123 = vrot.lane.b32.xlu0 %v4945, 52
        %v5124 = vpop.permute.xlu0 %5123
        %5125 = vrot.lane.b32.xlu0 %v4946, 52
        %v5126 = vpop.permute.xlu0 %5125
        %5127 = vrot.lane.b32.xlu0 %v4947, 52
        %v5128 = vpop.permute.xlu0 %5127
        %5129 = vrot.lane.b32.xlu0 %v4948, 52
        %v5130 = vpop.permute.xlu0 %5129
        %5131 = vrot.lane.b32.xlu0 %v4949, 52
        %v5132 = vpop.permute.xlu0 %5131
        %5133 = vrot.lane.b32.xlu0 %v4950, 52
        %v5134 = vpop.permute.xlu0 %5133
        %5135 = vrot.lane.b32.xlu0 %v4951, 52
        %v5136 = vpop.permute.xlu0 %5135
        %5137 = vrot.lane.b32.xlu0 %v4952, 52
        %v5138 = vpop.permute.xlu0 %5137
        %5139 = vrot.lane.b32.xlu0 %v4953, 52
        %v5140 = vpop.permute.xlu0 %5139
        %5141 = vrot.lane.b32.xlu0 %v4954, 52
        %v5142 = vpop.permute.xlu0 %5141
        %5143 = vrot.lane.b32.xlu0 %v4955, 52
        %v5144 = vpop.permute.xlu0 %5143
        %5145 = vrot.lane.b32.xlu0 %v4956, 52
        %v5146 = vpop.permute.xlu0 %5145
        %5147 = vrot.lane.b32.xlu0 %v4957, 52
        %v5148 = vpop.permute.xlu0 %5147
        %5149 = vrot.lane.b32.xlu0 %v4958, 52
        %v5150 = vpop.permute.xlu0 %5149
        %vm5215 = vcmask 458144
        %5216 = vst.msk [vmem:[#allocation2] sm:$0xff] %vm5215, %v5024
        %5217 = vst.msk [vmem:[#allocation2 + $0x8] sm:$0xff] %vm5215, %v5026
        %5218 = vst.msk [vmem:[#allocation2 + $0x10] sm:$0xff] %vm5215, %v5028
        %5219 = vst.msk [vmem:[#allocation2 + $0x18] sm:$0xff] %vm5215, %v5030
        %5220 = vst.msk [vmem:[#allocation2 + $0x20] sm:$0xff] %vm5215, %v5032
        %5221 = vst.msk [vmem:[#allocation2 + $0x28] sm:$0xff] %vm5215, %v5034
        %5222 = vst.msk [vmem:[#allocation2 + $0x30] sm:$0xff] %vm5215, %v5036
        %5223 = vst.msk [vmem:[#allocation2 + $0x38] sm:$0xff] %vm5215, %v5038
        %5224 = vst.msk [vmem:[#allocation2 + $0x40] sm:$0xff] %vm5215, %v5040
        %5225 = vst.msk [vmem:[#allocation2 + $0x48] sm:$0xff] %vm5215, %v5042
        %5226 = vst.msk [vmem:[#allocation2 + $0x50] sm:$0xff] %vm5215, %v5044
        %5227 = vst.msk [vmem:[#allocation2 + $0x58] sm:$0xff] %vm5215, %v5046
        %5228 = vst.msk [vmem:[#allocation2 + $0x60] sm:$0xff] %vm5215, %v5048
        %5229 = vst.msk [vmem:[#allocation2 + $0x68] sm:$0xff] %vm5215, %v5050
        %5230 = vst.msk [vmem:[#allocation2 + $0x70] sm:$0xff] %vm5215, %v5052
        %5231 = vst.msk [vmem:[#allocation2 + $0x78] sm:$0xff] %vm5215, %v5054
        %5232 = vst.msk [vmem:[#allocation2 + $0x80] sm:$0xff] %vm5215, %v5056
        %5233 = vst.msk [vmem:[#allocation2 + $0x88] sm:$0xff] %vm5215, %v5058
        %5234 = vst.msk [vmem:[#allocation2 + $0x90] sm:$0xff] %vm5215, %v5060
        %5235 = vst.msk [vmem:[#allocation2 + $0x98] sm:$0xff] %vm5215, %v5062
        %5236 = vst.msk [vmem:[#allocation2 + $0xa0] sm:$0xff] %vm5215, %v5064
        %5237 = vst.msk [vmem:[#allocation2 + $0xa8] sm:$0xff] %vm5215, %v5066
        %5238 = vst.msk [vmem:[#allocation2 + $0xb0] sm:$0xff] %vm5215, %v5068
        %5239 = vst.msk [vmem:[#allocation2 + $0xb8] sm:$0xff] %vm5215, %v5070
        %5240 = vst.msk [vmem:[#allocation2 + $0xc0] sm:$0xff] %vm5215, %v5072
        %5241 = vst.msk [vmem:[#allocation2 + $0xc8] sm:$0xff] %vm5215, %v5074
        %5242 = vst.msk [vmem:[#allocation2 + $0xd0] sm:$0xff] %vm5215, %v5076
        %5243 = vst.msk [vmem:[#allocation2 + $0xd8] sm:$0xff] %vm5215, %v5078
        %5244 = vst.msk [vmem:[#allocation2 + $0xe0] sm:$0xff] %vm5215, %v5080
        %5245 = vst.msk [vmem:[#allocation2 + $0xe8] sm:$0xff] %vm5215, %v5082
        %5246 = vst.msk [vmem:[#allocation2 + $0xf0] sm:$0xff] %vm5215, %v5084
        %5247 = vst.msk [vmem:[#allocation2 + $0xf8] sm:$0xff] %vm5215, %v5086
        %5248 = vst.msk [vmem:[#allocation2 + $0x100] sm:$0xff] %vm5215, %v5088
        %5249 = vst.msk [vmem:[#allocation2 + $0x108] sm:$0xff] %vm5215, %v5090
        %5250 = vst.msk [vmem:[#allocation2 + $0x110] sm:$0xff] %vm5215, %v5092
        %5251 = vst.msk [vmem:[#allocation2 + $0x118] sm:$0xff] %vm5215, %v5094
        %5252 = vst.msk [vmem:[#allocation2 + $0x120] sm:$0xff] %vm5215, %v5096
        %5253 = vst.msk [vmem:[#allocation2 + $0x128] sm:$0xff] %vm5215, %v5098
        %5254 = vst.msk [vmem:[#allocation2 + $0x130] sm:$0xff] %vm5215, %v5100
        %5255 = vst.msk [vmem:[#allocation2 + $0x138] sm:$0xff] %vm5215, %v5102
        %5256 = vst.msk [vmem:[#allocation2 + $0x140] sm:$0xff] %vm5215, %v5104
        %5257 = vst.msk [vmem:[#allocation2 + $0x148] sm:$0xff] %vm5215, %v5106
        %5258 = vst.msk [vmem:[#allocation2 + $0x150] sm:$0xff] %vm5215, %v5108
        %5259 = vst.msk [vmem:[#allocation2 + $0x158] sm:$0xff] %vm5215, %v5110
        %5260 = vst.msk [vmem:[#allocation2 + $0x160] sm:$0xff] %vm5215, %v5112
        %5261 = vst.msk [vmem:[#allocation2 + $0x168] sm:$0xff] %vm5215, %v5114
        %5262 = vst.msk [vmem:[#allocation2 + $0x170] sm:$0xff] %vm5215, %v5116
        %5263 = vst.msk [vmem:[#allocation2 + $0x178] sm:$0xff] %vm5215, %v5118
        %5264 = vst.msk [vmem:[#allocation2 + $0x180] sm:$0xff] %vm5215, %v5120
        %5265 = vst.msk [vmem:[#allocation2 + $0x188] sm:$0xff] %vm5215, %v5122
        %5266 = vst.msk [vmem:[#allocation2 + $0x190] sm:$0xff] %vm5215, %v5124
        %5267 = vst.msk [vmem:[#allocation2 + $0x198] sm:$0xff] %vm5215, %v5126
        %5268 = vst.msk [vmem:[#allocation2 + $0x1a0] sm:$0xff] %vm5215, %v5128
        %5269 = vst.msk [vmem:[#allocation2 + $0x1a8] sm:$0xff] %vm5215, %v5130
        %5270 = vst.msk [vmem:[#allocation2 + $0x1b0] sm:$0xff] %vm5215, %v5132
        %5271 = vst.msk [vmem:[#allocation2 + $0x1b8] sm:$0xff] %vm5215, %v5134
        %5272 = vst.msk [vmem:[#allocation2 + $0x1c0] sm:$0xff] %vm5215, %v5136
        %5273 = vst.msk [vmem:[#allocation2 + $0x1c8] sm:$0xff] %vm5215, %v5138
        %5274 = vst.msk [vmem:[#allocation2 + $0x1d0] sm:$0xff] %vm5215, %v5140
        %5275 = vst.msk [vmem:[#allocation2 + $0x1d8] sm:$0xff] %vm5215, %v5142
        %5276 = vst.msk [vmem:[#allocation2 + $0x1e0] sm:$0xff] %vm5215, %v5144
        %5277 = vst.msk [vmem:[#allocation2 + $0x1e8] sm:$0xff] %vm5215, %v5146
        %5278 = vst.msk [vmem:[#allocation2 + $0x1f0] sm:$0xff] %vm5215, %v5148
        %5279 = vst.msk [vmem:[#allocation2 + $0x1f8] sm:$0xff] %vm5215, %v5150
        %v5280 = vld [vmem:[%s4509 + $0x2] sm:$0xff]
        %v5281 = vld [vmem:[%s4509 + $0x12] sm:$0xff]
        %v5282 = vld [vmem:[%s4509 + $0x22] sm:$0xff]
        %v5283 = vld [vmem:[%s4509 + $0x32] sm:$0xff]
        %v5284 = vld [vmem:[%s4509 + $0x42] sm:$0xff]
        %v5285 = vld [vmem:[%s4509 + $0x52] sm:$0xff]
        %v5286 = vld [vmem:[%s4509 + $0x62] sm:$0xff]
        %v5287 = vld [vmem:[%s4509 + $0x72] sm:$0xff]
        %v5288 = vld [vmem:[%s4509 + $0xa2] sm:$0xff]
        %v5289 = vld [vmem:[%s4509 + $0xb2] sm:$0xff]
        %v5290 = vld [vmem:[%s4509 + $0xc2] sm:$0xff]
        %v5291 = vld [vmem:[%s4509 + $0xd2] sm:$0xff]
        %v5292 = vld [vmem:[%s4509 + $0xe2] sm:$0xff]
        %v5293 = vld [vmem:[%s4509 + $0xf2] sm:$0xff]
        %v5294 = vld [vmem:[%s4509 + $0x102] sm:$0xff]
        %v5295 = vld [vmem:[%s4509 + $0x112] sm:$0xff]
        %v5296 = vld [vmem:[%s4509 + $0x142] sm:$0xff]
        %v5297 = vld [vmem:[%s4509 + $0x152] sm:$0xff]
        %v5298 = vld [vmem:[%s4509 + $0x162] sm:$0xff]
        %v5299 = vld [vmem:[%s4509 + $0x172] sm:$0xff]
        %v5300 = vld [vmem:[%s4509 + $0x182] sm:$0xff]
        %v5301 = vld [vmem:[%s4509 + $0x192] sm:$0xff]
        %v5302 = vld [vmem:[%s4509 + $0x1a2] sm:$0xff]
        %v5303 = vld [vmem:[%s4509 + $0x1b2] sm:$0xff]
        %v5304 = vld [vmem:[%s4509 + $0x1e2] sm:$0xff]
        %v5305 = vld [vmem:[%s4509 + $0x1f2] sm:$0xff]
        %v5306 = vld [vmem:[%s4509 + $0x202] sm:$0xff]
        %v5307 = vld [vmem:[%s4509 + $0x212] sm:$0xff]
        %v5308 = vld [vmem:[%s4509 + $0x222] sm:$0xff]
        %v5309 = vld [vmem:[%s4509 + $0x232] sm:$0xff]
        %v5310 = vld [vmem:[%s4509 + $0x242] sm:$0xff]
        %v5311 = vld [vmem:[%s4509 + $0x252] sm:$0xff]
        %v5312 = vld [vmem:[%s4509 + $0x282] sm:$0xff]
        %v5313 = vld [vmem:[%s4509 + $0x292] sm:$0xff]
        %v5314 = vld [vmem:[%s4509 + $0x2a2] sm:$0xff]
        %v5315 = vld [vmem:[%s4509 + $0x2b2] sm:$0xff]
        %v5316 = vld [vmem:[%s4509 + $0x2c2] sm:$0xff]
        %v5317 = vld [vmem:[%s4509 + $0x2d2] sm:$0xff]
        %v5318 = vld [vmem:[%s4509 + $0x2e2] sm:$0xff]
        %v5319 = vld [vmem:[%s4509 + $0x2f2] sm:$0xff]
        %v5320 = vld [vmem:[%s4509 + $0x322] sm:$0xff]
        %v5321 = vld [vmem:[%s4509 + $0x332] sm:$0xff]
        %v5322 = vld [vmem:[%s4509 + $0x342] sm:$0xff]
        %v5323 = vld [vmem:[%s4509 + $0x352] sm:$0xff]
        %v5324 = vld [vmem:[%s4509 + $0x362] sm:$0xff]
        %v5325 = vld [vmem:[%s4509 + $0x372] sm:$0xff]
        %v5326 = vld [vmem:[%s4509 + $0x382] sm:$0xff]
        %v5327 = vld [vmem:[%s4509 + $0x392] sm:$0xff]
        %v5328 = vld [vmem:[%s4509 + $0x3c2] sm:$0xff]
        %v5329 = vld [vmem:[%s4509 + $0x3d2] sm:$0xff]
        %v5330 = vld [vmem:[%s4509 + $0x3e2] sm:$0xff]
        %v5331 = vld [vmem:[%s4509 + $0x3f2] sm:$0xff]
        %v5332 = vld [vmem:[%s4509 + $0x402] sm:$0xff]
        %v5333 = vld [vmem:[%s4509 + $0x412] sm:$0xff]
        %v5334 = vld [vmem:[%s4509 + $0x422] sm:$0xff]
        %v5335 = vld [vmem:[%s4509 + $0x432] sm:$0xff]
        %v5336 = vld [vmem:[%s4509 + $0x462] sm:$0xff]
        %v5337 = vld [vmem:[%s4509 + $0x472] sm:$0xff]
        %v5338 = vld [vmem:[%s4509 + $0x482] sm:$0xff]
        %v5339 = vld [vmem:[%s4509 + $0x492] sm:$0xff]
        %v5340 = vld [vmem:[%s4509 + $0x4a2] sm:$0xff]
        %v5341 = vld [vmem:[%s4509 + $0x4b2] sm:$0xff]
        %v5342 = vld [vmem:[%s4509 + $0x4c2] sm:$0xff]
        %v5343 = vld [vmem:[%s4509 + $0x4d2] sm:$0xff]
        %5408 = vrot.lane.b32.xlu0 %v5280, 56
        %v5409 = vpop.permute.xlu0 %5408
        %5410 = vrot.lane.b32.xlu0 %v5281, 56
        %v5411 = vpop.permute.xlu0 %5410
        %5412 = vrot.lane.b32.xlu0 %v5282, 56
        %v5413 = vpop.permute.xlu0 %5412
        %5414 = vrot.lane.b32.xlu0 %v5283, 56
        %v5415 = vpop.permute.xlu0 %5414
        %5416 = vrot.lane.b32.xlu0 %v5284, 56
        %v5417 = vpop.permute.xlu0 %5416
        %5418 = vrot.lane.b32.xlu0 %v5285, 56
        %v5419 = vpop.permute.xlu0 %5418
        %5420 = vrot.lane.b32.xlu0 %v5286, 56
        %v5421 = vpop.permute.xlu0 %5420
        %5422 = vrot.lane.b32.xlu0 %v5287, 56
        %v5423 = vpop.permute.xlu0 %5422
        %5424 = vrot.lane.b32.xlu0 %v5288, 56
        %v5425 = vpop.permute.xlu0 %5424
        %5426 = vrot.lane.b32.xlu0 %v5289, 56
        %v5427 = vpop.permute.xlu0 %5426
        %5428 = vrot.lane.b32.xlu0 %v5290, 56
        %v5429 = vpop.permute.xlu0 %5428
        %5430 = vrot.lane.b32.xlu0 %v5291, 56
        %v5431 = vpop.permute.xlu0 %5430
        %5432 = vrot.lane.b32.xlu0 %v5292, 56
        %v5433 = vpop.permute.xlu0 %5432
        %5434 = vrot.lane.b32.xlu0 %v5293, 56
        %v5435 = vpop.permute.xlu0 %5434
        %5436 = vrot.lane.b32.xlu0 %v5294, 56
        %v5437 = vpop.permute.xlu0 %5436
        %5438 = vrot.lane.b32.xlu0 %v5295, 56
        %v5439 = vpop.permute.xlu0 %5438
        %5440 = vrot.lane.b32.xlu0 %v5296, 56
        %v5441 = vpop.permute.xlu0 %5440
        %5442 = vrot.lane.b32.xlu0 %v5297, 56
        %v5443 = vpop.permute.xlu0 %5442
        %5444 = vrot.lane.b32.xlu0 %v5298, 56
        %v5445 = vpop.permute.xlu0 %5444
        %5446 = vrot.lane.b32.xlu0 %v5299, 56
        %v5447 = vpop.permute.xlu0 %5446
        %5448 = vrot.lane.b32.xlu0 %v5300, 56
        %v5449 = vpop.permute.xlu0 %5448
        %5450 = vrot.lane.b32.xlu0 %v5301, 56
        %v5451 = vpop.permute.xlu0 %5450
        %5452 = vrot.lane.b32.xlu0 %v5302, 56
        %v5453 = vpop.permute.xlu0 %5452
        %5454 = vrot.lane.b32.xlu0 %v5303, 56
        %v5455 = vpop.permute.xlu0 %5454
        %5456 = vrot.lane.b32.xlu0 %v5304, 56
        %v5457 = vpop.permute.xlu0 %5456
        %5458 = vrot.lane.b32.xlu0 %v5305, 56
        %v5459 = vpop.permute.xlu0 %5458
        %5460 = vrot.lane.b32.xlu0 %v5306, 56
        %v5461 = vpop.permute.xlu0 %5460
        %5462 = vrot.lane.b32.xlu0 %v5307, 56
        %v5463 = vpop.permute.xlu0 %5462
        %5464 = vrot.lane.b32.xlu0 %v5308, 56
        %v5465 = vpop.permute.xlu0 %5464
        %5466 = vrot.lane.b32.xlu0 %v5309, 56
        %v5467 = vpop.permute.xlu0 %5466
        %5468 = vrot.lane.b32.xlu0 %v5310, 56
        %v5469 = vpop.permute.xlu0 %5468
        %5470 = vrot.lane.b32.xlu0 %v5311, 56
        %v5471 = vpop.permute.xlu0 %5470
        %5472 = vrot.lane.b32.xlu0 %v5312, 56
        %v5473 = vpop.permute.xlu0 %5472
        %5474 = vrot.lane.b32.xlu0 %v5313, 56
        %v5475 = vpop.permute.xlu0 %5474
        %5476 = vrot.lane.b32.xlu0 %v5314, 56
        %v5477 = vpop.permute.xlu0 %5476
        %5478 = vrot.lane.b32.xlu0 %v5315, 56
        %v5479 = vpop.permute.xlu0 %5478
        %5480 = vrot.lane.b32.xlu0 %v5316, 56
        %v5481 = vpop.permute.xlu0 %5480
        %5482 = vrot.lane.b32.xlu0 %v5317, 56
        %v5483 = vpop.permute.xlu0 %5482
        %5484 = vrot.lane.b32.xlu0 %v5318, 56
        %v5485 = vpop.permute.xlu0 %5484
        %5486 = vrot.lane.b32.xlu0 %v5319, 56
        %v5487 = vpop.permute.xlu0 %5486
        %5488 = vrot.lane.b32.xlu0 %v5320, 56
        %v5489 = vpop.permute.xlu0 %5488
        %5490 = vrot.lane.b32.xlu0 %v5321, 56
        %v5491 = vpop.permute.xlu0 %5490
        %5492 = vrot.lane.b32.xlu0 %v5322, 56
        %v5493 = vpop.permute.xlu0 %5492
        %5494 = vrot.lane.b32.xlu0 %v5323, 56
        %v5495 = vpop.permute.xlu0 %5494
        %5496 = vrot.lane.b32.xlu0 %v5324, 56
        %v5497 = vpop.permute.xlu0 %5496
        %5498 = vrot.lane.b32.xlu0 %v5325, 56
        %v5499 = vpop.permute.xlu0 %5498
        %5500 = vrot.lane.b32.xlu0 %v5326, 56
        %v5501 = vpop.permute.xlu0 %5500
        %5502 = vrot.lane.b32.xlu0 %v5327, 56
        %v5503 = vpop.permute.xlu0 %5502
        %5504 = vrot.lane.b32.xlu0 %v5328, 56
        %v5505 = vpop.permute.xlu0 %5504
        %5506 = vrot.lane.b32.xlu0 %v5329, 56
        %v5507 = vpop.permute.xlu0 %5506
        %5508 = vrot.lane.b32.xlu0 %v5330, 56
        %v5509 = vpop.permute.xlu0 %5508
        %5510 = vrot.lane.b32.xlu0 %v5331, 56
        %v5511 = vpop.permute.xlu0 %5510
        %5512 = vrot.lane.b32.xlu0 %v5332, 56
        %v5513 = vpop.permute.xlu0 %5512
        %5514 = vrot.lane.b32.xlu0 %v5333, 56
        %v5515 = vpop.permute.xlu0 %5514
        %5516 = vrot.lane.b32.xlu0 %v5334, 56
        %v5517 = vpop.permute.xlu0 %5516
        %5518 = vrot.lane.b32.xlu0 %v5335, 56
        %v5519 = vpop.permute.xlu0 %5518
        %5520 = vrot.lane.b32.xlu0 %v5336, 56
        %v5521 = vpop.permute.xlu0 %5520
        %5522 = vrot.lane.b32.xlu0 %v5337, 56
        %v5523 = vpop.permute.xlu0 %5522
        %5524 = vrot.lane.b32.xlu0 %v5338, 56
        %v5525 = vpop.permute.xlu0 %5524
        %5526 = vrot.lane.b32.xlu0 %v5339, 56
        %v5527 = vpop.permute.xlu0 %5526
        %5528 = vrot.lane.b32.xlu0 %v5340, 56
        %v5529 = vpop.permute.xlu0 %5528
        %5530 = vrot.lane.b32.xlu0 %v5341, 56
        %v5531 = vpop.permute.xlu0 %5530
        %5532 = vrot.lane.b32.xlu0 %v5342, 56
        %v5533 = vpop.permute.xlu0 %5532
        %5534 = vrot.lane.b32.xlu0 %v5343, 56
        %v5535 = vpop.permute.xlu0 %5534
        %vm5600 = vcmask 490944
        %5601 = vst.msk [vmem:[#allocation2] sm:$0xff] %vm5600, %v5409
        %5602 = vst.msk [vmem:[#allocation2 + $0x8] sm:$0xff] %vm5600, %v5411
        %5603 = vst.msk [vmem:[#allocation2 + $0x10] sm:$0xff] %vm5600, %v5413
        %5604 = vst.msk [vmem:[#allocation2 + $0x18] sm:$0xff] %vm5600, %v5415
        %5605 = vst.msk [vmem:[#allocation2 + $0x20] sm:$0xff] %vm5600, %v5417
        %5606 = vst.msk [vmem:[#allocation2 + $0x28] sm:$0xff] %vm5600, %v5419
        %5607 = vst.msk [vmem:[#allocation2 + $0x30] sm:$0xff] %vm5600, %v5421
        %5608 = vst.msk [vmem:[#allocation2 + $0x38] sm:$0xff] %vm5600, %v5423
        %5609 = vst.msk [vmem:[#allocation2 + $0x40] sm:$0xff] %vm5600, %v5425
        %5610 = vst.msk [vmem:[#allocation2 + $0x48] sm:$0xff] %vm5600, %v5427
        %5611 = vst.msk [vmem:[#allocation2 + $0x50] sm:$0xff] %vm5600, %v5429
        %5612 = vst.msk [vmem:[#allocation2 + $0x58] sm:$0xff] %vm5600, %v5431
        %5613 = vst.msk [vmem:[#allocation2 + $0x60] sm:$0xff] %vm5600, %v5433
        %5614 = vst.msk [vmem:[#allocation2 + $0x68] sm:$0xff] %vm5600, %v5435
        %5615 = vst.msk [vmem:[#allocation2 + $0x70] sm:$0xff] %vm5600, %v5437
        %5616 = vst.msk [vmem:[#allocation2 + $0x78] sm:$0xff] %vm5600, %v5439
        %5617 = vst.msk [vmem:[#allocation2 + $0x80] sm:$0xff] %vm5600, %v5441
        %5618 = vst.msk [vmem:[#allocation2 + $0x88] sm:$0xff] %vm5600, %v5443
        %5619 = vst.msk [vmem:[#allocation2 + $0x90] sm:$0xff] %vm5600, %v5445
        %5620 = vst.msk [vmem:[#allocation2 + $0x98] sm:$0xff] %vm5600, %v5447
        %5621 = vst.msk [vmem:[#allocation2 + $0xa0] sm:$0xff] %vm5600, %v5449
        %5622 = vst.msk [vmem:[#allocation2 + $0xa8] sm:$0xff] %vm5600, %v5451
        %5623 = vst.msk [vmem:[#allocation2 + $0xb0] sm:$0xff] %vm5600, %v5453
        %5624 = vst.msk [vmem:[#allocation2 + $0xb8] sm:$0xff] %vm5600, %v5455
        %5625 = vst.msk [vmem:[#allocation2 + $0xc0] sm:$0xff] %vm5600, %v5457
        %5626 = vst.msk [vmem:[#allocation2 + $0xc8] sm:$0xff] %vm5600, %v5459
        %5627 = vst.msk [vmem:[#allocation2 + $0xd0] sm:$0xff] %vm5600, %v5461
        %5628 = vst.msk [vmem:[#allocation2 + $0xd8] sm:$0xff] %vm5600, %v5463
        %5629 = vst.msk [vmem:[#allocation2 + $0xe0] sm:$0xff] %vm5600, %v5465
        %5630 = vst.msk [vmem:[#allocation2 + $0xe8] sm:$0xff] %vm5600, %v5467
        %5631 = vst.msk [vmem:[#allocation2 + $0xf0] sm:$0xff] %vm5600, %v5469
        %5632 = vst.msk [vmem:[#allocation2 + $0xf8] sm:$0xff] %vm5600, %v5471
        %5633 = vst.msk [vmem:[#allocation2 + $0x100] sm:$0xff] %vm5600, %v5473
        %5634 = vst.msk [vmem:[#allocation2 + $0x108] sm:$0xff] %vm5600, %v5475
        %5635 = vst.msk [vmem:[#allocation2 + $0x110] sm:$0xff] %vm5600, %v5477
        %5636 = vst.msk [vmem:[#allocation2 + $0x118] sm:$0xff] %vm5600, %v5479
        %5637 = vst.msk [vmem:[#allocation2 + $0x120] sm:$0xff] %vm5600, %v5481
        %5638 = vst.msk [vmem:[#allocation2 + $0x128] sm:$0xff] %vm5600, %v5483
        %5639 = vst.msk [vmem:[#allocation2 + $0x130] sm:$0xff] %vm5600, %v5485
        %5640 = vst.msk [vmem:[#allocation2 + $0x138] sm:$0xff] %vm5600, %v5487
        %5641 = vst.msk [vmem:[#allocation2 + $0x140] sm:$0xff] %vm5600, %v5489
        %5642 = vst.msk [vmem:[#allocation2 + $0x148] sm:$0xff] %vm5600, %v5491
        %5643 = vst.msk [vmem:[#allocation2 + $0x150] sm:$0xff] %vm5600, %v5493
        %5644 = vst.msk [vmem:[#allocation2 + $0x158] sm:$0xff] %vm5600, %v5495
        %5645 = vst.msk [vmem:[#allocation2 + $0x160] sm:$0xff] %vm5600, %v5497
        %5646 = vst.msk [vmem:[#allocation2 + $0x168] sm:$0xff] %vm5600, %v5499
        %5647 = vst.msk [vmem:[#allocation2 + $0x170] sm:$0xff] %vm5600, %v5501
        %5648 = vst.msk [vmem:[#allocation2 + $0x178] sm:$0xff] %vm5600, %v5503
        %5649 = vst.msk [vmem:[#allocation2 + $0x180] sm:$0xff] %vm5600, %v5505
        %5650 = vst.msk [vmem:[#allocation2 + $0x188] sm:$0xff] %vm5600, %v5507
        %5651 = vst.msk [vmem:[#allocation2 + $0x190] sm:$0xff] %vm5600, %v5509
        %5652 = vst.msk [vmem:[#allocation2 + $0x198] sm:$0xff] %vm5600, %v5511
        %5653 = vst.msk [vmem:[#allocation2 + $0x1a0] sm:$0xff] %vm5600, %v5513
        %5654 = vst.msk [vmem:[#allocation2 + $0x1a8] sm:$0xff] %vm5600, %v5515
        %5655 = vst.msk [vmem:[#allocation2 + $0x1b0] sm:$0xff] %vm5600, %v5517
        %5656 = vst.msk [vmem:[#allocation2 + $0x1b8] sm:$0xff] %vm5600, %v5519
        %5657 = vst.msk [vmem:[#allocation2 + $0x1c0] sm:$0xff] %vm5600, %v5521
        %5658 = vst.msk [vmem:[#allocation2 + $0x1c8] sm:$0xff] %vm5600, %v5523
        %5659 = vst.msk [vmem:[#allocation2 + $0x1d0] sm:$0xff] %vm5600, %v5525
        %5660 = vst.msk [vmem:[#allocation2 + $0x1d8] sm:$0xff] %vm5600, %v5527
        %5661 = vst.msk [vmem:[#allocation2 + $0x1e0] sm:$0xff] %vm5600, %v5529
        %5662 = vst.msk [vmem:[#allocation2 + $0x1e8] sm:$0xff] %vm5600, %v5531
        %5663 = vst.msk [vmem:[#allocation2 + $0x1f0] sm:$0xff] %vm5600, %v5533
        %5664 = vst.msk [vmem:[#allocation2 + $0x1f8] sm:$0xff] %vm5600, %v5535
        %s5665 = scalar_lea.vmem %s141, 192
        %v5666 = vld [vmem:[%s5665] sm:$0xff]
        %v5667 = vld [vmem:[%s5665 + $0x10] sm:$0xff]
        %v5668 = vld [vmem:[%s5665 + $0x20] sm:$0xff]
        %v5669 = vld [vmem:[%s5665 + $0x30] sm:$0xff]
        %v5670 = vld [vmem:[%s5665 + $0x40] sm:$0xff]
        %v5671 = vld [vmem:[%s5665 + $0x50] sm:$0xff]
        %v5672 = vld [vmem:[%s5665 + $0x60] sm:$0xff]
        %v5673 = vld [vmem:[%s5665 + $0x70] sm:$0xff]
        %v5674 = vld [vmem:[%s5665 + $0xa0] sm:$0xff]
        %v5675 = vld [vmem:[%s5665 + $0xb0] sm:$0xff]
        %v5676 = vld [vmem:[%s5665 + $0xc0] sm:$0xff]
        %v5677 = vld [vmem:[%s5665 + $0xd0] sm:$0xff]
        %v5678 = vld [vmem:[%s5665 + $0xe0] sm:$0xff]
        %v5679 = vld [vmem:[%s5665 + $0xf0] sm:$0xff]
        %v5680 = vld [vmem:[%s5665 + $0x100] sm:$0xff]
        %v5681 = vld [vmem:[%s5665 + $0x110] sm:$0xff]
        %v5682 = vld [vmem:[%s5665 + $0x140] sm:$0xff]
        %v5683 = vld [vmem:[%s5665 + $0x150] sm:$0xff]
        %v5684 = vld [vmem:[%s5665 + $0x160] sm:$0xff]
        %v5685 = vld [vmem:[%s5665 + $0x170] sm:$0xff]
        %v5686 = vld [vmem:[%s5665 + $0x180] sm:$0xff]
        %v5687 = vld [vmem:[%s5665 + $0x190] sm:$0xff]
        %v5688 = vld [vmem:[%s5665 + $0x1a0] sm:$0xff]
        %v5689 = vld [vmem:[%s5665 + $0x1b0] sm:$0xff]
        %v5690 = vld [vmem:[%s5665 + $0x1e0] sm:$0xff]
        %v5691 = vld [vmem:[%s5665 + $0x1f0] sm:$0xff]
        %v5692 = vld [vmem:[%s5665 + $0x200] sm:$0xff]
        %v5693 = vld [vmem:[%s5665 + $0x210] sm:$0xff]
        %v5694 = vld [vmem:[%s5665 + $0x220] sm:$0xff]
        %v5695 = vld [vmem:[%s5665 + $0x230] sm:$0xff]
        %v5696 = vld [vmem:[%s5665 + $0x240] sm:$0xff]
        %v5697 = vld [vmem:[%s5665 + $0x250] sm:$0xff]
        %v5698 = vld [vmem:[%s5665 + $0x280] sm:$0xff]
        %v5699 = vld [vmem:[%s5665 + $0x290] sm:$0xff]
        %v5700 = vld [vmem:[%s5665 + $0x2a0] sm:$0xff]
        %v5701 = vld [vmem:[%s5665 + $0x2b0] sm:$0xff]
        %v5702 = vld [vmem:[%s5665 + $0x2c0] sm:$0xff]
        %v5703 = vld [vmem:[%s5665 + $0x2d0] sm:$0xff]
        %v5704 = vld [vmem:[%s5665 + $0x2e0] sm:$0xff]
        %v5705 = vld [vmem:[%s5665 + $0x2f0] sm:$0xff]
        %v5706 = vld [vmem:[%s5665 + $0x320] sm:$0xff]
        %v5707 = vld [vmem:[%s5665 + $0x330] sm:$0xff]
        %v5708 = vld [vmem:[%s5665 + $0x340] sm:$0xff]
        %v5709 = vld [vmem:[%s5665 + $0x350] sm:$0xff]
        %v5710 = vld [vmem:[%s5665 + $0x360] sm:$0xff]
        %v5711 = vld [vmem:[%s5665 + $0x370] sm:$0xff]
        %v5712 = vld [vmem:[%s5665 + $0x380] sm:$0xff]
        %v5713 = vld [vmem:[%s5665 + $0x390] sm:$0xff]
        %v5714 = vld [vmem:[%s5665 + $0x3c0] sm:$0xff]
        %v5715 = vld [vmem:[%s5665 + $0x3d0] sm:$0xff]
        %v5716 = vld [vmem:[%s5665 + $0x3e0] sm:$0xff]
        %v5717 = vld [vmem:[%s5665 + $0x3f0] sm:$0xff]
        %v5718 = vld [vmem:[%s5665 + $0x400] sm:$0xff]
        %v5719 = vld [vmem:[%s5665 + $0x410] sm:$0xff]
        %v5720 = vld [vmem:[%s5665 + $0x420] sm:$0xff]
        %v5721 = vld [vmem:[%s5665 + $0x430] sm:$0xff]
        %v5722 = vld [vmem:[%s5665 + $0x460] sm:$0xff]
        %v5723 = vld [vmem:[%s5665 + $0x470] sm:$0xff]
        %v5724 = vld [vmem:[%s5665 + $0x480] sm:$0xff]
        %v5725 = vld [vmem:[%s5665 + $0x490] sm:$0xff]
        %v5726 = vld [vmem:[%s5665 + $0x4a0] sm:$0xff]
        %v5727 = vld [vmem:[%s5665 + $0x4b0] sm:$0xff]
        %v5728 = vld [vmem:[%s5665 + $0x4c0] sm:$0xff]
        %v5729 = vld [vmem:[%s5665 + $0x4d0] sm:$0xff]
        %5794 = vrot.lane.b32.xlu0 %v5666, 60
        %v5795 = vpop.permute.xlu0 %5794
        %5796 = vrot.lane.b32.xlu0 %v5667, 60
        %v5797 = vpop.permute.xlu0 %5796
        %5798 = vrot.lane.b32.xlu0 %v5668, 60
        %v5799 = vpop.permute.xlu0 %5798
        %5800 = vrot.lane.b32.xlu0 %v5669, 60
        %v5801 = vpop.permute.xlu0 %5800
        %5802 = vrot.lane.b32.xlu0 %v5670, 60
        %v5803 = vpop.permute.xlu0 %5802
        %5804 = vrot.lane.b32.xlu0 %v5671, 60
        %v5805 = vpop.permute.xlu0 %5804
        %5806 = vrot.lane.b32.xlu0 %v5672, 60
        %v5807 = vpop.permute.xlu0 %5806
        %5808 = vrot.lane.b32.xlu0 %v5673, 60
        %v5809 = vpop.permute.xlu0 %5808
        %5810 = vrot.lane.b32.xlu0 %v5674, 60
        %v5811 = vpop.permute.xlu0 %5810
        %5812 = vrot.lane.b32.xlu0 %v5675, 60
        %v5813 = vpop.permute.xlu0 %5812
        %5814 = vrot.lane.b32.xlu0 %v5676, 60
        %v5815 = vpop.permute.xlu0 %5814
        %5816 = vrot.lane.b32.xlu0 %v5677, 60
        %v5817 = vpop.permute.xlu0 %5816
        %5818 = vrot.lane.b32.xlu0 %v5678, 60
        %v5819 = vpop.permute.xlu0 %5818
        %5820 = vrot.lane.b32.xlu0 %v5679, 60
        %v5821 = vpop.permute.xlu0 %5820
        %5822 = vrot.lane.b32.xlu0 %v5680, 60
        %v5823 = vpop.permute.xlu0 %5822
        %5824 = vrot.lane.b32.xlu0 %v5681, 60
        %v5825 = vpop.permute.xlu0 %5824
        %5826 = vrot.lane.b32.xlu0 %v5682, 60
        %v5827 = vpop.permute.xlu0 %5826
        %5828 = vrot.lane.b32.xlu0 %v5683, 60
        %v5829 = vpop.permute.xlu0 %5828
        %5830 = vrot.lane.b32.xlu0 %v5684, 60
        %v5831 = vpop.permute.xlu0 %5830
        %5832 = vrot.lane.b32.xlu0 %v5685, 60
        %v5833 = vpop.permute.xlu0 %5832
        %5834 = vrot.lane.b32.xlu0 %v5686, 60
        %v5835 = vpop.permute.xlu0 %5834
        %5836 = vrot.lane.b32.xlu0 %v5687, 60
        %v5837 = vpop.permute.xlu0 %5836
        %5838 = vrot.lane.b32.xlu0 %v5688, 60
        %v5839 = vpop.permute.xlu0 %5838
        %5840 = vrot.lane.b32.xlu0 %v5689, 60
        %v5841 = vpop.permute.xlu0 %5840
        %5842 = vrot.lane.b32.xlu0 %v5690, 60
        %v5843 = vpop.permute.xlu0 %5842
        %5844 = vrot.lane.b32.xlu0 %v5691, 60
        %v5845 = vpop.permute.xlu0 %5844
        %5846 = vrot.lane.b32.xlu0 %v5692, 60
        %v5847 = vpop.permute.xlu0 %5846
        %5848 = vrot.lane.b32.xlu0 %v5693, 60
        %v5849 = vpop.permute.xlu0 %5848
        %5850 = vrot.lane.b32.xlu0 %v5694, 60
        %v5851 = vpop.permute.xlu0 %5850
        %5852 = vrot.lane.b32.xlu0 %v5695, 60
        %v5853 = vpop.permute.xlu0 %5852
        %5854 = vrot.lane.b32.xlu0 %v5696, 60
        %v5855 = vpop.permute.xlu0 %5854
        %5856 = vrot.lane.b32.xlu0 %v5697, 60
        %v5857 = vpop.permute.xlu0 %5856
        %5858 = vrot.lane.b32.xlu0 %v5698, 60
        %v5859 = vpop.permute.xlu0 %5858
        %5860 = vrot.lane.b32.xlu0 %v5699, 60
        %v5861 = vpop.permute.xlu0 %5860
        %5862 = vrot.lane.b32.xlu0 %v5700, 60
        %v5863 = vpop.permute.xlu0 %5862
        %5864 = vrot.lane.b32.xlu0 %v5701, 60
        %v5865 = vpop.permute.xlu0 %5864
        %5866 = vrot.lane.b32.xlu0 %v5702, 60
        %v5867 = vpop.permute.xlu0 %5866
        %5868 = vrot.lane.b32.xlu0 %v5703, 60
        %v5869 = vpop.permute.xlu0 %5868
        %5870 = vrot.lane.b32.xlu0 %v5704, 60
        %v5871 = vpop.permute.xlu0 %5870
        %5872 = vrot.lane.b32.xlu0 %v5705, 60
        %v5873 = vpop.permute.xlu0 %5872
        %5874 = vrot.lane.b32.xlu0 %v5706, 60
        %v5875 = vpop.permute.xlu0 %5874
        %5876 = vrot.lane.b32.xlu0 %v5707, 60
        %v5877 = vpop.permute.xlu0 %5876
        %5878 = vrot.lane.b32.xlu0 %v5708, 60
        %v5879 = vpop.permute.xlu0 %5878
        %5880 = vrot.lane.b32.xlu0 %v5709, 60
        %v5881 = vpop.permute.xlu0 %5880
        %5882 = vrot.lane.b32.xlu0 %v5710, 60
        %v5883 = vpop.permute.xlu0 %5882
        %5884 = vrot.lane.b32.xlu0 %v5711, 60
        %v5885 = vpop.permute.xlu0 %5884
        %5886 = vrot.lane.b32.xlu0 %v5712, 60
        %v5887 = vpop.permute.xlu0 %5886
        %5888 = vrot.lane.b32.xlu0 %v5713, 60
        %v5889 = vpop.permute.xlu0 %5888
        %5890 = vrot.lane.b32.xlu0 %v5714, 60
        %v5891 = vpop.permute.xlu0 %5890
        %5892 = vrot.lane.b32.xlu0 %v5715, 60
        %v5893 = vpop.permute.xlu0 %5892
        %5894 = vrot.lane.b32.xlu0 %v5716, 60
        %v5895 = vpop.permute.xlu0 %5894
        %5896 = vrot.lane.b32.xlu0 %v5717, 60
        %v5897 = vpop.permute.xlu0 %5896
        %5898 = vrot.lane.b32.xlu0 %v5718, 60
        %v5899 = vpop.permute.xlu0 %5898
        %5900 = vrot.lane.b32.xlu0 %v5719, 60
        %v5901 = vpop.permute.xlu0 %5900
        %5902 = vrot.lane.b32.xlu0 %v5720, 60
        %v5903 = vpop.permute.xlu0 %5902
        %5904 = vrot.lane.b32.xlu0 %v5721, 60
        %v5905 = vpop.permute.xlu0 %5904
        %5906 = vrot.lane.b32.xlu0 %v5722, 60
        %v5907 = vpop.permute.xlu0 %5906
        %5908 = vrot.lane.b32.xlu0 %v5723, 60
        %v5909 = vpop.permute.xlu0 %5908
        %5910 = vrot.lane.b32.xlu0 %v5724, 60
        %v5911 = vpop.permute.xlu0 %5910
        %5912 = vrot.lane.b32.xlu0 %v5725, 60
        %v5913 = vpop.permute.xlu0 %5912
        %5914 = vrot.lane.b32.xlu0 %v5726, 60
        %v5915 = vpop.permute.xlu0 %5914
        %5916 = vrot.lane.b32.xlu0 %v5727, 60
        %v5917 = vpop.permute.xlu0 %5916
        %5918 = vrot.lane.b32.xlu0 %v5728, 60
        %v5919 = vpop.permute.xlu0 %5918
        %5920 = vrot.lane.b32.xlu0 %v5729, 60
        %v5921 = vpop.permute.xlu0 %5920
        %vm5986 = vcmask 523744
        %5987 = vst.msk [vmem:[#allocation2] sm:$0xff] %vm5986, %v5795
        %5988 = vst.msk [vmem:[#allocation2 + $0x8] sm:$0xff] %vm5986, %v5797
        %5989 = vst.msk [vmem:[#allocation2 + $0x10] sm:$0xff] %vm5986, %v5799
        %5990 = vst.msk [vmem:[#allocation2 + $0x18] sm:$0xff] %vm5986, %v5801
        %5991 = vst.msk [vmem:[#allocation2 + $0x20] sm:$0xff] %vm5986, %v5803
        %5992 = vst.msk [vmem:[#allocation2 + $0x28] sm:$0xff] %vm5986, %v5805
        %5993 = vst.msk [vmem:[#allocation2 + $0x30] sm:$0xff] %vm5986, %v5807
        %5994 = vst.msk [vmem:[#allocation2 + $0x38] sm:$0xff] %vm5986, %v5809
        %5995 = vst.msk [vmem:[#allocation2 + $0x40] sm:$0xff] %vm5986, %v5811
        %5996 = vst.msk [vmem:[#allocation2 + $0x48] sm:$0xff] %vm5986, %v5813
        %5997 = vst.msk [vmem:[#allocation2 + $0x50] sm:$0xff] %vm5986, %v5815
        %5998 = vst.msk [vmem:[#allocation2 + $0x58] sm:$0xff] %vm5986, %v5817
        %5999 = vst.msk [vmem:[#allocation2 + $0x60] sm:$0xff] %vm5986, %v5819
        %6000 = vst.msk [vmem:[#allocation2 + $0x68] sm:$0xff] %vm5986, %v5821
        %6001 = vst.msk [vmem:[#allocation2 + $0x70] sm:$0xff] %vm5986, %v5823
        %6002 = vst.msk [vmem:[#allocation2 + $0x78] sm:$0xff] %vm5986, %v5825
        %6003 = vst.msk [vmem:[#allocation2 + $0x80] sm:$0xff] %vm5986, %v5827
        %6004 = vst.msk [vmem:[#allocation2 + $0x88] sm:$0xff] %vm5986, %v5829
        %6005 = vst.msk [vmem:[#allocation2 + $0x90] sm:$0xff] %vm5986, %v5831
        %6006 = vst.msk [vmem:[#allocation2 + $0x98] sm:$0xff] %vm5986, %v5833
        %6007 = vst.msk [vmem:[#allocation2 + $0xa0] sm:$0xff] %vm5986, %v5835
        %6008 = vst.msk [vmem:[#allocation2 + $0xa8] sm:$0xff] %vm5986, %v5837
        %6009 = vst.msk [vmem:[#allocation2 + $0xb0] sm:$0xff] %vm5986, %v5839
        %6010 = vst.msk [vmem:[#allocation2 + $0xb8] sm:$0xff] %vm5986, %v5841
        %6011 = vst.msk [vmem:[#allocation2 + $0xc0] sm:$0xff] %vm5986, %v5843
        %6012 = vst.msk [vmem:[#allocation2 + $0xc8] sm:$0xff] %vm5986, %v5845
        %6013 = vst.msk [vmem:[#allocation2 + $0xd0] sm:$0xff] %vm5986, %v5847
        %6014 = vst.msk [vmem:[#allocation2 + $0xd8] sm:$0xff] %vm5986, %v5849
        %6015 = vst.msk [vmem:[#allocation2 + $0xe0] sm:$0xff] %vm5986, %v5851
        %6016 = vst.msk [vmem:[#allocation2 + $0xe8] sm:$0xff] %vm5986, %v5853
        %6017 = vst.msk [vmem:[#allocation2 + $0xf0] sm:$0xff] %vm5986, %v5855
        %6018 = vst.msk [vmem:[#allocation2 + $0xf8] sm:$0xff] %vm5986, %v5857
        %6019 = vst.msk [vmem:[#allocation2 + $0x100] sm:$0xff] %vm5986, %v5859
        %6020 = vst.msk [vmem:[#allocation2 + $0x108] sm:$0xff] %vm5986, %v5861
        %6021 = vst.msk [vmem:[#allocation2 + $0x110] sm:$0xff] %vm5986, %v5863
        %6022 = vst.msk [vmem:[#allocation2 + $0x118] sm:$0xff] %vm5986, %v5865
        %6023 = vst.msk [vmem:[#allocation2 + $0x120] sm:$0xff] %vm5986, %v5867
        %6024 = vst.msk [vmem:[#allocation2 + $0x128] sm:$0xff] %vm5986, %v5869
        %6025 = vst.msk [vmem:[#allocation2 + $0x130] sm:$0xff] %vm5986, %v5871
        %6026 = vst.msk [vmem:[#allocation2 + $0x138] sm:$0xff] %vm5986, %v5873
        %6027 = vst.msk [vmem:[#allocation2 + $0x140] sm:$0xff] %vm5986, %v5875
        %6028 = vst.msk [vmem:[#allocation2 + $0x148] sm:$0xff] %vm5986, %v5877
        %6029 = vst.msk [vmem:[#allocation2 + $0x150] sm:$0xff] %vm5986, %v5879
        %6030 = vst.msk [vmem:[#allocation2 + $0x158] sm:$0xff] %vm5986, %v5881
        %6031 = vst.msk [vmem:[#allocation2 + $0x160] sm:$0xff] %vm5986, %v5883
        %6032 = vst.msk [vmem:[#allocation2 + $0x168] sm:$0xff] %vm5986, %v5885
        %6033 = vst.msk [vmem:[#allocation2 + $0x170] sm:$0xff] %vm5986, %v5887
        %6034 = vst.msk [vmem:[#allocation2 + $0x178] sm:$0xff] %vm5986, %v5889
        %6035 = vst.msk [vmem:[#allocation2 + $0x180] sm:$0xff] %vm5986, %v5891
        %6036 = vst.msk [vmem:[#allocation2 + $0x188] sm:$0xff] %vm5986, %v5893
        %6037 = vst.msk [vmem:[#allocation2 + $0x190] sm:$0xff] %vm5986, %v5895
        %6038 = vst.msk [vmem:[#allocation2 + $0x198] sm:$0xff] %vm5986, %v5897
        %6039 = vst.msk [vmem:[#allocation2 + $0x1a0] sm:$0xff] %vm5986, %v5899
        %6040 = vst.msk [vmem:[#allocation2 + $0x1a8] sm:$0xff] %vm5986, %v5901
        %6041 = vst.msk [vmem:[#allocation2 + $0x1b0] sm:$0xff] %vm5986, %v5903
        %6042 = vst.msk [vmem:[#allocation2 + $0x1b8] sm:$0xff] %vm5986, %v5905
        %6043 = vst.msk [vmem:[#allocation2 + $0x1c0] sm:$0xff] %vm5986, %v5907
        %6044 = vst.msk [vmem:[#allocation2 + $0x1c8] sm:$0xff] %vm5986, %v5909
        %6045 = vst.msk [vmem:[#allocation2 + $0x1d0] sm:$0xff] %vm5986, %v5911
        %6046 = vst.msk [vmem:[#allocation2 + $0x1d8] sm:$0xff] %vm5986, %v5913
        %6047 = vst.msk [vmem:[#allocation2 + $0x1e0] sm:$0xff] %vm5986, %v5915
        %6048 = vst.msk [vmem:[#allocation2 + $0x1e8] sm:$0xff] %vm5986, %v5917
        %6049 = vst.msk [vmem:[#allocation2 + $0x1f0] sm:$0xff] %vm5986, %v5919
        %6050 = vst.msk [vmem:[#allocation2 + $0x1f8] sm:$0xff] %vm5986, %v5921
        %v6051 = vld [vmem:[%s5665 + $0x1] sm:$0xff]
        %v6052 = vld [vmem:[%s5665 + $0x11] sm:$0xff]
        %v6053 = vld [vmem:[%s5665 + $0x21] sm:$0xff]
        %v6054 = vld [vmem:[%s5665 + $0x31] sm:$0xff]
        %v6055 = vld [vmem:[%s5665 + $0x41] sm:$0xff]
        %v6056 = vld [vmem:[%s5665 + $0x51] sm:$0xff]
        %v6057 = vld [vmem:[%s5665 + $0x61] sm:$0xff]
        %v6058 = vld [vmem:[%s5665 + $0x71] sm:$0xff]
        %v6059 = vld [vmem:[%s5665 + $0xa1] sm:$0xff]
        %v6060 = vld [vmem:[%s5665 + $0xb1] sm:$0xff]
        %v6061 = vld [vmem:[%s5665 + $0xc1] sm:$0xff]
        %v6062 = vld [vmem:[%s5665 + $0xd1] sm:$0xff]
        %v6063 = vld [vmem:[%s5665 + $0xe1] sm:$0xff]
        %v6064 = vld [vmem:[%s5665 + $0xf1] sm:$0xff]
        %v6065 = vld [vmem:[%s5665 + $0x101] sm:$0xff]
        %v6066 = vld [vmem:[%s5665 + $0x111] sm:$0xff]
        %v6067 = vld [vmem:[%s5665 + $0x141] sm:$0xff]
        %v6068 = vld [vmem:[%s5665 + $0x151] sm:$0xff]
        %v6069 = vld [vmem:[%s5665 + $0x161] sm:$0xff]
        %v6070 = vld [vmem:[%s5665 + $0x171] sm:$0xff]
        %v6071 = vld [vmem:[%s5665 + $0x181] sm:$0xff]
        %v6072 = vld [vmem:[%s5665 + $0x191] sm:$0xff]
        %v6073 = vld [vmem:[%s5665 + $0x1a1] sm:$0xff]
        %v6074 = vld [vmem:[%s5665 + $0x1b1] sm:$0xff]
        %v6075 = vld [vmem:[%s5665 + $0x1e1] sm:$0xff]
        %v6076 = vld [vmem:[%s5665 + $0x1f1] sm:$0xff]
        %v6077 = vld [vmem:[%s5665 + $0x201] sm:$0xff]
        %v6078 = vld [vmem:[%s5665 + $0x211] sm:$0xff]
        %v6079 = vld [vmem:[%s5665 + $0x221] sm:$0xff]
        %v6080 = vld [vmem:[%s5665 + $0x231] sm:$0xff]
        %v6081 = vld [vmem:[%s5665 + $0x241] sm:$0xff]
        %v6082 = vld [vmem:[%s5665 + $0x251] sm:$0xff]
        %v6083 = vld [vmem:[%s5665 + $0x281] sm:$0xff]
        %v6084 = vld [vmem:[%s5665 + $0x291] sm:$0xff]
        %v6085 = vld [vmem:[%s5665 + $0x2a1] sm:$0xff]
        %v6086 = vld [vmem:[%s5665 + $0x2b1] sm:$0xff]
        %v6087 = vld [vmem:[%s5665 + $0x2c1] sm:$0xff]
        %v6088 = vld [vmem:[%s5665 + $0x2d1] sm:$0xff]
        %v6089 = vld [vmem:[%s5665 + $0x2e1] sm:$0xff]
        %v6090 = vld [vmem:[%s5665 + $0x2f1] sm:$0xff]
        %v6091 = vld [vmem:[%s5665 + $0x321] sm:$0xff]
        %v6092 = vld [vmem:[%s5665 + $0x331] sm:$0xff]
        %v6093 = vld [vmem:[%s5665 + $0x341] sm:$0xff]
        %v6094 = vld [vmem:[%s5665 + $0x351] sm:$0xff]
        %v6095 = vld [vmem:[%s5665 + $0x361] sm:$0xff]
        %v6096 = vld [vmem:[%s5665 + $0x371] sm:$0xff]
        %v6097 = vld [vmem:[%s5665 + $0x381] sm:$0xff]
        %v6098 = vld [vmem:[%s5665 + $0x391] sm:$0xff]
        %v6099 = vld [vmem:[%s5665 + $0x3c1] sm:$0xff]
        %v6100 = vld [vmem:[%s5665 + $0x3d1] sm:$0xff]
        %v6101 = vld [vmem:[%s5665 + $0x3e1] sm:$0xff]
        %v6102 = vld [vmem:[%s5665 + $0x3f1] sm:$0xff]
        %v6103 = vld [vmem:[%s5665 + $0x401] sm:$0xff]
        %v6104 = vld [vmem:[%s5665 + $0x411] sm:$0xff]
        %v6105 = vld [vmem:[%s5665 + $0x421] sm:$0xff]
        %v6106 = vld [vmem:[%s5665 + $0x431] sm:$0xff]
        %v6107 = vld [vmem:[%s5665 + $0x461] sm:$0xff]
        %v6108 = vld [vmem:[%s5665 + $0x471] sm:$0xff]
        %v6109 = vld [vmem:[%s5665 + $0x481] sm:$0xff]
        %v6110 = vld [vmem:[%s5665 + $0x491] sm:$0xff]
        %v6111 = vld [vmem:[%s5665 + $0x4a1] sm:$0xff]
        %v6112 = vld [vmem:[%s5665 + $0x4b1] sm:$0xff]
        %v6113 = vld [vmem:[%s5665 + $0x4c1] sm:$0xff]
        %v6114 = vld [vmem:[%s5665 + $0x4d1] sm:$0xff]
        %6179 = vrot.lane.b32.xlu0 %v6051, 64
        %v6180 = vpop.permute.xlu0 %6179
        %6181 = vrot.lane.b32.xlu0 %v6052, 64
        %v6182 = vpop.permute.xlu0 %6181
        %6183 = vrot.lane.b32.xlu0 %v6053, 64
        %v6184 = vpop.permute.xlu0 %6183
        %6185 = vrot.lane.b32.xlu0 %v6054, 64
        %v6186 = vpop.permute.xlu0 %6185
        %6187 = vrot.lane.b32.xlu0 %v6055, 64
        %v6188 = vpop.permute.xlu0 %6187
        %6189 = vrot.lane.b32.xlu0 %v6056, 64
        %v6190 = vpop.permute.xlu0 %6189
        %6191 = vrot.lane.b32.xlu0 %v6057, 64
        %v6192 = vpop.permute.xlu0 %6191
        %6193 = vrot.lane.b32.xlu0 %v6058, 64
        %v6194 = vpop.permute.xlu0 %6193
        %6195 = vrot.lane.b32.xlu0 %v6059, 64
        %v6196 = vpop.permute.xlu0 %6195
        %6197 = vrot.lane.b32.xlu0 %v6060, 64
        %v6198 = vpop.permute.xlu0 %6197
        %6199 = vrot.lane.b32.xlu0 %v6061, 64
        %v6200 = vpop.permute.xlu0 %6199
        %6201 = vrot.lane.b32.xlu0 %v6062, 64
        %v6202 = vpop.permute.xlu0 %6201
        %6203 = vrot.lane.b32.xlu0 %v6063, 64
        %v6204 = vpop.permute.xlu0 %6203
        %6205 = vrot.lane.b32.xlu0 %v6064, 64
        %v6206 = vpop.permute.xlu0 %6205
        %6207 = vrot.lane.b32.xlu0 %v6065, 64
        %v6208 = vpop.permute.xlu0 %6207
        %6209 = vrot.lane.b32.xlu0 %v6066, 64
        %v6210 = vpop.permute.xlu0 %6209
        %6211 = vrot.lane.b32.xlu0 %v6067, 64
        %v6212 = vpop.permute.xlu0 %6211
        %6213 = vrot.lane.b32.xlu0 %v6068, 64
        %v6214 = vpop.permute.xlu0 %6213
        %6215 = vrot.lane.b32.xlu0 %v6069, 64
        %v6216 = vpop.permute.xlu0 %6215
        %6217 = vrot.lane.b32.xlu0 %v6070, 64
        %v6218 = vpop.permute.xlu0 %6217
        %6219 = vrot.lane.b32.xlu0 %v6071, 64
        %v6220 = vpop.permute.xlu0 %6219
        %6221 = vrot.lane.b32.xlu0 %v6072, 64
        %v6222 = vpop.permute.xlu0 %6221
        %6223 = vrot.lane.b32.xlu0 %v6073, 64
        %v6224 = vpop.permute.xlu0 %6223
        %6225 = vrot.lane.b32.xlu0 %v6074, 64
        %v6226 = vpop.permute.xlu0 %6225
        %6227 = vrot.lane.b32.xlu0 %v6075, 64
        %v6228 = vpop.permute.xlu0 %6227
        %6229 = vrot.lane.b32.xlu0 %v6076, 64
        %v6230 = vpop.permute.xlu0 %6229
        %6231 = vrot.lane.b32.xlu0 %v6077, 64
        %v6232 = vpop.permute.xlu0 %6231
        %6233 = vrot.lane.b32.xlu0 %v6078, 64
        %v6234 = vpop.permute.xlu0 %6233
        %6235 = vrot.lane.b32.xlu0 %v6079, 64
        %v6236 = vpop.permute.xlu0 %6235
        %6237 = vrot.lane.b32.xlu0 %v6080, 64
        %v6238 = vpop.permute.xlu0 %6237
        %6239 = vrot.lane.b32.xlu0 %v6081, 64
        %v6240 = vpop.permute.xlu0 %6239
        %6241 = vrot.lane.b32.xlu0 %v6082, 64
        %v6242 = vpop.permute.xlu0 %6241
        %6243 = vrot.lane.b32.xlu0 %v6083, 64
        %v6244 = vpop.permute.xlu0 %6243
        %6245 = vrot.lane.b32.xlu0 %v6084, 64
        %v6246 = vpop.permute.xlu0 %6245
        %6247 = vrot.lane.b32.xlu0 %v6085, 64
        %v6248 = vpop.permute.xlu0 %6247
        %6249 = vrot.lane.b32.xlu0 %v6086, 64
        %v6250 = vpop.permute.xlu0 %6249
        %6251 = vrot.lane.b32.xlu0 %v6087, 64
        %v6252 = vpop.permute.xlu0 %6251
        %6253 = vrot.lane.b32.xlu0 %v6088, 64
        %v6254 = vpop.permute.xlu0 %6253
        %6255 = vrot.lane.b32.xlu0 %v6089, 64
        %v6256 = vpop.permute.xlu0 %6255
        %6257 = vrot.lane.b32.xlu0 %v6090, 64
        %v6258 = vpop.permute.xlu0 %6257
        %6259 = vrot.lane.b32.xlu0 %v6091, 64
        %v6260 = vpop.permute.xlu0 %6259
        %6261 = vrot.lane.b32.xlu0 %v6092, 64
        %v6262 = vpop.permute.xlu0 %6261
        %6263 = vrot.lane.b32.xlu0 %v6093, 64
        %v6264 = vpop.permute.xlu0 %6263
        %6265 = vrot.lane.b32.xlu0 %v6094, 64
        %v6266 = vpop.permute.xlu0 %6265
        %6267 = vrot.lane.b32.xlu0 %v6095, 64
        %v6268 = vpop.permute.xlu0 %6267
        %6269 = vrot.lane.b32.xlu0 %v6096, 64
        %v6270 = vpop.permute.xlu0 %6269
        %6271 = vrot.lane.b32.xlu0 %v6097, 64
        %v6272 = vpop.permute.xlu0 %6271
        %6273 = vrot.lane.b32.xlu0 %v6098, 64
        %v6274 = vpop.permute.xlu0 %6273
        %6275 = vrot.lane.b32.xlu0 %v6099, 64
        %v6276 = vpop.permute.xlu0 %6275
        %6277 = vrot.lane.b32.xlu0 %v6100, 64
        %v6278 = vpop.permute.xlu0 %6277
        %6279 = vrot.lane.b32.xlu0 %v6101, 64
        %v6280 = vpop.permute.xlu0 %6279
        %6281 = vrot.lane.b32.xlu0 %v6102, 64
        %v6282 = vpop.permute.xlu0 %6281
        %6283 = vrot.lane.b32.xlu0 %v6103, 64
        %v6284 = vpop.permute.xlu0 %6283
        %6285 = vrot.lane.b32.xlu0 %v6104, 64
        %v6286 = vpop.permute.xlu0 %6285
        %6287 = vrot.lane.b32.xlu0 %v6105, 64
        %v6288 = vpop.permute.xlu0 %6287
        %6289 = vrot.lane.b32.xlu0 %v6106, 64
        %v6290 = vpop.permute.xlu0 %6289
        %6291 = vrot.lane.b32.xlu0 %v6107, 64
        %v6292 = vpop.permute.xlu0 %6291
        %6293 = vrot.lane.b32.xlu0 %v6108, 64
        %v6294 = vpop.permute.xlu0 %6293
        %6295 = vrot.lane.b32.xlu0 %v6109, 64
        %v6296 = vpop.permute.xlu0 %6295
        %6297 = vrot.lane.b32.xlu0 %v6110, 64
        %v6298 = vpop.permute.xlu0 %6297
        %6299 = vrot.lane.b32.xlu0 %v6111, 64
        %v6300 = vpop.permute.xlu0 %6299
        %6301 = vrot.lane.b32.xlu0 %v6112, 64
        %v6302 = vpop.permute.xlu0 %6301
        %6303 = vrot.lane.b32.xlu0 %v6113, 64
        %v6304 = vpop.permute.xlu0 %6303
        %6305 = vrot.lane.b32.xlu0 %v6114, 64
        %v6306 = vpop.permute.xlu0 %6305
        %vm6371 = vcmask 556544
        %6372 = vst.msk [vmem:[#allocation2] sm:$0xff] %vm6371, %v6180
        %6373 = vst.msk [vmem:[#allocation2 + $0x8] sm:$0xff] %vm6371, %v6182
        %6374 = vst.msk [vmem:[#allocation2 + $0x10] sm:$0xff] %vm6371, %v6184
        %6375 = vst.msk [vmem:[#allocation2 + $0x18] sm:$0xff] %vm6371, %v6186
        %6376 = vst.msk [vmem:[#allocation2 + $0x20] sm:$0xff] %vm6371, %v6188
        %6377 = vst.msk [vmem:[#allocation2 + $0x28] sm:$0xff] %vm6371, %v6190
        %6378 = vst.msk [vmem:[#allocation2 + $0x30] sm:$0xff] %vm6371, %v6192
        %6379 = vst.msk [vmem:[#allocation2 + $0x38] sm:$0xff] %vm6371, %v6194
        %6380 = vst.msk [vmem:[#allocation2 + $0x40] sm:$0xff] %vm6371, %v6196
        %6381 = vst.msk [vmem:[#allocation2 + $0x48] sm:$0xff] %vm6371, %v6198
        %6382 = vst.msk [vmem:[#allocation2 + $0x50] sm:$0xff] %vm6371, %v6200
        %6383 = vst.msk [vmem:[#allocation2 + $0x58] sm:$0xff] %vm6371, %v6202
        %6384 = vst.msk [vmem:[#allocation2 + $0x60] sm:$0xff] %vm6371, %v6204
        %6385 = vst.msk [vmem:[#allocation2 + $0x68] sm:$0xff] %vm6371, %v6206
        %6386 = vst.msk [vmem:[#allocation2 + $0x70] sm:$0xff] %vm6371, %v6208
        %6387 = vst.msk [vmem:[#allocation2 + $0x78] sm:$0xff] %vm6371, %v6210
        %6388 = vst.msk [vmem:[#allocation2 + $0x80] sm:$0xff] %vm6371, %v6212
        %6389 = vst.msk [vmem:[#allocation2 + $0x88] sm:$0xff] %vm6371, %v6214
        %6390 = vst.msk [vmem:[#allocation2 + $0x90] sm:$0xff] %vm6371, %v6216
        %6391 = vst.msk [vmem:[#allocation2 + $0x98] sm:$0xff] %vm6371, %v6218
        %6392 = vst.msk [vmem:[#allocation2 + $0xa0] sm:$0xff] %vm6371, %v6220
        %6393 = vst.msk [vmem:[#allocation2 + $0xa8] sm:$0xff] %vm6371, %v6222
        %6394 = vst.msk [vmem:[#allocation2 + $0xb0] sm:$0xff] %vm6371, %v6224
        %6395 = vst.msk [vmem:[#allocation2 + $0xb8] sm:$0xff] %vm6371, %v6226
        %6396 = vst.msk [vmem:[#allocation2 + $0xc0] sm:$0xff] %vm6371, %v6228
        %6397 = vst.msk [vmem:[#allocation2 + $0xc8] sm:$0xff] %vm6371, %v6230
        %6398 = vst.msk [vmem:[#allocation2 + $0xd0] sm:$0xff] %vm6371, %v6232
        %6399 = vst.msk [vmem:[#allocation2 + $0xd8] sm:$0xff] %vm6371, %v6234
        %6400 = vst.msk [vmem:[#allocation2 + $0xe0] sm:$0xff] %vm6371, %v6236
        %6401 = vst.msk [vmem:[#allocation2 + $0xe8] sm:$0xff] %vm6371, %v6238
        %6402 = vst.msk [vmem:[#allocation2 + $0xf0] sm:$0xff] %vm6371, %v6240
        %6403 = vst.msk [vmem:[#allocation2 + $0xf8] sm:$0xff] %vm6371, %v6242
        %6404 = vst.msk [vmem:[#allocation2 + $0x100] sm:$0xff] %vm6371, %v6244
        %6405 = vst.msk [vmem:[#allocation2 + $0x108] sm:$0xff] %vm6371, %v6246
        %6406 = vst.msk [vmem:[#allocation2 + $0x110] sm:$0xff] %vm6371, %v6248
        %6407 = vst.msk [vmem:[#allocation2 + $0x118] sm:$0xff] %vm6371, %v6250
        %6408 = vst.msk [vmem:[#allocation2 + $0x120] sm:$0xff] %vm6371, %v6252
        %6409 = vst.msk [vmem:[#allocation2 + $0x128] sm:$0xff] %vm6371, %v6254
        %6410 = vst.msk [vmem:[#allocation2 + $0x130] sm:$0xff] %vm6371, %v6256
        %6411 = vst.msk [vmem:[#allocation2 + $0x138] sm:$0xff] %vm6371, %v6258
        %6412 = vst.msk [vmem:[#allocation2 + $0x140] sm:$0xff] %vm6371, %v6260
        %6413 = vst.msk [vmem:[#allocation2 + $0x148] sm:$0xff] %vm6371, %v6262
        %6414 = vst.msk [vmem:[#allocation2 + $0x150] sm:$0xff] %vm6371, %v6264
        %6415 = vst.msk [vmem:[#allocation2 + $0x158] sm:$0xff] %vm6371, %v6266
        %6416 = vst.msk [vmem:[#allocation2 + $0x160] sm:$0xff] %vm6371, %v6268
        %6417 = vst.msk [vmem:[#allocation2 + $0x168] sm:$0xff] %vm6371, %v6270
        %6418 = vst.msk [vmem:[#allocation2 + $0x170] sm:$0xff] %vm6371, %v6272
        %6419 = vst.msk [vmem:[#allocation2 + $0x178] sm:$0xff] %vm6371, %v6274
        %6420 = vst.msk [vmem:[#allocation2 + $0x180] sm:$0xff] %vm6371, %v6276
        %6421 = vst.msk [vmem:[#allocation2 + $0x188] sm:$0xff] %vm6371, %v6278
        %6422 = vst.msk [vmem:[#allocation2 + $0x190] sm:$0xff] %vm6371, %v6280
        %6423 = vst.msk [vmem:[#allocation2 + $0x198] sm:$0xff] %vm6371, %v6282
        %6424 = vst.msk [vmem:[#allocation2 + $0x1a0] sm:$0xff] %vm6371, %v6284
        %6425 = vst.msk [vmem:[#allocation2 + $0x1a8] sm:$0xff] %vm6371, %v6286
        %6426 = vst.msk [vmem:[#allocation2 + $0x1b0] sm:$0xff] %vm6371, %v6288
        %6427 = vst.msk [vmem:[#allocation2 + $0x1b8] sm:$0xff] %vm6371, %v6290
        %6428 = vst.msk [vmem:[#allocation2 + $0x1c0] sm:$0xff] %vm6371, %v6292
        %6429 = vst.msk [vmem:[#allocation2 + $0x1c8] sm:$0xff] %vm6371, %v6294
        %6430 = vst.msk [vmem:[#allocation2 + $0x1d0] sm:$0xff] %vm6371, %v6296
        %6431 = vst.msk [vmem:[#allocation2 + $0x1d8] sm:$0xff] %vm6371, %v6298
        %6432 = vst.msk [vmem:[#allocation2 + $0x1e0] sm:$0xff] %vm6371, %v6300
        %6433 = vst.msk [vmem:[#allocation2 + $0x1e8] sm:$0xff] %vm6371, %v6302
        %6434 = vst.msk [vmem:[#allocation2 + $0x1f0] sm:$0xff] %vm6371, %v6304
        %6435 = vst.msk [vmem:[#allocation2 + $0x1f8] sm:$0xff] %vm6371, %v6306
        %v6436 = vld [vmem:[%s5665 + $0x2] sm:$0xff]
        %v6437 = vld [vmem:[%s5665 + $0x12] sm:$0xff]
        %v6438 = vld [vmem:[%s5665 + $0x22] sm:$0xff]
        %v6439 = vld [vmem:[%s5665 + $0x32] sm:$0xff]
        %v6440 = vld [vmem:[%s5665 + $0x42] sm:$0xff]
        %v6441 = vld [vmem:[%s5665 + $0x52] sm:$0xff]
        %v6442 = vld [vmem:[%s5665 + $0x62] sm:$0xff]
        %v6443 = vld [vmem:[%s5665 + $0x72] sm:$0xff]
        %v6444 = vld [vmem:[%s5665 + $0xa2] sm:$0xff]
        %v6445 = vld [vmem:[%s5665 + $0xb2] sm:$0xff]
        %v6446 = vld [vmem:[%s5665 + $0xc2] sm:$0xff]
        %v6447 = vld [vmem:[%s5665 + $0xd2] sm:$0xff]
        %v6448 = vld [vmem:[%s5665 + $0xe2] sm:$0xff]
        %v6449 = vld [vmem:[%s5665 + $0xf2] sm:$0xff]
        %v6450 = vld [vmem:[%s5665 + $0x102] sm:$0xff]
        %v6451 = vld [vmem:[%s5665 + $0x112] sm:$0xff]
        %v6452 = vld [vmem:[%s5665 + $0x142] sm:$0xff]
        %v6453 = vld [vmem:[%s5665 + $0x152] sm:$0xff]
        %v6454 = vld [vmem:[%s5665 + $0x162] sm:$0xff]
        %v6455 = vld [vmem:[%s5665 + $0x172] sm:$0xff]
        %v6456 = vld [vmem:[%s5665 + $0x182] sm:$0xff]
        %v6457 = vld [vmem:[%s5665 + $0x192] sm:$0xff]
        %v6458 = vld [vmem:[%s5665 + $0x1a2] sm:$0xff]
        %v6459 = vld [vmem:[%s5665 + $0x1b2] sm:$0xff]
        %v6460 = vld [vmem:[%s5665 + $0x1e2] sm:$0xff]
        %v6461 = vld [vmem:[%s5665 + $0x1f2] sm:$0xff]
        %v6462 = vld [vmem:[%s5665 + $0x202] sm:$0xff]
        %v6463 = vld [vmem:[%s5665 + $0x212] sm:$0xff]
        %v6464 = vld [vmem:[%s5665 + $0x222] sm:$0xff]
        %v6465 = vld [vmem:[%s5665 + $0x232] sm:$0xff]
        %v6466 = vld [vmem:[%s5665 + $0x242] sm:$0xff]
        %v6467 = vld [vmem:[%s5665 + $0x252] sm:$0xff]
        %v6468 = vld [vmem:[%s5665 + $0x282] sm:$0xff]
        %v6469 = vld [vmem:[%s5665 + $0x292] sm:$0xff]
        %v6470 = vld [vmem:[%s5665 + $0x2a2] sm:$0xff]
        %v6471 = vld [vmem:[%s5665 + $0x2b2] sm:$0xff]
        %v6472 = vld [vmem:[%s5665 + $0x2c2] sm:$0xff]
        %v6473 = vld [vmem:[%s5665 + $0x2d2] sm:$0xff]
        %v6474 = vld [vmem:[%s5665 + $0x2e2] sm:$0xff]
        %v6475 = vld [vmem:[%s5665 + $0x2f2] sm:$0xff]
        %v6476 = vld [vmem:[%s5665 + $0x322] sm:$0xff]
        %v6477 = vld [vmem:[%s5665 + $0x332] sm:$0xff]
        %v6478 = vld [vmem:[%s5665 + $0x342] sm:$0xff]
        %v6479 = vld [vmem:[%s5665 + $0x352] sm:$0xff]
        %v6480 = vld [vmem:[%s5665 + $0x362] sm:$0xff]
        %v6481 = vld [vmem:[%s5665 + $0x372] sm:$0xff]
        %v6482 = vld [vmem:[%s5665 + $0x382] sm:$0xff]
        %v6483 = vld [vmem:[%s5665 + $0x392] sm:$0xff]
        %v6484 = vld [vmem:[%s5665 + $0x3c2] sm:$0xff]
        %v6485 = vld [vmem:[%s5665 + $0x3d2] sm:$0xff]
        %v6486 = vld [vmem:[%s5665 + $0x3e2] sm:$0xff]
        %v6487 = vld [vmem:[%s5665 + $0x3f2] sm:$0xff]
        %v6488 = vld [vmem:[%s5665 + $0x402] sm:$0xff]
        %v6489 = vld [vmem:[%s5665 + $0x412] sm:$0xff]
        %v6490 = vld [vmem:[%s5665 + $0x422] sm:$0xff]
        %v6491 = vld [vmem:[%s5665 + $0x432] sm:$0xff]
        %v6492 = vld [vmem:[%s5665 + $0x462] sm:$0xff]
        %v6493 = vld [vmem:[%s5665 + $0x472] sm:$0xff]
        %v6494 = vld [vmem:[%s5665 + $0x482] sm:$0xff]
        %v6495 = vld [vmem:[%s5665 + $0x492] sm:$0xff]
        %v6496 = vld [vmem:[%s5665 + $0x4a2] sm:$0xff]
        %v6497 = vld [vmem:[%s5665 + $0x4b2] sm:$0xff]
        %v6498 = vld [vmem:[%s5665 + $0x4c2] sm:$0xff]
        %v6499 = vld [vmem:[%s5665 + $0x4d2] sm:$0xff]
        %6564 = vrot.lane.b32.xlu0 %v6436, 68
        %v6565 = vpop.permute.xlu0 %6564
        %6566 = vrot.lane.b32.xlu0 %v6437, 68
        %v6567 = vpop.permute.xlu0 %6566
        %6568 = vrot.lane.b32.xlu0 %v6438, 68
        %v6569 = vpop.permute.xlu0 %6568
        %6570 = vrot.lane.b32.xlu0 %v6439, 68
        %v6571 = vpop.permute.xlu0 %6570
        %6572 = vrot.lane.b32.xlu0 %v6440, 68
        %v6573 = vpop.permute.xlu0 %6572
        %6574 = vrot.lane.b32.xlu0 %v6441, 68
        %v6575 = vpop.permute.xlu0 %6574
        %6576 = vrot.lane.b32.xlu0 %v6442, 68
        %v6577 = vpop.permute.xlu0 %6576
        %6578 = vrot.lane.b32.xlu0 %v6443, 68
        %v6579 = vpop.permute.xlu0 %6578
        %6580 = vrot.lane.b32.xlu0 %v6444, 68
        %v6581 = vpop.permute.xlu0 %6580
        %6582 = vrot.lane.b32.xlu0 %v6445, 68
        %v6583 = vpop.permute.xlu0 %6582
        %6584 = vrot.lane.b32.xlu0 %v6446, 68
        %v6585 = vpop.permute.xlu0 %6584
        %6586 = vrot.lane.b32.xlu0 %v6447, 68
        %v6587 = vpop.permute.xlu0 %6586
        %6588 = vrot.lane.b32.xlu0 %v6448, 68
        %v6589 = vpop.permute.xlu0 %6588
        %6590 = vrot.lane.b32.xlu0 %v6449, 68
        %v6591 = vpop.permute.xlu0 %6590
        %6592 = vrot.lane.b32.xlu0 %v6450, 68
        %v6593 = vpop.permute.xlu0 %6592
        %6594 = vrot.lane.b32.xlu0 %v6451, 68
        %v6595 = vpop.permute.xlu0 %6594
        %6596 = vrot.lane.b32.xlu0 %v6452, 68
        %v6597 = vpop.permute.xlu0 %6596
        %6598 = vrot.lane.b32.xlu0 %v6453, 68
        %v6599 = vpop.permute.xlu0 %6598
        %6600 = vrot.lane.b32.xlu0 %v6454, 68
        %v6601 = vpop.permute.xlu0 %6600
        %6602 = vrot.lane.b32.xlu0 %v6455, 68
        %v6603 = vpop.permute.xlu0 %6602
        %6604 = vrot.lane.b32.xlu0 %v6456, 68
        %v6605 = vpop.permute.xlu0 %6604
        %6606 = vrot.lane.b32.xlu0 %v6457, 68
        %v6607 = vpop.permute.xlu0 %6606
        %6608 = vrot.lane.b32.xlu0 %v6458, 68
        %v6609 = vpop.permute.xlu0 %6608
        %6610 = vrot.lane.b32.xlu0 %v6459, 68
        %v6611 = vpop.permute.xlu0 %6610
        %6612 = vrot.lane.b32.xlu0 %v6460, 68
        %v6613 = vpop.permute.xlu0 %6612
        %6614 = vrot.lane.b32.xlu0 %v6461, 68
        %v6615 = vpop.permute.xlu0 %6614
        %6616 = vrot.lane.b32.xlu0 %v6462, 68
        %v6617 = vpop.permute.xlu0 %6616
        %6618 = vrot.lane.b32.xlu0 %v6463, 68
        %v6619 = vpop.permute.xlu0 %6618
        %6620 = vrot.lane.b32.xlu0 %v6464, 68
        %v6621 = vpop.permute.xlu0 %6620
        %6622 = vrot.lane.b32.xlu0 %v6465, 68
        %v6623 = vpop.permute.xlu0 %6622
        %6624 = vrot.lane.b32.xlu0 %v6466, 68
        %v6625 = vpop.permute.xlu0 %6624
        %6626 = vrot.lane.b32.xlu0 %v6467, 68
        %v6627 = vpop.permute.xlu0 %6626
        %6628 = vrot.lane.b32.xlu0 %v6468, 68
        %v6629 = vpop.permute.xlu0 %6628
        %6630 = vrot.lane.b32.xlu0 %v6469, 68
        %v6631 = vpop.permute.xlu0 %6630
        %6632 = vrot.lane.b32.xlu0 %v6470, 68
        %v6633 = vpop.permute.xlu0 %6632
        %6634 = vrot.lane.b32.xlu0 %v6471, 68
        %v6635 = vpop.permute.xlu0 %6634
        %6636 = vrot.lane.b32.xlu0 %v6472, 68
        %v6637 = vpop.permute.xlu0 %6636
        %6638 = vrot.lane.b32.xlu0 %v6473, 68
        %v6639 = vpop.permute.xlu0 %6638
        %6640 = vrot.lane.b32.xlu0 %v6474, 68
        %v6641 = vpop.permute.xlu0 %6640
        %6642 = vrot.lane.b32.xlu0 %v6475, 68
        %v6643 = vpop.permute.xlu0 %6642
        %6644 = vrot.lane.b32.xlu0 %v6476, 68
        %v6645 = vpop.permute.xlu0 %6644
        %6646 = vrot.lane.b32.xlu0 %v6477, 68
        %v6647 = vpop.permute.xlu0 %6646
        %6648 = vrot.lane.b32.xlu0 %v6478, 68
        %v6649 = vpop.permute.xlu0 %6648
        %6650 = vrot.lane.b32.xlu0 %v6479, 68
        %v6651 = vpop.permute.xlu0 %6650
        %6652 = vrot.lane.b32.xlu0 %v6480, 68
        %v6653 = vpop.permute.xlu0 %6652
        %6654 = vrot.lane.b32.xlu0 %v6481, 68
        %v6655 = vpop.permute.xlu0 %6654
        %6656 = vrot.lane.b32.xlu0 %v6482, 68
        %v6657 = vpop.permute.xlu0 %6656
        %6658 = vrot.lane.b32.xlu0 %v6483, 68
        %v6659 = vpop.permute.xlu0 %6658
        %6660 = vrot.lane.b32.xlu0 %v6484, 68
        %v6661 = vpop.permute.xlu0 %6660
        %6662 = vrot.lane.b32.xlu0 %v6485, 68
        %v6663 = vpop.permute.xlu0 %6662
        %6664 = vrot.lane.b32.xlu0 %v6486, 68
        %v6665 = vpop.permute.xlu0 %6664
        %6666 = vrot.lane.b32.xlu0 %v6487, 68
        %v6667 = vpop.permute.xlu0 %6666
        %6668 = vrot.lane.b32.xlu0 %v6488, 68
        %v6669 = vpop.permute.xlu0 %6668
        %6670 = vrot.lane.b32.xlu0 %v6489, 68
        %v6671 = vpop.permute.xlu0 %6670
        %6672 = vrot.lane.b32.xlu0 %v6490, 68
        %v6673 = vpop.permute.xlu0 %6672
        %6674 = vrot.lane.b32.xlu0 %v6491, 68
        %v6675 = vpop.permute.xlu0 %6674
        %6676 = vrot.lane.b32.xlu0 %v6492, 68
        %v6677 = vpop.permute.xlu0 %6676
        %6678 = vrot.lane.b32.xlu0 %v6493, 68
        %v6679 = vpop.permute.xlu0 %6678
        %6680 = vrot.lane.b32.xlu0 %v6494, 68
        %v6681 = vpop.permute.xlu0 %6680
        %6682 = vrot.lane.b32.xlu0 %v6495, 68
        %v6683 = vpop.permute.xlu0 %6682
        %6684 = vrot.lane.b32.xlu0 %v6496, 68
        %v6685 = vpop.permute.xlu0 %6684
        %6686 = vrot.lane.b32.xlu0 %v6497, 68
        %v6687 = vpop.permute.xlu0 %6686
        %6688 = vrot.lane.b32.xlu0 %v6498, 68
        %v6689 = vpop.permute.xlu0 %6688
        %6690 = vrot.lane.b32.xlu0 %v6499, 68
        %v6691 = vpop.permute.xlu0 %6690
        %vm6756 = vcmask 589344
        %6757 = vst.msk [vmem:[#allocation2] sm:$0xff] %vm6756, %v6565
        %6758 = vst.msk [vmem:[#allocation2 + $0x8] sm:$0xff] %vm6756, %v6567
        %6759 = vst.msk [vmem:[#allocation2 + $0x10] sm:$0xff] %vm6756, %v6569
        %6760 = vst.msk [vmem:[#allocation2 + $0x18] sm:$0xff] %vm6756, %v6571
        %6761 = vst.msk [vmem:[#allocation2 + $0x20] sm:$0xff] %vm6756, %v6573
        %6762 = vst.msk [vmem:[#allocation2 + $0x28] sm:$0xff] %vm6756, %v6575
        %6763 = vst.msk [vmem:[#allocation2 + $0x30] sm:$0xff] %vm6756, %v6577
        %6764 = vst.msk [vmem:[#allocation2 + $0x38] sm:$0xff] %vm6756, %v6579
        %6765 = vst.msk [vmem:[#allocation2 + $0x40] sm:$0xff] %vm6756, %v6581
        %6766 = vst.msk [vmem:[#allocation2 + $0x48] sm:$0xff] %vm6756, %v6583
        %6767 = vst.msk [vmem:[#allocation2 + $0x50] sm:$0xff] %vm6756, %v6585
        %6768 = vst.msk [vmem:[#allocation2 + $0x58] sm:$0xff] %vm6756, %v6587
        %6769 = vst.msk [vmem:[#allocation2 + $0x60] sm:$0xff] %vm6756, %v6589
        %6770 = vst.msk [vmem:[#allocation2 + $0x68] sm:$0xff] %vm6756, %v6591
        %6771 = vst.msk [vmem:[#allocation2 + $0x70] sm:$0xff] %vm6756, %v6593
        %6772 = vst.msk [vmem:[#allocation2 + $0x78] sm:$0xff] %vm6756, %v6595
        %6773 = vst.msk [vmem:[#allocation2 + $0x80] sm:$0xff] %vm6756, %v6597
        %6774 = vst.msk [vmem:[#allocation2 + $0x88] sm:$0xff] %vm6756, %v6599
        %6775 = vst.msk [vmem:[#allocation2 + $0x90] sm:$0xff] %vm6756, %v6601
        %6776 = vst.msk [vmem:[#allocation2 + $0x98] sm:$0xff] %vm6756, %v6603
        %6777 = vst.msk [vmem:[#allocation2 + $0xa0] sm:$0xff] %vm6756, %v6605
        %6778 = vst.msk [vmem:[#allocation2 + $0xa8] sm:$0xff] %vm6756, %v6607
        %6779 = vst.msk [vmem:[#allocation2 + $0xb0] sm:$0xff] %vm6756, %v6609
        %6780 = vst.msk [vmem:[#allocation2 + $0xb8] sm:$0xff] %vm6756, %v6611
        %6781 = vst.msk [vmem:[#allocation2 + $0xc0] sm:$0xff] %vm6756, %v6613
        %6782 = vst.msk [vmem:[#allocation2 + $0xc8] sm:$0xff] %vm6756, %v6615
        %6783 = vst.msk [vmem:[#allocation2 + $0xd0] sm:$0xff] %vm6756, %v6617
        %6784 = vst.msk [vmem:[#allocation2 + $0xd8] sm:$0xff] %vm6756, %v6619
        %6785 = vst.msk [vmem:[#allocation2 + $0xe0] sm:$0xff] %vm6756, %v6621
        %6786 = vst.msk [vmem:[#allocation2 + $0xe8] sm:$0xff] %vm6756, %v6623
        %6787 = vst.msk [vmem:[#allocation2 + $0xf0] sm:$0xff] %vm6756, %v6625
        %6788 = vst.msk [vmem:[#allocation2 + $0xf8] sm:$0xff] %vm6756, %v6627
        %6789 = vst.msk [vmem:[#allocation2 + $0x100] sm:$0xff] %vm6756, %v6629
        %6790 = vst.msk [vmem:[#allocation2 + $0x108] sm:$0xff] %vm6756, %v6631
        %6791 = vst.msk [vmem:[#allocation2 + $0x110] sm:$0xff] %vm6756, %v6633
        %6792 = vst.msk [vmem:[#allocation2 + $0x118] sm:$0xff] %vm6756, %v6635
        %6793 = vst.msk [vmem:[#allocation2 + $0x120] sm:$0xff] %vm6756, %v6637
        %6794 = vst.msk [vmem:[#allocation2 + $0x128] sm:$0xff] %vm6756, %v6639
        %6795 = vst.msk [vmem:[#allocation2 + $0x130] sm:$0xff] %vm6756, %v6641
        %6796 = vst.msk [vmem:[#allocation2 + $0x138] sm:$0xff] %vm6756, %v6643
        %6797 = vst.msk [vmem:[#allocation2 + $0x140] sm:$0xff] %vm6756, %v6645
        %6798 = vst.msk [vmem:[#allocation2 + $0x148] sm:$0xff] %vm6756, %v6647
        %6799 = vst.msk [vmem:[#allocation2 + $0x150] sm:$0xff] %vm6756, %v6649
        %6800 = vst.msk [vmem:[#allocation2 + $0x158] sm:$0xff] %vm6756, %v6651
        %6801 = vst.msk [vmem:[#allocation2 + $0x160] sm:$0xff] %vm6756, %v6653
        %6802 = vst.msk [vmem:[#allocation2 + $0x168] sm:$0xff] %vm6756, %v6655
        %6803 = vst.msk [vmem:[#allocation2 + $0x170] sm:$0xff] %vm6756, %v6657
        %6804 = vst.msk [vmem:[#allocation2 + $0x178] sm:$0xff] %vm6756, %v6659
        %6805 = vst.msk [vmem:[#allocation2 + $0x180] sm:$0xff] %vm6756, %v6661
        %6806 = vst.msk [vmem:[#allocation2 + $0x188] sm:$0xff] %vm6756, %v6663
        %6807 = vst.msk [vmem:[#allocation2 + $0x190] sm:$0xff] %vm6756, %v6665
        %6808 = vst.msk [vmem:[#allocation2 + $0x198] sm:$0xff] %vm6756, %v6667
        %6809 = vst.msk [vmem:[#allocation2 + $0x1a0] sm:$0xff] %vm6756, %v6669
        %6810 = vst.msk [vmem:[#allocation2 + $0x1a8] sm:$0xff] %vm6756, %v6671
        %6811 = vst.msk [vmem:[#allocation2 + $0x1b0] sm:$0xff] %vm6756, %v6673
        %6812 = vst.msk [vmem:[#allocation2 + $0x1b8] sm:$0xff] %vm6756, %v6675
        %6813 = vst.msk [vmem:[#allocation2 + $0x1c0] sm:$0xff] %vm6756, %v6677
        %6814 = vst.msk [vmem:[#allocation2 + $0x1c8] sm:$0xff] %vm6756, %v6679
        %6815 = vst.msk [vmem:[#allocation2 + $0x1d0] sm:$0xff] %vm6756, %v6681
        %6816 = vst.msk [vmem:[#allocation2 + $0x1d8] sm:$0xff] %vm6756, %v6683
        %6817 = vst.msk [vmem:[#allocation2 + $0x1e0] sm:$0xff] %vm6756, %v6685
        %6818 = vst.msk [vmem:[#allocation2 + $0x1e8] sm:$0xff] %vm6756, %v6687
        %6819 = vst.msk [vmem:[#allocation2 + $0x1f0] sm:$0xff] %vm6756, %v6689
        %6820 = vst.msk [vmem:[#allocation2 + $0x1f8] sm:$0xff] %vm6756, %v6691
        %s6821 = scalar_lea.vmem %s141, 320
        %v6822 = vld [vmem:[%s6821] sm:$0xff]
        %v6823 = vld [vmem:[%s6821 + $0x10] sm:$0xff]
        %v6824 = vld [vmem:[%s6821 + $0x20] sm:$0xff]
        %v6825 = vld [vmem:[%s6821 + $0x30] sm:$0xff]
        %v6826 = vld [vmem:[%s6821 + $0x40] sm:$0xff]
        %v6827 = vld [vmem:[%s6821 + $0x50] sm:$0xff]
        %v6828 = vld [vmem:[%s6821 + $0x60] sm:$0xff]
        %v6829 = vld [vmem:[%s6821 + $0x70] sm:$0xff]
        %v6830 = vld [vmem:[%s6821 + $0xa0] sm:$0xff]
        %v6831 = vld [vmem:[%s6821 + $0xb0] sm:$0xff]
        %v6832 = vld [vmem:[%s6821 + $0xc0] sm:$0xff]
        %v6833 = vld [vmem:[%s6821 + $0xd0] sm:$0xff]
        %v6834 = vld [vmem:[%s6821 + $0xe0] sm:$0xff]
        %v6835 = vld [vmem:[%s6821 + $0xf0] sm:$0xff]
        %v6836 = vld [vmem:[%s6821 + $0x100] sm:$0xff]
        %v6837 = vld [vmem:[%s6821 + $0x110] sm:$0xff]
        %v6838 = vld [vmem:[%s6821 + $0x140] sm:$0xff]
        %v6839 = vld [vmem:[%s6821 + $0x150] sm:$0xff]
        %v6840 = vld [vmem:[%s6821 + $0x160] sm:$0xff]
        %v6841 = vld [vmem:[%s6821 + $0x170] sm:$0xff]
        %v6842 = vld [vmem:[%s6821 + $0x180] sm:$0xff]
        %v6843 = vld [vmem:[%s6821 + $0x190] sm:$0xff]
        %v6844 = vld [vmem:[%s6821 + $0x1a0] sm:$0xff]
        %v6845 = vld [vmem:[%s6821 + $0x1b0] sm:$0xff]
        %v6846 = vld [vmem:[%s6821 + $0x1e0] sm:$0xff]
        %v6847 = vld [vmem:[%s6821 + $0x1f0] sm:$0xff]
        %v6848 = vld [vmem:[%s6821 + $0x200] sm:$0xff]
        %v6849 = vld [vmem:[%s6821 + $0x210] sm:$0xff]
        %v6850 = vld [vmem:[%s6821 + $0x220] sm:$0xff]
        %v6851 = vld [vmem:[%s6821 + $0x230] sm:$0xff]
        %v6852 = vld [vmem:[%s6821 + $0x240] sm:$0xff]
        %v6853 = vld [vmem:[%s6821 + $0x250] sm:$0xff]
        %v6854 = vld [vmem:[%s6821 + $0x280] sm:$0xff]
        %v6855 = vld [vmem:[%s6821 + $0x290] sm:$0xff]
        %v6856 = vld [vmem:[%s6821 + $0x2a0] sm:$0xff]
        %v6857 = vld [vmem:[%s6821 + $0x2b0] sm:$0xff]
        %v6858 = vld [vmem:[%s6821 + $0x2c0] sm:$0xff]
        %v6859 = vld [vmem:[%s6821 + $0x2d0] sm:$0xff]
        %v6860 = vld [vmem:[%s6821 + $0x2e0] sm:$0xff]
        %v6861 = vld [vmem:[%s6821 + $0x2f0] sm:$0xff]
        %v6862 = vld [vmem:[%s6821 + $0x320] sm:$0xff]
        %v6863 = vld [vmem:[%s6821 + $0x330] sm:$0xff]
        %v6864 = vld [vmem:[%s6821 + $0x340] sm:$0xff]
        %v6865 = vld [vmem:[%s6821 + $0x350] sm:$0xff]
        %v6866 = vld [vmem:[%s6821 + $0x360] sm:$0xff]
        %v6867 = vld [vmem:[%s6821 + $0x370] sm:$0xff]
        %v6868 = vld [vmem:[%s6821 + $0x380] sm:$0xff]
        %v6869 = vld [vmem:[%s6821 + $0x390] sm:$0xff]
        %v6870 = vld [vmem:[%s6821 + $0x3c0] sm:$0xff]
        %v6871 = vld [vmem:[%s6821 + $0x3d0] sm:$0xff]
        %v6872 = vld [vmem:[%s6821 + $0x3e0] sm:$0xff]
        %v6873 = vld [vmem:[%s6821 + $0x3f0] sm:$0xff]
        %v6874 = vld [vmem:[%s6821 + $0x400] sm:$0xff]
        %v6875 = vld [vmem:[%s6821 + $0x410] sm:$0xff]
        %v6876 = vld [vmem:[%s6821 + $0x420] sm:$0xff]
        %v6877 = vld [vmem:[%s6821 + $0x430] sm:$0xff]
        %v6878 = vld [vmem:[%s6821 + $0x460] sm:$0xff]
        %v6879 = vld [vmem:[%s6821 + $0x470] sm:$0xff]
        %v6880 = vld [vmem:[%s6821 + $0x480] sm:$0xff]
        %v6881 = vld [vmem:[%s6821 + $0x490] sm:$0xff]
        %v6882 = vld [vmem:[%s6821 + $0x4a0] sm:$0xff]
        %v6883 = vld [vmem:[%s6821 + $0x4b0] sm:$0xff]
        %v6884 = vld [vmem:[%s6821 + $0x4c0] sm:$0xff]
        %v6885 = vld [vmem:[%s6821 + $0x4d0] sm:$0xff]
        %6950 = vrot.lane.b32.xlu0 %v6822, 72
        %v6951 = vpop.permute.xlu0 %6950
        %6952 = vrot.lane.b32.xlu0 %v6823, 72
        %v6953 = vpop.permute.xlu0 %6952
        %6954 = vrot.lane.b32.xlu0 %v6824, 72
        %v6955 = vpop.permute.xlu0 %6954
        %6956 = vrot.lane.b32.xlu0 %v6825, 72
        %v6957 = vpop.permute.xlu0 %6956
        %6958 = vrot.lane.b32.xlu0 %v6826, 72
        %v6959 = vpop.permute.xlu0 %6958
        %6960 = vrot.lane.b32.xlu0 %v6827, 72
        %v6961 = vpop.permute.xlu0 %6960
        %6962 = vrot.lane.b32.xlu0 %v6828, 72
        %v6963 = vpop.permute.xlu0 %6962
        %6964 = vrot.lane.b32.xlu0 %v6829, 72
        %v6965 = vpop.permute.xlu0 %6964
        %6966 = vrot.lane.b32.xlu0 %v6830, 72
        %v6967 = vpop.permute.xlu0 %6966
        %6968 = vrot.lane.b32.xlu0 %v6831, 72
        %v6969 = vpop.permute.xlu0 %6968
        %6970 = vrot.lane.b32.xlu0 %v6832, 72
        %v6971 = vpop.permute.xlu0 %6970
        %6972 = vrot.lane.b32.xlu0 %v6833, 72
        %v6973 = vpop.permute.xlu0 %6972
        %6974 = vrot.lane.b32.xlu0 %v6834, 72
        %v6975 = vpop.permute.xlu0 %6974
        %6976 = vrot.lane.b32.xlu0 %v6835, 72
        %v6977 = vpop.permute.xlu0 %6976
        %6978 = vrot.lane.b32.xlu0 %v6836, 72
        %v6979 = vpop.permute.xlu0 %6978
        %6980 = vrot.lane.b32.xlu0 %v6837, 72
        %v6981 = vpop.permute.xlu0 %6980
        %6982 = vrot.lane.b32.xlu0 %v6838, 72
        %v6983 = vpop.permute.xlu0 %6982
        %6984 = vrot.lane.b32.xlu0 %v6839, 72
        %v6985 = vpop.permute.xlu0 %6984
        %6986 = vrot.lane.b32.xlu0 %v6840, 72
        %v6987 = vpop.permute.xlu0 %6986
        %6988 = vrot.lane.b32.xlu0 %v6841, 72
        %v6989 = vpop.permute.xlu0 %6988
        %6990 = vrot.lane.b32.xlu0 %v6842, 72
        %v6991 = vpop.permute.xlu0 %6990
        %6992 = vrot.lane.b32.xlu0 %v6843, 72
        %v6993 = vpop.permute.xlu0 %6992
        %6994 = vrot.lane.b32.xlu0 %v6844, 72
        %v6995 = vpop.permute.xlu0 %6994
        %6996 = vrot.lane.b32.xlu0 %v6845, 72
        %v6997 = vpop.permute.xlu0 %6996
        %6998 = vrot.lane.b32.xlu0 %v6846, 72
        %v6999 = vpop.permute.xlu0 %6998
        %7000 = vrot.lane.b32.xlu0 %v6847, 72
        %v7001 = vpop.permute.xlu0 %7000
        %7002 = vrot.lane.b32.xlu0 %v6848, 72
        %v7003 = vpop.permute.xlu0 %7002
        %7004 = vrot.lane.b32.xlu0 %v6849, 72
        %v7005 = vpop.permute.xlu0 %7004
        %7006 = vrot.lane.b32.xlu0 %v6850, 72
        %v7007 = vpop.permute.xlu0 %7006
        %7008 = vrot.lane.b32.xlu0 %v6851, 72
        %v7009 = vpop.permute.xlu0 %7008
        %7010 = vrot.lane.b32.xlu0 %v6852, 72
        %v7011 = vpop.permute.xlu0 %7010
        %7012 = vrot.lane.b32.xlu0 %v6853, 72
        %v7013 = vpop.permute.xlu0 %7012
        %7014 = vrot.lane.b32.xlu0 %v6854, 72
        %v7015 = vpop.permute.xlu0 %7014
        %7016 = vrot.lane.b32.xlu0 %v6855, 72
        %v7017 = vpop.permute.xlu0 %7016
        %7018 = vrot.lane.b32.xlu0 %v6856, 72
        %v7019 = vpop.permute.xlu0 %7018
        %7020 = vrot.lane.b32.xlu0 %v6857, 72
        %v7021 = vpop.permute.xlu0 %7020
        %7022 = vrot.lane.b32.xlu0 %v6858, 72
        %v7023 = vpop.permute.xlu0 %7022
        %7024 = vrot.lane.b32.xlu0 %v6859, 72
        %v7025 = vpop.permute.xlu0 %7024
        %7026 = vrot.lane.b32.xlu0 %v6860, 72
        %v7027 = vpop.permute.xlu0 %7026
        %7028 = vrot.lane.b32.xlu0 %v6861, 72
        %v7029 = vpop.permute.xlu0 %7028
        %7030 = vrot.lane.b32.xlu0 %v6862, 72
        %v7031 = vpop.permute.xlu0 %7030
        %7032 = vrot.lane.b32.xlu0 %v6863, 72
        %v7033 = vpop.permute.xlu0 %7032
        %7034 = vrot.lane.b32.xlu0 %v6864, 72
        %v7035 = vpop.permute.xlu0 %7034
        %7036 = vrot.lane.b32.xlu0 %v6865, 72
        %v7037 = vpop.permute.xlu0 %7036
        %7038 = vrot.lane.b32.xlu0 %v6866, 72
        %v7039 = vpop.permute.xlu0 %7038
        %7040 = vrot.lane.b32.xlu0 %v6867, 72
        %v7041 = vpop.permute.xlu0 %7040
        %7042 = vrot.lane.b32.xlu0 %v6868, 72
        %v7043 = vpop.permute.xlu0 %7042
        %7044 = vrot.lane.b32.xlu0 %v6869, 72
        %v7045 = vpop.permute.xlu0 %7044
        %7046 = vrot.lane.b32.xlu0 %v6870, 72
        %v7047 = vpop.permute.xlu0 %7046
        %7048 = vrot.lane.b32.xlu0 %v6871, 72
        %v7049 = vpop.permute.xlu0 %7048
        %7050 = vrot.lane.b32.xlu0 %v6872, 72
        %v7051 = vpop.permute.xlu0 %7050
        %7052 = vrot.lane.b32.xlu0 %v6873, 72
        %v7053 = vpop.permute.xlu0 %7052
        %7054 = vrot.lane.b32.xlu0 %v6874, 72
        %v7055 = vpop.permute.xlu0 %7054
        %7056 = vrot.lane.b32.xlu0 %v6875, 72
        %v7057 = vpop.permute.xlu0 %7056
        %7058 = vrot.lane.b32.xlu0 %v6876, 72
        %v7059 = vpop.permute.xlu0 %7058
        %7060 = vrot.lane.b32.xlu0 %v6877, 72
        %v7061 = vpop.permute.xlu0 %7060
        %7062 = vrot.lane.b32.xlu0 %v6878, 72
        %v7063 = vpop.permute.xlu0 %7062
        %7064 = vrot.lane.b32.xlu0 %v6879, 72
        %v7065 = vpop.permute.xlu0 %7064
        %7066 = vrot.lane.b32.xlu0 %v6880, 72
        %v7067 = vpop.permute.xlu0 %7066
        %7068 = vrot.lane.b32.xlu0 %v6881, 72
        %v7069 = vpop.permute.xlu0 %7068
        %7070 = vrot.lane.b32.xlu0 %v6882, 72
        %v7071 = vpop.permute.xlu0 %7070
        %7072 = vrot.lane.b32.xlu0 %v6883, 72
        %v7073 = vpop.permute.xlu0 %7072
        %7074 = vrot.lane.b32.xlu0 %v6884, 72
        %v7075 = vpop.permute.xlu0 %7074
        %7076 = vrot.lane.b32.xlu0 %v6885, 72
        %v7077 = vpop.permute.xlu0 %7076
        %vm7142 = vcmask 622144
        %7143 = vst.msk [vmem:[#allocation2] sm:$0xff] %vm7142, %v6951
        %7144 = vst.msk [vmem:[#allocation2 + $0x8] sm:$0xff] %vm7142, %v6953
        %7145 = vst.msk [vmem:[#allocation2 + $0x10] sm:$0xff] %vm7142, %v6955
        %7146 = vst.msk [vmem:[#allocation2 + $0x18] sm:$0xff] %vm7142, %v6957
        %7147 = vst.msk [vmem:[#allocation2 + $0x20] sm:$0xff] %vm7142, %v6959
        %7148 = vst.msk [vmem:[#allocation2 + $0x28] sm:$0xff] %vm7142, %v6961
        %7149 = vst.msk [vmem:[#allocation2 + $0x30] sm:$0xff] %vm7142, %v6963
        %7150 = vst.msk [vmem:[#allocation2 + $0x38] sm:$0xff] %vm7142, %v6965
        %7151 = vst.msk [vmem:[#allocation2 + $0x40] sm:$0xff] %vm7142, %v6967
        %7152 = vst.msk [vmem:[#allocation2 + $0x48] sm:$0xff] %vm7142, %v6969
        %7153 = vst.msk [vmem:[#allocation2 + $0x50] sm:$0xff] %vm7142, %v6971
        %7154 = vst.msk [vmem:[#allocation2 + $0x58] sm:$0xff] %vm7142, %v6973
        %7155 = vst.msk [vmem:[#allocation2 + $0x60] sm:$0xff] %vm7142, %v6975
        %7156 = vst.msk [vmem:[#allocation2 + $0x68] sm:$0xff] %vm7142, %v6977
        %7157 = vst.msk [vmem:[#allocation2 + $0x70] sm:$0xff] %vm7142, %v6979
        %7158 = vst.msk [vmem:[#allocation2 + $0x78] sm:$0xff] %vm7142, %v6981
        %7159 = vst.msk [vmem:[#allocation2 + $0x80] sm:$0xff] %vm7142, %v6983
        %7160 = vst.msk [vmem:[#allocation2 + $0x88] sm:$0xff] %vm7142, %v6985
        %7161 = vst.msk [vmem:[#allocation2 + $0x90] sm:$0xff] %vm7142, %v6987
        %7162 = vst.msk [vmem:[#allocation2 + $0x98] sm:$0xff] %vm7142, %v6989
        %7163 = vst.msk [vmem:[#allocation2 + $0xa0] sm:$0xff] %vm7142, %v6991
        %7164 = vst.msk [vmem:[#allocation2 + $0xa8] sm:$0xff] %vm7142, %v6993
        %7165 = vst.msk [vmem:[#allocation2 + $0xb0] sm:$0xff] %vm7142, %v6995
        %7166 = vst.msk [vmem:[#allocation2 + $0xb8] sm:$0xff] %vm7142, %v6997
        %7167 = vst.msk [vmem:[#allocation2 + $0xc0] sm:$0xff] %vm7142, %v6999
        %7168 = vst.msk [vmem:[#allocation2 + $0xc8] sm:$0xff] %vm7142, %v7001
        %7169 = vst.msk [vmem:[#allocation2 + $0xd0] sm:$0xff] %vm7142, %v7003
        %7170 = vst.msk [vmem:[#allocation2 + $0xd8] sm:$0xff] %vm7142, %v7005
        %7171 = vst.msk [vmem:[#allocation2 + $0xe0] sm:$0xff] %vm7142, %v7007
        %7172 = vst.msk [vmem:[#allocation2 + $0xe8] sm:$0xff] %vm7142, %v7009
        %7173 = vst.msk [vmem:[#allocation2 + $0xf0] sm:$0xff] %vm7142, %v7011
        %7174 = vst.msk [vmem:[#allocation2 + $0xf8] sm:$0xff] %vm7142, %v7013
        %7175 = vst.msk [vmem:[#allocation2 + $0x100] sm:$0xff] %vm7142, %v7015
        %7176 = vst.msk [vmem:[#allocation2 + $0x108] sm:$0xff] %vm7142, %v7017
        %7177 = vst.msk [vmem:[#allocation2 + $0x110] sm:$0xff] %vm7142, %v7019
        %7178 = vst.msk [vmem:[#allocation2 + $0x118] sm:$0xff] %vm7142, %v7021
        %7179 = vst.msk [vmem:[#allocation2 + $0x120] sm:$0xff] %vm7142, %v7023
        %7180 = vst.msk [vmem:[#allocation2 + $0x128] sm:$0xff] %vm7142, %v7025
        %7181 = vst.msk [vmem:[#allocation2 + $0x130] sm:$0xff] %vm7142, %v7027
        %7182 = vst.msk [vmem:[#allocation2 + $0x138] sm:$0xff] %vm7142, %v7029
        %7183 = vst.msk [vmem:[#allocation2 + $0x140] sm:$0xff] %vm7142, %v7031
        %7184 = vst.msk [vmem:[#allocation2 + $0x148] sm:$0xff] %vm7142, %v7033
        %7185 = vst.msk [vmem:[#allocation2 + $0x150] sm:$0xff] %vm7142, %v7035
        %7186 = vst.msk [vmem:[#allocation2 + $0x158] sm:$0xff] %vm7142, %v7037
        %7187 = vst.msk [vmem:[#allocation2 + $0x160] sm:$0xff] %vm7142, %v7039
        %7188 = vst.msk [vmem:[#allocation2 + $0x168] sm:$0xff] %vm7142, %v7041
        %7189 = vst.msk [vmem:[#allocation2 + $0x170] sm:$0xff] %vm7142, %v7043
        %7190 = vst.msk [vmem:[#allocation2 + $0x178] sm:$0xff] %vm7142, %v7045
        %7191 = vst.msk [vmem:[#allocation2 + $0x180] sm:$0xff] %vm7142, %v7047
        %7192 = vst.msk [vmem:[#allocation2 + $0x188] sm:$0xff] %vm7142, %v7049
        %7193 = vst.msk [vmem:[#allocation2 + $0x190] sm:$0xff] %vm7142, %v7051
        %7194 = vst.msk [vmem:[#allocation2 + $0x198] sm:$0xff] %vm7142, %v7053
        %7195 = vst.msk [vmem:[#allocation2 + $0x1a0] sm:$0xff] %vm7142, %v7055
        %7196 = vst.msk [vmem:[#allocation2 + $0x1a8] sm:$0xff] %vm7142, %v7057
        %7197 = vst.msk [vmem:[#allocation2 + $0x1b0] sm:$0xff] %vm7142, %v7059
        %7198 = vst.msk [vmem:[#allocation2 + $0x1b8] sm:$0xff] %vm7142, %v7061
        %7199 = vst.msk [vmem:[#allocation2 + $0x1c0] sm:$0xff] %vm7142, %v7063
        %7200 = vst.msk [vmem:[#allocation2 + $0x1c8] sm:$0xff] %vm7142, %v7065
        %7201 = vst.msk [vmem:[#allocation2 + $0x1d0] sm:$0xff] %vm7142, %v7067
        %7202 = vst.msk [vmem:[#allocation2 + $0x1d8] sm:$0xff] %vm7142, %v7069
        %7203 = vst.msk [vmem:[#allocation2 + $0x1e0] sm:$0xff] %vm7142, %v7071
        %7204 = vst.msk [vmem:[#allocation2 + $0x1e8] sm:$0xff] %vm7142, %v7073
        %7205 = vst.msk [vmem:[#allocation2 + $0x1f0] sm:$0xff] %vm7142, %v7075
        %7206 = vst.msk [vmem:[#allocation2 + $0x1f8] sm:$0xff] %vm7142, %v7077
        %v7207 = vld [vmem:[%s6821 + $0x1] sm:$0xff]
        %v7208 = vld [vmem:[%s6821 + $0x11] sm:$0xff]
        %v7209 = vld [vmem:[%s6821 + $0x21] sm:$0xff]
        %v7210 = vld [vmem:[%s6821 + $0x31] sm:$0xff]
        %v7211 = vld [vmem:[%s6821 + $0x41] sm:$0xff]
        %v7212 = vld [vmem:[%s6821 + $0x51] sm:$0xff]
        %v7213 = vld [vmem:[%s6821 + $0x61] sm:$0xff]
        %v7214 = vld [vmem:[%s6821 + $0x71] sm:$0xff]
        %v7215 = vld [vmem:[%s6821 + $0xa1] sm:$0xff]
        %v7216 = vld [vmem:[%s6821 + $0xb1] sm:$0xff]
        %v7217 = vld [vmem:[%s6821 + $0xc1] sm:$0xff]
        %v7218 = vld [vmem:[%s6821 + $0xd1] sm:$0xff]
        %v7219 = vld [vmem:[%s6821 + $0xe1] sm:$0xff]
        %v7220 = vld [vmem:[%s6821 + $0xf1] sm:$0xff]
        %v7221 = vld [vmem:[%s6821 + $0x101] sm:$0xff]
        %v7222 = vld [vmem:[%s6821 + $0x111] sm:$0xff]
        %v7223 = vld [vmem:[%s6821 + $0x141] sm:$0xff]
        %v7224 = vld [vmem:[%s6821 + $0x151] sm:$0xff]
        %v7225 = vld [vmem:[%s6821 + $0x161] sm:$0xff]
        %v7226 = vld [vmem:[%s6821 + $0x171] sm:$0xff]
        %v7227 = vld [vmem:[%s6821 + $0x181] sm:$0xff]
        %v7228 = vld [vmem:[%s6821 + $0x191] sm:$0xff]
        %v7229 = vld [vmem:[%s6821 + $0x1a1] sm:$0xff]
        %v7230 = vld [vmem:[%s6821 + $0x1b1] sm:$0xff]
        %v7231 = vld [vmem:[%s6821 + $0x1e1] sm:$0xff]
        %v7232 = vld [vmem:[%s6821 + $0x1f1] sm:$0xff]
        %v7233 = vld [vmem:[%s6821 + $0x201] sm:$0xff]
        %v7234 = vld [vmem:[%s6821 + $0x211] sm:$0xff]
        %v7235 = vld [vmem:[%s6821 + $0x221] sm:$0xff]
        %v7236 = vld [vmem:[%s6821 + $0x231] sm:$0xff]
        %v7237 = vld [vmem:[%s6821 + $0x241] sm:$0xff]
        %v7238 = vld [vmem:[%s6821 + $0x251] sm:$0xff]
        %v7239 = vld [vmem:[%s6821 + $0x281] sm:$0xff]
        %v7240 = vld [vmem:[%s6821 + $0x291] sm:$0xff]
        %v7241 = vld [vmem:[%s6821 + $0x2a1] sm:$0xff]
        %v7242 = vld [vmem:[%s6821 + $0x2b1] sm:$0xff]
        %v7243 = vld [vmem:[%s6821 + $0x2c1] sm:$0xff]
        %v7244 = vld [vmem:[%s6821 + $0x2d1] sm:$0xff]
        %v7245 = vld [vmem:[%s6821 + $0x2e1] sm:$0xff]
        %v7246 = vld [vmem:[%s6821 + $0x2f1] sm:$0xff]
        %v7247 = vld [vmem:[%s6821 + $0x321] sm:$0xff]
        %v7248 = vld [vmem:[%s6821 + $0x331] sm:$0xff]
        %v7249 = vld [vmem:[%s6821 + $0x341] sm:$0xff]
        %v7250 = vld [vmem:[%s6821 + $0x351] sm:$0xff]
        %v7251 = vld [vmem:[%s6821 + $0x361] sm:$0xff]
        %v7252 = vld [vmem:[%s6821 + $0x371] sm:$0xff]
        %v7253 = vld [vmem:[%s6821 + $0x381] sm:$0xff]
        %v7254 = vld [vmem:[%s6821 + $0x391] sm:$0xff]
        %v7255 = vld [vmem:[%s6821 + $0x3c1] sm:$0xff]
        %v7256 = vld [vmem:[%s6821 + $0x3d1] sm:$0xff]
        %v7257 = vld [vmem:[%s6821 + $0x3e1] sm:$0xff]
        %v7258 = vld [vmem:[%s6821 + $0x3f1] sm:$0xff]
        %v7259 = vld [vmem:[%s6821 + $0x401] sm:$0xff]
        %v7260 = vld [vmem:[%s6821 + $0x411] sm:$0xff]
        %v7261 = vld [vmem:[%s6821 + $0x421] sm:$0xff]
        %v7262 = vld [vmem:[%s6821 + $0x431] sm:$0xff]
        %v7263 = vld [vmem:[%s6821 + $0x461] sm:$0xff]
        %v7264 = vld [vmem:[%s6821 + $0x471] sm:$0xff]
        %v7265 = vld [vmem:[%s6821 + $0x481] sm:$0xff]
        %v7266 = vld [vmem:[%s6821 + $0x491] sm:$0xff]
        %v7267 = vld [vmem:[%s6821 + $0x4a1] sm:$0xff]
        %v7268 = vld [vmem:[%s6821 + $0x4b1] sm:$0xff]
        %v7269 = vld [vmem:[%s6821 + $0x4c1] sm:$0xff]
        %v7270 = vld [vmem:[%s6821 + $0x4d1] sm:$0xff]
        %7335 = vrot.lane.b32.xlu0 %v7207, 76
        %v7336 = vpop.permute.xlu0 %7335
        %7337 = vrot.lane.b32.xlu0 %v7208, 76
        %v7338 = vpop.permute.xlu0 %7337
        %7339 = vrot.lane.b32.xlu0 %v7209, 76
        %v7340 = vpop.permute.xlu0 %7339
        %7341 = vrot.lane.b32.xlu0 %v7210, 76
        %v7342 = vpop.permute.xlu0 %7341
        %7343 = vrot.lane.b32.xlu0 %v7211, 76
        %v7344 = vpop.permute.xlu0 %7343
        %7345 = vrot.lane.b32.xlu0 %v7212, 76
        %v7346 = vpop.permute.xlu0 %7345
        %7347 = vrot.lane.b32.xlu0 %v7213, 76
        %v7348 = vpop.permute.xlu0 %7347
        %7349 = vrot.lane.b32.xlu0 %v7214, 76
        %v7350 = vpop.permute.xlu0 %7349
        %7351 = vrot.lane.b32.xlu0 %v7215, 76
        %v7352 = vpop.permute.xlu0 %7351
        %7353 = vrot.lane.b32.xlu0 %v7216, 76
        %v7354 = vpop.permute.xlu0 %7353
        %7355 = vrot.lane.b32.xlu0 %v7217, 76
        %v7356 = vpop.permute.xlu0 %7355
        %7357 = vrot.lane.b32.xlu0 %v7218, 76
        %v7358 = vpop.permute.xlu0 %7357
        %7359 = vrot.lane.b32.xlu0 %v7219, 76
        %v7360 = vpop.permute.xlu0 %7359
        %7361 = vrot.lane.b32.xlu0 %v7220, 76
        %v7362 = vpop.permute.xlu0 %7361
        %7363 = vrot.lane.b32.xlu0 %v7221, 76
        %v7364 = vpop.permute.xlu0 %7363
        %7365 = vrot.lane.b32.xlu0 %v7222, 76
        %v7366 = vpop.permute.xlu0 %7365
        %7367 = vrot.lane.b32.xlu0 %v7223, 76
        %v7368 = vpop.permute.xlu0 %7367
        %7369 = vrot.lane.b32.xlu0 %v7224, 76
        %v7370 = vpop.permute.xlu0 %7369
        %7371 = vrot.lane.b32.xlu0 %v7225, 76
        %v7372 = vpop.permute.xlu0 %7371
        %7373 = vrot.lane.b32.xlu0 %v7226, 76
        %v7374 = vpop.permute.xlu0 %7373
        %7375 = vrot.lane.b32.xlu0 %v7227, 76
        %v7376 = vpop.permute.xlu0 %7375
        %7377 = vrot.lane.b32.xlu0 %v7228, 76
        %v7378 = vpop.permute.xlu0 %7377
        %7379 = vrot.lane.b32.xlu0 %v7229, 76
        %v7380 = vpop.permute.xlu0 %7379
        %7381 = vrot.lane.b32.xlu0 %v7230, 76
        %v7382 = vpop.permute.xlu0 %7381
        %7383 = vrot.lane.b32.xlu0 %v7231, 76
        %v7384 = vpop.permute.xlu0 %7383
        %7385 = vrot.lane.b32.xlu0 %v7232, 76
        %v7386 = vpop.permute.xlu0 %7385
        %7387 = vrot.lane.b32.xlu0 %v7233, 76
        %v7388 = vpop.permute.xlu0 %7387
        %7389 = vrot.lane.b32.xlu0 %v7234, 76
        %v7390 = vpop.permute.xlu0 %7389
        %7391 = vrot.lane.b32.xlu0 %v7235, 76
        %v7392 = vpop.permute.xlu0 %7391
        %7393 = vrot.lane.b32.xlu0 %v7236, 76
        %v7394 = vpop.permute.xlu0 %7393
        %7395 = vrot.lane.b32.xlu0 %v7237, 76
        %v7396 = vpop.permute.xlu0 %7395
        %7397 = vrot.lane.b32.xlu0 %v7238, 76
        %v7398 = vpop.permute.xlu0 %7397
        %7399 = vrot.lane.b32.xlu0 %v7239, 76
        %v7400 = vpop.permute.xlu0 %7399
        %7401 = vrot.lane.b32.xlu0 %v7240, 76
        %v7402 = vpop.permute.xlu0 %7401
        %7403 = vrot.lane.b32.xlu0 %v7241, 76
        %v7404 = vpop.permute.xlu0 %7403
        %7405 = vrot.lane.b32.xlu0 %v7242, 76
        %v7406 = vpop.permute.xlu0 %7405
        %7407 = vrot.lane.b32.xlu0 %v7243, 76
        %v7408 = vpop.permute.xlu0 %7407
        %7409 = vrot.lane.b32.xlu0 %v7244, 76
        %v7410 = vpop.permute.xlu0 %7409
        %7411 = vrot.lane.b32.xlu0 %v7245, 76
        %v7412 = vpop.permute.xlu0 %7411
        %7413 = vrot.lane.b32.xlu0 %v7246, 76
        %v7414 = vpop.permute.xlu0 %7413
        %7415 = vrot.lane.b32.xlu0 %v7247, 76
        %v7416 = vpop.permute.xlu0 %7415
        %7417 = vrot.lane.b32.xlu0 %v7248, 76
        %v7418 = vpop.permute.xlu0 %7417
        %7419 = vrot.lane.b32.xlu0 %v7249, 76
        %v7420 = vpop.permute.xlu0 %7419
        %7421 = vrot.lane.b32.xlu0 %v7250, 76
        %v7422 = vpop.permute.xlu0 %7421
        %7423 = vrot.lane.b32.xlu0 %v7251, 76
        %v7424 = vpop.permute.xlu0 %7423
        %7425 = vrot.lane.b32.xlu0 %v7252, 76
        %v7426 = vpop.permute.xlu0 %7425
        %7427 = vrot.lane.b32.xlu0 %v7253, 76
        %v7428 = vpop.permute.xlu0 %7427
        %7429 = vrot.lane.b32.xlu0 %v7254, 76
        %v7430 = vpop.permute.xlu0 %7429
        %7431 = vrot.lane.b32.xlu0 %v7255, 76
        %v7432 = vpop.permute.xlu0 %7431
        %7433 = vrot.lane.b32.xlu0 %v7256, 76
        %v7434 = vpop.permute.xlu0 %7433
        %7435 = vrot.lane.b32.xlu0 %v7257, 76
        %v7436 = vpop.permute.xlu0 %7435
        %7437 = vrot.lane.b32.xlu0 %v7258, 76
        %v7438 = vpop.permute.xlu0 %7437
        %7439 = vrot.lane.b32.xlu0 %v7259, 76
        %v7440 = vpop.permute.xlu0 %7439
        %7441 = vrot.lane.b32.xlu0 %v7260, 76
        %v7442 = vpop.permute.xlu0 %7441
        %7443 = vrot.lane.b32.xlu0 %v7261, 76
        %v7444 = vpop.permute.xlu0 %7443
        %7445 = vrot.lane.b32.xlu0 %v7262, 76
        %v7446 = vpop.permute.xlu0 %7445
        %7447 = vrot.lane.b32.xlu0 %v7263, 76
        %v7448 = vpop.permute.xlu0 %7447
        %7449 = vrot.lane.b32.xlu0 %v7264, 76
        %v7450 = vpop.permute.xlu0 %7449
        %7451 = vrot.lane.b32.xlu0 %v7265, 76
        %v7452 = vpop.permute.xlu0 %7451
        %7453 = vrot.lane.b32.xlu0 %v7266, 76
        %v7454 = vpop.permute.xlu0 %7453
        %7455 = vrot.lane.b32.xlu0 %v7267, 76
        %v7456 = vpop.permute.xlu0 %7455
        %7457 = vrot.lane.b32.xlu0 %v7268, 76
        %v7458 = vpop.permute.xlu0 %7457
        %7459 = vrot.lane.b32.xlu0 %v7269, 76
        %v7460 = vpop.permute.xlu0 %7459
        %7461 = vrot.lane.b32.xlu0 %v7270, 76
        %v7462 = vpop.permute.xlu0 %7461
        %vm7527 = vcmask 654944
        %7528 = vst.msk [vmem:[#allocation2] sm:$0xff] %vm7527, %v7336
        %7529 = vst.msk [vmem:[#allocation2 + $0x8] sm:$0xff] %vm7527, %v7338
        %7530 = vst.msk [vmem:[#allocation2 + $0x10] sm:$0xff] %vm7527, %v7340
        %7531 = vst.msk [vmem:[#allocation2 + $0x18] sm:$0xff] %vm7527, %v7342
        %7532 = vst.msk [vmem:[#allocation2 + $0x20] sm:$0xff] %vm7527, %v7344
        %7533 = vst.msk [vmem:[#allocation2 + $0x28] sm:$0xff] %vm7527, %v7346
        %7534 = vst.msk [vmem:[#allocation2 + $0x30] sm:$0xff] %vm7527, %v7348
        %7535 = vst.msk [vmem:[#allocation2 + $0x38] sm:$0xff] %vm7527, %v7350
        %7536 = vst.msk [vmem:[#allocation2 + $0x40] sm:$0xff] %vm7527, %v7352
        %7537 = vst.msk [vmem:[#allocation2 + $0x48] sm:$0xff] %vm7527, %v7354
        %7538 = vst.msk [vmem:[#allocation2 + $0x50] sm:$0xff] %vm7527, %v7356
        %7539 = vst.msk [vmem:[#allocation2 + $0x58] sm:$0xff] %vm7527, %v7358
        %7540 = vst.msk [vmem:[#allocation2 + $0x60] sm:$0xff] %vm7527, %v7360
        %7541 = vst.msk [vmem:[#allocation2 + $0x68] sm:$0xff] %vm7527, %v7362
        %7542 = vst.msk [vmem:[#allocation2 + $0x70] sm:$0xff] %vm7527, %v7364
        %7543 = vst.msk [vmem:[#allocation2 + $0x78] sm:$0xff] %vm7527, %v7366
        %7544 = vst.msk [vmem:[#allocation2 + $0x80] sm:$0xff] %vm7527, %v7368
        %7545 = vst.msk [vmem:[#allocation2 + $0x88] sm:$0xff] %vm7527, %v7370
        %7546 = vst.msk [vmem:[#allocation2 + $0x90] sm:$0xff] %vm7527, %v7372
        %7547 = vst.msk [vmem:[#allocation2 + $0x98] sm:$0xff] %vm7527, %v7374
        %7548 = vst.msk [vmem:[#allocation2 + $0xa0] sm:$0xff] %vm7527, %v7376
        %7549 = vst.msk [vmem:[#allocation2 + $0xa8] sm:$0xff] %vm7527, %v7378
        %7550 = vst.msk [vmem:[#allocation2 + $0xb0] sm:$0xff] %vm7527, %v7380
        %7551 = vst.msk [vmem:[#allocation2 + $0xb8] sm:$0xff] %vm7527, %v7382
        %7552 = vst.msk [vmem:[#allocation2 + $0xc0] sm:$0xff] %vm7527, %v7384
        %7553 = vst.msk [vmem:[#allocation2 + $0xc8] sm:$0xff] %vm7527, %v7386
        %7554 = vst.msk [vmem:[#allocation2 + $0xd0] sm:$0xff] %vm7527, %v7388
        %7555 = vst.msk [vmem:[#allocation2 + $0xd8] sm:$0xff] %vm7527, %v7390
        %7556 = vst.msk [vmem:[#allocation2 + $0xe0] sm:$0xff] %vm7527, %v7392
        %7557 = vst.msk [vmem:[#allocation2 + $0xe8] sm:$0xff] %vm7527, %v7394
        %7558 = vst.msk [vmem:[#allocation2 + $0xf0] sm:$0xff] %vm7527, %v7396
        %7559 = vst.msk [vmem:[#allocation2 + $0xf8] sm:$0xff] %vm7527, %v7398
        %7560 = vst.msk [vmem:[#allocation2 + $0x100] sm:$0xff] %vm7527, %v7400
        %7561 = vst.msk [vmem:[#allocation2 + $0x108] sm:$0xff] %vm7527, %v7402
        %7562 = vst.msk [vmem:[#allocation2 + $0x110] sm:$0xff] %vm7527, %v7404
        %7563 = vst.msk [vmem:[#allocation2 + $0x118] sm:$0xff] %vm7527, %v7406
        %7564 = vst.msk [vmem:[#allocation2 + $0x120] sm:$0xff] %vm7527, %v7408
        %7565 = vst.msk [vmem:[#allocation2 + $0x128] sm:$0xff] %vm7527, %v7410
        %7566 = vst.msk [vmem:[#allocation2 + $0x130] sm:$0xff] %vm7527, %v7412
        %7567 = vst.msk [vmem:[#allocation2 + $0x138] sm:$0xff] %vm7527, %v7414
        %7568 = vst.msk [vmem:[#allocation2 + $0x140] sm:$0xff] %vm7527, %v7416
        %7569 = vst.msk [vmem:[#allocation2 + $0x148] sm:$0xff] %vm7527, %v7418
        %7570 = vst.msk [vmem:[#allocation2 + $0x150] sm:$0xff] %vm7527, %v7420
        %7571 = vst.msk [vmem:[#allocation2 + $0x158] sm:$0xff] %vm7527, %v7422
        %7572 = vst.msk [vmem:[#allocation2 + $0x160] sm:$0xff] %vm7527, %v7424
        %7573 = vst.msk [vmem:[#allocation2 + $0x168] sm:$0xff] %vm7527, %v7426
        %7574 = vst.msk [vmem:[#allocation2 + $0x170] sm:$0xff] %vm7527, %v7428
        %7575 = vst.msk [vmem:[#allocation2 + $0x178] sm:$0xff] %vm7527, %v7430
        %7576 = vst.msk [vmem:[#allocation2 + $0x180] sm:$0xff] %vm7527, %v7432
        %7577 = vst.msk [vmem:[#allocation2 + $0x188] sm:$0xff] %vm7527, %v7434
        %7578 = vst.msk [vmem:[#allocation2 + $0x190] sm:$0xff] %vm7527, %v7436
        %7579 = vst.msk [vmem:[#allocation2 + $0x198] sm:$0xff] %vm7527, %v7438
        %7580 = vst.msk [vmem:[#allocation2 + $0x1a0] sm:$0xff] %vm7527, %v7440
        %7581 = vst.msk [vmem:[#allocation2 + $0x1a8] sm:$0xff] %vm7527, %v7442
        %7582 = vst.msk [vmem:[#allocation2 + $0x1b0] sm:$0xff] %vm7527, %v7444
        %7583 = vst.msk [vmem:[#allocation2 + $0x1b8] sm:$0xff] %vm7527, %v7446
        %7584 = vst.msk [vmem:[#allocation2 + $0x1c0] sm:$0xff] %vm7527, %v7448
        %7585 = vst.msk [vmem:[#allocation2 + $0x1c8] sm:$0xff] %vm7527, %v7450
        %7586 = vst.msk [vmem:[#allocation2 + $0x1d0] sm:$0xff] %vm7527, %v7452
        %7587 = vst.msk [vmem:[#allocation2 + $0x1d8] sm:$0xff] %vm7527, %v7454
        %7588 = vst.msk [vmem:[#allocation2 + $0x1e0] sm:$0xff] %vm7527, %v7456
        %7589 = vst.msk [vmem:[#allocation2 + $0x1e8] sm:$0xff] %vm7527, %v7458
        %7590 = vst.msk [vmem:[#allocation2 + $0x1f0] sm:$0xff] %vm7527, %v7460
        %7591 = vst.msk [vmem:[#allocation2 + $0x1f8] sm:$0xff] %vm7527, %v7462
        %v7592 = vld [vmem:[%s6821 + $0x2] sm:$0xff]
        %v7593 = vld [vmem:[%s6821 + $0x12] sm:$0xff]
        %v7594 = vld [vmem:[%s6821 + $0x22] sm:$0xff]
        %v7595 = vld [vmem:[%s6821 + $0x32] sm:$0xff]
        %v7596 = vld [vmem:[%s6821 + $0x42] sm:$0xff]
        %v7597 = vld [vmem:[%s6821 + $0x52] sm:$0xff]
        %v7598 = vld [vmem:[%s6821 + $0x62] sm:$0xff]
        %v7599 = vld [vmem:[%s6821 + $0x72] sm:$0xff]
        %v7600 = vld [vmem:[%s6821 + $0xa2] sm:$0xff]
        %v7601 = vld [vmem:[%s6821 + $0xb2] sm:$0xff]
        %v7602 = vld [vmem:[%s6821 + $0xc2] sm:$0xff]
        %v7603 = vld [vmem:[%s6821 + $0xd2] sm:$0xff]
        %v7604 = vld [vmem:[%s6821 + $0xe2] sm:$0xff]
        %v7605 = vld [vmem:[%s6821 + $0xf2] sm:$0xff]
        %v7606 = vld [vmem:[%s6821 + $0x102] sm:$0xff]
        %v7607 = vld [vmem:[%s6821 + $0x112] sm:$0xff]
        %v7608 = vld [vmem:[%s6821 + $0x142] sm:$0xff]
        %v7609 = vld [vmem:[%s6821 + $0x152] sm:$0xff]
        %v7610 = vld [vmem:[%s6821 + $0x162] sm:$0xff]
        %v7611 = vld [vmem:[%s6821 + $0x172] sm:$0xff]
        %v7612 = vld [vmem:[%s6821 + $0x182] sm:$0xff]
        %v7613 = vld [vmem:[%s6821 + $0x192] sm:$0xff]
        %v7614 = vld [vmem:[%s6821 + $0x1a2] sm:$0xff]
        %v7615 = vld [vmem:[%s6821 + $0x1b2] sm:$0xff]
        %v7616 = vld [vmem:[%s6821 + $0x1e2] sm:$0xff]
        %v7617 = vld [vmem:[%s6821 + $0x1f2] sm:$0xff]
        %v7618 = vld [vmem:[%s6821 + $0x202] sm:$0xff]
        %v7619 = vld [vmem:[%s6821 + $0x212] sm:$0xff]
        %v7620 = vld [vmem:[%s6821 + $0x222] sm:$0xff]
        %v7621 = vld [vmem:[%s6821 + $0x232] sm:$0xff]
        %v7622 = vld [vmem:[%s6821 + $0x242] sm:$0xff]
        %v7623 = vld [vmem:[%s6821 + $0x252] sm:$0xff]
        %v7624 = vld [vmem:[%s6821 + $0x282] sm:$0xff]
        %v7625 = vld [vmem:[%s6821 + $0x292] sm:$0xff]
        %v7626 = vld [vmem:[%s6821 + $0x2a2] sm:$0xff]
        %v7627 = vld [vmem:[%s6821 + $0x2b2] sm:$0xff]
        %v7628 = vld [vmem:[%s6821 + $0x2c2] sm:$0xff]
        %v7629 = vld [vmem:[%s6821 + $0x2d2] sm:$0xff]
        %v7630 = vld [vmem:[%s6821 + $0x2e2] sm:$0xff]
        %v7631 = vld [vmem:[%s6821 + $0x2f2] sm:$0xff]
        %v7632 = vld [vmem:[%s6821 + $0x322] sm:$0xff]
        %v7633 = vld [vmem:[%s6821 + $0x332] sm:$0xff]
        %v7634 = vld [vmem:[%s6821 + $0x342] sm:$0xff]
        %v7635 = vld [vmem:[%s6821 + $0x352] sm:$0xff]
        %v7636 = vld [vmem:[%s6821 + $0x362] sm:$0xff]
        %v7637 = vld [vmem:[%s6821 + $0x372] sm:$0xff]
        %v7638 = vld [vmem:[%s6821 + $0x382] sm:$0xff]
        %v7639 = vld [vmem:[%s6821 + $0x392] sm:$0xff]
        %v7640 = vld [vmem:[%s6821 + $0x3c2] sm:$0xff]
        %v7641 = vld [vmem:[%s6821 + $0x3d2] sm:$0xff]
        %v7642 = vld [vmem:[%s6821 + $0x3e2] sm:$0xff]
        %v7643 = vld [vmem:[%s6821 + $0x3f2] sm:$0xff]
        %v7644 = vld [vmem:[%s6821 + $0x402] sm:$0xff]
        %v7645 = vld [vmem:[%s6821 + $0x412] sm:$0xff]
        %v7646 = vld [vmem:[%s6821 + $0x422] sm:$0xff]
        %v7647 = vld [vmem:[%s6821 + $0x432] sm:$0xff]
        %v7648 = vld [vmem:[%s6821 + $0x462] sm:$0xff]
        %v7649 = vld [vmem:[%s6821 + $0x472] sm:$0xff]
        %v7650 = vld [vmem:[%s6821 + $0x482] sm:$0xff]
        %v7651 = vld [vmem:[%s6821 + $0x492] sm:$0xff]
        %v7652 = vld [vmem:[%s6821 + $0x4a2] sm:$0xff]
        %v7653 = vld [vmem:[%s6821 + $0x4b2] sm:$0xff]
        %v7654 = vld [vmem:[%s6821 + $0x4c2] sm:$0xff]
        %v7655 = vld [vmem:[%s6821 + $0x4d2] sm:$0xff]
        %7720 = vrot.lane.b32.xlu0 %v7592, 80
        %v7721 = vpop.permute.xlu0 %7720
        %7722 = vrot.lane.b32.xlu0 %v7593, 80
        %v7723 = vpop.permute.xlu0 %7722
        %7724 = vrot.lane.b32.xlu0 %v7594, 80
        %v7725 = vpop.permute.xlu0 %7724
        %7726 = vrot.lane.b32.xlu0 %v7595, 80
        %v7727 = vpop.permute.xlu0 %7726
        %7728 = vrot.lane.b32.xlu0 %v7596, 80
        %v7729 = vpop.permute.xlu0 %7728
        %7730 = vrot.lane.b32.xlu0 %v7597, 80
        %v7731 = vpop.permute.xlu0 %7730
        %7732 = vrot.lane.b32.xlu0 %v7598, 80
        %v7733 = vpop.permute.xlu0 %7732
        %7734 = vrot.lane.b32.xlu0 %v7599, 80
        %v7735 = vpop.permute.xlu0 %7734
        %7736 = vrot.lane.b32.xlu0 %v7600, 80
        %v7737 = vpop.permute.xlu0 %7736
        %7738 = vrot.lane.b32.xlu0 %v7601, 80
        %v7739 = vpop.permute.xlu0 %7738
        %7740 = vrot.lane.b32.xlu0 %v7602, 80
        %v7741 = vpop.permute.xlu0 %7740
        %7742 = vrot.lane.b32.xlu0 %v7603, 80
        %v7743 = vpop.permute.xlu0 %7742
        %7744 = vrot.lane.b32.xlu0 %v7604, 80
        %v7745 = vpop.permute.xlu0 %7744
        %7746 = vrot.lane.b32.xlu0 %v7605, 80
        %v7747 = vpop.permute.xlu0 %7746
        %7748 = vrot.lane.b32.xlu0 %v7606, 80
        %v7749 = vpop.permute.xlu0 %7748
        %7750 = vrot.lane.b32.xlu0 %v7607, 80
        %v7751 = vpop.permute.xlu0 %7750
        %7752 = vrot.lane.b32.xlu0 %v7608, 80
        %v7753 = vpop.permute.xlu0 %7752
        %7754 = vrot.lane.b32.xlu0 %v7609, 80
        %v7755 = vpop.permute.xlu0 %7754
        %7756 = vrot.lane.b32.xlu0 %v7610, 80
        %v7757 = vpop.permute.xlu0 %7756
        %7758 = vrot.lane.b32.xlu0 %v7611, 80
        %v7759 = vpop.permute.xlu0 %7758
        %7760 = vrot.lane.b32.xlu0 %v7612, 80
        %v7761 = vpop.permute.xlu0 %7760
        %7762 = vrot.lane.b32.xlu0 %v7613, 80
        %v7763 = vpop.permute.xlu0 %7762
        %7764 = vrot.lane.b32.xlu0 %v7614, 80
        %v7765 = vpop.permute.xlu0 %7764
        %7766 = vrot.lane.b32.xlu0 %v7615, 80
        %v7767 = vpop.permute.xlu0 %7766
        %7768 = vrot.lane.b32.xlu0 %v7616, 80
        %v7769 = vpop.permute.xlu0 %7768
        %7770 = vrot.lane.b32.xlu0 %v7617, 80
        %v7771 = vpop.permute.xlu0 %7770
        %7772 = vrot.lane.b32.xlu0 %v7618, 80
        %v7773 = vpop.permute.xlu0 %7772
        %7774 = vrot.lane.b32.xlu0 %v7619, 80
        %v7775 = vpop.permute.xlu0 %7774
        %7776 = vrot.lane.b32.xlu0 %v7620, 80
        %v7777 = vpop.permute.xlu0 %7776
        %7778 = vrot.lane.b32.xlu0 %v7621, 80
        %v7779 = vpop.permute.xlu0 %7778
        %7780 = vrot.lane.b32.xlu0 %v7622, 80
        %v7781 = vpop.permute.xlu0 %7780
        %7782 = vrot.lane.b32.xlu0 %v7623, 80
        %v7783 = vpop.permute.xlu0 %7782
        %7784 = vrot.lane.b32.xlu0 %v7624, 80
        %v7785 = vpop.permute.xlu0 %7784
        %7786 = vrot.lane.b32.xlu0 %v7625, 80
        %v7787 = vpop.permute.xlu0 %7786
        %7788 = vrot.lane.b32.xlu0 %v7626, 80
        %v7789 = vpop.permute.xlu0 %7788
        %7790 = vrot.lane.b32.xlu0 %v7627, 80
        %v7791 = vpop.permute.xlu0 %7790
        %7792 = vrot.lane.b32.xlu0 %v7628, 80
        %v7793 = vpop.permute.xlu0 %7792
        %7794 = vrot.lane.b32.xlu0 %v7629, 80
        %v7795 = vpop.permute.xlu0 %7794
        %7796 = vrot.lane.b32.xlu0 %v7630, 80
        %v7797 = vpop.permute.xlu0 %7796
        %7798 = vrot.lane.b32.xlu0 %v7631, 80
        %v7799 = vpop.permute.xlu0 %7798
        %7800 = vrot.lane.b32.xlu0 %v7632, 80
        %v7801 = vpop.permute.xlu0 %7800
        %7802 = vrot.lane.b32.xlu0 %v7633, 80
        %v7803 = vpop.permute.xlu0 %7802
        %7804 = vrot.lane.b32.xlu0 %v7634, 80
        %v7805 = vpop.permute.xlu0 %7804
        %7806 = vrot.lane.b32.xlu0 %v7635, 80
        %v7807 = vpop.permute.xlu0 %7806
        %7808 = vrot.lane.b32.xlu0 %v7636, 80
        %v7809 = vpop.permute.xlu0 %7808
        %7810 = vrot.lane.b32.xlu0 %v7637, 80
        %v7811 = vpop.permute.xlu0 %7810
        %7812 = vrot.lane.b32.xlu0 %v7638, 80
        %v7813 = vpop.permute.xlu0 %7812
        %7814 = vrot.lane.b32.xlu0 %v7639, 80
        %v7815 = vpop.permute.xlu0 %7814
        %7816 = vrot.lane.b32.xlu0 %v7640, 80
        %v7817 = vpop.permute.xlu0 %7816
        %7818 = vrot.lane.b32.xlu0 %v7641, 80
        %v7819 = vpop.permute.xlu0 %7818
        %7820 = vrot.lane.b32.xlu0 %v7642, 80
        %v7821 = vpop.permute.xlu0 %7820
        %7822 = vrot.lane.b32.xlu0 %v7643, 80
        %v7823 = vpop.permute.xlu0 %7822
        %7824 = vrot.lane.b32.xlu0 %v7644, 80
        %v7825 = vpop.permute.xlu0 %7824
        %7826 = vrot.lane.b32.xlu0 %v7645, 80
        %v7827 = vpop.permute.xlu0 %7826
        %7828 = vrot.lane.b32.xlu0 %v7646, 80
        %v7829 = vpop.permute.xlu0 %7828
        %7830 = vrot.lane.b32.xlu0 %v7647, 80
        %v7831 = vpop.permute.xlu0 %7830
        %7832 = vrot.lane.b32.xlu0 %v7648, 80
        %v7833 = vpop.permute.xlu0 %7832
        %7834 = vrot.lane.b32.xlu0 %v7649, 80
        %v7835 = vpop.permute.xlu0 %7834
        %7836 = vrot.lane.b32.xlu0 %v7650, 80
        %v7837 = vpop.permute.xlu0 %7836
        %7838 = vrot.lane.b32.xlu0 %v7651, 80
        %v7839 = vpop.permute.xlu0 %7838
        %7840 = vrot.lane.b32.xlu0 %v7652, 80
        %v7841 = vpop.permute.xlu0 %7840
        %7842 = vrot.lane.b32.xlu0 %v7653, 80
        %v7843 = vpop.permute.xlu0 %7842
        %7844 = vrot.lane.b32.xlu0 %v7654, 80
        %v7845 = vpop.permute.xlu0 %7844
        %7846 = vrot.lane.b32.xlu0 %v7655, 80
        %v7847 = vpop.permute.xlu0 %7846
        %vm7912 = vcmask 687744
        %7913 = vst.msk [vmem:[#allocation2] sm:$0xff] %vm7912, %v7721
        %7914 = vst.msk [vmem:[#allocation2 + $0x8] sm:$0xff] %vm7912, %v7723
        %7915 = vst.msk [vmem:[#allocation2 + $0x10] sm:$0xff] %vm7912, %v7725
        %7916 = vst.msk [vmem:[#allocation2 + $0x18] sm:$0xff] %vm7912, %v7727
        %7917 = vst.msk [vmem:[#allocation2 + $0x20] sm:$0xff] %vm7912, %v7729
        %7918 = vst.msk [vmem:[#allocation2 + $0x28] sm:$0xff] %vm7912, %v7731
        %7919 = vst.msk [vmem:[#allocation2 + $0x30] sm:$0xff] %vm7912, %v7733
        %7920 = vst.msk [vmem:[#allocation2 + $0x38] sm:$0xff] %vm7912, %v7735
        %7921 = vst.msk [vmem:[#allocation2 + $0x40] sm:$0xff] %vm7912, %v7737
        %7922 = vst.msk [vmem:[#allocation2 + $0x48] sm:$0xff] %vm7912, %v7739
        %7923 = vst.msk [vmem:[#allocation2 + $0x50] sm:$0xff] %vm7912, %v7741
        %7924 = vst.msk [vmem:[#allocation2 + $0x58] sm:$0xff] %vm7912, %v7743
        %7925 = vst.msk [vmem:[#allocation2 + $0x60] sm:$0xff] %vm7912, %v7745
        %7926 = vst.msk [vmem:[#allocation2 + $0x68] sm:$0xff] %vm7912, %v7747
        %7927 = vst.msk [vmem:[#allocation2 + $0x70] sm:$0xff] %vm7912, %v7749
        %7928 = vst.msk [vmem:[#allocation2 + $0x78] sm:$0xff] %vm7912, %v7751
        %7929 = vst.msk [vmem:[#allocation2 + $0x80] sm:$0xff] %vm7912, %v7753
        %7930 = vst.msk [vmem:[#allocation2 + $0x88] sm:$0xff] %vm7912, %v7755
        %7931 = vst.msk [vmem:[#allocation2 + $0x90] sm:$0xff] %vm7912, %v7757
        %7932 = vst.msk [vmem:[#allocation2 + $0x98] sm:$0xff] %vm7912, %v7759
        %7933 = vst.msk [vmem:[#allocation2 + $0xa0] sm:$0xff] %vm7912, %v7761
        %7934 = vst.msk [vmem:[#allocation2 + $0xa8] sm:$0xff] %vm7912, %v7763
        %7935 = vst.msk [vmem:[#allocation2 + $0xb0] sm:$0xff] %vm7912, %v7765
        %7936 = vst.msk [vmem:[#allocation2 + $0xb8] sm:$0xff] %vm7912, %v7767
        %7937 = vst.msk [vmem:[#allocation2 + $0xc0] sm:$0xff] %vm7912, %v7769
        %7938 = vst.msk [vmem:[#allocation2 + $0xc8] sm:$0xff] %vm7912, %v7771
        %7939 = vst.msk [vmem:[#allocation2 + $0xd0] sm:$0xff] %vm7912, %v7773
        %7940 = vst.msk [vmem:[#allocation2 + $0xd8] sm:$0xff] %vm7912, %v7775
        %7941 = vst.msk [vmem:[#allocation2 + $0xe0] sm:$0xff] %vm7912, %v7777
        %7942 = vst.msk [vmem:[#allocation2 + $0xe8] sm:$0xff] %vm7912, %v7779
        %7943 = vst.msk [vmem:[#allocation2 + $0xf0] sm:$0xff] %vm7912, %v7781
        %7944 = vst.msk [vmem:[#allocation2 + $0xf8] sm:$0xff] %vm7912, %v7783
        %7945 = vst.msk [vmem:[#allocation2 + $0x100] sm:$0xff] %vm7912, %v7785
        %7946 = vst.msk [vmem:[#allocation2 + $0x108] sm:$0xff] %vm7912, %v7787
        %7947 = vst.msk [vmem:[#allocation2 + $0x110] sm:$0xff] %vm7912, %v7789
        %7948 = vst.msk [vmem:[#allocation2 + $0x118] sm:$0xff] %vm7912, %v7791
        %7949 = vst.msk [vmem:[#allocation2 + $0x120] sm:$0xff] %vm7912, %v7793
        %7950 = vst.msk [vmem:[#allocation2 + $0x128] sm:$0xff] %vm7912, %v7795
        %7951 = vst.msk [vmem:[#allocation2 + $0x130] sm:$0xff] %vm7912, %v7797
        %7952 = vst.msk [vmem:[#allocation2 + $0x138] sm:$0xff] %vm7912, %v7799
        %7953 = vst.msk [vmem:[#allocation2 + $0x140] sm:$0xff] %vm7912, %v7801
        %7954 = vst.msk [vmem:[#allocation2 + $0x148] sm:$0xff] %vm7912, %v7803
        %7955 = vst.msk [vmem:[#allocation2 + $0x150] sm:$0xff] %vm7912, %v7805
        %7956 = vst.msk [vmem:[#allocation2 + $0x158] sm:$0xff] %vm7912, %v7807
        %7957 = vst.msk [vmem:[#allocation2 + $0x160] sm:$0xff] %vm7912, %v7809
        %7958 = vst.msk [vmem:[#allocation2 + $0x168] sm:$0xff] %vm7912, %v7811
        %7959 = vst.msk [vmem:[#allocation2 + $0x170] sm:$0xff] %vm7912, %v7813
        %7960 = vst.msk [vmem:[#allocation2 + $0x178] sm:$0xff] %vm7912, %v7815
        %7961 = vst.msk [vmem:[#allocation2 + $0x180] sm:$0xff] %vm7912, %v7817
        %7962 = vst.msk [vmem:[#allocation2 + $0x188] sm:$0xff] %vm7912, %v7819
        %7963 = vst.msk [vmem:[#allocation2 + $0x190] sm:$0xff] %vm7912, %v7821
        %7964 = vst.msk [vmem:[#allocation2 + $0x198] sm:$0xff] %vm7912, %v7823
        %7965 = vst.msk [vmem:[#allocation2 + $0x1a0] sm:$0xff] %vm7912, %v7825
        %7966 = vst.msk [vmem:[#allocation2 + $0x1a8] sm:$0xff] %vm7912, %v7827
        %7967 = vst.msk [vmem:[#allocation2 + $0x1b0] sm:$0xff] %vm7912, %v7829
        %7968 = vst.msk [vmem:[#allocation2 + $0x1b8] sm:$0xff] %vm7912, %v7831
        %7969 = vst.msk [vmem:[#allocation2 + $0x1c0] sm:$0xff] %vm7912, %v7833
        %7970 = vst.msk [vmem:[#allocation2 + $0x1c8] sm:$0xff] %vm7912, %v7835
        %7971 = vst.msk [vmem:[#allocation2 + $0x1d0] sm:$0xff] %vm7912, %v7837
        %7972 = vst.msk [vmem:[#allocation2 + $0x1d8] sm:$0xff] %vm7912, %v7839
        %7973 = vst.msk [vmem:[#allocation2 + $0x1e0] sm:$0xff] %vm7912, %v7841
        %7974 = vst.msk [vmem:[#allocation2 + $0x1e8] sm:$0xff] %vm7912, %v7843
        %7975 = vst.msk [vmem:[#allocation2 + $0x1f0] sm:$0xff] %vm7912, %v7845
        %7976 = vst.msk [vmem:[#allocation2 + $0x1f8] sm:$0xff] %vm7912, %v7847
        %s7977 = scalar_lea.vmem %s141, 336
        %v7978 = vld [vmem:[%s7977] sm:$0xff]
        %v7979 = vld [vmem:[%s7977 + $0x10] sm:$0xff]
        %v7980 = vld [vmem:[%s7977 + $0x20] sm:$0xff]
        %v7981 = vld [vmem:[%s7977 + $0x30] sm:$0xff]
        %v7982 = vld [vmem:[%s7977 + $0x40] sm:$0xff]
        %v7983 = vld [vmem:[%s7977 + $0x50] sm:$0xff]
        %v7984 = vld [vmem:[%s7977 + $0x60] sm:$0xff]
        %v7985 = vld [vmem:[%s7977 + $0x70] sm:$0xff]
        %v7986 = vld [vmem:[%s7977 + $0xa0] sm:$0xff]
        %v7987 = vld [vmem:[%s7977 + $0xb0] sm:$0xff]
        %v7988 = vld [vmem:[%s7977 + $0xc0] sm:$0xff]
        %v7989 = vld [vmem:[%s7977 + $0xd0] sm:$0xff]
        %v7990 = vld [vmem:[%s7977 + $0xe0] sm:$0xff]
        %v7991 = vld [vmem:[%s7977 + $0xf0] sm:$0xff]
        %v7992 = vld [vmem:[%s7977 + $0x100] sm:$0xff]
        %v7993 = vld [vmem:[%s7977 + $0x110] sm:$0xff]
        %v7994 = vld [vmem:[%s7977 + $0x140] sm:$0xff]
        %v7995 = vld [vmem:[%s7977 + $0x150] sm:$0xff]
        %v7996 = vld [vmem:[%s7977 + $0x160] sm:$0xff]
        %v7997 = vld [vmem:[%s7977 + $0x170] sm:$0xff]
        %v7998 = vld [vmem:[%s7977 + $0x180] sm:$0xff]
        %v7999 = vld [vmem:[%s7977 + $0x190] sm:$0xff]
        %v8000 = vld [vmem:[%s7977 + $0x1a0] sm:$0xff]
        %v8001 = vld [vmem:[%s7977 + $0x1b0] sm:$0xff]
        %v8002 = vld [vmem:[%s7977 + $0x1e0] sm:$0xff]
        %v8003 = vld [vmem:[%s7977 + $0x1f0] sm:$0xff]
        %v8004 = vld [vmem:[%s7977 + $0x200] sm:$0xff]
        %v8005 = vld [vmem:[%s7977 + $0x210] sm:$0xff]
        %v8006 = vld [vmem:[%s7977 + $0x220] sm:$0xff]
        %v8007 = vld [vmem:[%s7977 + $0x230] sm:$0xff]
        %v8008 = vld [vmem:[%s7977 + $0x240] sm:$0xff]
        %v8009 = vld [vmem:[%s7977 + $0x250] sm:$0xff]
        %v8010 = vld [vmem:[%s7977 + $0x280] sm:$0xff]
        %v8011 = vld [vmem:[%s7977 + $0x290] sm:$0xff]
        %v8012 = vld [vmem:[%s7977 + $0x2a0] sm:$0xff]
        %v8013 = vld [vmem:[%s7977 + $0x2b0] sm:$0xff]
        %v8014 = vld [vmem:[%s7977 + $0x2c0] sm:$0xff]
        %v8015 = vld [vmem:[%s7977 + $0x2d0] sm:$0xff]
        %v8016 = vld [vmem:[%s7977 + $0x2e0] sm:$0xff]
        %v8017 = vld [vmem:[%s7977 + $0x2f0] sm:$0xff]
        %v8018 = vld [vmem:[%s7977 + $0x320] sm:$0xff]
        %v8019 = vld [vmem:[%s7977 + $0x330] sm:$0xff]
        %v8020 = vld [vmem:[%s7977 + $0x340] sm:$0xff]
        %v8021 = vld [vmem:[%s7977 + $0x350] sm:$0xff]
        %v8022 = vld [vmem:[%s7977 + $0x360] sm:$0xff]
        %v8023 = vld [vmem:[%s7977 + $0x370] sm:$0xff]
        %v8024 = vld [vmem:[%s7977 + $0x380] sm:$0xff]
        %v8025 = vld [vmem:[%s7977 + $0x390] sm:$0xff]
        %v8026 = vld [vmem:[%s7977 + $0x3c0] sm:$0xff]
        %v8027 = vld [vmem:[%s7977 + $0x3d0] sm:$0xff]
        %v8028 = vld [vmem:[%s7977 + $0x3e0] sm:$0xff]
        %v8029 = vld [vmem:[%s7977 + $0x3f0] sm:$0xff]
        %v8030 = vld [vmem:[%s7977 + $0x400] sm:$0xff]
        %v8031 = vld [vmem:[%s7977 + $0x410] sm:$0xff]
        %v8032 = vld [vmem:[%s7977 + $0x420] sm:$0xff]
        %v8033 = vld [vmem:[%s7977 + $0x430] sm:$0xff]
        %v8034 = vld [vmem:[%s7977 + $0x460] sm:$0xff]
        %v8035 = vld [vmem:[%s7977 + $0x470] sm:$0xff]
        %v8036 = vld [vmem:[%s7977 + $0x480] sm:$0xff]
        %v8037 = vld [vmem:[%s7977 + $0x490] sm:$0xff]
        %v8038 = vld [vmem:[%s7977 + $0x4a0] sm:$0xff]
        %v8039 = vld [vmem:[%s7977 + $0x4b0] sm:$0xff]
        %v8040 = vld [vmem:[%s7977 + $0x4c0] sm:$0xff]
        %v8041 = vld [vmem:[%s7977 + $0x4d0] sm:$0xff]
        %8106 = vrot.lane.b32.xlu0 %v7978, 84
        %v8107 = vpop.permute.xlu0 %8106
        %8108 = vrot.lane.b32.xlu0 %v7979, 84
        %v8109 = vpop.permute.xlu0 %8108
        %8110 = vrot.lane.b32.xlu0 %v7980, 84
        %v8111 = vpop.permute.xlu0 %8110
        %8112 = vrot.lane.b32.xlu0 %v7981, 84
        %v8113 = vpop.permute.xlu0 %8112
        %8114 = vrot.lane.b32.xlu0 %v7982, 84
        %v8115 = vpop.permute.xlu0 %8114
        %8116 = vrot.lane.b32.xlu0 %v7983, 84
        %v8117 = vpop.permute.xlu0 %8116
        %8118 = vrot.lane.b32.xlu0 %v7984, 84
        %v8119 = vpop.permute.xlu0 %8118
        %8120 = vrot.lane.b32.xlu0 %v7985, 84
        %v8121 = vpop.permute.xlu0 %8120
        %8122 = vrot.lane.b32.xlu0 %v7986, 84
        %v8123 = vpop.permute.xlu0 %8122
        %8124 = vrot.lane.b32.xlu0 %v7987, 84
        %v8125 = vpop.permute.xlu0 %8124
        %8126 = vrot.lane.b32.xlu0 %v7988, 84
        %v8127 = vpop.permute.xlu0 %8126
        %8128 = vrot.lane.b32.xlu0 %v7989, 84
        %v8129 = vpop.permute.xlu0 %8128
        %8130 = vrot.lane.b32.xlu0 %v7990, 84
        %v8131 = vpop.permute.xlu0 %8130
        %8132 = vrot.lane.b32.xlu0 %v7991, 84
        %v8133 = vpop.permute.xlu0 %8132
        %8134 = vrot.lane.b32.xlu0 %v7992, 84
        %v8135 = vpop.permute.xlu0 %8134
        %8136 = vrot.lane.b32.xlu0 %v7993, 84
        %v8137 = vpop.permute.xlu0 %8136
        %8138 = vrot.lane.b32.xlu0 %v7994, 84
        %v8139 = vpop.permute.xlu0 %8138
        %8140 = vrot.lane.b32.xlu0 %v7995, 84
        %v8141 = vpop.permute.xlu0 %8140
        %8142 = vrot.lane.b32.xlu0 %v7996, 84
        %v8143 = vpop.permute.xlu0 %8142
        %8144 = vrot.lane.b32.xlu0 %v7997, 84
        %v8145 = vpop.permute.xlu0 %8144
        %8146 = vrot.lane.b32.xlu0 %v7998, 84
        %v8147 = vpop.permute.xlu0 %8146
        %8148 = vrot.lane.b32.xlu0 %v7999, 84
        %v8149 = vpop.permute.xlu0 %8148
        %8150 = vrot.lane.b32.xlu0 %v8000, 84
        %v8151 = vpop.permute.xlu0 %8150
        %8152 = vrot.lane.b32.xlu0 %v8001, 84
        %v8153 = vpop.permute.xlu0 %8152
        %8154 = vrot.lane.b32.xlu0 %v8002, 84
        %v8155 = vpop.permute.xlu0 %8154
        %8156 = vrot.lane.b32.xlu0 %v8003, 84
        %v8157 = vpop.permute.xlu0 %8156
        %8158 = vrot.lane.b32.xlu0 %v8004, 84
        %v8159 = vpop.permute.xlu0 %8158
        %8160 = vrot.lane.b32.xlu0 %v8005, 84
        %v8161 = vpop.permute.xlu0 %8160
        %8162 = vrot.lane.b32.xlu0 %v8006, 84
        %v8163 = vpop.permute.xlu0 %8162
        %8164 = vrot.lane.b32.xlu0 %v8007, 84
        %v8165 = vpop.permute.xlu0 %8164
        %8166 = vrot.lane.b32.xlu0 %v8008, 84
        %v8167 = vpop.permute.xlu0 %8166
        %8168 = vrot.lane.b32.xlu0 %v8009, 84
        %v8169 = vpop.permute.xlu0 %8168
        %8170 = vrot.lane.b32.xlu0 %v8010, 84
        %v8171 = vpop.permute.xlu0 %8170
        %8172 = vrot.lane.b32.xlu0 %v8011, 84
        %v8173 = vpop.permute.xlu0 %8172
        %8174 = vrot.lane.b32.xlu0 %v8012, 84
        %v8175 = vpop.permute.xlu0 %8174
        %8176 = vrot.lane.b32.xlu0 %v8013, 84
        %v8177 = vpop.permute.xlu0 %8176
        %8178 = vrot.lane.b32.xlu0 %v8014, 84
        %v8179 = vpop.permute.xlu0 %8178
        %8180 = vrot.lane.b32.xlu0 %v8015, 84
        %v8181 = vpop.permute.xlu0 %8180
        %8182 = vrot.lane.b32.xlu0 %v8016, 84
        %v8183 = vpop.permute.xlu0 %8182
        %8184 = vrot.lane.b32.xlu0 %v8017, 84
        %v8185 = vpop.permute.xlu0 %8184
        %8186 = vrot.lane.b32.xlu0 %v8018, 84
        %v8187 = vpop.permute.xlu0 %8186
        %8188 = vrot.lane.b32.xlu0 %v8019, 84
        %v8189 = vpop.permute.xlu0 %8188
        %8190 = vrot.lane.b32.xlu0 %v8020, 84
        %v8191 = vpop.permute.xlu0 %8190
        %8192 = vrot.lane.b32.xlu0 %v8021, 84
        %v8193 = vpop.permute.xlu0 %8192
        %8194 = vrot.lane.b32.xlu0 %v8022, 84
        %v8195 = vpop.permute.xlu0 %8194
        %8196 = vrot.lane.b32.xlu0 %v8023, 84
        %v8197 = vpop.permute.xlu0 %8196
        %8198 = vrot.lane.b32.xlu0 %v8024, 84
        %v8199 = vpop.permute.xlu0 %8198
        %8200 = vrot.lane.b32.xlu0 %v8025, 84
        %v8201 = vpop.permute.xlu0 %8200
        %8202 = vrot.lane.b32.xlu0 %v8026, 84
        %v8203 = vpop.permute.xlu0 %8202
        %8204 = vrot.lane.b32.xlu0 %v8027, 84
        %v8205 = vpop.permute.xlu0 %8204
        %8206 = vrot.lane.b32.xlu0 %v8028, 84
        %v8207 = vpop.permute.xlu0 %8206
        %8208 = vrot.lane.b32.xlu0 %v8029, 84
        %v8209 = vpop.permute.xlu0 %8208
        %8210 = vrot.lane.b32.xlu0 %v8030, 84
        %v8211 = vpop.permute.xlu0 %8210
        %8212 = vrot.lane.b32.xlu0 %v8031, 84
        %v8213 = vpop.permute.xlu0 %8212
        %8214 = vrot.lane.b32.xlu0 %v8032, 84
        %v8215 = vpop.permute.xlu0 %8214
        %8216 = vrot.lane.b32.xlu0 %v8033, 84
        %v8217 = vpop.permute.xlu0 %8216
        %8218 = vrot.lane.b32.xlu0 %v8034, 84
        %v8219 = vpop.permute.xlu0 %8218
        %8220 = vrot.lane.b32.xlu0 %v8035, 84
        %v8221 = vpop.permute.xlu0 %8220
        %8222 = vrot.lane.b32.xlu0 %v8036, 84
        %v8223 = vpop.permute.xlu0 %8222
        %8224 = vrot.lane.b32.xlu0 %v8037, 84
        %v8225 = vpop.permute.xlu0 %8224
        %8226 = vrot.lane.b32.xlu0 %v8038, 84
        %v8227 = vpop.permute.xlu0 %8226
        %8228 = vrot.lane.b32.xlu0 %v8039, 84
        %v8229 = vpop.permute.xlu0 %8228
        %8230 = vrot.lane.b32.xlu0 %v8040, 84
        %v8231 = vpop.permute.xlu0 %8230
        %8232 = vrot.lane.b32.xlu0 %v8041, 84
        %v8233 = vpop.permute.xlu0 %8232
        %vm8298 = vcmask 720544
        %8299 = vst.msk [vmem:[#allocation2] sm:$0xff] %vm8298, %v8107
        %8300 = vst.msk [vmem:[#allocation2 + $0x8] sm:$0xff] %vm8298, %v8109
        %8301 = vst.msk [vmem:[#allocation2 + $0x10] sm:$0xff] %vm8298, %v8111
        %8302 = vst.msk [vmem:[#allocation2 + $0x18] sm:$0xff] %vm8298, %v8113
        %8303 = vst.msk [vmem:[#allocation2 + $0x20] sm:$0xff] %vm8298, %v8115
        %8304 = vst.msk [vmem:[#allocation2 + $0x28] sm:$0xff] %vm8298, %v8117
        %8305 = vst.msk [vmem:[#allocation2 + $0x30] sm:$0xff] %vm8298, %v8119
        %8306 = vst.msk [vmem:[#allocation2 + $0x38] sm:$0xff] %vm8298, %v8121
        %8307 = vst.msk [vmem:[#allocation2 + $0x40] sm:$0xff] %vm8298, %v8123
        %8308 = vst.msk [vmem:[#allocation2 + $0x48] sm:$0xff] %vm8298, %v8125
        %8309 = vst.msk [vmem:[#allocation2 + $0x50] sm:$0xff] %vm8298, %v8127
        %8310 = vst.msk [vmem:[#allocation2 + $0x58] sm:$0xff] %vm8298, %v8129
        %8311 = vst.msk [vmem:[#allocation2 + $0x60] sm:$0xff] %vm8298, %v8131
        %8312 = vst.msk [vmem:[#allocation2 + $0x68] sm:$0xff] %vm8298, %v8133
        %8313 = vst.msk [vmem:[#allocation2 + $0x70] sm:$0xff] %vm8298, %v8135
        %8314 = vst.msk [vmem:[#allocation2 + $0x78] sm:$0xff] %vm8298, %v8137
        %8315 = vst.msk [vmem:[#allocation2 + $0x80] sm:$0xff] %vm8298, %v8139
        %8316 = vst.msk [vmem:[#allocation2 + $0x88] sm:$0xff] %vm8298, %v8141
        %8317 = vst.msk [vmem:[#allocation2 + $0x90] sm:$0xff] %vm8298, %v8143
        %8318 = vst.msk [vmem:[#allocation2 + $0x98] sm:$0xff] %vm8298, %v8145
        %8319 = vst.msk [vmem:[#allocation2 + $0xa0] sm:$0xff] %vm8298, %v8147
        %8320 = vst.msk [vmem:[#allocation2 + $0xa8] sm:$0xff] %vm8298, %v8149
        %8321 = vst.msk [vmem:[#allocation2 + $0xb0] sm:$0xff] %vm8298, %v8151
        %8322 = vst.msk [vmem:[#allocation2 + $0xb8] sm:$0xff] %vm8298, %v8153
        %8323 = vst.msk [vmem:[#allocation2 + $0xc0] sm:$0xff] %vm8298, %v8155
        %8324 = vst.msk [vmem:[#allocation2 + $0xc8] sm:$0xff] %vm8298, %v8157
        %8325 = vst.msk [vmem:[#allocation2 + $0xd0] sm:$0xff] %vm8298, %v8159
        %8326 = vst.msk [vmem:[#allocation2 + $0xd8] sm:$0xff] %vm8298, %v8161
        %8327 = vst.msk [vmem:[#allocation2 + $0xe0] sm:$0xff] %vm8298, %v8163
        %8328 = vst.msk [vmem:[#allocation2 + $0xe8] sm:$0xff] %vm8298, %v8165
        %8329 = vst.msk [vmem:[#allocation2 + $0xf0] sm:$0xff] %vm8298, %v8167
        %8330 = vst.msk [vmem:[#allocation2 + $0xf8] sm:$0xff] %vm8298, %v8169
        %8331 = vst.msk [vmem:[#allocation2 + $0x100] sm:$0xff] %vm8298, %v8171
        %8332 = vst.msk [vmem:[#allocation2 + $0x108] sm:$0xff] %vm8298, %v8173
        %8333 = vst.msk [vmem:[#allocation2 + $0x110] sm:$0xff] %vm8298, %v8175
        %8334 = vst.msk [vmem:[#allocation2 + $0x118] sm:$0xff] %vm8298, %v8177
        %8335 = vst.msk [vmem:[#allocation2 + $0x120] sm:$0xff] %vm8298, %v8179
        %8336 = vst.msk [vmem:[#allocation2 + $0x128] sm:$0xff] %vm8298, %v8181
        %8337 = vst.msk [vmem:[#allocation2 + $0x130] sm:$0xff] %vm8298, %v8183
        %8338 = vst.msk [vmem:[#allocation2 + $0x138] sm:$0xff] %vm8298, %v8185
        %8339 = vst.msk [vmem:[#allocation2 + $0x140] sm:$0xff] %vm8298, %v8187
        %8340 = vst.msk [vmem:[#allocation2 + $0x148] sm:$0xff] %vm8298, %v8189
        %8341 = vst.msk [vmem:[#allocation2 + $0x150] sm:$0xff] %vm8298, %v8191
        %8342 = vst.msk [vmem:[#allocation2 + $0x158] sm:$0xff] %vm8298, %v8193
        %8343 = vst.msk [vmem:[#allocation2 + $0x160] sm:$0xff] %vm8298, %v8195
        %8344 = vst.msk [vmem:[#allocation2 + $0x168] sm:$0xff] %vm8298, %v8197
        %8345 = vst.msk [vmem:[#allocation2 + $0x170] sm:$0xff] %vm8298, %v8199
        %8346 = vst.msk [vmem:[#allocation2 + $0x178] sm:$0xff] %vm8298, %v8201
        %8347 = vst.msk [vmem:[#allocation2 + $0x180] sm:$0xff] %vm8298, %v8203
        %8348 = vst.msk [vmem:[#allocation2 + $0x188] sm:$0xff] %vm8298, %v8205
        %8349 = vst.msk [vmem:[#allocation2 + $0x190] sm:$0xff] %vm8298, %v8207
        %8350 = vst.msk [vmem:[#allocation2 + $0x198] sm:$0xff] %vm8298, %v8209
        %8351 = vst.msk [vmem:[#allocation2 + $0x1a0] sm:$0xff] %vm8298, %v8211
        %8352 = vst.msk [vmem:[#allocation2 + $0x1a8] sm:$0xff] %vm8298, %v8213
        %8353 = vst.msk [vmem:[#allocation2 + $0x1b0] sm:$0xff] %vm8298, %v8215
        %8354 = vst.msk [vmem:[#allocation2 + $0x1b8] sm:$0xff] %vm8298, %v8217
        %8355 = vst.msk [vmem:[#allocation2 + $0x1c0] sm:$0xff] %vm8298, %v8219
        %8356 = vst.msk [vmem:[#allocation2 + $0x1c8] sm:$0xff] %vm8298, %v8221
        %8357 = vst.msk [vmem:[#allocation2 + $0x1d0] sm:$0xff] %vm8298, %v8223
        %8358 = vst.msk [vmem:[#allocation2 + $0x1d8] sm:$0xff] %vm8298, %v8225
        %8359 = vst.msk [vmem:[#allocation2 + $0x1e0] sm:$0xff] %vm8298, %v8227
        %8360 = vst.msk [vmem:[#allocation2 + $0x1e8] sm:$0xff] %vm8298, %v8229
        %8361 = vst.msk [vmem:[#allocation2 + $0x1f0] sm:$0xff] %vm8298, %v8231
        %8362 = vst.msk [vmem:[#allocation2 + $0x1f8] sm:$0xff] %vm8298, %v8233
        %v8363 = vld [vmem:[%s7977 + $0x1] sm:$0xff]
        %v8364 = vld [vmem:[%s7977 + $0x11] sm:$0xff]
        %v8365 = vld [vmem:[%s7977 + $0x21] sm:$0xff]
        %v8366 = vld [vmem:[%s7977 + $0x31] sm:$0xff]
        %v8367 = vld [vmem:[%s7977 + $0x41] sm:$0xff]
        %v8368 = vld [vmem:[%s7977 + $0x51] sm:$0xff]
        %v8369 = vld [vmem:[%s7977 + $0x61] sm:$0xff]
        %v8370 = vld [vmem:[%s7977 + $0x71] sm:$0xff]
        %v8371 = vld [vmem:[%s7977 + $0xa1] sm:$0xff]
        %v8372 = vld [vmem:[%s7977 + $0xb1] sm:$0xff]
        %v8373 = vld [vmem:[%s7977 + $0xc1] sm:$0xff]
        %v8374 = vld [vmem:[%s7977 + $0xd1] sm:$0xff]
        %v8375 = vld [vmem:[%s7977 + $0xe1] sm:$0xff]
        %v8376 = vld [vmem:[%s7977 + $0xf1] sm:$0xff]
        %v8377 = vld [vmem:[%s7977 + $0x101] sm:$0xff]
        %v8378 = vld [vmem:[%s7977 + $0x111] sm:$0xff]
        %v8379 = vld [vmem:[%s7977 + $0x141] sm:$0xff]
        %v8380 = vld [vmem:[%s7977 + $0x151] sm:$0xff]
        %v8381 = vld [vmem:[%s7977 + $0x161] sm:$0xff]
        %v8382 = vld [vmem:[%s7977 + $0x171] sm:$0xff]
        %v8383 = vld [vmem:[%s7977 + $0x181] sm:$0xff]
        %v8384 = vld [vmem:[%s7977 + $0x191] sm:$0xff]
        %v8385 = vld [vmem:[%s7977 + $0x1a1] sm:$0xff]
        %v8386 = vld [vmem:[%s7977 + $0x1b1] sm:$0xff]
        %v8387 = vld [vmem:[%s7977 + $0x1e1] sm:$0xff]
        %v8388 = vld [vmem:[%s7977 + $0x1f1] sm:$0xff]
        %v8389 = vld [vmem:[%s7977 + $0x201] sm:$0xff]
        %v8390 = vld [vmem:[%s7977 + $0x211] sm:$0xff]
        %v8391 = vld [vmem:[%s7977 + $0x221] sm:$0xff]
        %v8392 = vld [vmem:[%s7977 + $0x231] sm:$0xff]
        %v8393 = vld [vmem:[%s7977 + $0x241] sm:$0xff]
        %v8394 = vld [vmem:[%s7977 + $0x251] sm:$0xff]
        %v8395 = vld [vmem:[%s7977 + $0x281] sm:$0xff]
        %v8396 = vld [vmem:[%s7977 + $0x291] sm:$0xff]
        %v8397 = vld [vmem:[%s7977 + $0x2a1] sm:$0xff]
        %v8398 = vld [vmem:[%s7977 + $0x2b1] sm:$0xff]
        %v8399 = vld [vmem:[%s7977 + $0x2c1] sm:$0xff]
        %v8400 = vld [vmem:[%s7977 + $0x2d1] sm:$0xff]
        %v8401 = vld [vmem:[%s7977 + $0x2e1] sm:$0xff]
        %v8402 = vld [vmem:[%s7977 + $0x2f1] sm:$0xff]
        %v8403 = vld [vmem:[%s7977 + $0x321] sm:$0xff]
        %v8404 = vld [vmem:[%s7977 + $0x331] sm:$0xff]
        %v8405 = vld [vmem:[%s7977 + $0x341] sm:$0xff]
        %v8406 = vld [vmem:[%s7977 + $0x351] sm:$0xff]
        %v8407 = vld [vmem:[%s7977 + $0x361] sm:$0xff]
        %v8408 = vld [vmem:[%s7977 + $0x371] sm:$0xff]
        %v8409 = vld [vmem:[%s7977 + $0x381] sm:$0xff]
        %v8410 = vld [vmem:[%s7977 + $0x391] sm:$0xff]
        %v8411 = vld [vmem:[%s7977 + $0x3c1] sm:$0xff]
        %v8412 = vld [vmem:[%s7977 + $0x3d1] sm:$0xff]
        %v8413 = vld [vmem:[%s7977 + $0x3e1] sm:$0xff]
        %v8414 = vld [vmem:[%s7977 + $0x3f1] sm:$0xff]
        %v8415 = vld [vmem:[%s7977 + $0x401] sm:$0xff]
        %v8416 = vld [vmem:[%s7977 + $0x411] sm:$0xff]
        %v8417 = vld [vmem:[%s7977 + $0x421] sm:$0xff]
        %v8418 = vld [vmem:[%s7977 + $0x431] sm:$0xff]
        %v8419 = vld [vmem:[%s7977 + $0x461] sm:$0xff]
        %v8420 = vld [vmem:[%s7977 + $0x471] sm:$0xff]
        %v8421 = vld [vmem:[%s7977 + $0x481] sm:$0xff]
        %v8422 = vld [vmem:[%s7977 + $0x491] sm:$0xff]
        %v8423 = vld [vmem:[%s7977 + $0x4a1] sm:$0xff]
        %v8424 = vld [vmem:[%s7977 + $0x4b1] sm:$0xff]
        %v8425 = vld [vmem:[%s7977 + $0x4c1] sm:$0xff]
        %v8426 = vld [vmem:[%s7977 + $0x4d1] sm:$0xff]
        %8491 = vrot.lane.b32.xlu0 %v8363, 88
        %v8492 = vpop.permute.xlu0 %8491
        %8493 = vrot.lane.b32.xlu0 %v8364, 88
        %v8494 = vpop.permute.xlu0 %8493
        %8495 = vrot.lane.b32.xlu0 %v8365, 88
        %v8496 = vpop.permute.xlu0 %8495
        %8497 = vrot.lane.b32.xlu0 %v8366, 88
        %v8498 = vpop.permute.xlu0 %8497
        %8499 = vrot.lane.b32.xlu0 %v8367, 88
        %v8500 = vpop.permute.xlu0 %8499
        %8501 = vrot.lane.b32.xlu0 %v8368, 88
        %v8502 = vpop.permute.xlu0 %8501
        %8503 = vrot.lane.b32.xlu0 %v8369, 88
        %v8504 = vpop.permute.xlu0 %8503
        %8505 = vrot.lane.b32.xlu0 %v8370, 88
        %v8506 = vpop.permute.xlu0 %8505
        %8507 = vrot.lane.b32.xlu0 %v8371, 88
        %v8508 = vpop.permute.xlu0 %8507
        %8509 = vrot.lane.b32.xlu0 %v8372, 88
        %v8510 = vpop.permute.xlu0 %8509
        %8511 = vrot.lane.b32.xlu0 %v8373, 88
        %v8512 = vpop.permute.xlu0 %8511
        %8513 = vrot.lane.b32.xlu0 %v8374, 88
        %v8514 = vpop.permute.xlu0 %8513
        %8515 = vrot.lane.b32.xlu0 %v8375, 88
        %v8516 = vpop.permute.xlu0 %8515
        %8517 = vrot.lane.b32.xlu0 %v8376, 88
        %v8518 = vpop.permute.xlu0 %8517
        %8519 = vrot.lane.b32.xlu0 %v8377, 88
        %v8520 = vpop.permute.xlu0 %8519
        %8521 = vrot.lane.b32.xlu0 %v8378, 88
        %v8522 = vpop.permute.xlu0 %8521
        %8523 = vrot.lane.b32.xlu0 %v8379, 88
        %v8524 = vpop.permute.xlu0 %8523
        %8525 = vrot.lane.b32.xlu0 %v8380, 88
        %v8526 = vpop.permute.xlu0 %8525
        %8527 = vrot.lane.b32.xlu0 %v8381, 88
        %v8528 = vpop.permute.xlu0 %8527
        %8529 = vrot.lane.b32.xlu0 %v8382, 88
        %v8530 = vpop.permute.xlu0 %8529
        %8531 = vrot.lane.b32.xlu0 %v8383, 88
        %v8532 = vpop.permute.xlu0 %8531
        %8533 = vrot.lane.b32.xlu0 %v8384, 88
        %v8534 = vpop.permute.xlu0 %8533
        %8535 = vrot.lane.b32.xlu0 %v8385, 88
        %v8536 = vpop.permute.xlu0 %8535
        %8537 = vrot.lane.b32.xlu0 %v8386, 88
        %v8538 = vpop.permute.xlu0 %8537
        %8539 = vrot.lane.b32.xlu0 %v8387, 88
        %v8540 = vpop.permute.xlu0 %8539
        %8541 = vrot.lane.b32.xlu0 %v8388, 88
        %v8542 = vpop.permute.xlu0 %8541
        %8543 = vrot.lane.b32.xlu0 %v8389, 88
        %v8544 = vpop.permute.xlu0 %8543
        %8545 = vrot.lane.b32.xlu0 %v8390, 88
        %v8546 = vpop.permute.xlu0 %8545
        %8547 = vrot.lane.b32.xlu0 %v8391, 88
        %v8548 = vpop.permute.xlu0 %8547
        %8549 = vrot.lane.b32.xlu0 %v8392, 88
        %v8550 = vpop.permute.xlu0 %8549
        %8551 = vrot.lane.b32.xlu0 %v8393, 88
        %v8552 = vpop.permute.xlu0 %8551
        %8553 = vrot.lane.b32.xlu0 %v8394, 88
        %v8554 = vpop.permute.xlu0 %8553
        %8555 = vrot.lane.b32.xlu0 %v8395, 88
        %v8556 = vpop.permute.xlu0 %8555
        %8557 = vrot.lane.b32.xlu0 %v8396, 88
        %v8558 = vpop.permute.xlu0 %8557
        %8559 = vrot.lane.b32.xlu0 %v8397, 88
        %v8560 = vpop.permute.xlu0 %8559
        %8561 = vrot.lane.b32.xlu0 %v8398, 88
        %v8562 = vpop.permute.xlu0 %8561
        %8563 = vrot.lane.b32.xlu0 %v8399, 88
        %v8564 = vpop.permute.xlu0 %8563
        %8565 = vrot.lane.b32.xlu0 %v8400, 88
        %v8566 = vpop.permute.xlu0 %8565
        %8567 = vrot.lane.b32.xlu0 %v8401, 88
        %v8568 = vpop.permute.xlu0 %8567
        %8569 = vrot.lane.b32.xlu0 %v8402, 88
        %v8570 = vpop.permute.xlu0 %8569
        %8571 = vrot.lane.b32.xlu0 %v8403, 88
        %v8572 = vpop.permute.xlu0 %8571
        %8573 = vrot.lane.b32.xlu0 %v8404, 88
        %v8574 = vpop.permute.xlu0 %8573
        %8575 = vrot.lane.b32.xlu0 %v8405, 88
        %v8576 = vpop.permute.xlu0 %8575
        %8577 = vrot.lane.b32.xlu0 %v8406, 88
        %v8578 = vpop.permute.xlu0 %8577
        %8579 = vrot.lane.b32.xlu0 %v8407, 88
        %v8580 = vpop.permute.xlu0 %8579
        %8581 = vrot.lane.b32.xlu0 %v8408, 88
        %v8582 = vpop.permute.xlu0 %8581
        %8583 = vrot.lane.b32.xlu0 %v8409, 88
        %v8584 = vpop.permute.xlu0 %8583
        %8585 = vrot.lane.b32.xlu0 %v8410, 88
        %v8586 = vpop.permute.xlu0 %8585
        %8587 = vrot.lane.b32.xlu0 %v8411, 88
        %v8588 = vpop.permute.xlu0 %8587
        %8589 = vrot.lane.b32.xlu0 %v8412, 88
        %v8590 = vpop.permute.xlu0 %8589
        %8591 = vrot.lane.b32.xlu0 %v8413, 88
        %v8592 = vpop.permute.xlu0 %8591
        %8593 = vrot.lane.b32.xlu0 %v8414, 88
        %v8594 = vpop.permute.xlu0 %8593
        %8595 = vrot.lane.b32.xlu0 %v8415, 88
        %v8596 = vpop.permute.xlu0 %8595
        %8597 = vrot.lane.b32.xlu0 %v8416, 88
        %v8598 = vpop.permute.xlu0 %8597
        %8599 = vrot.lane.b32.xlu0 %v8417, 88
        %v8600 = vpop.permute.xlu0 %8599
        %8601 = vrot.lane.b32.xlu0 %v8418, 88
        %v8602 = vpop.permute.xlu0 %8601
        %8603 = vrot.lane.b32.xlu0 %v8419, 88
        %v8604 = vpop.permute.xlu0 %8603
        %8605 = vrot.lane.b32.xlu0 %v8420, 88
        %v8606 = vpop.permute.xlu0 %8605
        %8607 = vrot.lane.b32.xlu0 %v8421, 88
        %v8608 = vpop.permute.xlu0 %8607
        %8609 = vrot.lane.b32.xlu0 %v8422, 88
        %v8610 = vpop.permute.xlu0 %8609
        %8611 = vrot.lane.b32.xlu0 %v8423, 88
        %v8612 = vpop.permute.xlu0 %8611
        %8613 = vrot.lane.b32.xlu0 %v8424, 88
        %v8614 = vpop.permute.xlu0 %8613
        %8615 = vrot.lane.b32.xlu0 %v8425, 88
        %v8616 = vpop.permute.xlu0 %8615
        %8617 = vrot.lane.b32.xlu0 %v8426, 88
        %v8618 = vpop.permute.xlu0 %8617
        %vm8683 = vcmask 753344
        %8684 = vst.msk [vmem:[#allocation2] sm:$0xff] %vm8683, %v8492
        %8685 = vst.msk [vmem:[#allocation2 + $0x8] sm:$0xff] %vm8683, %v8494
        %8686 = vst.msk [vmem:[#allocation2 + $0x10] sm:$0xff] %vm8683, %v8496
        %8687 = vst.msk [vmem:[#allocation2 + $0x18] sm:$0xff] %vm8683, %v8498
        %8688 = vst.msk [vmem:[#allocation2 + $0x20] sm:$0xff] %vm8683, %v8500
        %8689 = vst.msk [vmem:[#allocation2 + $0x28] sm:$0xff] %vm8683, %v8502
        %8690 = vst.msk [vmem:[#allocation2 + $0x30] sm:$0xff] %vm8683, %v8504
        %8691 = vst.msk [vmem:[#allocation2 + $0x38] sm:$0xff] %vm8683, %v8506
        %8692 = vst.msk [vmem:[#allocation2 + $0x40] sm:$0xff] %vm8683, %v8508
        %8693 = vst.msk [vmem:[#allocation2 + $0x48] sm:$0xff] %vm8683, %v8510
        %8694 = vst.msk [vmem:[#allocation2 + $0x50] sm:$0xff] %vm8683, %v8512
        %8695 = vst.msk [vmem:[#allocation2 + $0x58] sm:$0xff] %vm8683, %v8514
        %8696 = vst.msk [vmem:[#allocation2 + $0x60] sm:$0xff] %vm8683, %v8516
        %8697 = vst.msk [vmem:[#allocation2 + $0x68] sm:$0xff] %vm8683, %v8518
        %8698 = vst.msk [vmem:[#allocation2 + $0x70] sm:$0xff] %vm8683, %v8520
        %8699 = vst.msk [vmem:[#allocation2 + $0x78] sm:$0xff] %vm8683, %v8522
        %8700 = vst.msk [vmem:[#allocation2 + $0x80] sm:$0xff] %vm8683, %v8524
        %8701 = vst.msk [vmem:[#allocation2 + $0x88] sm:$0xff] %vm8683, %v8526
        %8702 = vst.msk [vmem:[#allocation2 + $0x90] sm:$0xff] %vm8683, %v8528
        %8703 = vst.msk [vmem:[#allocation2 + $0x98] sm:$0xff] %vm8683, %v8530
        %8704 = vst.msk [vmem:[#allocation2 + $0xa0] sm:$0xff] %vm8683, %v8532
        %8705 = vst.msk [vmem:[#allocation2 + $0xa8] sm:$0xff] %vm8683, %v8534
        %8706 = vst.msk [vmem:[#allocation2 + $0xb0] sm:$0xff] %vm8683, %v8536
        %8707 = vst.msk [vmem:[#allocation2 + $0xb8] sm:$0xff] %vm8683, %v8538
        %8708 = vst.msk [vmem:[#allocation2 + $0xc0] sm:$0xff] %vm8683, %v8540
        %8709 = vst.msk [vmem:[#allocation2 + $0xc8] sm:$0xff] %vm8683, %v8542
        %8710 = vst.msk [vmem:[#allocation2 + $0xd0] sm:$0xff] %vm8683, %v8544
        %8711 = vst.msk [vmem:[#allocation2 + $0xd8] sm:$0xff] %vm8683, %v8546
        %8712 = vst.msk [vmem:[#allocation2 + $0xe0] sm:$0xff] %vm8683, %v8548
        %8713 = vst.msk [vmem:[#allocation2 + $0xe8] sm:$0xff] %vm8683, %v8550
        %8714 = vst.msk [vmem:[#allocation2 + $0xf0] sm:$0xff] %vm8683, %v8552
        %8715 = vst.msk [vmem:[#allocation2 + $0xf8] sm:$0xff] %vm8683, %v8554
        %8716 = vst.msk [vmem:[#allocation2 + $0x100] sm:$0xff] %vm8683, %v8556
        %8717 = vst.msk [vmem:[#allocation2 + $0x108] sm:$0xff] %vm8683, %v8558
        %8718 = vst.msk [vmem:[#allocation2 + $0x110] sm:$0xff] %vm8683, %v8560
        %8719 = vst.msk [vmem:[#allocation2 + $0x118] sm:$0xff] %vm8683, %v8562
        %8720 = vst.msk [vmem:[#allocation2 + $0x120] sm:$0xff] %vm8683, %v8564
        %8721 = vst.msk [vmem:[#allocation2 + $0x128] sm:$0xff] %vm8683, %v8566
        %8722 = vst.msk [vmem:[#allocation2 + $0x130] sm:$0xff] %vm8683, %v8568
        %8723 = vst.msk [vmem:[#allocation2 + $0x138] sm:$0xff] %vm8683, %v8570
        %8724 = vst.msk [vmem:[#allocation2 + $0x140] sm:$0xff] %vm8683, %v8572
        %8725 = vst.msk [vmem:[#allocation2 + $0x148] sm:$0xff] %vm8683, %v8574
        %8726 = vst.msk [vmem:[#allocation2 + $0x150] sm:$0xff] %vm8683, %v8576
        %8727 = vst.msk [vmem:[#allocation2 + $0x158] sm:$0xff] %vm8683, %v8578
        %8728 = vst.msk [vmem:[#allocation2 + $0x160] sm:$0xff] %vm8683, %v8580
        %8729 = vst.msk [vmem:[#allocation2 + $0x168] sm:$0xff] %vm8683, %v8582
        %8730 = vst.msk [vmem:[#allocation2 + $0x170] sm:$0xff] %vm8683, %v8584
        %8731 = vst.msk [vmem:[#allocation2 + $0x178] sm:$0xff] %vm8683, %v8586
        %8732 = vst.msk [vmem:[#allocation2 + $0x180] sm:$0xff] %vm8683, %v8588
        %8733 = vst.msk [vmem:[#allocation2 + $0x188] sm:$0xff] %vm8683, %v8590
        %8734 = vst.msk [vmem:[#allocation2 + $0x190] sm:$0xff] %vm8683, %v8592
        %8735 = vst.msk [vmem:[#allocation2 + $0x198] sm:$0xff] %vm8683, %v8594
        %8736 = vst.msk [vmem:[#allocation2 + $0x1a0] sm:$0xff] %vm8683, %v8596
        %8737 = vst.msk [vmem:[#allocation2 + $0x1a8] sm:$0xff] %vm8683, %v8598
        %8738 = vst.msk [vmem:[#allocation2 + $0x1b0] sm:$0xff] %vm8683, %v8600
        %8739 = vst.msk [vmem:[#allocation2 + $0x1b8] sm:$0xff] %vm8683, %v8602
        %8740 = vst.msk [vmem:[#allocation2 + $0x1c0] sm:$0xff] %vm8683, %v8604
        %8741 = vst.msk [vmem:[#allocation2 + $0x1c8] sm:$0xff] %vm8683, %v8606
        %8742 = vst.msk [vmem:[#allocation2 + $0x1d0] sm:$0xff] %vm8683, %v8608
        %8743 = vst.msk [vmem:[#allocation2 + $0x1d8] sm:$0xff] %vm8683, %v8610
        %8744 = vst.msk [vmem:[#allocation2 + $0x1e0] sm:$0xff] %vm8683, %v8612
        %8745 = vst.msk [vmem:[#allocation2 + $0x1e8] sm:$0xff] %vm8683, %v8614
        %8746 = vst.msk [vmem:[#allocation2 + $0x1f0] sm:$0xff] %vm8683, %v8616
        %8747 = vst.msk [vmem:[#allocation2 + $0x1f8] sm:$0xff] %vm8683, %v8618
        %v8748 = vld [vmem:[%s7977 + $0x2] sm:$0xff]
        %v8749 = vld [vmem:[%s7977 + $0x12] sm:$0xff]
        %v8750 = vld [vmem:[%s7977 + $0x22] sm:$0xff]
        %v8751 = vld [vmem:[%s7977 + $0x32] sm:$0xff]
        %v8752 = vld [vmem:[%s7977 + $0x42] sm:$0xff]
        %v8753 = vld [vmem:[%s7977 + $0x52] sm:$0xff]
        %v8754 = vld [vmem:[%s7977 + $0x62] sm:$0xff]
        %v8755 = vld [vmem:[%s7977 + $0x72] sm:$0xff]
        %v8756 = vld [vmem:[%s7977 + $0xa2] sm:$0xff]
        %v8757 = vld [vmem:[%s7977 + $0xb2] sm:$0xff]
        %v8758 = vld [vmem:[%s7977 + $0xc2] sm:$0xff]
        %v8759 = vld [vmem:[%s7977 + $0xd2] sm:$0xff]
        %v8760 = vld [vmem:[%s7977 + $0xe2] sm:$0xff]
        %v8761 = vld [vmem:[%s7977 + $0xf2] sm:$0xff]
        %v8762 = vld [vmem:[%s7977 + $0x102] sm:$0xff]
        %v8763 = vld [vmem:[%s7977 + $0x112] sm:$0xff]
        %v8764 = vld [vmem:[%s7977 + $0x142] sm:$0xff]
        %v8765 = vld [vmem:[%s7977 + $0x152] sm:$0xff]
        %v8766 = vld [vmem:[%s7977 + $0x162] sm:$0xff]
        %v8767 = vld [vmem:[%s7977 + $0x172] sm:$0xff]
        %v8768 = vld [vmem:[%s7977 + $0x182] sm:$0xff]
        %v8769 = vld [vmem:[%s7977 + $0x192] sm:$0xff]
        %v8770 = vld [vmem:[%s7977 + $0x1a2] sm:$0xff]
        %v8771 = vld [vmem:[%s7977 + $0x1b2] sm:$0xff]
        %v8772 = vld [vmem:[%s7977 + $0x1e2] sm:$0xff]
        %v8773 = vld [vmem:[%s7977 + $0x1f2] sm:$0xff]
        %v8774 = vld [vmem:[%s7977 + $0x202] sm:$0xff]
        %v8775 = vld [vmem:[%s7977 + $0x212] sm:$0xff]
        %v8776 = vld [vmem:[%s7977 + $0x222] sm:$0xff]
        %v8777 = vld [vmem:[%s7977 + $0x232] sm:$0xff]
        %v8778 = vld [vmem:[%s7977 + $0x242] sm:$0xff]
        %v8779 = vld [vmem:[%s7977 + $0x252] sm:$0xff]
        %v8780 = vld [vmem:[%s7977 + $0x282] sm:$0xff]
        %v8781 = vld [vmem:[%s7977 + $0x292] sm:$0xff]
        %v8782 = vld [vmem:[%s7977 + $0x2a2] sm:$0xff]
        %v8783 = vld [vmem:[%s7977 + $0x2b2] sm:$0xff]
        %v8784 = vld [vmem:[%s7977 + $0x2c2] sm:$0xff]
        %v8785 = vld [vmem:[%s7977 + $0x2d2] sm:$0xff]
        %v8786 = vld [vmem:[%s7977 + $0x2e2] sm:$0xff]
        %v8787 = vld [vmem:[%s7977 + $0x2f2] sm:$0xff]
        %v8788 = vld [vmem:[%s7977 + $0x322] sm:$0xff]
        %v8789 = vld [vmem:[%s7977 + $0x332] sm:$0xff]
        %v8790 = vld [vmem:[%s7977 + $0x342] sm:$0xff]
        %v8791 = vld [vmem:[%s7977 + $0x352] sm:$0xff]
        %v8792 = vld [vmem:[%s7977 + $0x362] sm:$0xff]
        %v8793 = vld [vmem:[%s7977 + $0x372] sm:$0xff]
        %v8794 = vld [vmem:[%s7977 + $0x382] sm:$0xff]
        %v8795 = vld [vmem:[%s7977 + $0x392] sm:$0xff]
        %v8796 = vld [vmem:[%s7977 + $0x3c2] sm:$0xff]
        %v8797 = vld [vmem:[%s7977 + $0x3d2] sm:$0xff]
        %v8798 = vld [vmem:[%s7977 + $0x3e2] sm:$0xff]
        %v8799 = vld [vmem:[%s7977 + $0x3f2] sm:$0xff]
        %v8800 = vld [vmem:[%s7977 + $0x402] sm:$0xff]
        %v8801 = vld [vmem:[%s7977 + $0x412] sm:$0xff]
        %v8802 = vld [vmem:[%s7977 + $0x422] sm:$0xff]
        %v8803 = vld [vmem:[%s7977 + $0x432] sm:$0xff]
        %v8804 = vld [vmem:[%s7977 + $0x462] sm:$0xff]
        %v8805 = vld [vmem:[%s7977 + $0x472] sm:$0xff]
        %v8806 = vld [vmem:[%s7977 + $0x482] sm:$0xff]
        %v8807 = vld [vmem:[%s7977 + $0x492] sm:$0xff]
        %v8808 = vld [vmem:[%s7977 + $0x4a2] sm:$0xff]
        %v8809 = vld [vmem:[%s7977 + $0x4b2] sm:$0xff]
        %v8810 = vld [vmem:[%s7977 + $0x4c2] sm:$0xff]
        %v8811 = vld [vmem:[%s7977 + $0x4d2] sm:$0xff]
        %8876 = vrot.lane.b32.xlu0 %v8748, 92
        %v8877 = vpop.permute.xlu0 %8876
        %8878 = vrot.lane.b32.xlu0 %v8749, 92
        %v8879 = vpop.permute.xlu0 %8878
        %8880 = vrot.lane.b32.xlu0 %v8750, 92
        %v8881 = vpop.permute.xlu0 %8880
        %8882 = vrot.lane.b32.xlu0 %v8751, 92
        %v8883 = vpop.permute.xlu0 %8882
        %8884 = vrot.lane.b32.xlu0 %v8752, 92
        %v8885 = vpop.permute.xlu0 %8884
        %8886 = vrot.lane.b32.xlu0 %v8753, 92
        %v8887 = vpop.permute.xlu0 %8886
        %8888 = vrot.lane.b32.xlu0 %v8754, 92
        %v8889 = vpop.permute.xlu0 %8888
        %8890 = vrot.lane.b32.xlu0 %v8755, 92
        %v8891 = vpop.permute.xlu0 %8890
        %8892 = vrot.lane.b32.xlu0 %v8756, 92
        %v8893 = vpop.permute.xlu0 %8892
        %8894 = vrot.lane.b32.xlu0 %v8757, 92
        %v8895 = vpop.permute.xlu0 %8894
        %8896 = vrot.lane.b32.xlu0 %v8758, 92
        %v8897 = vpop.permute.xlu0 %8896
        %8898 = vrot.lane.b32.xlu0 %v8759, 92
        %v8899 = vpop.permute.xlu0 %8898
        %8900 = vrot.lane.b32.xlu0 %v8760, 92
        %v8901 = vpop.permute.xlu0 %8900
        %8902 = vrot.lane.b32.xlu0 %v8761, 92
        %v8903 = vpop.permute.xlu0 %8902
        %8904 = vrot.lane.b32.xlu0 %v8762, 92
        %v8905 = vpop.permute.xlu0 %8904
        %8906 = vrot.lane.b32.xlu0 %v8763, 92
        %v8907 = vpop.permute.xlu0 %8906
        %8908 = vrot.lane.b32.xlu0 %v8764, 92
        %v8909 = vpop.permute.xlu0 %8908
        %8910 = vrot.lane.b32.xlu0 %v8765, 92
        %v8911 = vpop.permute.xlu0 %8910
        %8912 = vrot.lane.b32.xlu0 %v8766, 92
        %v8913 = vpop.permute.xlu0 %8912
        %8914 = vrot.lane.b32.xlu0 %v8767, 92
        %v8915 = vpop.permute.xlu0 %8914
        %8916 = vrot.lane.b32.xlu0 %v8768, 92
        %v8917 = vpop.permute.xlu0 %8916
        %8918 = vrot.lane.b32.xlu0 %v8769, 92
        %v8919 = vpop.permute.xlu0 %8918
        %8920 = vrot.lane.b32.xlu0 %v8770, 92
        %v8921 = vpop.permute.xlu0 %8920
        %8922 = vrot.lane.b32.xlu0 %v8771, 92
        %v8923 = vpop.permute.xlu0 %8922
        %8924 = vrot.lane.b32.xlu0 %v8772, 92
        %v8925 = vpop.permute.xlu0 %8924
        %8926 = vrot.lane.b32.xlu0 %v8773, 92
        %v8927 = vpop.permute.xlu0 %8926
        %8928 = vrot.lane.b32.xlu0 %v8774, 92
        %v8929 = vpop.permute.xlu0 %8928
        %8930 = vrot.lane.b32.xlu0 %v8775, 92
        %v8931 = vpop.permute.xlu0 %8930
        %8932 = vrot.lane.b32.xlu0 %v8776, 92
        %v8933 = vpop.permute.xlu0 %8932
        %8934 = vrot.lane.b32.xlu0 %v8777, 92
        %v8935 = vpop.permute.xlu0 %8934
        %8936 = vrot.lane.b32.xlu0 %v8778, 92
        %v8937 = vpop.permute.xlu0 %8936
        %8938 = vrot.lane.b32.xlu0 %v8779, 92
        %v8939 = vpop.permute.xlu0 %8938
        %8940 = vrot.lane.b32.xlu0 %v8780, 92
        %v8941 = vpop.permute.xlu0 %8940
        %8942 = vrot.lane.b32.xlu0 %v8781, 92
        %v8943 = vpop.permute.xlu0 %8942
        %8944 = vrot.lane.b32.xlu0 %v8782, 92
        %v8945 = vpop.permute.xlu0 %8944
        %8946 = vrot.lane.b32.xlu0 %v8783, 92
        %v8947 = vpop.permute.xlu0 %8946
        %8948 = vrot.lane.b32.xlu0 %v8784, 92
        %v8949 = vpop.permute.xlu0 %8948
        %8950 = vrot.lane.b32.xlu0 %v8785, 92
        %v8951 = vpop.permute.xlu0 %8950
        %8952 = vrot.lane.b32.xlu0 %v8786, 92
        %v8953 = vpop.permute.xlu0 %8952
        %8954 = vrot.lane.b32.xlu0 %v8787, 92
        %v8955 = vpop.permute.xlu0 %8954
        %8956 = vrot.lane.b32.xlu0 %v8788, 92
        %v8957 = vpop.permute.xlu0 %8956
        %8958 = vrot.lane.b32.xlu0 %v8789, 92
        %v8959 = vpop.permute.xlu0 %8958
        %8960 = vrot.lane.b32.xlu0 %v8790, 92
        %v8961 = vpop.permute.xlu0 %8960
        %8962 = vrot.lane.b32.xlu0 %v8791, 92
        %v8963 = vpop.permute.xlu0 %8962
        %8964 = vrot.lane.b32.xlu0 %v8792, 92
        %v8965 = vpop.permute.xlu0 %8964
        %8966 = vrot.lane.b32.xlu0 %v8793, 92
        %v8967 = vpop.permute.xlu0 %8966
        %8968 = vrot.lane.b32.xlu0 %v8794, 92
        %v8969 = vpop.permute.xlu0 %8968
        %8970 = vrot.lane.b32.xlu0 %v8795, 92
        %v8971 = vpop.permute.xlu0 %8970
        %8972 = vrot.lane.b32.xlu0 %v8796, 92
        %v8973 = vpop.permute.xlu0 %8972
        %8974 = vrot.lane.b32.xlu0 %v8797, 92
        %v8975 = vpop.permute.xlu0 %8974
        %8976 = vrot.lane.b32.xlu0 %v8798, 92
        %v8977 = vpop.permute.xlu0 %8976
        %8978 = vrot.lane.b32.xlu0 %v8799, 92
        %v8979 = vpop.permute.xlu0 %8978
        %8980 = vrot.lane.b32.xlu0 %v8800, 92
        %v8981 = vpop.permute.xlu0 %8980
        %8982 = vrot.lane.b32.xlu0 %v8801, 92
        %v8983 = vpop.permute.xlu0 %8982
        %8984 = vrot.lane.b32.xlu0 %v8802, 92
        %v8985 = vpop.permute.xlu0 %8984
        %8986 = vrot.lane.b32.xlu0 %v8803, 92
        %v8987 = vpop.permute.xlu0 %8986
        %8988 = vrot.lane.b32.xlu0 %v8804, 92
        %v8989 = vpop.permute.xlu0 %8988
        %8990 = vrot.lane.b32.xlu0 %v8805, 92
        %v8991 = vpop.permute.xlu0 %8990
        %8992 = vrot.lane.b32.xlu0 %v8806, 92
        %v8993 = vpop.permute.xlu0 %8992
        %8994 = vrot.lane.b32.xlu0 %v8807, 92
        %v8995 = vpop.permute.xlu0 %8994
        %8996 = vrot.lane.b32.xlu0 %v8808, 92
        %v8997 = vpop.permute.xlu0 %8996
        %8998 = vrot.lane.b32.xlu0 %v8809, 92
        %v8999 = vpop.permute.xlu0 %8998
        %9000 = vrot.lane.b32.xlu0 %v8810, 92
        %v9001 = vpop.permute.xlu0 %9000
        %9002 = vrot.lane.b32.xlu0 %v8811, 92
        %v9003 = vpop.permute.xlu0 %9002
        %vm9068 = vcmask 786144
        %9069 = vst.msk [vmem:[#allocation2] sm:$0xff] %vm9068, %v8877
        %9070 = vst.msk [vmem:[#allocation2 + $0x8] sm:$0xff] %vm9068, %v8879
        %9071 = vst.msk [vmem:[#allocation2 + $0x10] sm:$0xff] %vm9068, %v8881
        %9072 = vst.msk [vmem:[#allocation2 + $0x18] sm:$0xff] %vm9068, %v8883
        %9073 = vst.msk [vmem:[#allocation2 + $0x20] sm:$0xff] %vm9068, %v8885
        %9074 = vst.msk [vmem:[#allocation2 + $0x28] sm:$0xff] %vm9068, %v8887
        %9075 = vst.msk [vmem:[#allocation2 + $0x30] sm:$0xff] %vm9068, %v8889
        %9076 = vst.msk [vmem:[#allocation2 + $0x38] sm:$0xff] %vm9068, %v8891
        %9077 = vst.msk [vmem:[#allocation2 + $0x40] sm:$0xff] %vm9068, %v8893
        %9078 = vst.msk [vmem:[#allocation2 + $0x48] sm:$0xff] %vm9068, %v8895
        %9079 = vst.msk [vmem:[#allocation2 + $0x50] sm:$0xff] %vm9068, %v8897
        %9080 = vst.msk [vmem:[#allocation2 + $0x58] sm:$0xff] %vm9068, %v8899
        %9081 = vst.msk [vmem:[#allocation2 + $0x60] sm:$0xff] %vm9068, %v8901
        %9082 = vst.msk [vmem:[#allocation2 + $0x68] sm:$0xff] %vm9068, %v8903
        %9083 = vst.msk [vmem:[#allocation2 + $0x70] sm:$0xff] %vm9068, %v8905
        %9084 = vst.msk [vmem:[#allocation2 + $0x78] sm:$0xff] %vm9068, %v8907
        %9085 = vst.msk [vmem:[#allocation2 + $0x80] sm:$0xff] %vm9068, %v8909
        %9086 = vst.msk [vmem:[#allocation2 + $0x88] sm:$0xff] %vm9068, %v8911
        %9087 = vst.msk [vmem:[#allocation2 + $0x90] sm:$0xff] %vm9068, %v8913
        %9088 = vst.msk [vmem:[#allocation2 + $0x98] sm:$0xff] %vm9068, %v8915
        %9089 = vst.msk [vmem:[#allocation2 + $0xa0] sm:$0xff] %vm9068, %v8917
        %9090 = vst.msk [vmem:[#allocation2 + $0xa8] sm:$0xff] %vm9068, %v8919
        %9091 = vst.msk [vmem:[#allocation2 + $0xb0] sm:$0xff] %vm9068, %v8921
        %9092 = vst.msk [vmem:[#allocation2 + $0xb8] sm:$0xff] %vm9068, %v8923
        %9093 = vst.msk [vmem:[#allocation2 + $0xc0] sm:$0xff] %vm9068, %v8925
        %9094 = vst.msk [vmem:[#allocation2 + $0xc8] sm:$0xff] %vm9068, %v8927
        %9095 = vst.msk [vmem:[#allocation2 + $0xd0] sm:$0xff] %vm9068, %v8929
        %9096 = vst.msk [vmem:[#allocation2 + $0xd8] sm:$0xff] %vm9068, %v8931
        %9097 = vst.msk [vmem:[#allocation2 + $0xe0] sm:$0xff] %vm9068, %v8933
        %9098 = vst.msk [vmem:[#allocation2 + $0xe8] sm:$0xff] %vm9068, %v8935
        %9099 = vst.msk [vmem:[#allocation2 + $0xf0] sm:$0xff] %vm9068, %v8937
        %9100 = vst.msk [vmem:[#allocation2 + $0xf8] sm:$0xff] %vm9068, %v8939
        %9101 = vst.msk [vmem:[#allocation2 + $0x100] sm:$0xff] %vm9068, %v8941
        %9102 = vst.msk [vmem:[#allocation2 + $0x108] sm:$0xff] %vm9068, %v8943
        %9103 = vst.msk [vmem:[#allocation2 + $0x110] sm:$0xff] %vm9068, %v8945
        %9104 = vst.msk [vmem:[#allocation2 + $0x118] sm:$0xff] %vm9068, %v8947
        %9105 = vst.msk [vmem:[#allocation2 + $0x120] sm:$0xff] %vm9068, %v8949
        %9106 = vst.msk [vmem:[#allocation2 + $0x128] sm:$0xff] %vm9068, %v8951
        %9107 = vst.msk [vmem:[#allocation2 + $0x130] sm:$0xff] %vm9068, %v8953
        %9108 = vst.msk [vmem:[#allocation2 + $0x138] sm:$0xff] %vm9068, %v8955
        %9109 = vst.msk [vmem:[#allocation2 + $0x140] sm:$0xff] %vm9068, %v8957
        %9110 = vst.msk [vmem:[#allocation2 + $0x148] sm:$0xff] %vm9068, %v8959
        %9111 = vst.msk [vmem:[#allocation2 + $0x150] sm:$0xff] %vm9068, %v8961
        %9112 = vst.msk [vmem:[#allocation2 + $0x158] sm:$0xff] %vm9068, %v8963
        %9113 = vst.msk [vmem:[#allocation2 + $0x160] sm:$0xff] %vm9068, %v8965
        %9114 = vst.msk [vmem:[#allocation2 + $0x168] sm:$0xff] %vm9068, %v8967
        %9115 = vst.msk [vmem:[#allocation2 + $0x170] sm:$0xff] %vm9068, %v8969
        %9116 = vst.msk [vmem:[#allocation2 + $0x178] sm:$0xff] %vm9068, %v8971
        %9117 = vst.msk [vmem:[#allocation2 + $0x180] sm:$0xff] %vm9068, %v8973
        %9118 = vst.msk [vmem:[#allocation2 + $0x188] sm:$0xff] %vm9068, %v8975
        %9119 = vst.msk [vmem:[#allocation2 + $0x190] sm:$0xff] %vm9068, %v8977
        %9120 = vst.msk [vmem:[#allocation2 + $0x198] sm:$0xff] %vm9068, %v8979
        %9121 = vst.msk [vmem:[#allocation2 + $0x1a0] sm:$0xff] %vm9068, %v8981
        %9122 = vst.msk [vmem:[#allocation2 + $0x1a8] sm:$0xff] %vm9068, %v8983
        %9123 = vst.msk [vmem:[#allocation2 + $0x1b0] sm:$0xff] %vm9068, %v8985
        %9124 = vst.msk [vmem:[#allocation2 + $0x1b8] sm:$0xff] %vm9068, %v8987
        %9125 = vst.msk [vmem:[#allocation2 + $0x1c0] sm:$0xff] %vm9068, %v8989
        %9126 = vst.msk [vmem:[#allocation2 + $0x1c8] sm:$0xff] %vm9068, %v8991
        %9127 = vst.msk [vmem:[#allocation2 + $0x1d0] sm:$0xff] %vm9068, %v8993
        %9128 = vst.msk [vmem:[#allocation2 + $0x1d8] sm:$0xff] %vm9068, %v8995
        %9129 = vst.msk [vmem:[#allocation2 + $0x1e0] sm:$0xff] %vm9068, %v8997
        %9130 = vst.msk [vmem:[#allocation2 + $0x1e8] sm:$0xff] %vm9068, %v8999
        %9131 = vst.msk [vmem:[#allocation2 + $0x1f0] sm:$0xff] %vm9068, %v9001
        %9132 = vst.msk [vmem:[#allocation2 + $0x1f8] sm:$0xff] %vm9068, %v9003
        %s9133 = scalar_lea.vmem %s141, 352
        %v9134 = vld [vmem:[%s9133] sm:$0xff]
        %v9135 = vld [vmem:[%s9133 + $0x10] sm:$0xff]
        %v9136 = vld [vmem:[%s9133 + $0x20] sm:$0xff]
        %v9137 = vld [vmem:[%s9133 + $0x30] sm:$0xff]
        %v9138 = vld [vmem:[%s9133 + $0x40] sm:$0xff]
        %v9139 = vld [vmem:[%s9133 + $0x50] sm:$0xff]
        %v9140 = vld [vmem:[%s9133 + $0x60] sm:$0xff]
        %v9141 = vld [vmem:[%s9133 + $0x70] sm:$0xff]
        %v9142 = vld [vmem:[%s9133 + $0xa0] sm:$0xff]
        %v9143 = vld [vmem:[%s9133 + $0xb0] sm:$0xff]
        %v9144 = vld [vmem:[%s9133 + $0xc0] sm:$0xff]
        %v9145 = vld [vmem:[%s9133 + $0xd0] sm:$0xff]
        %v9146 = vld [vmem:[%s9133 + $0xe0] sm:$0xff]
        %v9147 = vld [vmem:[%s9133 + $0xf0] sm:$0xff]
        %v9148 = vld [vmem:[%s9133 + $0x100] sm:$0xff]
        %v9149 = vld [vmem:[%s9133 + $0x110] sm:$0xff]
        %v9150 = vld [vmem:[%s9133 + $0x140] sm:$0xff]
        %v9151 = vld [vmem:[%s9133 + $0x150] sm:$0xff]
        %v9152 = vld [vmem:[%s9133 + $0x160] sm:$0xff]
        %v9153 = vld [vmem:[%s9133 + $0x170] sm:$0xff]
        %v9154 = vld [vmem:[%s9133 + $0x180] sm:$0xff]
        %v9155 = vld [vmem:[%s9133 + $0x190] sm:$0xff]
        %v9156 = vld [vmem:[%s9133 + $0x1a0] sm:$0xff]
        %v9157 = vld [vmem:[%s9133 + $0x1b0] sm:$0xff]
        %v9158 = vld [vmem:[%s9133 + $0x1e0] sm:$0xff]
        %v9159 = vld [vmem:[%s9133 + $0x1f0] sm:$0xff]
        %v9160 = vld [vmem:[%s9133 + $0x200] sm:$0xff]
        %v9161 = vld [vmem:[%s9133 + $0x210] sm:$0xff]
        %v9162 = vld [vmem:[%s9133 + $0x220] sm:$0xff]
        %v9163 = vld [vmem:[%s9133 + $0x230] sm:$0xff]
        %v9164 = vld [vmem:[%s9133 + $0x240] sm:$0xff]
        %v9165 = vld [vmem:[%s9133 + $0x250] sm:$0xff]
        %v9166 = vld [vmem:[%s9133 + $0x280] sm:$0xff]
        %v9167 = vld [vmem:[%s9133 + $0x290] sm:$0xff]
        %v9168 = vld [vmem:[%s9133 + $0x2a0] sm:$0xff]
        %v9169 = vld [vmem:[%s9133 + $0x2b0] sm:$0xff]
        %v9170 = vld [vmem:[%s9133 + $0x2c0] sm:$0xff]
        %v9171 = vld [vmem:[%s9133 + $0x2d0] sm:$0xff]
        %v9172 = vld [vmem:[%s9133 + $0x2e0] sm:$0xff]
        %v9173 = vld [vmem:[%s9133 + $0x2f0] sm:$0xff]
        %v9174 = vld [vmem:[%s9133 + $0x320] sm:$0xff]
        %v9175 = vld [vmem:[%s9133 + $0x330] sm:$0xff]
        %v9176 = vld [vmem:[%s9133 + $0x340] sm:$0xff]
        %v9177 = vld [vmem:[%s9133 + $0x350] sm:$0xff]
        %v9178 = vld [vmem:[%s9133 + $0x360] sm:$0xff]
        %v9179 = vld [vmem:[%s9133 + $0x370] sm:$0xff]
        %v9180 = vld [vmem:[%s9133 + $0x380] sm:$0xff]
        %v9181 = vld [vmem:[%s9133 + $0x390] sm:$0xff]
        %v9182 = vld [vmem:[%s9133 + $0x3c0] sm:$0xff]
        %v9183 = vld [vmem:[%s9133 + $0x3d0] sm:$0xff]
        %v9184 = vld [vmem:[%s9133 + $0x3e0] sm:$0xff]
        %v9185 = vld [vmem:[%s9133 + $0x3f0] sm:$0xff]
        %v9186 = vld [vmem:[%s9133 + $0x400] sm:$0xff]
        %v9187 = vld [vmem:[%s9133 + $0x410] sm:$0xff]
        %v9188 = vld [vmem:[%s9133 + $0x420] sm:$0xff]
        %v9189 = vld [vmem:[%s9133 + $0x430] sm:$0xff]
        %v9190 = vld [vmem:[%s9133 + $0x460] sm:$0xff]
        %v9191 = vld [vmem:[%s9133 + $0x470] sm:$0xff]
        %v9192 = vld [vmem:[%s9133 + $0x480] sm:$0xff]
        %v9193 = vld [vmem:[%s9133 + $0x490] sm:$0xff]
        %v9194 = vld [vmem:[%s9133 + $0x4a0] sm:$0xff]
        %v9195 = vld [vmem:[%s9133 + $0x4b0] sm:$0xff]
        %v9196 = vld [vmem:[%s9133 + $0x4c0] sm:$0xff]
        %v9197 = vld [vmem:[%s9133 + $0x4d0] sm:$0xff]
        %9262 = vrot.lane.b32.xlu0 %v9134, 96
        %v9263 = vpop.permute.xlu0 %9262
        %9264 = vrot.lane.b32.xlu0 %v9135, 96
        %v9265 = vpop.permute.xlu0 %9264
        %9266 = vrot.lane.b32.xlu0 %v9136, 96
        %v9267 = vpop.permute.xlu0 %9266
        %9268 = vrot.lane.b32.xlu0 %v9137, 96
        %v9269 = vpop.permute.xlu0 %9268
        %9270 = vrot.lane.b32.xlu0 %v9138, 96
        %v9271 = vpop.permute.xlu0 %9270
        %9272 = vrot.lane.b32.xlu0 %v9139, 96
        %v9273 = vpop.permute.xlu0 %9272
        %9274 = vrot.lane.b32.xlu0 %v9140, 96
        %v9275 = vpop.permute.xlu0 %9274
        %9276 = vrot.lane.b32.xlu0 %v9141, 96
        %v9277 = vpop.permute.xlu0 %9276
        %9278 = vrot.lane.b32.xlu0 %v9142, 96
        %v9279 = vpop.permute.xlu0 %9278
        %9280 = vrot.lane.b32.xlu0 %v9143, 96
        %v9281 = vpop.permute.xlu0 %9280
        %9282 = vrot.lane.b32.xlu0 %v9144, 96
        %v9283 = vpop.permute.xlu0 %9282
        %9284 = vrot.lane.b32.xlu0 %v9145, 96
        %v9285 = vpop.permute.xlu0 %9284
        %9286 = vrot.lane.b32.xlu0 %v9146, 96
        %v9287 = vpop.permute.xlu0 %9286
        %9288 = vrot.lane.b32.xlu0 %v9147, 96
        %v9289 = vpop.permute.xlu0 %9288
        %9290 = vrot.lane.b32.xlu0 %v9148, 96
        %v9291 = vpop.permute.xlu0 %9290
        %9292 = vrot.lane.b32.xlu0 %v9149, 96
        %v9293 = vpop.permute.xlu0 %9292
        %9294 = vrot.lane.b32.xlu0 %v9150, 96
        %v9295 = vpop.permute.xlu0 %9294
        %9296 = vrot.lane.b32.xlu0 %v9151, 96
        %v9297 = vpop.permute.xlu0 %9296
        %9298 = vrot.lane.b32.xlu0 %v9152, 96
        %v9299 = vpop.permute.xlu0 %9298
        %9300 = vrot.lane.b32.xlu0 %v9153, 96
        %v9301 = vpop.permute.xlu0 %9300
        %9302 = vrot.lane.b32.xlu0 %v9154, 96
        %v9303 = vpop.permute.xlu0 %9302
        %9304 = vrot.lane.b32.xlu0 %v9155, 96
        %v9305 = vpop.permute.xlu0 %9304
        %9306 = vrot.lane.b32.xlu0 %v9156, 96
        %v9307 = vpop.permute.xlu0 %9306
        %9308 = vrot.lane.b32.xlu0 %v9157, 96
        %v9309 = vpop.permute.xlu0 %9308
        %9310 = vrot.lane.b32.xlu0 %v9158, 96
        %v9311 = vpop.permute.xlu0 %9310
        %9312 = vrot.lane.b32.xlu0 %v9159, 96
        %v9313 = vpop.permute.xlu0 %9312
        %9314 = vrot.lane.b32.xlu0 %v9160, 96
        %v9315 = vpop.permute.xlu0 %9314
        %9316 = vrot.lane.b32.xlu0 %v9161, 96
        %v9317 = vpop.permute.xlu0 %9316
        %9318 = vrot.lane.b32.xlu0 %v9162, 96
        %v9319 = vpop.permute.xlu0 %9318
        %9320 = vrot.lane.b32.xlu0 %v9163, 96
        %v9321 = vpop.permute.xlu0 %9320
        %9322 = vrot.lane.b32.xlu0 %v9164, 96
        %v9323 = vpop.permute.xlu0 %9322
        %9324 = vrot.lane.b32.xlu0 %v9165, 96
        %v9325 = vpop.permute.xlu0 %9324
        %9326 = vrot.lane.b32.xlu0 %v9166, 96
        %v9327 = vpop.permute.xlu0 %9326
        %9328 = vrot.lane.b32.xlu0 %v9167, 96
        %v9329 = vpop.permute.xlu0 %9328
        %9330 = vrot.lane.b32.xlu0 %v9168, 96
        %v9331 = vpop.permute.xlu0 %9330
        %9332 = vrot.lane.b32.xlu0 %v9169, 96
        %v9333 = vpop.permute.xlu0 %9332
        %9334 = vrot.lane.b32.xlu0 %v9170, 96
        %v9335 = vpop.permute.xlu0 %9334
        %9336 = vrot.lane.b32.xlu0 %v9171, 96
        %v9337 = vpop.permute.xlu0 %9336
        %9338 = vrot.lane.b32.xlu0 %v9172, 96
        %v9339 = vpop.permute.xlu0 %9338
        %9340 = vrot.lane.b32.xlu0 %v9173, 96
        %v9341 = vpop.permute.xlu0 %9340
        %9342 = vrot.lane.b32.xlu0 %v9174, 96
        %v9343 = vpop.permute.xlu0 %9342
        %9344 = vrot.lane.b32.xlu0 %v9175, 96
        %v9345 = vpop.permute.xlu0 %9344
        %9346 = vrot.lane.b32.xlu0 %v9176, 96
        %v9347 = vpop.permute.xlu0 %9346
        %9348 = vrot.lane.b32.xlu0 %v9177, 96
        %v9349 = vpop.permute.xlu0 %9348
        %9350 = vrot.lane.b32.xlu0 %v9178, 96
        %v9351 = vpop.permute.xlu0 %9350
        %9352 = vrot.lane.b32.xlu0 %v9179, 96
        %v9353 = vpop.permute.xlu0 %9352
        %9354 = vrot.lane.b32.xlu0 %v9180, 96
        %v9355 = vpop.permute.xlu0 %9354
        %9356 = vrot.lane.b32.xlu0 %v9181, 96
        %v9357 = vpop.permute.xlu0 %9356
        %9358 = vrot.lane.b32.xlu0 %v9182, 96
        %v9359 = vpop.permute.xlu0 %9358
        %9360 = vrot.lane.b32.xlu0 %v9183, 96
        %v9361 = vpop.permute.xlu0 %9360
        %9362 = vrot.lane.b32.xlu0 %v9184, 96
        %v9363 = vpop.permute.xlu0 %9362
        %9364 = vrot.lane.b32.xlu0 %v9185, 96
        %v9365 = vpop.permute.xlu0 %9364
        %9366 = vrot.lane.b32.xlu0 %v9186, 96
        %v9367 = vpop.permute.xlu0 %9366
        %9368 = vrot.lane.b32.xlu0 %v9187, 96
        %v9369 = vpop.permute.xlu0 %9368
        %9370 = vrot.lane.b32.xlu0 %v9188, 96
        %v9371 = vpop.permute.xlu0 %9370
        %9372 = vrot.lane.b32.xlu0 %v9189, 96
        %v9373 = vpop.permute.xlu0 %9372
        %9374 = vrot.lane.b32.xlu0 %v9190, 96
        %v9375 = vpop.permute.xlu0 %9374
        %9376 = vrot.lane.b32.xlu0 %v9191, 96
        %v9377 = vpop.permute.xlu0 %9376
        %9378 = vrot.lane.b32.xlu0 %v9192, 96
        %v9379 = vpop.permute.xlu0 %9378
        %9380 = vrot.lane.b32.xlu0 %v9193, 96
        %v9381 = vpop.permute.xlu0 %9380
        %9382 = vrot.lane.b32.xlu0 %v9194, 96
        %v9383 = vpop.permute.xlu0 %9382
        %9384 = vrot.lane.b32.xlu0 %v9195, 96
        %v9385 = vpop.permute.xlu0 %9384
        %9386 = vrot.lane.b32.xlu0 %v9196, 96
        %v9387 = vpop.permute.xlu0 %9386
        %9388 = vrot.lane.b32.xlu0 %v9197, 96
        %v9389 = vpop.permute.xlu0 %9388
        %vm9454 = vcmask 818944
        %9455 = vst.msk [vmem:[#allocation2] sm:$0xff] %vm9454, %v9263
        %9456 = vst.msk [vmem:[#allocation2 + $0x8] sm:$0xff] %vm9454, %v9265
        %9457 = vst.msk [vmem:[#allocation2 + $0x10] sm:$0xff] %vm9454, %v9267
        %9458 = vst.msk [vmem:[#allocation2 + $0x18] sm:$0xff] %vm9454, %v9269
        %9459 = vst.msk [vmem:[#allocation2 + $0x20] sm:$0xff] %vm9454, %v9271
        %9460 = vst.msk [vmem:[#allocation2 + $0x28] sm:$0xff] %vm9454, %v9273
        %9461 = vst.msk [vmem:[#allocation2 + $0x30] sm:$0xff] %vm9454, %v9275
        %9462 = vst.msk [vmem:[#allocation2 + $0x38] sm:$0xff] %vm9454, %v9277
        %9463 = vst.msk [vmem:[#allocation2 + $0x40] sm:$0xff] %vm9454, %v9279
        %9464 = vst.msk [vmem:[#allocation2 + $0x48] sm:$0xff] %vm9454, %v9281
        %9465 = vst.msk [vmem:[#allocation2 + $0x50] sm:$0xff] %vm9454, %v9283
        %9466 = vst.msk [vmem:[#allocation2 + $0x58] sm:$0xff] %vm9454, %v9285
        %9467 = vst.msk [vmem:[#allocation2 + $0x60] sm:$0xff] %vm9454, %v9287
        %9468 = vst.msk [vmem:[#allocation2 + $0x68] sm:$0xff] %vm9454, %v9289
        %9469 = vst.msk [vmem:[#allocation2 + $0x70] sm:$0xff] %vm9454, %v9291
        %9470 = vst.msk [vmem:[#allocation2 + $0x78] sm:$0xff] %vm9454, %v9293
        %9471 = vst.msk [vmem:[#allocation2 + $0x80] sm:$0xff] %vm9454, %v9295
        %9472 = vst.msk [vmem:[#allocation2 + $0x88] sm:$0xff] %vm9454, %v9297
        %9473 = vst.msk [vmem:[#allocation2 + $0x90] sm:$0xff] %vm9454, %v9299
        %9474 = vst.msk [vmem:[#allocation2 + $0x98] sm:$0xff] %vm9454, %v9301
        %9475 = vst.msk [vmem:[#allocation2 + $0xa0] sm:$0xff] %vm9454, %v9303
        %9476 = vst.msk [vmem:[#allocation2 + $0xa8] sm:$0xff] %vm9454, %v9305
        %9477 = vst.msk [vmem:[#allocation2 + $0xb0] sm:$0xff] %vm9454, %v9307
        %9478 = vst.msk [vmem:[#allocation2 + $0xb8] sm:$0xff] %vm9454, %v9309
        %9479 = vst.msk [vmem:[#allocation2 + $0xc0] sm:$0xff] %vm9454, %v9311
        %9480 = vst.msk [vmem:[#allocation2 + $0xc8] sm:$0xff] %vm9454, %v9313
        %9481 = vst.msk [vmem:[#allocation2 + $0xd0] sm:$0xff] %vm9454, %v9315
        %9482 = vst.msk [vmem:[#allocation2 + $0xd8] sm:$0xff] %vm9454, %v9317
        %9483 = vst.msk [vmem:[#allocation2 + $0xe0] sm:$0xff] %vm9454, %v9319
        %9484 = vst.msk [vmem:[#allocation2 + $0xe8] sm:$0xff] %vm9454, %v9321
        %9485 = vst.msk [vmem:[#allocation2 + $0xf0] sm:$0xff] %vm9454, %v9323
        %9486 = vst.msk [vmem:[#allocation2 + $0xf8] sm:$0xff] %vm9454, %v9325
        %9487 = vst.msk [vmem:[#allocation2 + $0x100] sm:$0xff] %vm9454, %v9327
        %9488 = vst.msk [vmem:[#allocation2 + $0x108] sm:$0xff] %vm9454, %v9329
        %9489 = vst.msk [vmem:[#allocation2 + $0x110] sm:$0xff] %vm9454, %v9331
        %9490 = vst.msk [vmem:[#allocation2 + $0x118] sm:$0xff] %vm9454, %v9333
        %9491 = vst.msk [vmem:[#allocation2 + $0x120] sm:$0xff] %vm9454, %v9335
        %9492 = vst.msk [vmem:[#allocation2 + $0x128] sm:$0xff] %vm9454, %v9337
        %9493 = vst.msk [vmem:[#allocation2 + $0x130] sm:$0xff] %vm9454, %v9339
        %9494 = vst.msk [vmem:[#allocation2 + $0x138] sm:$0xff] %vm9454, %v9341
        %9495 = vst.msk [vmem:[#allocation2 + $0x140] sm:$0xff] %vm9454, %v9343
        %9496 = vst.msk [vmem:[#allocation2 + $0x148] sm:$0xff] %vm9454, %v9345
        %9497 = vst.msk [vmem:[#allocation2 + $0x150] sm:$0xff] %vm9454, %v9347
        %9498 = vst.msk [vmem:[#allocation2 + $0x158] sm:$0xff] %vm9454, %v9349
        %9499 = vst.msk [vmem:[#allocation2 + $0x160] sm:$0xff] %vm9454, %v9351
        %9500 = vst.msk [vmem:[#allocation2 + $0x168] sm:$0xff] %vm9454, %v9353
        %9501 = vst.msk [vmem:[#allocation2 + $0x170] sm:$0xff] %vm9454, %v9355
        %9502 = vst.msk [vmem:[#allocation2 + $0x178] sm:$0xff] %vm9454, %v9357
        %9503 = vst.msk [vmem:[#allocation2 + $0x180] sm:$0xff] %vm9454, %v9359
        %9504 = vst.msk [vmem:[#allocation2 + $0x188] sm:$0xff] %vm9454, %v9361
        %9505 = vst.msk [vmem:[#allocation2 + $0x190] sm:$0xff] %vm9454, %v9363
        %9506 = vst.msk [vmem:[#allocation2 + $0x198] sm:$0xff] %vm9454, %v9365
        %9507 = vst.msk [vmem:[#allocation2 + $0x1a0] sm:$0xff] %vm9454, %v9367
        %9508 = vst.msk [vmem:[#allocation2 + $0x1a8] sm:$0xff] %vm9454, %v9369
        %9509 = vst.msk [vmem:[#allocation2 + $0x1b0] sm:$0xff] %vm9454, %v9371
        %9510 = vst.msk [vmem:[#allocation2 + $0x1b8] sm:$0xff] %vm9454, %v9373
        %9511 = vst.msk [vmem:[#allocation2 + $0x1c0] sm:$0xff] %vm9454, %v9375
        %9512 = vst.msk [vmem:[#allocation2 + $0x1c8] sm:$0xff] %vm9454, %v9377
        %9513 = vst.msk [vmem:[#allocation2 + $0x1d0] sm:$0xff] %vm9454, %v9379
        %9514 = vst.msk [vmem:[#allocation2 + $0x1d8] sm:$0xff] %vm9454, %v9381
        %9515 = vst.msk [vmem:[#allocation2 + $0x1e0] sm:$0xff] %vm9454, %v9383
        %9516 = vst.msk [vmem:[#allocation2 + $0x1e8] sm:$0xff] %vm9454, %v9385
        %9517 = vst.msk [vmem:[#allocation2 + $0x1f0] sm:$0xff] %vm9454, %v9387
        %9518 = vst.msk [vmem:[#allocation2 + $0x1f8] sm:$0xff] %vm9454, %v9389
        %v9519 = vld [vmem:[%s9133 + $0x1] sm:$0xff]
        %v9520 = vld [vmem:[%s9133 + $0x11] sm:$0xff]
        %v9521 = vld [vmem:[%s9133 + $0x21] sm:$0xff]
        %v9522 = vld [vmem:[%s9133 + $0x31] sm:$0xff]
        %v9523 = vld [vmem:[%s9133 + $0x41] sm:$0xff]
        %v9524 = vld [vmem:[%s9133 + $0x51] sm:$0xff]
        %v9525 = vld [vmem:[%s9133 + $0x61] sm:$0xff]
        %v9526 = vld [vmem:[%s9133 + $0x71] sm:$0xff]
        %v9527 = vld [vmem:[%s9133 + $0xa1] sm:$0xff]
        %v9528 = vld [vmem:[%s9133 + $0xb1] sm:$0xff]
        %v9529 = vld [vmem:[%s9133 + $0xc1] sm:$0xff]
        %v9530 = vld [vmem:[%s9133 + $0xd1] sm:$0xff]
        %v9531 = vld [vmem:[%s9133 + $0xe1] sm:$0xff]
        %v9532 = vld [vmem:[%s9133 + $0xf1] sm:$0xff]
        %v9533 = vld [vmem:[%s9133 + $0x101] sm:$0xff]
        %v9534 = vld [vmem:[%s9133 + $0x111] sm:$0xff]
        %v9535 = vld [vmem:[%s9133 + $0x141] sm:$0xff]
        %v9536 = vld [vmem:[%s9133 + $0x151] sm:$0xff]
        %v9537 = vld [vmem:[%s9133 + $0x161] sm:$0xff]
        %v9538 = vld [vmem:[%s9133 + $0x171] sm:$0xff]
        %v9539 = vld [vmem:[%s9133 + $0x181] sm:$0xff]
        %v9540 = vld [vmem:[%s9133 + $0x191] sm:$0xff]
        %v9541 = vld [vmem:[%s9133 + $0x1a1] sm:$0xff]
        %v9542 = vld [vmem:[%s9133 + $0x1b1] sm:$0xff]
        %v9543 = vld [vmem:[%s9133 + $0x1e1] sm:$0xff]
        %v9544 = vld [vmem:[%s9133 + $0x1f1] sm:$0xff]
        %v9545 = vld [vmem:[%s9133 + $0x201] sm:$0xff]
        %v9546 = vld [vmem:[%s9133 + $0x211] sm:$0xff]
        %v9547 = vld [vmem:[%s9133 + $0x221] sm:$0xff]
        %v9548 = vld [vmem:[%s9133 + $0x231] sm:$0xff]
        %v9549 = vld [vmem:[%s9133 + $0x241] sm:$0xff]
        %v9550 = vld [vmem:[%s9133 + $0x251] sm:$0xff]
        %v9551 = vld [vmem:[%s9133 + $0x281] sm:$0xff]
        %v9552 = vld [vmem:[%s9133 + $0x291] sm:$0xff]
        %v9553 = vld [vmem:[%s9133 + $0x2a1] sm:$0xff]
        %v9554 = vld [vmem:[%s9133 + $0x2b1] sm:$0xff]
        %v9555 = vld [vmem:[%s9133 + $0x2c1] sm:$0xff]
        %v9556 = vld [vmem:[%s9133 + $0x2d1] sm:$0xff]
        %v9557 = vld [vmem:[%s9133 + $0x2e1] sm:$0xff]
        %v9558 = vld [vmem:[%s9133 + $0x2f1] sm:$0xff]
        %v9559 = vld [vmem:[%s9133 + $0x321] sm:$0xff]
        %v9560 = vld [vmem:[%s9133 + $0x331] sm:$0xff]
        %v9561 = vld [vmem:[%s9133 + $0x341] sm:$0xff]
        %v9562 = vld [vmem:[%s9133 + $0x351] sm:$0xff]
        %v9563 = vld [vmem:[%s9133 + $0x361] sm:$0xff]
        %v9564 = vld [vmem:[%s9133 + $0x371] sm:$0xff]
        %v9565 = vld [vmem:[%s9133 + $0x381] sm:$0xff]
        %v9566 = vld [vmem:[%s9133 + $0x391] sm:$0xff]
        %v9567 = vld [vmem:[%s9133 + $0x3c1] sm:$0xff]
        %v9568 = vld [vmem:[%s9133 + $0x3d1] sm:$0xff]
        %v9569 = vld [vmem:[%s9133 + $0x3e1] sm:$0xff]
        %v9570 = vld [vmem:[%s9133 + $0x3f1] sm:$0xff]
        %v9571 = vld [vmem:[%s9133 + $0x401] sm:$0xff]
        %v9572 = vld [vmem:[%s9133 + $0x411] sm:$0xff]
        %v9573 = vld [vmem:[%s9133 + $0x421] sm:$0xff]
        %v9574 = vld [vmem:[%s9133 + $0x431] sm:$0xff]
        %v9575 = vld [vmem:[%s9133 + $0x461] sm:$0xff]
        %v9576 = vld [vmem:[%s9133 + $0x471] sm:$0xff]
        %v9577 = vld [vmem:[%s9133 + $0x481] sm:$0xff]
        %v9578 = vld [vmem:[%s9133 + $0x491] sm:$0xff]
        %v9579 = vld [vmem:[%s9133 + $0x4a1] sm:$0xff]
        %v9580 = vld [vmem:[%s9133 + $0x4b1] sm:$0xff]
        %v9581 = vld [vmem:[%s9133 + $0x4c1] sm:$0xff]
        %v9582 = vld [vmem:[%s9133 + $0x4d1] sm:$0xff]
        %9647 = vrot.lane.b32.xlu0 %v9519, 100
        %v9648 = vpop.permute.xlu0 %9647
        %9649 = vrot.lane.b32.xlu0 %v9520, 100
        %v9650 = vpop.permute.xlu0 %9649
        %9651 = vrot.lane.b32.xlu0 %v9521, 100
        %v9652 = vpop.permute.xlu0 %9651
        %9653 = vrot.lane.b32.xlu0 %v9522, 100
        %v9654 = vpop.permute.xlu0 %9653
        %9655 = vrot.lane.b32.xlu0 %v9523, 100
        %v9656 = vpop.permute.xlu0 %9655
        %9657 = vrot.lane.b32.xlu0 %v9524, 100
        %v9658 = vpop.permute.xlu0 %9657
        %9659 = vrot.lane.b32.xlu0 %v9525, 100
        %v9660 = vpop.permute.xlu0 %9659
        %9661 = vrot.lane.b32.xlu0 %v9526, 100
        %v9662 = vpop.permute.xlu0 %9661
        %9663 = vrot.lane.b32.xlu0 %v9527, 100
        %v9664 = vpop.permute.xlu0 %9663
        %9665 = vrot.lane.b32.xlu0 %v9528, 100
        %v9666 = vpop.permute.xlu0 %9665
        %9667 = vrot.lane.b32.xlu0 %v9529, 100
        %v9668 = vpop.permute.xlu0 %9667
        %9669 = vrot.lane.b32.xlu0 %v9530, 100
        %v9670 = vpop.permute.xlu0 %9669
        %9671 = vrot.lane.b32.xlu0 %v9531, 100
        %v9672 = vpop.permute.xlu0 %9671
        %9673 = vrot.lane.b32.xlu0 %v9532, 100
        %v9674 = vpop.permute.xlu0 %9673
        %9675 = vrot.lane.b32.xlu0 %v9533, 100
        %v9676 = vpop.permute.xlu0 %9675
        %9677 = vrot.lane.b32.xlu0 %v9534, 100
        %v9678 = vpop.permute.xlu0 %9677
        %9679 = vrot.lane.b32.xlu0 %v9535, 100
        %v9680 = vpop.permute.xlu0 %9679
        %9681 = vrot.lane.b32.xlu0 %v9536, 100
        %v9682 = vpop.permute.xlu0 %9681
        %9683 = vrot.lane.b32.xlu0 %v9537, 100
        %v9684 = vpop.permute.xlu0 %9683
        %9685 = vrot.lane.b32.xlu0 %v9538, 100
        %v9686 = vpop.permute.xlu0 %9685
        %9687 = vrot.lane.b32.xlu0 %v9539, 100
        %v9688 = vpop.permute.xlu0 %9687
        %9689 = vrot.lane.b32.xlu0 %v9540, 100
        %v9690 = vpop.permute.xlu0 %9689
        %9691 = vrot.lane.b32.xlu0 %v9541, 100
        %v9692 = vpop.permute.xlu0 %9691
        %9693 = vrot.lane.b32.xlu0 %v9542, 100
        %v9694 = vpop.permute.xlu0 %9693
        %9695 = vrot.lane.b32.xlu0 %v9543, 100
        %v9696 = vpop.permute.xlu0 %9695
        %9697 = vrot.lane.b32.xlu0 %v9544, 100
        %v9698 = vpop.permute.xlu0 %9697
        %9699 = vrot.lane.b32.xlu0 %v9545, 100
        %v9700 = vpop.permute.xlu0 %9699
        %9701 = vrot.lane.b32.xlu0 %v9546, 100
        %v9702 = vpop.permute.xlu0 %9701
        %9703 = vrot.lane.b32.xlu0 %v9547, 100
        %v9704 = vpop.permute.xlu0 %9703
        %9705 = vrot.lane.b32.xlu0 %v9548, 100
        %v9706 = vpop.permute.xlu0 %9705
        %9707 = vrot.lane.b32.xlu0 %v9549, 100
        %v9708 = vpop.permute.xlu0 %9707
        %9709 = vrot.lane.b32.xlu0 %v9550, 100
        %v9710 = vpop.permute.xlu0 %9709
        %9711 = vrot.lane.b32.xlu0 %v9551, 100
        %v9712 = vpop.permute.xlu0 %9711
        %9713 = vrot.lane.b32.xlu0 %v9552, 100
        %v9714 = vpop.permute.xlu0 %9713
        %9715 = vrot.lane.b32.xlu0 %v9553, 100
        %v9716 = vpop.permute.xlu0 %9715
        %9717 = vrot.lane.b32.xlu0 %v9554, 100
        %v9718 = vpop.permute.xlu0 %9717
        %9719 = vrot.lane.b32.xlu0 %v9555, 100
        %v9720 = vpop.permute.xlu0 %9719
        %9721 = vrot.lane.b32.xlu0 %v9556, 100
        %v9722 = vpop.permute.xlu0 %9721
        %9723 = vrot.lane.b32.xlu0 %v9557, 100
        %v9724 = vpop.permute.xlu0 %9723
        %9725 = vrot.lane.b32.xlu0 %v9558, 100
        %v9726 = vpop.permute.xlu0 %9725
        %9727 = vrot.lane.b32.xlu0 %v9559, 100
        %v9728 = vpop.permute.xlu0 %9727
        %9729 = vrot.lane.b32.xlu0 %v9560, 100
        %v9730 = vpop.permute.xlu0 %9729
        %9731 = vrot.lane.b32.xlu0 %v9561, 100
        %v9732 = vpop.permute.xlu0 %9731
        %9733 = vrot.lane.b32.xlu0 %v9562, 100
        %v9734 = vpop.permute.xlu0 %9733
        %9735 = vrot.lane.b32.xlu0 %v9563, 100
        %v9736 = vpop.permute.xlu0 %9735
        %9737 = vrot.lane.b32.xlu0 %v9564, 100
        %v9738 = vpop.permute.xlu0 %9737
        %9739 = vrot.lane.b32.xlu0 %v9565, 100
        %v9740 = vpop.permute.xlu0 %9739
        %9741 = vrot.lane.b32.xlu0 %v9566, 100
        %v9742 = vpop.permute.xlu0 %9741
        %9743 = vrot.lane.b32.xlu0 %v9567, 100
        %v9744 = vpop.permute.xlu0 %9743
        %9745 = vrot.lane.b32.xlu0 %v9568, 100
        %v9746 = vpop.permute.xlu0 %9745
        %9747 = vrot.lane.b32.xlu0 %v9569, 100
        %v9748 = vpop.permute.xlu0 %9747
        %9749 = vrot.lane.b32.xlu0 %v9570, 100
        %v9750 = vpop.permute.xlu0 %9749
        %9751 = vrot.lane.b32.xlu0 %v9571, 100
        %v9752 = vpop.permute.xlu0 %9751
        %9753 = vrot.lane.b32.xlu0 %v9572, 100
        %v9754 = vpop.permute.xlu0 %9753
        %9755 = vrot.lane.b32.xlu0 %v9573, 100
        %v9756 = vpop.permute.xlu0 %9755
        %9757 = vrot.lane.b32.xlu0 %v9574, 100
        %v9758 = vpop.permute.xlu0 %9757
        %9759 = vrot.lane.b32.xlu0 %v9575, 100
        %v9760 = vpop.permute.xlu0 %9759
        %9761 = vrot.lane.b32.xlu0 %v9576, 100
        %v9762 = vpop.permute.xlu0 %9761
        %9763 = vrot.lane.b32.xlu0 %v9577, 100
        %v9764 = vpop.permute.xlu0 %9763
        %9765 = vrot.lane.b32.xlu0 %v9578, 100
        %v9766 = vpop.permute.xlu0 %9765
        %9767 = vrot.lane.b32.xlu0 %v9579, 100
        %v9768 = vpop.permute.xlu0 %9767
        %9769 = vrot.lane.b32.xlu0 %v9580, 100
        %v9770 = vpop.permute.xlu0 %9769
        %9771 = vrot.lane.b32.xlu0 %v9581, 100
        %v9772 = vpop.permute.xlu0 %9771
        %9773 = vrot.lane.b32.xlu0 %v9582, 100
        %v9774 = vpop.permute.xlu0 %9773
        %vm9839 = vcmask 851744
        %9840 = vst.msk [vmem:[#allocation2] sm:$0xff] %vm9839, %v9648
        %9841 = vst.msk [vmem:[#allocation2 + $0x8] sm:$0xff] %vm9839, %v9650
        %9842 = vst.msk [vmem:[#allocation2 + $0x10] sm:$0xff] %vm9839, %v9652
        %9843 = vst.msk [vmem:[#allocation2 + $0x18] sm:$0xff] %vm9839, %v9654
        %9844 = vst.msk [vmem:[#allocation2 + $0x20] sm:$0xff] %vm9839, %v9656
        %9845 = vst.msk [vmem:[#allocation2 + $0x28] sm:$0xff] %vm9839, %v9658
        %9846 = vst.msk [vmem:[#allocation2 + $0x30] sm:$0xff] %vm9839, %v9660
        %9847 = vst.msk [vmem:[#allocation2 + $0x38] sm:$0xff] %vm9839, %v9662
        %9848 = vst.msk [vmem:[#allocation2 + $0x40] sm:$0xff] %vm9839, %v9664
        %9849 = vst.msk [vmem:[#allocation2 + $0x48] sm:$0xff] %vm9839, %v9666
        %9850 = vst.msk [vmem:[#allocation2 + $0x50] sm:$0xff] %vm9839, %v9668
        %9851 = vst.msk [vmem:[#allocation2 + $0x58] sm:$0xff] %vm9839, %v9670
        %9852 = vst.msk [vmem:[#allocation2 + $0x60] sm:$0xff] %vm9839, %v9672
        %9853 = vst.msk [vmem:[#allocation2 + $0x68] sm:$0xff] %vm9839, %v9674
        %9854 = vst.msk [vmem:[#allocation2 + $0x70] sm:$0xff] %vm9839, %v9676
        %9855 = vst.msk [vmem:[#allocation2 + $0x78] sm:$0xff] %vm9839, %v9678
        %9856 = vst.msk [vmem:[#allocation2 + $0x80] sm:$0xff] %vm9839, %v9680
        %9857 = vst.msk [vmem:[#allocation2 + $0x88] sm:$0xff] %vm9839, %v9682
        %9858 = vst.msk [vmem:[#allocation2 + $0x90] sm:$0xff] %vm9839, %v9684
        %9859 = vst.msk [vmem:[#allocation2 + $0x98] sm:$0xff] %vm9839, %v9686
        %9860 = vst.msk [vmem:[#allocation2 + $0xa0] sm:$0xff] %vm9839, %v9688
        %9861 = vst.msk [vmem:[#allocation2 + $0xa8] sm:$0xff] %vm9839, %v9690
        %9862 = vst.msk [vmem:[#allocation2 + $0xb0] sm:$0xff] %vm9839, %v9692
        %9863 = vst.msk [vmem:[#allocation2 + $0xb8] sm:$0xff] %vm9839, %v9694
        %9864 = vst.msk [vmem:[#allocation2 + $0xc0] sm:$0xff] %vm9839, %v9696
        %9865 = vst.msk [vmem:[#allocation2 + $0xc8] sm:$0xff] %vm9839, %v9698
        %9866 = vst.msk [vmem:[#allocation2 + $0xd0] sm:$0xff] %vm9839, %v9700
        %9867 = vst.msk [vmem:[#allocation2 + $0xd8] sm:$0xff] %vm9839, %v9702
        %9868 = vst.msk [vmem:[#allocation2 + $0xe0] sm:$0xff] %vm9839, %v9704
        %9869 = vst.msk [vmem:[#allocation2 + $0xe8] sm:$0xff] %vm9839, %v9706
        %9870 = vst.msk [vmem:[#allocation2 + $0xf0] sm:$0xff] %vm9839, %v9708
        %9871 = vst.msk [vmem:[#allocation2 + $0xf8] sm:$0xff] %vm9839, %v9710
        %9872 = vst.msk [vmem:[#allocation2 + $0x100] sm:$0xff] %vm9839, %v9712
        %9873 = vst.msk [vmem:[#allocation2 + $0x108] sm:$0xff] %vm9839, %v9714
        %9874 = vst.msk [vmem:[#allocation2 + $0x110] sm:$0xff] %vm9839, %v9716
        %9875 = vst.msk [vmem:[#allocation2 + $0x118] sm:$0xff] %vm9839, %v9718
        %9876 = vst.msk [vmem:[#allocation2 + $0x120] sm:$0xff] %vm9839, %v9720
        %9877 = vst.msk [vmem:[#allocation2 + $0x128] sm:$0xff] %vm9839, %v9722
        %9878 = vst.msk [vmem:[#allocation2 + $0x130] sm:$0xff] %vm9839, %v9724
        %9879 = vst.msk [vmem:[#allocation2 + $0x138] sm:$0xff] %vm9839, %v9726
        %9880 = vst.msk [vmem:[#allocation2 + $0x140] sm:$0xff] %vm9839, %v9728
        %9881 = vst.msk [vmem:[#allocation2 + $0x148] sm:$0xff] %vm9839, %v9730
        %9882 = vst.msk [vmem:[#allocation2 + $0x150] sm:$0xff] %vm9839, %v9732
        %9883 = vst.msk [vmem:[#allocation2 + $0x158] sm:$0xff] %vm9839, %v9734
        %9884 = vst.msk [vmem:[#allocation2 + $0x160] sm:$0xff] %vm9839, %v9736
        %9885 = vst.msk [vmem:[#allocation2 + $0x168] sm:$0xff] %vm9839, %v9738
        %9886 = vst.msk [vmem:[#allocation2 + $0x170] sm:$0xff] %vm9839, %v9740
        %9887 = vst.msk [vmem:[#allocation2 + $0x178] sm:$0xff] %vm9839, %v9742
        %9888 = vst.msk [vmem:[#allocation2 + $0x180] sm:$0xff] %vm9839, %v9744
        %9889 = vst.msk [vmem:[#allocation2 + $0x188] sm:$0xff] %vm9839, %v9746
        %9890 = vst.msk [vmem:[#allocation2 + $0x190] sm:$0xff] %vm9839, %v9748
        %9891 = vst.msk [vmem:[#allocation2 + $0x198] sm:$0xff] %vm9839, %v9750
        %9892 = vst.msk [vmem:[#allocation2 + $0x1a0] sm:$0xff] %vm9839, %v9752
        %9893 = vst.msk [vmem:[#allocation2 + $0x1a8] sm:$0xff] %vm9839, %v9754
        %9894 = vst.msk [vmem:[#allocation2 + $0x1b0] sm:$0xff] %vm9839, %v9756
        %9895 = vst.msk [vmem:[#allocation2 + $0x1b8] sm:$0xff] %vm9839, %v9758
        %9896 = vst.msk [vmem:[#allocation2 + $0x1c0] sm:$0xff] %vm9839, %v9760
        %9897 = vst.msk [vmem:[#allocation2 + $0x1c8] sm:$0xff] %vm9839, %v9762
        %9898 = vst.msk [vmem:[#allocation2 + $0x1d0] sm:$0xff] %vm9839, %v9764
        %9899 = vst.msk [vmem:[#allocation2 + $0x1d8] sm:$0xff] %vm9839, %v9766
        %9900 = vst.msk [vmem:[#allocation2 + $0x1e0] sm:$0xff] %vm9839, %v9768
        %9901 = vst.msk [vmem:[#allocation2 + $0x1e8] sm:$0xff] %vm9839, %v9770
        %9902 = vst.msk [vmem:[#allocation2 + $0x1f0] sm:$0xff] %vm9839, %v9772
        %9903 = vst.msk [vmem:[#allocation2 + $0x1f8] sm:$0xff] %vm9839, %v9774
        %v9904 = vld [vmem:[%s9133 + $0x2] sm:$0xff]
        %v9905 = vld [vmem:[%s9133 + $0x12] sm:$0xff]
        %v9906 = vld [vmem:[%s9133 + $0x22] sm:$0xff]
        %v9907 = vld [vmem:[%s9133 + $0x32] sm:$0xff]
        %v9908 = vld [vmem:[%s9133 + $0x42] sm:$0xff]
        %v9909 = vld [vmem:[%s9133 + $0x52] sm:$0xff]
        %v9910 = vld [vmem:[%s9133 + $0x62] sm:$0xff]
        %v9911 = vld [vmem:[%s9133 + $0x72] sm:$0xff]
        %v9912 = vld [vmem:[%s9133 + $0xa2] sm:$0xff]
        %v9913 = vld [vmem:[%s9133 + $0xb2] sm:$0xff]
        %v9914 = vld [vmem:[%s9133 + $0xc2] sm:$0xff]
        %v9915 = vld [vmem:[%s9133 + $0xd2] sm:$0xff]
        %v9916 = vld [vmem:[%s9133 + $0xe2] sm:$0xff]
        %v9917 = vld [vmem:[%s9133 + $0xf2] sm:$0xff]
        %v9918 = vld [vmem:[%s9133 + $0x102] sm:$0xff]
        %v9919 = vld [vmem:[%s9133 + $0x112] sm:$0xff]
        %v9920 = vld [vmem:[%s9133 + $0x142] sm:$0xff]
        %v9921 = vld [vmem:[%s9133 + $0x152] sm:$0xff]
        %v9922 = vld [vmem:[%s9133 + $0x162] sm:$0xff]
        %v9923 = vld [vmem:[%s9133 + $0x172] sm:$0xff]
        %v9924 = vld [vmem:[%s9133 + $0x182] sm:$0xff]
        %v9925 = vld [vmem:[%s9133 + $0x192] sm:$0xff]
        %v9926 = vld [vmem:[%s9133 + $0x1a2] sm:$0xff]
        %v9927 = vld [vmem:[%s9133 + $0x1b2] sm:$0xff]
        %v9928 = vld [vmem:[%s9133 + $0x1e2] sm:$0xff]
        %v9929 = vld [vmem:[%s9133 + $0x1f2] sm:$0xff]
        %v9930 = vld [vmem:[%s9133 + $0x202] sm:$0xff]
        %v9931 = vld [vmem:[%s9133 + $0x212] sm:$0xff]
        %v9932 = vld [vmem:[%s9133 + $0x222] sm:$0xff]
        %v9933 = vld [vmem:[%s9133 + $0x232] sm:$0xff]
        %v9934 = vld [vmem:[%s9133 + $0x242] sm:$0xff]
        %v9935 = vld [vmem:[%s9133 + $0x252] sm:$0xff]
        %v9936 = vld [vmem:[%s9133 + $0x282] sm:$0xff]
        %v9937 = vld [vmem:[%s9133 + $0x292] sm:$0xff]
        %v9938 = vld [vmem:[%s9133 + $0x2a2] sm:$0xff]
        %v9939 = vld [vmem:[%s9133 + $0x2b2] sm:$0xff]
        %v9940 = vld [vmem:[%s9133 + $0x2c2] sm:$0xff]
        %v9941 = vld [vmem:[%s9133 + $0x2d2] sm:$0xff]
        %v9942 = vld [vmem:[%s9133 + $0x2e2] sm:$0xff]
        %v9943 = vld [vmem:[%s9133 + $0x2f2] sm:$0xff]
        %v9944 = vld [vmem:[%s9133 + $0x322] sm:$0xff]
        %v9945 = vld [vmem:[%s9133 + $0x332] sm:$0xff]
        %v9946 = vld [vmem:[%s9133 + $0x342] sm:$0xff]
        %v9947 = vld [vmem:[%s9133 + $0x352] sm:$0xff]
        %v9948 = vld [vmem:[%s9133 + $0x362] sm:$0xff]
        %v9949 = vld [vmem:[%s9133 + $0x372] sm:$0xff]
        %v9950 = vld [vmem:[%s9133 + $0x382] sm:$0xff]
        %v9951 = vld [vmem:[%s9133 + $0x392] sm:$0xff]
        %v9952 = vld [vmem:[%s9133 + $0x3c2] sm:$0xff]
        %v9953 = vld [vmem:[%s9133 + $0x3d2] sm:$0xff]
        %v9954 = vld [vmem:[%s9133 + $0x3e2] sm:$0xff]
        %v9955 = vld [vmem:[%s9133 + $0x3f2] sm:$0xff]
        %v9956 = vld [vmem:[%s9133 + $0x402] sm:$0xff]
        %v9957 = vld [vmem:[%s9133 + $0x412] sm:$0xff]
        %v9958 = vld [vmem:[%s9133 + $0x422] sm:$0xff]
        %v9959 = vld [vmem:[%s9133 + $0x432] sm:$0xff]
        %v9960 = vld [vmem:[%s9133 + $0x462] sm:$0xff]
        %v9961 = vld [vmem:[%s9133 + $0x472] sm:$0xff]
        %v9962 = vld [vmem:[%s9133 + $0x482] sm:$0xff]
        %v9963 = vld [vmem:[%s9133 + $0x492] sm:$0xff]
        %v9964 = vld [vmem:[%s9133 + $0x4a2] sm:$0xff]
        %v9965 = vld [vmem:[%s9133 + $0x4b2] sm:$0xff]
        %v9966 = vld [vmem:[%s9133 + $0x4c2] sm:$0xff]
        %v9967 = vld [vmem:[%s9133 + $0x4d2] sm:$0xff]
        %10032 = vrot.lane.b32.xlu0 %v9904, 104
        %v10033 = vpop.permute.xlu0 %10032
        %10034 = vrot.lane.b32.xlu0 %v9905, 104
        %v10035 = vpop.permute.xlu0 %10034
        %10036 = vrot.lane.b32.xlu0 %v9906, 104
        %v10037 = vpop.permute.xlu0 %10036
        %10038 = vrot.lane.b32.xlu0 %v9907, 104
        %v10039 = vpop.permute.xlu0 %10038
        %10040 = vrot.lane.b32.xlu0 %v9908, 104
        %v10041 = vpop.permute.xlu0 %10040
        %10042 = vrot.lane.b32.xlu0 %v9909, 104
        %v10043 = vpop.permute.xlu0 %10042
        %10044 = vrot.lane.b32.xlu0 %v9910, 104
        %v10045 = vpop.permute.xlu0 %10044
        %10046 = vrot.lane.b32.xlu0 %v9911, 104
        %v10047 = vpop.permute.xlu0 %10046
        %10048 = vrot.lane.b32.xlu0 %v9912, 104
        %v10049 = vpop.permute.xlu0 %10048
        %10050 = vrot.lane.b32.xlu0 %v9913, 104
        %v10051 = vpop.permute.xlu0 %10050
        %10052 = vrot.lane.b32.xlu0 %v9914, 104
        %v10053 = vpop.permute.xlu0 %10052
        %10054 = vrot.lane.b32.xlu0 %v9915, 104
        %v10055 = vpop.permute.xlu0 %10054
        %10056 = vrot.lane.b32.xlu0 %v9916, 104
        %v10057 = vpop.permute.xlu0 %10056
        %10058 = vrot.lane.b32.xlu0 %v9917, 104
        %v10059 = vpop.permute.xlu0 %10058
        %10060 = vrot.lane.b32.xlu0 %v9918, 104
        %v10061 = vpop.permute.xlu0 %10060
        %10062 = vrot.lane.b32.xlu0 %v9919, 104
        %v10063 = vpop.permute.xlu0 %10062
        %10064 = vrot.lane.b32.xlu0 %v9920, 104
        %v10065 = vpop.permute.xlu0 %10064
        %10066 = vrot.lane.b32.xlu0 %v9921, 104
        %v10067 = vpop.permute.xlu0 %10066
        %10068 = vrot.lane.b32.xlu0 %v9922, 104
        %v10069 = vpop.permute.xlu0 %10068
        %10070 = vrot.lane.b32.xlu0 %v9923, 104
        %v10071 = vpop.permute.xlu0 %10070
        %10072 = vrot.lane.b32.xlu0 %v9924, 104
        %v10073 = vpop.permute.xlu0 %10072
        %10074 = vrot.lane.b32.xlu0 %v9925, 104
        %v10075 = vpop.permute.xlu0 %10074
        %10076 = vrot.lane.b32.xlu0 %v9926, 104
        %v10077 = vpop.permute.xlu0 %10076
        %10078 = vrot.lane.b32.xlu0 %v9927, 104
        %v10079 = vpop.permute.xlu0 %10078
        %10080 = vrot.lane.b32.xlu0 %v9928, 104
        %v10081 = vpop.permute.xlu0 %10080
        %10082 = vrot.lane.b32.xlu0 %v9929, 104
        %v10083 = vpop.permute.xlu0 %10082
        %10084 = vrot.lane.b32.xlu0 %v9930, 104
        %v10085 = vpop.permute.xlu0 %10084
        %10086 = vrot.lane.b32.xlu0 %v9931, 104
        %v10087 = vpop.permute.xlu0 %10086
        %10088 = vrot.lane.b32.xlu0 %v9932, 104
        %v10089 = vpop.permute.xlu0 %10088
        %10090 = vrot.lane.b32.xlu0 %v9933, 104
        %v10091 = vpop.permute.xlu0 %10090
        %10092 = vrot.lane.b32.xlu0 %v9934, 104
        %v10093 = vpop.permute.xlu0 %10092
        %10094 = vrot.lane.b32.xlu0 %v9935, 104
        %v10095 = vpop.permute.xlu0 %10094
        %10096 = vrot.lane.b32.xlu0 %v9936, 104
        %v10097 = vpop.permute.xlu0 %10096
        %10098 = vrot.lane.b32.xlu0 %v9937, 104
        %v10099 = vpop.permute.xlu0 %10098
        %10100 = vrot.lane.b32.xlu0 %v9938, 104
        %v10101 = vpop.permute.xlu0 %10100
        %10102 = vrot.lane.b32.xlu0 %v9939, 104
        %v10103 = vpop.permute.xlu0 %10102
        %10104 = vrot.lane.b32.xlu0 %v9940, 104
        %v10105 = vpop.permute.xlu0 %10104
        %10106 = vrot.lane.b32.xlu0 %v9941, 104
        %v10107 = vpop.permute.xlu0 %10106
        %10108 = vrot.lane.b32.xlu0 %v9942, 104
        %v10109 = vpop.permute.xlu0 %10108
        %10110 = vrot.lane.b32.xlu0 %v9943, 104
        %v10111 = vpop.permute.xlu0 %10110
        %10112 = vrot.lane.b32.xlu0 %v9944, 104
        %v10113 = vpop.permute.xlu0 %10112
        %10114 = vrot.lane.b32.xlu0 %v9945, 104
        %v10115 = vpop.permute.xlu0 %10114
        %10116 = vrot.lane.b32.xlu0 %v9946, 104
        %v10117 = vpop.permute.xlu0 %10116
        %10118 = vrot.lane.b32.xlu0 %v9947, 104
        %v10119 = vpop.permute.xlu0 %10118
        %10120 = vrot.lane.b32.xlu0 %v9948, 104
        %v10121 = vpop.permute.xlu0 %10120
        %10122 = vrot.lane.b32.xlu0 %v9949, 104
        %v10123 = vpop.permute.xlu0 %10122
        %10124 = vrot.lane.b32.xlu0 %v9950, 104
        %v10125 = vpop.permute.xlu0 %10124
        %10126 = vrot.lane.b32.xlu0 %v9951, 104
        %v10127 = vpop.permute.xlu0 %10126
        %10128 = vrot.lane.b32.xlu0 %v9952, 104
        %v10129 = vpop.permute.xlu0 %10128
        %10130 = vrot.lane.b32.xlu0 %v9953, 104
        %v10131 = vpop.permute.xlu0 %10130
        %10132 = vrot.lane.b32.xlu0 %v9954, 104
        %v10133 = vpop.permute.xlu0 %10132
        %10134 = vrot.lane.b32.xlu0 %v9955, 104
        %v10135 = vpop.permute.xlu0 %10134
        %10136 = vrot.lane.b32.xlu0 %v9956, 104
        %v10137 = vpop.permute.xlu0 %10136
        %10138 = vrot.lane.b32.xlu0 %v9957, 104
        %v10139 = vpop.permute.xlu0 %10138
        %10140 = vrot.lane.b32.xlu0 %v9958, 104
        %v10141 = vpop.permute.xlu0 %10140
        %10142 = vrot.lane.b32.xlu0 %v9959, 104
        %v10143 = vpop.permute.xlu0 %10142
        %10144 = vrot.lane.b32.xlu0 %v9960, 104
        %v10145 = vpop.permute.xlu0 %10144
        %10146 = vrot.lane.b32.xlu0 %v9961, 104
        %v10147 = vpop.permute.xlu0 %10146
        %10148 = vrot.lane.b32.xlu0 %v9962, 104
        %v10149 = vpop.permute.xlu0 %10148
        %10150 = vrot.lane.b32.xlu0 %v9963, 104
        %v10151 = vpop.permute.xlu0 %10150
        %10152 = vrot.lane.b32.xlu0 %v9964, 104
        %v10153 = vpop.permute.xlu0 %10152
        %10154 = vrot.lane.b32.xlu0 %v9965, 104
        %v10155 = vpop.permute.xlu0 %10154
        %10156 = vrot.lane.b32.xlu0 %v9966, 104
        %v10157 = vpop.permute.xlu0 %10156
        %10158 = vrot.lane.b32.xlu0 %v9967, 104
        %v10159 = vpop.permute.xlu0 %10158
        %vm10224 = vcmask 884544
        %10225 = vst.msk [vmem:[#allocation2] sm:$0xff] %vm10224, %v10033
        %10226 = vst.msk [vmem:[#allocation2 + $0x8] sm:$0xff] %vm10224, %v10035
        %10227 = vst.msk [vmem:[#allocation2 + $0x10] sm:$0xff] %vm10224, %v10037
        %10228 = vst.msk [vmem:[#allocation2 + $0x18] sm:$0xff] %vm10224, %v10039
        %10229 = vst.msk [vmem:[#allocation2 + $0x20] sm:$0xff] %vm10224, %v10041
        %10230 = vst.msk [vmem:[#allocation2 + $0x28] sm:$0xff] %vm10224, %v10043
        %10231 = vst.msk [vmem:[#allocation2 + $0x30] sm:$0xff] %vm10224, %v10045
        %10232 = vst.msk [vmem:[#allocation2 + $0x38] sm:$0xff] %vm10224, %v10047
        %10233 = vst.msk [vmem:[#allocation2 + $0x40] sm:$0xff] %vm10224, %v10049
        %10234 = vst.msk [vmem:[#allocation2 + $0x48] sm:$0xff] %vm10224, %v10051
        %10235 = vst.msk [vmem:[#allocation2 + $0x50] sm:$0xff] %vm10224, %v10053
        %10236 = vst.msk [vmem:[#allocation2 + $0x58] sm:$0xff] %vm10224, %v10055
        %10237 = vst.msk [vmem:[#allocation2 + $0x60] sm:$0xff] %vm10224, %v10057
        %10238 = vst.msk [vmem:[#allocation2 + $0x68] sm:$0xff] %vm10224, %v10059
        %10239 = vst.msk [vmem:[#allocation2 + $0x70] sm:$0xff] %vm10224, %v10061
        %10240 = vst.msk [vmem:[#allocation2 + $0x78] sm:$0xff] %vm10224, %v10063
        %10241 = vst.msk [vmem:[#allocation2 + $0x80] sm:$0xff] %vm10224, %v10065
        %10242 = vst.msk [vmem:[#allocation2 + $0x88] sm:$0xff] %vm10224, %v10067
        %10243 = vst.msk [vmem:[#allocation2 + $0x90] sm:$0xff] %vm10224, %v10069
        %10244 = vst.msk [vmem:[#allocation2 + $0x98] sm:$0xff] %vm10224, %v10071
        %10245 = vst.msk [vmem:[#allocation2 + $0xa0] sm:$0xff] %vm10224, %v10073
        %10246 = vst.msk [vmem:[#allocation2 + $0xa8] sm:$0xff] %vm10224, %v10075
        %10247 = vst.msk [vmem:[#allocation2 + $0xb0] sm:$0xff] %vm10224, %v10077
        %10248 = vst.msk [vmem:[#allocation2 + $0xb8] sm:$0xff] %vm10224, %v10079
        %10249 = vst.msk [vmem:[#allocation2 + $0xc0] sm:$0xff] %vm10224, %v10081
        %10250 = vst.msk [vmem:[#allocation2 + $0xc8] sm:$0xff] %vm10224, %v10083
        %10251 = vst.msk [vmem:[#allocation2 + $0xd0] sm:$0xff] %vm10224, %v10085
        %10252 = vst.msk [vmem:[#allocation2 + $0xd8] sm:$0xff] %vm10224, %v10087
        %10253 = vst.msk [vmem:[#allocation2 + $0xe0] sm:$0xff] %vm10224, %v10089
        %10254 = vst.msk [vmem:[#allocation2 + $0xe8] sm:$0xff] %vm10224, %v10091
        %10255 = vst.msk [vmem:[#allocation2 + $0xf0] sm:$0xff] %vm10224, %v10093
        %10256 = vst.msk [vmem:[#allocation2 + $0xf8] sm:$0xff] %vm10224, %v10095
        %10257 = vst.msk [vmem:[#allocation2 + $0x100] sm:$0xff] %vm10224, %v10097
        %10258 = vst.msk [vmem:[#allocation2 + $0x108] sm:$0xff] %vm10224, %v10099
        %10259 = vst.msk [vmem:[#allocation2 + $0x110] sm:$0xff] %vm10224, %v10101
        %10260 = vst.msk [vmem:[#allocation2 + $0x118] sm:$0xff] %vm10224, %v10103
        %10261 = vst.msk [vmem:[#allocation2 + $0x120] sm:$0xff] %vm10224, %v10105
        %10262 = vst.msk [vmem:[#allocation2 + $0x128] sm:$0xff] %vm10224, %v10107
        %10263 = vst.msk [vmem:[#allocation2 + $0x130] sm:$0xff] %vm10224, %v10109
        %10264 = vst.msk [vmem:[#allocation2 + $0x138] sm:$0xff] %vm10224, %v10111
        %10265 = vst.msk [vmem:[#allocation2 + $0x140] sm:$0xff] %vm10224, %v10113
        %10266 = vst.msk [vmem:[#allocation2 + $0x148] sm:$0xff] %vm10224, %v10115
        %10267 = vst.msk [vmem:[#allocation2 + $0x150] sm:$0xff] %vm10224, %v10117
        %10268 = vst.msk [vmem:[#allocation2 + $0x158] sm:$0xff] %vm10224, %v10119
        %10269 = vst.msk [vmem:[#allocation2 + $0x160] sm:$0xff] %vm10224, %v10121
        %10270 = vst.msk [vmem:[#allocation2 + $0x168] sm:$0xff] %vm10224, %v10123
        %10271 = vst.msk [vmem:[#allocation2 + $0x170] sm:$0xff] %vm10224, %v10125
        %10272 = vst.msk [vmem:[#allocation2 + $0x178] sm:$0xff] %vm10224, %v10127
        %10273 = vst.msk [vmem:[#allocation2 + $0x180] sm:$0xff] %vm10224, %v10129
        %10274 = vst.msk [vmem:[#allocation2 + $0x188] sm:$0xff] %vm10224, %v10131
        %10275 = vst.msk [vmem:[#allocation2 + $0x190] sm:$0xff] %vm10224, %v10133
        %10276 = vst.msk [vmem:[#allocation2 + $0x198] sm:$0xff] %vm10224, %v10135
        %10277 = vst.msk [vmem:[#allocation2 + $0x1a0] sm:$0xff] %vm10224, %v10137
        %10278 = vst.msk [vmem:[#allocation2 + $0x1a8] sm:$0xff] %vm10224, %v10139
        %10279 = vst.msk [vmem:[#allocation2 + $0x1b0] sm:$0xff] %vm10224, %v10141
        %10280 = vst.msk [vmem:[#allocation2 + $0x1b8] sm:$0xff] %vm10224, %v10143
        %10281 = vst.msk [vmem:[#allocation2 + $0x1c0] sm:$0xff] %vm10224, %v10145
        %10282 = vst.msk [vmem:[#allocation2 + $0x1c8] sm:$0xff] %vm10224, %v10147
        %10283 = vst.msk [vmem:[#allocation2 + $0x1d0] sm:$0xff] %vm10224, %v10149
        %10284 = vst.msk [vmem:[#allocation2 + $0x1d8] sm:$0xff] %vm10224, %v10151
        %10285 = vst.msk [vmem:[#allocation2 + $0x1e0] sm:$0xff] %vm10224, %v10153
        %10286 = vst.msk [vmem:[#allocation2 + $0x1e8] sm:$0xff] %vm10224, %v10155
        %10287 = vst.msk [vmem:[#allocation2 + $0x1f0] sm:$0xff] %vm10224, %v10157
        %10288 = vst.msk [vmem:[#allocation2 + $0x1f8] sm:$0xff] %vm10224, %v10159
        %v10289 = vld [vmem:[#allocation2] sm:$0xff]
        %v10290 = vld [vmem:[#allocation2 + $0x8] sm:$0xff]
        %v10291 = vld [vmem:[#allocation2 + $0x10] sm:$0xff]
        %v10292 = vld [vmem:[#allocation2 + $0x18] sm:$0xff]
        %v10293 = vld [vmem:[#allocation2 + $0x20] sm:$0xff]
        %v10294 = vld [vmem:[#allocation2 + $0x28] sm:$0xff]
        %v10295 = vld [vmem:[#allocation2 + $0x30] sm:$0xff]
        %v10296 = vld [vmem:[#allocation2 + $0x38] sm:$0xff]
        %v10297 = vld [vmem:[#allocation2 + $0x40] sm:$0xff]
        %v10298 = vld [vmem:[#allocation2 + $0x48] sm:$0xff]
        %v10299 = vld [vmem:[#allocation2 + $0x50] sm:$0xff]
        %v10300 = vld [vmem:[#allocation2 + $0x58] sm:$0xff]
        %v10301 = vld [vmem:[#allocation2 + $0x60] sm:$0xff]
        %v10302 = vld [vmem:[#allocation2 + $0x68] sm:$0xff]
        %v10303 = vld [vmem:[#allocation2 + $0x70] sm:$0xff]
        %v10304 = vld [vmem:[#allocation2 + $0x78] sm:$0xff]
        %v10305 = vld [vmem:[#allocation2 + $0x80] sm:$0xff]
        %v10306 = vld [vmem:[#allocation2 + $0x88] sm:$0xff]
        %v10307 = vld [vmem:[#allocation2 + $0x90] sm:$0xff]
        %v10308 = vld [vmem:[#allocation2 + $0x98] sm:$0xff]
        %v10309 = vld [vmem:[#allocation2 + $0xa0] sm:$0xff]
        %v10310 = vld [vmem:[#allocation2 + $0xa8] sm:$0xff]
        %v10311 = vld [vmem:[#allocation2 + $0xb0] sm:$0xff]
        %v10312 = vld [vmem:[#allocation2 + $0xb8] sm:$0xff]
        %v10313 = vld [vmem:[#allocation2 + $0xc0] sm:$0xff]
        %v10314 = vld [vmem:[#allocation2 + $0xc8] sm:$0xff]
        %v10315 = vld [vmem:[#allocation2 + $0xd0] sm:$0xff]
        %v10316 = vld [vmem:[#allocation2 + $0xd8] sm:$0xff]
        %v10317 = vld [vmem:[#allocation2 + $0xe0] sm:$0xff]
        %v10318 = vld [vmem:[#allocation2 + $0xe8] sm:$0xff]
        %v10319 = vld [vmem:[#allocation2 + $0xf0] sm:$0xff]
        %v10320 = vld [vmem:[#allocation2 + $0xf8] sm:$0xff]
        %v10321 = vld [vmem:[#allocation2 + $0x100] sm:$0xff]
        %v10322 = vld [vmem:[#allocation2 + $0x108] sm:$0xff]
        %v10323 = vld [vmem:[#allocation2 + $0x110] sm:$0xff]
        %v10324 = vld [vmem:[#allocation2 + $0x118] sm:$0xff]
        %v10325 = vld [vmem:[#allocation2 + $0x120] sm:$0xff]
        %v10326 = vld [vmem:[#allocation2 + $0x128] sm:$0xff]
        %v10327 = vld [vmem:[#allocation2 + $0x130] sm:$0xff]
        %v10328 = vld [vmem:[#allocation2 + $0x138] sm:$0xff]
        %v10329 = vld [vmem:[#allocation2 + $0x140] sm:$0xff]
        %v10330 = vld [vmem:[#allocation2 + $0x148] sm:$0xff]
        %v10331 = vld [vmem:[#allocation2 + $0x150] sm:$0xff]
        %v10332 = vld [vmem:[#allocation2 + $0x158] sm:$0xff]
        %v10333 = vld [vmem:[#allocation2 + $0x160] sm:$0xff]
        %v10334 = vld [vmem:[#allocation2 + $0x168] sm:$0xff]
        %v10335 = vld [vmem:[#allocation2 + $0x170] sm:$0xff]
        %v10336 = vld [vmem:[#allocation2 + $0x178] sm:$0xff]
        %v10337 = vld [vmem:[#allocation2 + $0x180] sm:$0xff]
        %v10338 = vld [vmem:[#allocation2 + $0x188] sm:$0xff]
        %v10339 = vld [vmem:[#allocation2 + $0x190] sm:$0xff]
        %v10340 = vld [vmem:[#allocation2 + $0x198] sm:$0xff]
        %v10341 = vld [vmem:[#allocation2 + $0x1a0] sm:$0xff]
        %v10342 = vld [vmem:[#allocation2 + $0x1a8] sm:$0xff]
        %v10343 = vld [vmem:[#allocation2 + $0x1b0] sm:$0xff]
        %v10344 = vld [vmem:[#allocation2 + $0x1b8] sm:$0xff]
        %v10345 = vld [vmem:[#allocation2 + $0x1c0] sm:$0xff]
        %v10346 = vld [vmem:[#allocation2 + $0x1c8] sm:$0xff]
        %v10347 = vld [vmem:[#allocation2 + $0x1d0] sm:$0xff]
        %v10348 = vld [vmem:[#allocation2 + $0x1d8] sm:$0xff]
        %v10349 = vld [vmem:[#allocation2 + $0x1e0] sm:$0xff]
        %v10350 = vld [vmem:[#allocation2 + $0x1e8] sm:$0xff]
        %v10351 = vld [vmem:[#allocation2 + $0x1f0] sm:$0xff]
        %v10352 = vld [vmem:[#allocation2 + $0x1f8] sm:$0xff]
        %v10353 = vpack.c.bf16 %v10290, %v10289
        %v10354 = vpack.c.bf16 %v10292, %v10291
        %v10355 = vpack.c.bf16 %v10294, %v10293
        %v10356 = vpack.c.bf16 %v10296, %v10295
        %v10357 = vpack.c.bf16 %v10298, %v10297
        %v10358 = vpack.c.bf16 %v10300, %v10299
        %v10359 = vpack.c.bf16 %v10302, %v10301
        %v10360 = vpack.c.bf16 %v10304, %v10303
        %v10361 = vpack.c.bf16 %v10306, %v10305
        %v10362 = vpack.c.bf16 %v10308, %v10307
        %v10363 = vpack.c.bf16 %v10310, %v10309
        %v10364 = vpack.c.bf16 %v10312, %v10311
        %v10365 = vpack.c.bf16 %v10314, %v10313
        %v10366 = vpack.c.bf16 %v10316, %v10315
        %v10367 = vpack.c.bf16 %v10318, %v10317
        %v10368 = vpack.c.bf16 %v10320, %v10319
        %v10369 = vpack.c.bf16 %v10322, %v10321
        %v10370 = vpack.c.bf16 %v10324, %v10323
        %v10371 = vpack.c.bf16 %v10326, %v10325
        %v10372 = vpack.c.bf16 %v10328, %v10327
        %v10373 = vpack.c.bf16 %v10330, %v10329
        %v10374 = vpack.c.bf16 %v10332, %v10331
        %v10375 = vpack.c.bf16 %v10334, %v10333
        %v10376 = vpack.c.bf16 %v10336, %v10335
        %v10377 = vpack.c.bf16 %v10338, %v10337
        %v10378 = vpack.c.bf16 %v10340, %v10339
        %v10379 = vpack.c.bf16 %v10342, %v10341
        %v10380 = vpack.c.bf16 %v10344, %v10343
        %v10381 = vpack.c.bf16 %v10346, %v10345
        %v10382 = vpack.c.bf16 %v10348, %v10347
        %v10383 = vpack.c.bf16 %v10350, %v10349
        %v10384 = vpack.c.bf16 %v10352, %v10351
        %v10385 = vld [vmem:[%s1] sm:$0xf]
        %vm10386 = vcmask 883712
        %v10388 = vsel %vm10386, %v10385, 0
        %v10391 = vsel %vm10386, %v10353, 0
        %v10394 = vsel %vm10386, %v10354, 0
        %v10397 = vsel %vm10386, %v10355, 0
        %v10400 = vsel %vm10386, %v10356, 0
        %v10403 = vsel %vm10386, %v10357, 0
        %v10406 = vsel %vm10386, %v10358, 0
        %v10409 = vsel %vm10386, %v10359, 0
        %v10412 = vsel %vm10386, %v10360, 0
        %v10415 = vsel %vm10386, %v10361, 0
        %v10418 = vsel %vm10386, %v10362, 0
        %v10421 = vsel %vm10386, %v10363, 0
        %v10424 = vsel %vm10386, %v10364, 0
        %v10427 = vsel %vm10386, %v10365, 0
        %v10430 = vsel %vm10386, %v10366, 0
        %v10433 = vsel %vm10386, %v10367, 0
        %v10436 = vsel %vm10386, %v10368, 0
        %v10439 = vsel %vm10386, %v10369, 0
        %v10442 = vsel %vm10386, %v10370, 0
        %v10445 = vsel %vm10386, %v10371, 0
        %v10448 = vsel %vm10386, %v10372, 0
        %v10451 = vsel %vm10386, %v10373, 0
        %v10454 = vsel %vm10386, %v10374, 0
        %v10457 = vsel %vm10386, %v10375, 0
        %v10460 = vsel %vm10386, %v10376, 0
        %v10463 = vsel %vm10386, %v10377, 0
        %v10466 = vsel %vm10386, %v10378, 0
        %v10469 = vsel %vm10386, %v10379, 0
        %v10472 = vsel %vm10386, %v10380, 0
        %v10475 = vsel %vm10386, %v10381, 0
        %v10478 = vsel %vm10386, %v10382, 0
        %v10481 = vsel %vm10386, %v10383, 0
        %v10484 = vsel %vm10386, %v10384, 0
        %10486 = vmatpush.bf16.xpose.msra.mxu0 %v10412
        %10487 = vmatpush.bf16.xpose.msra.mxu0 %v10409
        %10488 = vmatpush.bf16.xpose.msra.mxu0 %v10406
        %10489 = vmatpush.bf16.xpose.msra.mxu0 %v10403
        %10490 = vmatpush.bf16.xpose.msra.mxu0 %v10400
        %10491 = vmatpush.bf16.xpose.msra.mxu0 %v10397
        %10492 = vmatpush.bf16.xpose.msra.mxu0 %v10394
        %10493 = vmatpush.bf16.xpose.msra.mxu0 %v10391
        %10494 = vmatmul.bf16.gmra.mxu0 %v10388
        %v10495 = vpop.f32.mrf.mxu0
        %v10496 = vadd.f32 0.0, %v10495
        %v10497 = vpop.f32.mrf.mxu0
        %10498 = vdwg.mxu0
        %10499 = vmatpush.bf16.xpose.msra.mxu0 %v10436
        %10500 = vmatpush.bf16.xpose.msra.mxu0 %v10433
        %10501 = vmatpush.bf16.xpose.msra.mxu0 %v10430
        %10502 = vmatpush.bf16.xpose.msra.mxu0 %v10427
        %10503 = vmatpush.bf16.xpose.msra.mxu0 %v10424
        %10504 = vmatpush.bf16.xpose.msra.mxu0 %v10421
        %10505 = vmatpush.bf16.xpose.msra.mxu0 %v10418
        %10506 = vmatpush.bf16.xpose.msra.mxu0 %v10415
        %10507 = vmatmul.bf16.gmra.mxu0 %v10388
        %v10508 = vpop.f32.mrf.mxu0
        %v10509 = vadd.f32 0.0, %v10508
        %v10510 = vpop.f32.mrf.mxu0
        %10511 = vdwg.mxu0
        %10512 = vmatpush.bf16.xpose.msra.mxu0 %v10460
        %10513 = vmatpush.bf16.xpose.msra.mxu0 %v10457
        %10514 = vmatpush.bf16.xpose.msra.mxu0 %v10454
        %10515 = vmatpush.bf16.xpose.msra.mxu0 %v10451
        %10516 = vmatpush.bf16.xpose.msra.mxu0 %v10448
        %10517 = vmatpush.bf16.xpose.msra.mxu0 %v10445
        %10518 = vmatpush.bf16.xpose.msra.mxu0 %v10442
        %10519 = vmatpush.bf16.xpose.msra.mxu0 %v10439
        %10520 = vmatmul.bf16.gmra.mxu0 %v10388
        %v10521 = vpop.f32.mrf.mxu0
        %v10522 = vadd.f32 0.0, %v10521
        %v10523 = vpop.f32.mrf.mxu0
        %10524 = vdwg.mxu0
        %10525 = vmatpush.bf16.xpose.msra.mxu0 %v10484
        %10526 = vmatpush.bf16.xpose.msra.mxu0 %v10481
        %10527 = vmatpush.bf16.xpose.msra.mxu0 %v10478
        %10528 = vmatpush.bf16.xpose.msra.mxu0 %v10475
        %10529 = vmatpush.bf16.xpose.msra.mxu0 %v10472
        %10530 = vmatpush.bf16.xpose.msra.mxu0 %v10469
        %10531 = vmatpush.bf16.xpose.msra.mxu0 %v10466
        %10532 = vmatpush.bf16.xpose.msra.mxu0 %v10463
        %10533 = vmatmul.bf16.gmra.mxu0 %v10388
        %v10534 = vpop.f32.mrf.mxu0
        %v10535 = vadd.f32 0.0, %v10534
        %v10536 = vpop.f32.mrf.mxu0
        %10537 = vdwg.mxu0
        %10538 = vst [vmem:[%s136] sm:$0xff] %v10496
        %10539 = vst [vmem:[%s136 + $0x8] sm:$0xff] %v10509
        %10540 = vst [vmem:[%s136 + $0x10] sm:$0xff] %v10522
        %10541 = vst [vmem:[%s136 + $0x18] sm:$0xff] %v10535
        %s10542 = sand.u32 %s71, 1
        %s10543 = scalar_lea.sflag [#allocation4], %s10542
        %s10544 = sand.u32 %s71, 1
        %s10545 = smul.addr %s10544, 32
        %s10546 = scalar_lea.vmem [#allocation3], %s10545
        // Predicated region
        $region29: #{tpu_custom_call.1} parent=27 // pred_check
          %p10547 = pneg %p81
        $region30: #{tpu_custom_call.1} parent=27 // pred_check_branch
          %10549 = sbr.rel (%p10547) target = $region32
        $region31: #{tpu_custom_call.1} parent=27 // pred_region
          %10551 = vsyncadd %s10543, 0
          %s10552 = smul.addr %s16, 4
          %s10553 = smul.addr %s10552, 8
          %s10554 = scalar_lea.hbm %s2, %s10553
          %s10556 = sshll.u32 %s10546, 4
          %s10557 = int_to_ptr.vmem [resolvable:$true] %s10556
          %s10558 = sshll.u32 %s10554, 4
          %s10559 = int_to_ptr.hbm [resolvable:$true] %s10558
          %10561 = dma.vmem_to_hbm [thread:$0]  %s10557, 512, %s10559, %s10543
        $region32: #{tpu_custom_call.1} parent=27 // pred_fallthru
          _
      $region28: #{tpu_custom_call.1} parent=5 // pred_fallthru
        _
      %p10562 = scmp.le.s32.totalorder 2, %s11
      // Predicated region
      $region33: #{tpu_custom_call.1} parent=5 // pred_check
        %p10563 = pneg %p10562
      $region34: #{tpu_custom_call.1} parent=5 // pred_check_branch
        %10565 = sbr.rel (%p10563) target = $region36
      $region35: #{tpu_custom_call.1} parent=5 // pred_region
        %s10566 = ssub.s32 %s11, 2
        // Predicated region
        $region37: #{tpu_custom_call.1} parent=35 // pred_check
          %p10567 = pneg %p87
        $region38: #{tpu_custom_call.1} parent=35 // pred_check_branch
          %10569 = sbr.rel (%p10567) target = $region40
        $region39: #{tpu_custom_call.1} parent=35 // pred_region
          %s10570 = sand.u32 %s72, 1
          %s10571 = scalar_lea.sflag [#allocation4], %s10570
          %s10572 = sand.u32 %s72, 1
          %s10573 = smul.addr %s10572, 32
          %s10574 = scalar_lea.vmem [#allocation3], %s10573
          %10576 = dma.done %s10571, 512
        $region40: #{tpu_custom_call.1} parent=35 // pred_fallthru
          _
      $region36: #{tpu_custom_call.1} parent=5 // pred_fallthru
        _
    $region6: #{tpu_custom_call.1} parent=1 // loop_footer
      %s15 = sadd.s32 1, %s11
    $region7: #{tpu_custom_call.1} parent=1 // loop_footer_branch
      %10 = sbr.rel target = $region3
    $region8: #{tpu_custom_call.1} parent=1 // loop_exit
      _
    %10577 = vsyncpa [#allocation4], 1
    %s10578 = scalar_lea.sflag [#allocation4], 1
    %10579 = vsyncpa %s10578, 1

</llo_original>
